<compile_context>
chip_gen: v7x
topology: tpu7x:2x2x1
jax: 0.10.0
libtpu: 0.0.40
codegen_flags: <defaults>
</compile_context>

<pallas_src>
import numpy as np

import jax
import jax.numpy as jnp
from jax import lax
from jax.experimental import pallas as pl
from jax.experimental.pallas import tpu as pltpu

H = W = 12
CIN = 1
COUT = 32
K = 3
WPAD = W + 2                 # 14: width zero-padded by one column on each side
ROWS = H * WPAD              # 168: flattened width-padded image rows per sample
ROWS_AUG = 176               # 168 + 1 ones-row (conv bias) + 7 zero rows (sublane align)
FC_IN = H * W * COUT         # 4608 = 36*128: PyTorch .view feature count
FC_OUT = 8


def _build_band_indices():
    """Static scatter indices for the banded conv-weight matrix.

    Wband[q, r] = conv_w[c, 0, kh, kw] where q = c*144 + i*12 + j and
    r = (i+kh-1)*14 + (j+kw), skipping out-of-range heights (height padding);
    width padding is handled by the zero columns already present in x_tile.
    """
    qs, rs, ws = [], [], []
    for c in range(COUT):
        for i in range(H):
            for j in range(W):
                q = c * H * W + i * W + j
                for kh in range(K):
                    ii = i + kh - 1
                    if ii < 0 or ii >= H:
                        continue
                    for kw in range(K):
                        qs.append(q)
                        rs.append(ii * WPAD + (j + kw))
                        ws.append(c * K * K + kh * K + kw)
    return (np.asarray(qs, np.int32), np.asarray(rs, np.int32),
            np.asarray(ws, np.int32))


_BAND_Q, _BAND_R, _BAND_W = _build_band_indices()


def dqn_kernel(x_ref, wband_ref, fw_ref, fb_ref, out_ref, h_ref):
    # x_ref:     (176, TB)    f32   batch tile, batch on the lane axis
    # wband_ref: (4608, 176)  bf16  resident banded conv weight (+bias column)
    # fw_ref:    (8, 4608)    bf16  resident fc weight
    # fb_ref:    (8, 1)       f32   fc bias
    # out_ref:   (8, TB)      f32   lane-dense output tile
    # h_ref:     (4608, TB)   bf16  scratch: relu(conv) in PyTorch flatten order
    x = x_ref[...].astype(jnp.bfloat16)

    # Conv (incl. bias via the ones-row) as one MXU matmul, f32 accumulation.
    conv = jnp.dot(wband_ref[...], x, preferred_element_type=jnp.float32)
    h_ref[...] = jnp.maximum(conv, 0.0).astype(jnp.bfloat16)

    # fc: (8, 4608) @ (4608, TB) -> (8, TB), bf16 operands, f32 accumulation.
    out_ref[...] = (
        jnp.dot(fw_ref[...], h_ref[...], preferred_element_type=jnp.float32)
        + fb_ref[...]
    )


def _pick_batch_tile(B):
    if B <= 128:
        return 128
    if B <= 256:
        return 128   # >=2 grid steps -> both TensorCores busy on v7x
    return 256       # fills the 256-wide MXU on v6e/v7x; grid still >=2 steps


def dqn_forward(x, conv_w, conv_b, fc_w, fc_b, *, batch_tile=None):
    """x: (B, 1, 12, 12) float32 NCHW.  Returns (B, 8) float32."""
    B = x.shape[0]
    tb = _pick_batch_tile(B) if batch_tile is None else batch_tile
    bp = ((B + tb - 1) // tb) * tb

    # (B,1,12,12) -> width-pad -> flatten -> append ones-row (conv bias) and
    # zero rows (sublane align) -> transpose so the batch is on the lane axis.
    xp = jnp.pad(x[:, 0, :, :], ((0, 0), (0, 0), (1, 1)))          # (B, 12, 14)
    x_flat = xp.reshape(B, ROWS)                                    # (B, 168)
    ones = jnp.ones((B, 1), x.dtype)
    zeros = jnp.zeros((B, ROWS_AUG - ROWS - 1), x.dtype)
    x_aug = jnp.concatenate([x_flat, ones, zeros], axis=1)          # (B, 176)
    x_t = jnp.pad(x_aug.T, ((0, 0), (0, bp - B)))                   # (176, bp) f32

    # Banded conv weight (4608, 176) bf16; column 168 carries the conv bias.
    wflat = conv_w.reshape(COUT * K * K).astype(jnp.float32)
    wband = jnp.zeros((FC_IN, ROWS_AUG), jnp.float32)
    wband = wband.at[_BAND_Q, _BAND_R].set(wflat[_BAND_W])
    wband = wband.at[np.arange(FC_IN), ROWS].set(
        jnp.repeat(conv_b.astype(jnp.float32), H * W))
    wband = wband.astype(jnp.bfloat16)                              # (4608, 176)

    fw = fc_w.astype(jnp.bfloat16)                                  # (8, 4608)
    fb = fc_b.reshape(FC_OUT, 1).astype(jnp.float32)                # (8, 1)

    grid = (bp // tb,)
    flops = 2 * bp * (FC_IN * ROWS_AUG + FC_OUT * FC_IN)
    bytes_accessed = (x_t.size * 4 + wband.size * 2 + fw.size * 2
                      + fb.size * 4 + FC_OUT * bp * 4)
    out_t = pl.pallas_call(
        dqn_kernel,
        out_shape=jax.ShapeDtypeStruct((FC_OUT, bp), jnp.float32),
        grid=grid,
        in_specs=[
            pl.BlockSpec((ROWS_AUG, tb), lambda i: (0, i)),          # x tile
            pl.BlockSpec((FC_IN, ROWS_AUG), lambda i: (0, 0)),       # Wband (resident)
            pl.BlockSpec((FC_OUT, FC_IN), lambda i: (0, 0)),         # fc weight (resident)
            pl.BlockSpec((FC_OUT, 1), lambda i: (0, 0)),             # fc bias (resident)
        ],
        out_specs=pl.BlockSpec((FC_OUT, tb), lambda i: (0, i)),
        scratch_shapes=[
            pltpu.VMEM((FC_IN, tb), jnp.bfloat16),                   # relu(conv)
        ],
        compiler_params=pltpu.CompilerParams(
            dimension_semantics=("parallel",),
            vmem_limit_bytes=40 * 1024 * 1024,
        ),
        cost_estimate=pl.CostEstimate(
            flops=flops, transcendentals=0, bytes_accessed=bytes_accessed),
    )(x_t, wband, fw, fb)

    return out_t[:, :B].T                                            # (B, 8)


def dqn_reference(x, conv_w, conv_b, fc_w, fc_b):
    """Pure-JAX reference matching the PyTorch forward."""
    y = lax.conv_general_dilated(
        x, conv_w, window_strides=(1, 1), padding=((1, 1), (1, 1)),
        dimension_numbers=("NCHW", "OIHW", "NCHW"))
    y = jax.nn.relu(y + conv_b.reshape(1, COUT, 1, 1))
    y = y.reshape(x.shape[0], FC_IN)                                 # (C,H,W) view order
    return y @ fc_w.T + fc_b


if __name__ == "__main__":
    key = jax.random.PRNGKey(0)
    kx, kcw, kcb, kfw, kfb, kx2 = jax.random.split(key, 6)

    # Deterministic synthetic parameters (shapes from the nn.Module __init__).
    conv_w = jax.random.normal(kcw, (COUT, CIN, K, K), dtype=jnp.float32) * 0.1
    conv_b = jax.random.normal(kcb, (COUT,), dtype=jnp.float32) * 0.1
    fc_w = jax.random.normal(kfw, (FC_OUT, FC_IN), dtype=jnp.float32) * 0.02
    fc_b = jax.random.normal(kfb, (FC_OUT,), dtype=jnp.float32) * 0.02

    # Reference with operands rounded to bf16 (the kernel uses bf16 MXU
    # operands with f32 accumulation); fc_b stays f32 like in the kernel.
    bf = lambda a: a.astype(jnp.bfloat16).astype(jnp.float32)

    # Small batch (single grid step).
    B = 4
    x = jax.random.normal(kx, (B, CIN, H, W), dtype=jnp.float32)
    out = jax.block_until_ready(dqn_forward(x, conv_w, conv_b, fc_w, fc_b))
    ref = dqn_reference(bf(x), bf(conv_w), bf(conv_b), bf(fc_w), fc_b)
    assert out.shape == (B, FC_OUT)
    assert jnp.allclose(out, ref, atol=2e-2, rtol=2e-2), "mismatch vs reference (B=4)"

    # Larger batch: exercises the multi-step batch grid and padding path.
    B2 = 160
    x2 = jax.random.normal(kx2, (B2, CIN, H, W), dtype=jnp.float32)
    out2 = jax.block_until_ready(dqn_forward(x2, conv_w, conv_b, fc_w, fc_b))
    ref2 = dqn_reference(bf(x2), bf(conv_w), bf(conv_b), bf(fc_w), fc_b)
    assert out2.shape == (B2, FC_OUT)
    assert jnp.allclose(out2, ref2, atol=2e-2, rtol=2e-2), "mismatch vs reference (B=160)"

    print("KERNEL_OK")
</pallas_src>

<mosaic_0001>
module attributes {stable_mosaic.version = 11 : i64} {
  func.func @dqn_kernel(%arg0: i32, %arg1: memref<176x128xf32, #tpu.memory_space<vmem>>, %arg2: memref<4608x176xbf16, #tpu.memory_space<vmem>>, %arg3: memref<8x4608xbf16, #tpu.memory_space<vmem>>, %arg4: memref<8x1xf32, #tpu.memory_space<vmem>>, %arg5: memref<8x128xf32, #tpu.memory_space<vmem>>, %arg6: memref<4608x128xbf16, #tpu.memory_space<vmem>>) attributes {dimension_semantics = [#tpu.dimension_semantics<parallel>], iteration_bounds = array<i64: 1>, scalar_prefetch = 0 : i64, scratch_operands = 1 : i64, tpu.core_type = #tpu.core_type<tc>, window_params = [{transform_indices = @transform_0, window_bounds = array<i64: 176, 128>}, {pipeline_mode = #tpu.pipeline_mode<synchronous>, transform_indices = @transform_1, window_bounds = array<i64: 4608, 176>}, {pipeline_mode = #tpu.pipeline_mode<synchronous>, transform_indices = @transform_2, window_bounds = array<i64: 8, 4608>}, {pipeline_mode = #tpu.pipeline_mode<synchronous>, transform_indices = @transform_3, window_bounds = array<i64: 8, 1>}, {transform_indices = @transform_4, window_bounds = array<i64: 8, 128>}]} {
    %c0 = arith.constant 0 : index
    %c0_0 = arith.constant 0 : index
    %0 = vector.load %arg1[%c0, %c0_0] : memref<176x128xf32, #tpu.memory_space<vmem>>, vector<176x128xf32>
    %1 = arith.truncf %0 : vector<176x128xf32> to vector<176x128xbf16>
    %c0_1 = arith.constant 0 : index
    %c0_2 = arith.constant 0 : index
    %2 = vector.load %arg2[%c0_1, %c0_2] : memref<4608x176xbf16, #tpu.memory_space<vmem>>, vector<4608x176xbf16>
    %cst = arith.constant dense<0.000000e+00> : vector<4608x128xf32>
    %3 = tpu.matmul %2, %1, %cst {dimension_numbers = #tpu.dot_dimension_numbers<[1], [0], [0], [1], [0, 0, 1, 1], [], []>} : vector<4608x176xbf16>, vector<176x128xbf16>, vector<4608x128xf32> -> vector<4608x128xf32>
    %cst_3 = arith.constant 0.000000e+00 : f32
    %4 = vector.broadcast %cst_3 : f32 to vector<4608x128xf32>
    %5 = arith.maximumf %3, %4 : vector<4608x128xf32>
    %6 = arith.truncf %5 : vector<4608x128xf32> to vector<4608x128xbf16>
    %c0_4 = arith.constant 0 : index
    %c0_5 = arith.constant 0 : index
    %7 = vector.load %arg6[%c0_4, %c0_5] : memref<4608x128xbf16, #tpu.memory_space<vmem>>, vector<4608x128xbf16>
    tpu.vector_store %arg6[%c0_4, %c0_5], %6 {strides = array<i32>} : memref<4608x128xbf16, #tpu.memory_space<vmem>>, vector<4608x128xbf16>,
    %c0_6 = arith.constant 0 : index
    %c0_7 = arith.constant 0 : index
    %8 = vector.load %arg3[%c0_6, %c0_7] : memref<8x4608xbf16, #tpu.memory_space<vmem>>, vector<8x4608xbf16>
    %c0_8 = arith.constant 0 : index
    %c0_9 = arith.constant 0 : index
    %9 = vector.load %arg6[%c0_8, %c0_9] : memref<4608x128xbf16, #tpu.memory_space<vmem>>, vector<4608x128xbf16>
    %cst_10 = arith.constant dense<0.000000e+00> : vector<8x128xf32>
    %10 = tpu.matmul %8, %9, %cst_10 {dimension_numbers = #tpu.dot_dimension_numbers<[1], [0], [0], [1], [0, 0, 1, 1], [], []>} : vector<8x4608xbf16>, vector<4608x128xbf16>, vector<8x128xf32> -> vector<8x128xf32>
    %c0_11 = arith.constant 0 : index
    %c0_12 = arith.constant 0 : index
    %11 = vector.load %arg4[%c0_11, %c0_12] : memref<8x1xf32, #tpu.memory_space<vmem>>, vector<8x1xf32>
    %12 = vector.broadcast %11 : vector<8x1xf32> to vector<8x128xf32>
    %13 = arith.addf %10, %12 : vector<8x128xf32>
    %c0_13 = arith.constant 0 : index
    %c0_14 = arith.constant 0 : index
    %14 = vector.load %arg5[%c0_13, %c0_14] : memref<8x128xf32, #tpu.memory_space<vmem>>, vector<8x128xf32>
    tpu.vector_store %arg5[%c0_13, %c0_14], %13 {strides = array<i32>} : memref<8x128xf32, #tpu.memory_space<vmem>>, vector<8x128xf32>,
    return
  }
  func.func @transform_0(%arg0: i32) -> (i32, i32) {
    %c0_i32 = arith.constant 0 : i32
    %c0_i32_0 = arith.constant 0 : i32
    return %c0_i32, %arg0 : i32, i32
  }
  func.func @transform_1(%arg0: i32) -> (i32, i32) {
    %c0_i32 = arith.constant 0 : i32
    %c0_i32_0 = arith.constant 0 : i32
    %c0_i32_1 = arith.constant 0 : i32
    return %c0_i32, %c0_i32_0 : i32, i32
  }
  func.func @transform_2(%arg0: i32) -> (i32, i32) {
    %c0_i32 = arith.constant 0 : i32
    %c0_i32_0 = arith.constant 0 : i32
    %c0_i32_1 = arith.constant 0 : i32
    return %c0_i32, %c0_i32_0 : i32, i32
  }
  func.func @transform_3(%arg0: i32) -> (i32, i32) {
    %c0_i32 = arith.constant 0 : i32
    %c0_i32_0 = arith.constant 0 : i32
    %c0_i32_1 = arith.constant 0 : i32
    return %c0_i32, %c0_i32_0 : i32, i32
  }
  func.func @transform_4(%arg0: i32) -> (i32, i32) {
    %c0_i32 = arith.constant 0 : i32
    %c0_i32_0 = arith.constant 0 : i32
    return %c0_i32, %arg0 : i32, i32
  }
}

</mosaic_0001>

<llo_original>
// kernel: tpu_custom_call.1
$region0: #{tpu_custom_call.1}
  #allocation0 [shape = 'u32[]', space=smem, size = 0x4, offset = 0x4, fixed_abs, tag = 'smem constant byte address 0x4 - core index']
  #allocation1 [shape = 'u32[144,128]{1,0:T(1,128)}', space=vmem, size = 0x12000, scoped, tag = 'internal scratch']
  #allocation2 [shape = 'bf16[4608,128]{1,0:T(16,128)(2,1)}', space=vmem, size = 0x120000, scoped, tag = 'scratch operand']
  %s0 = inlined_call_operand.vmem [shape: f32[176,128], index: 0, kind: input, shape index: {}]
  %s1 = inlined_call_operand.vmem [shape: bf16[4608,176], index: 1, kind: input, shape index: {}]
  %s2 = inlined_call_operand.vmem [shape: bf16[8,4608], index: 2, kind: input, shape index: {}]
  %s3 = inlined_call_operand.vmem [shape: f32[8,1], index: 3, kind: input, shape index: {}]
  %s4 = inlined_call_operand.hbm [shape: f32[8,128], index: 4, kind: output, shape index: {}]
  %s5 = sld [smem:[#allocation0]]
  $region26: #{tpu_custom_call.1} parent=0
    _
  %s7 = ssub.s32 1, %s5
  %s8 = scalar_select 0, %s7, %s5
  $region1: #{tpu_custom_call.1} parent=0
    #allocation3 [shape = 'u8[4096]{0}', space=vmem, size = 0x1000, scoped, tag = 'output window, operand 0, single buffered']
    #allocation4 [shape = 's32[1]{0}', space=sflag, size = 0x4, scoped, tag = 'scoped memory for tpu_custom_call.1']
    %9 = vsyncpa [#allocation4], 0
    // Predicated region
    $region2: #{tpu_custom_call.1} parent=1 // pred_check
      _
    $region3: #{tpu_custom_call.1} parent=1 // pred_check_branch
      %11 = sbr.rel (0) target = $region5
    $region4: #{tpu_custom_call.1} parent=1 // pred_region
      _
    $region5: #{tpu_custom_call.1} parent=1 // pred_fallthru
      _
    // Predicated region
    $region6: #{tpu_custom_call.1} parent=1 // pred_check
      _
    $region7: #{tpu_custom_call.1} parent=1 // pred_check_branch
      %13 = sbr.rel (0) target = $region9
    $region8: #{tpu_custom_call.1} parent=1 // pred_region
      _
    $region9: #{tpu_custom_call.1} parent=1 // pred_fallthru
      _
    // Predicated region
    $region10: #{tpu_custom_call.1} parent=1 // pred_check
      _
    $region11: #{tpu_custom_call.1} parent=1 // pred_check_branch
      %15 = sbr.rel (0) target = $region13
    $region12: #{tpu_custom_call.1} parent=1 // pred_region
      _
    $region13: #{tpu_custom_call.1} parent=1 // pred_fallthru
      _
    // Predicated region
    $region14: #{tpu_custom_call.1} parent=1 // pred_check
      _
    $region15: #{tpu_custom_call.1} parent=1 // pred_check_branch
      %17 = sbr.rel (0) target = $region17
    $region16: #{tpu_custom_call.1} parent=1 // pred_region
      _
    $region17: #{tpu_custom_call.1} parent=1 // pred_fallthru
      _
    %v19 = vld [vmem:[%s0] sm:$0xff]
    %v20 = vld [vmem:[%s0 + $0x8] sm:$0xff]
    %v21 = vld [vmem:[%s0 + $0x10] sm:$0xff]
    %v22 = vld [vmem:[%s0 + $0x18] sm:$0xff]
    %v23 = vld [vmem:[%s0 + $0x20] sm:$0xff]
    %v24 = vld [vmem:[%s0 + $0x28] sm:$0xff]
    %v25 = vld [vmem:[%s0 + $0x30] sm:$0xff]
    %v26 = vld [vmem:[%s0 + $0x38] sm:$0xff]
    %v27 = vld [vmem:[%s0 + $0x40] sm:$0xff]
    %v28 = vld [vmem:[%s0 + $0x48] sm:$0xff]
    %v29 = vld [vmem:[%s0 + $0x50] sm:$0xff]
    %v30 = vld [vmem:[%s0 + $0x58] sm:$0xff]
    %v31 = vld [vmem:[%s0 + $0x60] sm:$0xff]
    %v32 = vld [vmem:[%s0 + $0x68] sm:$0xff]
    %v33 = vld [vmem:[%s0 + $0x70] sm:$0xff]
    %v34 = vld [vmem:[%s0 + $0x78] sm:$0xff]
    %v35 = vld [vmem:[%s0 + $0x80] sm:$0xff]
    %v36 = vld [vmem:[%s0 + $0x88] sm:$0xff]
    %v37 = vld [vmem:[%s0 + $0x90] sm:$0xff]
    %v38 = vld [vmem:[%s0 + $0x98] sm:$0xff]
    %v39 = vld [vmem:[%s0 + $0xa0] sm:$0xff]
    %v40 = vld [vmem:[%s0 + $0xa8] sm:$0xff]
    %v41 = vpack.c.bf16 %v20, %v19
    %v42 = vpack.c.bf16 %v22, %v21
    %v43 = vpack.c.bf16 %v24, %v23
    %v44 = vpack.c.bf16 %v26, %v25
    %v45 = vpack.c.bf16 %v28, %v27
    %v46 = vpack.c.bf16 %v30, %v29
    %v47 = vpack.c.bf16 %v32, %v31
    %v48 = vpack.c.bf16 %v34, %v33
    %v49 = vpack.c.bf16 %v36, %v35
    %v50 = vpack.c.bf16 %v38, %v37
    %v51 = vpack.c.bf16 %v40, %v39
    %v52 = vld [vmem:[%s1] sm:$0xff]
    %v53 = vld [vmem:[%s1 + $0x8] sm:$0xff]
    %v54 = vld [vmem:[%s1 + $0x10] sm:$0xff]
    %v55 = vld [vmem:[%s1 + $0x18] sm:$0xff]
    %v56 = vld [vmem:[%s1 + $0x20] sm:$0xff]
    %v57 = vld [vmem:[%s1 + $0x28] sm:$0xff]
    %v58 = vld [vmem:[%s1 + $0x30] sm:$0xff]
    %v59 = vld [vmem:[%s1 + $0x38] sm:$0xff]
    %v60 = vld [vmem:[%s1 + $0x40] sm:$0xff]
    %v61 = vld [vmem:[%s1 + $0x48] sm:$0xff]
    %v62 = vld [vmem:[%s1 + $0x50] sm:$0xff]
    %v63 = vld [vmem:[%s1 + $0x58] sm:$0xff]
    %v64 = vld [vmem:[%s1 + $0x60] sm:$0xff]
    %v65 = vld [vmem:[%s1 + $0x68] sm:$0xff]
    %v66 = vld [vmem:[%s1 + $0x70] sm:$0xff]
    %v67 = vld [vmem:[%s1 + $0x78] sm:$0xff]
    %v68 = vld [vmem:[%s1 + $0x80] sm:$0xff]
    %v69 = vld [vmem:[%s1 + $0x88] sm:$0xff]
    %v70 = vld [vmem:[%s1 + $0x90] sm:$0xff]
    %v71 = vld [vmem:[%s1 + $0x98] sm:$0xff]
    %v72 = vld [vmem:[%s1 + $0xa0] sm:$0xff]
    %v73 = vld [vmem:[%s1 + $0xa8] sm:$0xff]
    %v74 = vld [vmem:[%s1 + $0xb0] sm:$0xff]
    %v75 = vld [vmem:[%s1 + $0xb8] sm:$0xff]
    %v76 = vld [vmem:[%s1 + $0xc0] sm:$0xff]
    %v77 = vld [vmem:[%s1 + $0xc8] sm:$0xff]
    %v78 = vld [vmem:[%s1 + $0xd0] sm:$0xff]
    %v79 = vld [vmem:[%s1 + $0xd8] sm:$0xff]
    %v80 = vld [vmem:[%s1 + $0xe0] sm:$0xff]
    %v81 = vld [vmem:[%s1 + $0xe8] sm:$0xff]
    %v82 = vld [vmem:[%s1 + $0xf0] sm:$0xff]
    %v83 = vld [vmem:[%s1 + $0xf8] sm:$0xff]
    %v84 = vld [vmem:[%s1 + $0x100] sm:$0xff]
    %v85 = vld [vmem:[%s1 + $0x108] sm:$0xff]
    %v86 = vld [vmem:[%s1 + $0x110] sm:$0xff]
    %v87 = vld [vmem:[%s1 + $0x118] sm:$0xff]
    %v88 = vld [vmem:[%s1 + $0x120] sm:$0xff]
    %v89 = vld [vmem:[%s1 + $0x128] sm:$0xff]
    %v90 = vld [vmem:[%s1 + $0x130] sm:$0xff]
    %v91 = vld [vmem:[%s1 + $0x138] sm:$0xff]
    %v92 = vld [vmem:[%s1 + $0x140] sm:$0xff]
    %v93 = vld [vmem:[%s1 + $0x148] sm:$0xff]
    %v94 = vld [vmem:[%s1 + $0x150] sm:$0xff]
    %v95 = vld [vmem:[%s1 + $0x158] sm:$0xff]
    %v96 = vld [vmem:[%s1 + $0x160] sm:$0xff]
    %v97 = vld [vmem:[%s1 + $0x168] sm:$0xff]
    %v98 = vld [vmem:[%s1 + $0x170] sm:$0xff]
    %v99 = vld [vmem:[%s1 + $0x178] sm:$0xff]
    %v100 = vld [vmem:[%s1 + $0x180] sm:$0xff]
    %v101 = vld [vmem:[%s1 + $0x188] sm:$0xff]
    %v102 = vld [vmem:[%s1 + $0x190] sm:$0xff]
    %v103 = vld [vmem:[%s1 + $0x198] sm:$0xff]
    %v104 = vld [vmem:[%s1 + $0x1a0] sm:$0xff]
    %v105 = vld [vmem:[%s1 + $0x1a8] sm:$0xff]
    %v106 = vld [vmem:[%s1 + $0x1b0] sm:$0xff]
    %v107 = vld [vmem:[%s1 + $0x1b8] sm:$0xff]
    %v108 = vld [vmem:[%s1 + $0x1c0] sm:$0xff]
    %v109 = vld [vmem:[%s1 + $0x1c8] sm:$0xff]
    %v110 = vld [vmem:[%s1 + $0x1d0] sm:$0xff]
    %v111 = vld [vmem:[%s1 + $0x1d8] sm:$0xff]
    %v112 = vld [vmem:[%s1 + $0x1e0] sm:$0xff]
    %v113 = vld [vmem:[%s1 + $0x1e8] sm:$0xff]
    %v114 = vld [vmem:[%s1 + $0x1f0] sm:$0xff]
    %v115 = vld [vmem:[%s1 + $0x1f8] sm:$0xff]
    %v116 = vld [vmem:[%s1 + $0x200] sm:$0xff]
    %v117 = vld [vmem:[%s1 + $0x208] sm:$0xff]
    %v118 = vld [vmem:[%s1 + $0x210] sm:$0xff]
    %v119 = vld [vmem:[%s1 + $0x218] sm:$0xff]
    %v120 = vld [vmem:[%s1 + $0x220] sm:$0xff]
    %v121 = vld [vmem:[%s1 + $0x228] sm:$0xff]
    %v122 = vld [vmem:[%s1 + $0x230] sm:$0xff]
    %v123 = vld [vmem:[%s1 + $0x238] sm:$0xff]
    %v124 = vld [vmem:[%s1 + $0x240] sm:$0xff]
    %v125 = vld [vmem:[%s1 + $0x248] sm:$0xff]
    %v126 = vld [vmem:[%s1 + $0x250] sm:$0xff]
    %v127 = vld [vmem:[%s1 + $0x258] sm:$0xff]
    %v128 = vld [vmem:[%s1 + $0x260] sm:$0xff]
    %v129 = vld [vmem:[%s1 + $0x268] sm:$0xff]
    %v130 = vld [vmem:[%s1 + $0x270] sm:$0xff]
    %v131 = vld [vmem:[%s1 + $0x278] sm:$0xff]
    %v132 = vld [vmem:[%s1 + $0x280] sm:$0xff]
    %v133 = vld [vmem:[%s1 + $0x288] sm:$0xff]
    %v134 = vld [vmem:[%s1 + $0x290] sm:$0xff]
    %v135 = vld [vmem:[%s1 + $0x298] sm:$0xff]
    %v136 = vld [vmem:[%s1 + $0x2a0] sm:$0xff]
    %v137 = vld [vmem:[%s1 + $0x2a8] sm:$0xff]
    %v138 = vld [vmem:[%s1 + $0x2b0] sm:$0xff]
    %v139 = vld [vmem:[%s1 + $0x2b8] sm:$0xff]
    %v140 = vld [vmem:[%s1 + $0x2c0] sm:$0xff]
    %v141 = vld [vmem:[%s1 + $0x2c8] sm:$0xff]
    %v142 = vld [vmem:[%s1 + $0x2d0] sm:$0xff]
    %v143 = vld [vmem:[%s1 + $0x2d8] sm:$0xff]
    %v144 = vld [vmem:[%s1 + $0x2e0] sm:$0xff]
    %v145 = vld [vmem:[%s1 + $0x2e8] sm:$0xff]
    %v146 = vld [vmem:[%s1 + $0x2f0] sm:$0xff]
    %v147 = vld [vmem:[%s1 + $0x2f8] sm:$0xff]
    %v148 = vld [vmem:[%s1 + $0x300] sm:$0xff]
    %v149 = vld [vmem:[%s1 + $0x308] sm:$0xff]
    %v150 = vld [vmem:[%s1 + $0x310] sm:$0xff]
    %v151 = vld [vmem:[%s1 + $0x318] sm:$0xff]
    %v152 = vld [vmem:[%s1 + $0x320] sm:$0xff]
    %v153 = vld [vmem:[%s1 + $0x328] sm:$0xff]
    %v154 = vld [vmem:[%s1 + $0x330] sm:$0xff]
    %v155 = vld [vmem:[%s1 + $0x338] sm:$0xff]
    %v156 = vld [vmem:[%s1 + $0x340] sm:$0xff]
    %v157 = vld [vmem:[%s1 + $0x348] sm:$0xff]
    %v158 = vld [vmem:[%s1 + $0x350] sm:$0xff]
    %v159 = vld [vmem:[%s1 + $0x358] sm:$0xff]
    %v160 = vld [vmem:[%s1 + $0x360] sm:$0xff]
    %v161 = vld [vmem:[%s1 + $0x368] sm:$0xff]
    %v162 = vld [vmem:[%s1 + $0x370] sm:$0xff]
    %v163 = vld [vmem:[%s1 + $0x378] sm:$0xff]
    %v164 = vld [vmem:[%s1 + $0x380] sm:$0xff]
    %v165 = vld [vmem:[%s1 + $0x388] sm:$0xff]
    %v166 = vld [vmem:[%s1 + $0x390] sm:$0xff]
    %v167 = vld [vmem:[%s1 + $0x398] sm:$0xff]
    %v168 = vld [vmem:[%s1 + $0x3a0] sm:$0xff]
    %v169 = vld [vmem:[%s1 + $0x3a8] sm:$0xff]
    %v170 = vld [vmem:[%s1 + $0x3b0] sm:$0xff]
    %v171 = vld [vmem:[%s1 + $0x3b8] sm:$0xff]
    %v172 = vld [vmem:[%s1 + $0x3c0] sm:$0xff]
    %v173 = vld [vmem:[%s1 + $0x3c8] sm:$0xff]
    %v174 = vld [vmem:[%s1 + $0x3d0] sm:$0xff]
    %v175 = vld [vmem:[%s1 + $0x3d8] sm:$0xff]
    %v176 = vld [vmem:[%s1 + $0x3e0] sm:$0xff]
    %v177 = vld [vmem:[%s1 + $0x3e8] sm:$0xff]
    %v178 = vld [vmem:[%s1 + $0x3f0] sm:$0xff]
    %v179 = vld [vmem:[%s1 + $0x3f8] sm:$0xff]
    %v180 = vld [vmem:[%s1 + $0x400] sm:$0xff]
    %v181 = vld [vmem:[%s1 + $0x408] sm:$0xff]
    %v182 = vld [vmem:[%s1 + $0x410] sm:$0xff]
    %v183 = vld [vmem:[%s1 + $0x418] sm:$0xff]
    %v184 = vld [vmem:[%s1 + $0x420] sm:$0xff]
    %v185 = vld [vmem:[%s1 + $0x428] sm:$0xff]
    %v186 = vld [vmem:[%s1 + $0x430] sm:$0xff]
    %v187 = vld [vmem:[%s1 + $0x438] sm:$0xff]
    %v188 = vld [vmem:[%s1 + $0x440] sm:$0xff]
    %v189 = vld [vmem:[%s1 + $0x448] sm:$0xff]
    %v190 = vld [vmem:[%s1 + $0x450] sm:$0xff]
    %v191 = vld [vmem:[%s1 + $0x458] sm:$0xff]
    %v192 = vld [vmem:[%s1 + $0x460] sm:$0xff]
    %v193 = vld [vmem:[%s1 + $0x468] sm:$0xff]
    %v194 = vld [vmem:[%s1 + $0x470] sm:$0xff]
    %v195 = vld [vmem:[%s1 + $0x478] sm:$0xff]
    %v196 = vld [vmem:[%s1 + $0x480] sm:$0xff]
    %v197 = vld [vmem:[%s1 + $0x488] sm:$0xff]
    %v198 = vld [vmem:[%s1 + $0x490] sm:$0xff]
    %v199 = vld [vmem:[%s1 + $0x498] sm:$0xff]
    %v200 = vld [vmem:[%s1 + $0x4a0] sm:$0xff]
    %v201 = vld [vmem:[%s1 + $0x4a8] sm:$0xff]
    %v202 = vld [vmem:[%s1 + $0x4b0] sm:$0xff]
    %v203 = vld [vmem:[%s1 + $0x4b8] sm:$0xff]
    %v204 = vld [vmem:[%s1 + $0x4c0] sm:$0xff]
    %v205 = vld [vmem:[%s1 + $0x4c8] sm:$0xff]
    %v206 = vld [vmem:[%s1 + $0x4d0] sm:$0xff]
    %v207 = vld [vmem:[%s1 + $0x4d8] sm:$0xff]
    %v208 = vld [vmem:[%s1 + $0x4e0] sm:$0xff]
    %v209 = vld [vmem:[%s1 + $0x4e8] sm:$0xff]
    %v210 = vld [vmem:[%s1 + $0x4f0] sm:$0xff]
    %v211 = vld [vmem:[%s1 + $0x4f8] sm:$0xff]
    %v212 = vld [vmem:[%s1 + $0x500] sm:$0xff]
    %v213 = vld [vmem:[%s1 + $0x508] sm:$0xff]
    %v214 = vld [vmem:[%s1 + $0x510] sm:$0xff]
    %v215 = vld [vmem:[%s1 + $0x518] sm:$0xff]
    %v216 = vld [vmem:[%s1 + $0x520] sm:$0xff]
    %v217 = vld [vmem:[%s1 + $0x528] sm:$0xff]
    %v218 = vld [vmem:[%s1 + $0x530] sm:$0xff]
    %v219 = vld [vmem:[%s1 + $0x538] sm:$0xff]
    %v220 = vld [vmem:[%s1 + $0x540] sm:$0xff]
    %v221 = vld [vmem:[%s1 + $0x548] sm:$0xff]
    %v222 = vld [vmem:[%s1 + $0x550] sm:$0xff]
    %v223 = vld [vmem:[%s1 + $0x558] sm:$0xff]
    %v224 = vld [vmem:[%s1 + $0x560] sm:$0xff]
    %v225 = vld [vmem:[%s1 + $0x568] sm:$0xff]
    %v226 = vld [vmem:[%s1 + $0x570] sm:$0xff]
    %v227 = vld [vmem:[%s1 + $0x578] sm:$0xff]
    %v228 = vld [vmem:[%s1 + $0x580] sm:$0xff]
    %v229 = vld [vmem:[%s1 + $0x588] sm:$0xff]
    %v230 = vld [vmem:[%s1 + $0x590] sm:$0xff]
    %v231 = vld [vmem:[%s1 + $0x598] sm:$0xff]
    %v232 = vld [vmem:[%s1 + $0x5a0] sm:$0xff]
    %v233 = vld [vmem:[%s1 + $0x5a8] sm:$0xff]
    %v234 = vld [vmem:[%s1 + $0x5b0] sm:$0xff]
    %v235 = vld [vmem:[%s1 + $0x5b8] sm:$0xff]
    %v236 = vld [vmem:[%s1 + $0x5c0] sm:$0xff]
    %v237 = vld [vmem:[%s1 + $0x5c8] sm:$0xff]
    %v238 = vld [vmem:[%s1 + $0x5d0] sm:$0xff]
    %v239 = vld [vmem:[%s1 + $0x5d8] sm:$0xff]
    %v240 = vld [vmem:[%s1 + $0x5e0] sm:$0xff]
    %v241 = vld [vmem:[%s1 + $0x5e8] sm:$0xff]
    %v242 = vld [vmem:[%s1 + $0x5f0] sm:$0xff]
    %v243 = vld [vmem:[%s1 + $0x5f8] sm:$0xff]
    %v244 = vld [vmem:[%s1 + $0x600] sm:$0xff]
    %v245 = vld [vmem:[%s1 + $0x608] sm:$0xff]
    %v246 = vld [vmem:[%s1 + $0x610] sm:$0xff]
    %v247 = vld [vmem:[%s1 + $0x618] sm:$0xff]
    %v248 = vld [vmem:[%s1 + $0x620] sm:$0xff]
    %v249 = vld [vmem:[%s1 + $0x628] sm:$0xff]
    %v250 = vld [vmem:[%s1 + $0x630] sm:$0xff]
    %v251 = vld [vmem:[%s1 + $0x638] sm:$0xff]
    %v252 = vld [vmem:[%s1 + $0x640] sm:$0xff]
    %v253 = vld [vmem:[%s1 + $0x648] sm:$0xff]
    %v254 = vld [vmem:[%s1 + $0x650] sm:$0xff]
    %v255 = vld [vmem:[%s1 + $0x658] sm:$0xff]
    %v256 = vld [vmem:[%s1 + $0x660] sm:$0xff]
    %v257 = vld [vmem:[%s1 + $0x668] sm:$0xff]
    %v258 = vld [vmem:[%s1 + $0x670] sm:$0xff]
    %v259 = vld [vmem:[%s1 + $0x678] sm:$0xff]
    %v260 = vld [vmem:[%s1 + $0x680] sm:$0xff]
    %v261 = vld [vmem:[%s1 + $0x688] sm:$0xff]
    %v262 = vld [vmem:[%s1 + $0x690] sm:$0xff]
    %v263 = vld [vmem:[%s1 + $0x698] sm:$0xff]
    %v264 = vld [vmem:[%s1 + $0x6a0] sm:$0xff]
    %v265 = vld [vmem:[%s1 + $0x6a8] sm:$0xff]
    %v266 = vld [vmem:[%s1 + $0x6b0] sm:$0xff]
    %v267 = vld [vmem:[%s1 + $0x6b8] sm:$0xff]
    %v268 = vld [vmem:[%s1 + $0x6c0] sm:$0xff]
    %v269 = vld [vmem:[%s1 + $0x6c8] sm:$0xff]
    %v270 = vld [vmem:[%s1 + $0x6d0] sm:$0xff]
    %v271 = vld [vmem:[%s1 + $0x6d8] sm:$0xff]
    %v272 = vld [vmem:[%s1 + $0x6e0] sm:$0xff]
    %v273 = vld [vmem:[%s1 + $0x6e8] sm:$0xff]
    %v274 = vld [vmem:[%s1 + $0x6f0] sm:$0xff]
    %v275 = vld [vmem:[%s1 + $0x6f8] sm:$0xff]
    %v276 = vld [vmem:[%s1 + $0x700] sm:$0xff]
    %v277 = vld [vmem:[%s1 + $0x708] sm:$0xff]
    %v278 = vld [vmem:[%s1 + $0x710] sm:$0xff]
    %v279 = vld [vmem:[%s1 + $0x718] sm:$0xff]
    %v280 = vld [vmem:[%s1 + $0x720] sm:$0xff]
    %v281 = vld [vmem:[%s1 + $0x728] sm:$0xff]
    %v282 = vld [vmem:[%s1 + $0x730] sm:$0xff]
    %v283 = vld [vmem:[%s1 + $0x738] sm:$0xff]
    %v284 = vld [vmem:[%s1 + $0x740] sm:$0xff]
    %v285 = vld [vmem:[%s1 + $0x748] sm:$0xff]
    %v286 = vld [vmem:[%s1 + $0x750] sm:$0xff]
    %v287 = vld [vmem:[%s1 + $0x758] sm:$0xff]
    %v288 = vld [vmem:[%s1 + $0x760] sm:$0xff]
    %v289 = vld [vmem:[%s1 + $0x768] sm:$0xff]
    %v290 = vld [vmem:[%s1 + $0x770] sm:$0xff]
    %v291 = vld [vmem:[%s1 + $0x778] sm:$0xff]
    %v292 = vld [vmem:[%s1 + $0x780] sm:$0xff]
    %v293 = vld [vmem:[%s1 + $0x788] sm:$0xff]
    %v294 = vld [vmem:[%s1 + $0x790] sm:$0xff]
    %v295 = vld [vmem:[%s1 + $0x798] sm:$0xff]
    %v296 = vld [vmem:[%s1 + $0x7a0] sm:$0xff]
    %v297 = vld [vmem:[%s1 + $0x7a8] sm:$0xff]
    %v298 = vld [vmem:[%s1 + $0x7b0] sm:$0xff]
    %v299 = vld [vmem:[%s1 + $0x7b8] sm:$0xff]
    %v300 = vld [vmem:[%s1 + $0x7c0] sm:$0xff]
    %v301 = vld [vmem:[%s1 + $0x7c8] sm:$0xff]
    %v302 = vld [vmem:[%s1 + $0x7d0] sm:$0xff]
    %v303 = vld [vmem:[%s1 + $0x7d8] sm:$0xff]
    %v304 = vld [vmem:[%s1 + $0x7e0] sm:$0xff]
    %v305 = vld [vmem:[%s1 + $0x7e8] sm:$0xff]
    %v306 = vld [vmem:[%s1 + $0x7f0] sm:$0xff]
    %v307 = vld [vmem:[%s1 + $0x7f8] sm:$0xff]
    %v308 = vld [vmem:[%s1 + $0x800] sm:$0xff]
    %v309 = vld [vmem:[%s1 + $0x808] sm:$0xff]
    %v310 = vld [vmem:[%s1 + $0x810] sm:$0xff]
    %v311 = vld [vmem:[%s1 + $0x818] sm:$0xff]
    %v312 = vld [vmem:[%s1 + $0x820] sm:$0xff]
    %v313 = vld [vmem:[%s1 + $0x828] sm:$0xff]
    %v314 = vld [vmem:[%s1 + $0x830] sm:$0xff]
    %v315 = vld [vmem:[%s1 + $0x838] sm:$0xff]
    %v316 = vld [vmem:[%s1 + $0x840] sm:$0xff]
    %v317 = vld [vmem:[%s1 + $0x848] sm:$0xff]
    %v318 = vld [vmem:[%s1 + $0x850] sm:$0xff]
    %v319 = vld [vmem:[%s1 + $0x858] sm:$0xff]
    %v320 = vld [vmem:[%s1 + $0x860] sm:$0xff]
    %v321 = vld [vmem:[%s1 + $0x868] sm:$0xff]
    %v322 = vld [vmem:[%s1 + $0x870] sm:$0xff]
    %v323 = vld [vmem:[%s1 + $0x878] sm:$0xff]
    %v324 = vld [vmem:[%s1 + $0x880] sm:$0xff]
    %v325 = vld [vmem:[%s1 + $0x888] sm:$0xff]
    %v326 = vld [vmem:[%s1 + $0x890] sm:$0xff]
    %v327 = vld [vmem:[%s1 + $0x898] sm:$0xff]
    %v328 = vld [vmem:[%s1 + $0x8a0] sm:$0xff]
    %v329 = vld [vmem:[%s1 + $0x8a8] sm:$0xff]
    %v330 = vld [vmem:[%s1 + $0x8b0] sm:$0xff]
    %v331 = vld [vmem:[%s1 + $0x8b8] sm:$0xff]
    %v332 = vld [vmem:[%s1 + $0x8c0] sm:$0xff]
    %v333 = vld [vmem:[%s1 + $0x8c8] sm:$0xff]
    %v334 = vld [vmem:[%s1 + $0x8d0] sm:$0xff]
    %v335 = vld [vmem:[%s1 + $0x8d8] sm:$0xff]
    %v336 = vld [vmem:[%s1 + $0x8e0] sm:$0xff]
    %v337 = vld [vmem:[%s1 + $0x8e8] sm:$0xff]
    %v338 = vld [vmem:[%s1 + $0x8f0] sm:$0xff]
    %v339 = vld [vmem:[%s1 + $0x8f8] sm:$0xff]
    %v340 = vld [vmem:[%s1 + $0x900] sm:$0xff]
    %v341 = vld [vmem:[%s1 + $0x908] sm:$0xff]
    %v342 = vld [vmem:[%s1 + $0x910] sm:$0xff]
    %v343 = vld [vmem:[%s1 + $0x918] sm:$0xff]
    %v344 = vld [vmem:[%s1 + $0x920] sm:$0xff]
    %v345 = vld [vmem:[%s1 + $0x928] sm:$0xff]
    %v346 = vld [vmem:[%s1 + $0x930] sm:$0xff]
    %v347 = vld [vmem:[%s1 + $0x938] sm:$0xff]
    %v348 = vld [vmem:[%s1 + $0x940] sm:$0xff]
    %v349 = vld [vmem:[%s1 + $0x948] sm:$0xff]
    %v350 = vld [vmem:[%s1 + $0x950] sm:$0xff]
    %v351 = vld [vmem:[%s1 + $0x958] sm:$0xff]
    %v352 = vld [vmem:[%s1 + $0x960] sm:$0xff]
    %v353 = vld [vmem:[%s1 + $0x968] sm:$0xff]
    %v354 = vld [vmem:[%s1 + $0x970] sm:$0xff]
    %v355 = vld [vmem:[%s1 + $0x978] sm:$0xff]
    %v356 = vld [vmem:[%s1 + $0x980] sm:$0xff]
    %v357 = vld [vmem:[%s1 + $0x988] sm:$0xff]
    %v358 = vld [vmem:[%s1 + $0x990] sm:$0xff]
    %v359 = vld [vmem:[%s1 + $0x998] sm:$0xff]
    %v360 = vld [vmem:[%s1 + $0x9a0] sm:$0xff]
    %v361 = vld [vmem:[%s1 + $0x9a8] sm:$0xff]
    %v362 = vld [vmem:[%s1 + $0x9b0] sm:$0xff]
    %v363 = vld [vmem:[%s1 + $0x9b8] sm:$0xff]
    %v364 = vld [vmem:[%s1 + $0x9c0] sm:$0xff]
    %v365 = vld [vmem:[%s1 + $0x9c8] sm:$0xff]
    %v366 = vld [vmem:[%s1 + $0x9d0] sm:$0xff]
    %v367 = vld [vmem:[%s1 + $0x9d8] sm:$0xff]
    %v368 = vld [vmem:[%s1 + $0x9e0] sm:$0xff]
    %v369 = vld [vmem:[%s1 + $0x9e8] sm:$0xff]
    %v370 = vld [vmem:[%s1 + $0x9f0] sm:$0xff]
    %v371 = vld [vmem:[%s1 + $0x9f8] sm:$0xff]
    %v372 = vld [vmem:[%s1 + $0xa00] sm:$0xff]
    %v373 = vld [vmem:[%s1 + $0xa08] sm:$0xff]
    %v374 = vld [vmem:[%s1 + $0xa10] sm:$0xff]
    %v375 = vld [vmem:[%s1 + $0xa18] sm:$0xff]
    %v376 = vld [vmem:[%s1 + $0xa20] sm:$0xff]
    %v377 = vld [vmem:[%s1 + $0xa28] sm:$0xff]
    %v378 = vld [vmem:[%s1 + $0xa30] sm:$0xff]
    %v379 = vld [vmem:[%s1 + $0xa38] sm:$0xff]
    %v380 = vld [vmem:[%s1 + $0xa40] sm:$0xff]
    %v381 = vld [vmem:[%s1 + $0xa48] sm:$0xff]
    %v382 = vld [vmem:[%s1 + $0xa50] sm:$0xff]
    %v383 = vld [vmem:[%s1 + $0xa58] sm:$0xff]
    %v384 = vld [vmem:[%s1 + $0xa60] sm:$0xff]
    %v385 = vld [vmem:[%s1 + $0xa68] sm:$0xff]
    %v386 = vld [vmem:[%s1 + $0xa70] sm:$0xff]
    %v387 = vld [vmem:[%s1 + $0xa78] sm:$0xff]
    %v388 = vld [vmem:[%s1 + $0xa80] sm:$0xff]
    %v389 = vld [vmem:[%s1 + $0xa88] sm:$0xff]
    %v390 = vld [vmem:[%s1 + $0xa90] sm:$0xff]
    %v391 = vld [vmem:[%s1 + $0xa98] sm:$0xff]
    %v392 = vld [vmem:[%s1 + $0xaa0] sm:$0xff]
    %v393 = vld [vmem:[%s1 + $0xaa8] sm:$0xff]
    %v394 = vld [vmem:[%s1 + $0xab0] sm:$0xff]
    %v395 = vld [vmem:[%s1 + $0xab8] sm:$0xff]
    %v396 = vld [vmem:[%s1 + $0xac0] sm:$0xff]
    %v397 = vld [vmem:[%s1 + $0xac8] sm:$0xff]
    %v398 = vld [vmem:[%s1 + $0xad0] sm:$0xff]
    %v399 = vld [vmem:[%s1 + $0xad8] sm:$0xff]
    %v400 = vld [vmem:[%s1 + $0xae0] sm:$0xff]
    %v401 = vld [vmem:[%s1 + $0xae8] sm:$0xff]
    %v402 = vld [vmem:[%s1 + $0xaf0] sm:$0xff]
    %v403 = vld [vmem:[%s1 + $0xaf8] sm:$0xff]
    %v404 = vld [vmem:[%s1 + $0xb00] sm:$0xff]
    %v405 = vld [vmem:[%s1 + $0xb08] sm:$0xff]
    %v406 = vld [vmem:[%s1 + $0xb10] sm:$0xff]
    %v407 = vld [vmem:[%s1 + $0xb18] sm:$0xff]
    %v408 = vld [vmem:[%s1 + $0xb20] sm:$0xff]
    %v409 = vld [vmem:[%s1 + $0xb28] sm:$0xff]
    %v410 = vld [vmem:[%s1 + $0xb30] sm:$0xff]
    %v411 = vld [vmem:[%s1 + $0xb38] sm:$0xff]
    %v412 = vld [vmem:[%s1 + $0xb40] sm:$0xff]
    %v413 = vld [vmem:[%s1 + $0xb48] sm:$0xff]
    %v414 = vld [vmem:[%s1 + $0xb50] sm:$0xff]
    %v415 = vld [vmem:[%s1 + $0xb58] sm:$0xff]
    %v416 = vld [vmem:[%s1 + $0xb60] sm:$0xff]
    %v417 = vld [vmem:[%s1 + $0xb68] sm:$0xff]
    %v418 = vld [vmem:[%s1 + $0xb70] sm:$0xff]
    %v419 = vld [vmem:[%s1 + $0xb78] sm:$0xff]
    %v420 = vld [vmem:[%s1 + $0xb80] sm:$0xff]
    %v421 = vld [vmem:[%s1 + $0xb88] sm:$0xff]
    %v422 = vld [vmem:[%s1 + $0xb90] sm:$0xff]
    %v423 = vld [vmem:[%s1 + $0xb98] sm:$0xff]
    %v424 = vld [vmem:[%s1 + $0xba0] sm:$0xff]
    %v425 = vld [vmem:[%s1 + $0xba8] sm:$0xff]
    %v426 = vld [vmem:[%s1 + $0xbb0] sm:$0xff]
    %v427 = vld [vmem:[%s1 + $0xbb8] sm:$0xff]
    %v428 = vld [vmem:[%s1 + $0xbc0] sm:$0xff]
    %v429 = vld [vmem:[%s1 + $0xbc8] sm:$0xff]
    %v430 = vld [vmem:[%s1 + $0xbd0] sm:$0xff]
    %v431 = vld [vmem:[%s1 + $0xbd8] sm:$0xff]
    %v432 = vld [vmem:[%s1 + $0xbe0] sm:$0xff]
    %v433 = vld [vmem:[%s1 + $0xbe8] sm:$0xff]
    %v434 = vld [vmem:[%s1 + $0xbf0] sm:$0xff]
    %v435 = vld [vmem:[%s1 + $0xbf8] sm:$0xff]
    %v436 = vld [vmem:[%s1 + $0xc00] sm:$0xff]
    %v437 = vld [vmem:[%s1 + $0xc08] sm:$0xff]
    %v438 = vld [vmem:[%s1 + $0xc10] sm:$0xff]
    %v439 = vld [vmem:[%s1 + $0xc18] sm:$0xff]
    %v440 = vld [vmem:[%s1 + $0xc20] sm:$0xff]
    %v441 = vld [vmem:[%s1 + $0xc28] sm:$0xff]
    %v442 = vld [vmem:[%s1 + $0xc30] sm:$0xff]
    %v443 = vld [vmem:[%s1 + $0xc38] sm:$0xff]
    %v444 = vld [vmem:[%s1 + $0xc40] sm:$0xff]
    %v445 = vld [vmem:[%s1 + $0xc48] sm:$0xff]
    %v446 = vld [vmem:[%s1 + $0xc50] sm:$0xff]
    %v447 = vld [vmem:[%s1 + $0xc58] sm:$0xff]
    %v448 = vld [vmem:[%s1 + $0xc60] sm:$0xff]
    %v449 = vld [vmem:[%s1 + $0xc68] sm:$0xff]
    %v450 = vld [vmem:[%s1 + $0xc70] sm:$0xff]
    %v451 = vld [vmem:[%s1 + $0xc78] sm:$0xff]
    %v452 = vld [vmem:[%s1 + $0xc80] sm:$0xff]
    %v453 = vld [vmem:[%s1 + $0xc88] sm:$0xff]
    %v454 = vld [vmem:[%s1 + $0xc90] sm:$0xff]
    %v455 = vld [vmem:[%s1 + $0xc98] sm:$0xff]
    %v456 = vld [vmem:[%s1 + $0xca0] sm:$0xff]
    %v457 = vld [vmem:[%s1 + $0xca8] sm:$0xff]
    %v458 = vld [vmem:[%s1 + $0xcb0] sm:$0xff]
    %v459 = vld [vmem:[%s1 + $0xcb8] sm:$0xff]
    %v460 = vld [vmem:[%s1 + $0xcc0] sm:$0xff]
    %v461 = vld [vmem:[%s1 + $0xcc8] sm:$0xff]
    %v462 = vld [vmem:[%s1 + $0xcd0] sm:$0xff]
    %v463 = vld [vmem:[%s1 + $0xcd8] sm:$0xff]
    %v464 = vld [vmem:[%s1 + $0xce0] sm:$0xff]
    %v465 = vld [vmem:[%s1 + $0xce8] sm:$0xff]
    %v466 = vld [vmem:[%s1 + $0xcf0] sm:$0xff]
    %v467 = vld [vmem:[%s1 + $0xcf8] sm:$0xff]
    %v468 = vld [vmem:[%s1 + $0xd00] sm:$0xff]
    %v469 = vld [vmem:[%s1 + $0xd08] sm:$0xff]
    %v470 = vld [vmem:[%s1 + $0xd10] sm:$0xff]
    %v471 = vld [vmem:[%s1 + $0xd18] sm:$0xff]
    %v472 = vld [vmem:[%s1 + $0xd20] sm:$0xff]
    %v473 = vld [vmem:[%s1 + $0xd28] sm:$0xff]
    %v474 = vld [vmem:[%s1 + $0xd30] sm:$0xff]
    %v475 = vld [vmem:[%s1 + $0xd38] sm:$0xff]
    %v476 = vld [vmem:[%s1 + $0xd40] sm:$0xff]
    %v477 = vld [vmem:[%s1 + $0xd48] sm:$0xff]
    %v478 = vld [vmem:[%s1 + $0xd50] sm:$0xff]
    %v479 = vld [vmem:[%s1 + $0xd58] sm:$0xff]
    %v480 = vld [vmem:[%s1 + $0xd60] sm:$0xff]
    %v481 = vld [vmem:[%s1 + $0xd68] sm:$0xff]
    %v482 = vld [vmem:[%s1 + $0xd70] sm:$0xff]
    %v483 = vld [vmem:[%s1 + $0xd78] sm:$0xff]
    %v484 = vld [vmem:[%s1 + $0xd80] sm:$0xff]
    %v485 = vld [vmem:[%s1 + $0xd88] sm:$0xff]
    %v486 = vld [vmem:[%s1 + $0xd90] sm:$0xff]
    %v487 = vld [vmem:[%s1 + $0xd98] sm:$0xff]
    %v488 = vld [vmem:[%s1 + $0xda0] sm:$0xff]
    %v489 = vld [vmem:[%s1 + $0xda8] sm:$0xff]
    %v490 = vld [vmem:[%s1 + $0xdb0] sm:$0xff]
    %v491 = vld [vmem:[%s1 + $0xdb8] sm:$0xff]
    %v492 = vld [vmem:[%s1 + $0xdc0] sm:$0xff]
    %v493 = vld [vmem:[%s1 + $0xdc8] sm:$0xff]
    %v494 = vld [vmem:[%s1 + $0xdd0] sm:$0xff]
    %v495 = vld [vmem:[%s1 + $0xdd8] sm:$0xff]
    %v496 = vld [vmem:[%s1 + $0xde0] sm:$0xff]
    %v497 = vld [vmem:[%s1 + $0xde8] sm:$0xff]
    %v498 = vld [vmem:[%s1 + $0xdf0] sm:$0xff]
    %v499 = vld [vmem:[%s1 + $0xdf8] sm:$0xff]
    %v500 = vld [vmem:[%s1 + $0xe00] sm:$0xff]
    %v501 = vld [vmem:[%s1 + $0xe08] sm:$0xff]
    %v502 = vld [vmem:[%s1 + $0xe10] sm:$0xff]
    %v503 = vld [vmem:[%s1 + $0xe18] sm:$0xff]
    %v504 = vld [vmem:[%s1 + $0xe20] sm:$0xff]
    %v505 = vld [vmem:[%s1 + $0xe28] sm:$0xff]
    %v506 = vld [vmem:[%s1 + $0xe30] sm:$0xff]
    %v507 = vld [vmem:[%s1 + $0xe38] sm:$0xff]
    %v508 = vld [vmem:[%s1 + $0xe40] sm:$0xff]
    %v509 = vld [vmem:[%s1 + $0xe48] sm:$0xff]
    %v510 = vld [vmem:[%s1 + $0xe50] sm:$0xff]
    %v511 = vld [vmem:[%s1 + $0xe58] sm:$0xff]
    %v512 = vld [vmem:[%s1 + $0xe60] sm:$0xff]
    %v513 = vld [vmem:[%s1 + $0xe68] sm:$0xff]
    %v514 = vld [vmem:[%s1 + $0xe70] sm:$0xff]
    %v515 = vld [vmem:[%s1 + $0xe78] sm:$0xff]
    %v516 = vld [vmem:[%s1 + $0xe80] sm:$0xff]
    %v517 = vld [vmem:[%s1 + $0xe88] sm:$0xff]
    %v518 = vld [vmem:[%s1 + $0xe90] sm:$0xff]
    %v519 = vld [vmem:[%s1 + $0xe98] sm:$0xff]
    %v520 = vld [vmem:[%s1 + $0xea0] sm:$0xff]
    %v521 = vld [vmem:[%s1 + $0xea8] sm:$0xff]
    %v522 = vld [vmem:[%s1 + $0xeb0] sm:$0xff]
    %v523 = vld [vmem:[%s1 + $0xeb8] sm:$0xff]
    %v524 = vld [vmem:[%s1 + $0xec0] sm:$0xff]
    %v525 = vld [vmem:[%s1 + $0xec8] sm:$0xff]
    %v526 = vld [vmem:[%s1 + $0xed0] sm:$0xff]
    %v527 = vld [vmem:[%s1 + $0xed8] sm:$0xff]
    %v528 = vld [vmem:[%s1 + $0xee0] sm:$0xff]
    %v529 = vld [vmem:[%s1 + $0xee8] sm:$0xff]
    %v530 = vld [vmem:[%s1 + $0xef0] sm:$0xff]
    %v531 = vld [vmem:[%s1 + $0xef8] sm:$0xff]
    %v532 = vld [vmem:[%s1 + $0xf00] sm:$0xff]
    %v533 = vld [vmem:[%s1 + $0xf08] sm:$0xff]
    %v534 = vld [vmem:[%s1 + $0xf10] sm:$0xff]
    %v535 = vld [vmem:[%s1 + $0xf18] sm:$0xff]
    %v536 = vld [vmem:[%s1 + $0xf20] sm:$0xff]
    %v537 = vld [vmem:[%s1 + $0xf28] sm:$0xff]
    %v538 = vld [vmem:[%s1 + $0xf30] sm:$0xff]
    %v539 = vld [vmem:[%s1 + $0xf38] sm:$0xff]
    %v540 = vld [vmem:[%s1 + $0xf40] sm:$0xff]
    %v541 = vld [vmem:[%s1 + $0xf48] sm:$0xff]
    %v542 = vld [vmem:[%s1 + $0xf50] sm:$0xff]
    %v543 = vld [vmem:[%s1 + $0xf58] sm:$0xff]
    %v544 = vld [vmem:[%s1 + $0xf60] sm:$0xff]
    %v545 = vld [vmem:[%s1 + $0xf68] sm:$0xff]
    %v546 = vld [vmem:[%s1 + $0xf70] sm:$0xff]
    %v547 = vld [vmem:[%s1 + $0xf78] sm:$0xff]
    %v548 = vld [vmem:[%s1 + $0xf80] sm:$0xff]
    %v549 = vld [vmem:[%s1 + $0xf88] sm:$0xff]
    %v550 = vld [vmem:[%s1 + $0xf90] sm:$0xff]
    %v551 = vld [vmem:[%s1 + $0xf98] sm:$0xff]
    %v552 = vld [vmem:[%s1 + $0xfa0] sm:$0xff]
    %v553 = vld [vmem:[%s1 + $0xfa8] sm:$0xff]
    %v554 = vld [vmem:[%s1 + $0xfb0] sm:$0xff]
    %v555 = vld [vmem:[%s1 + $0xfb8] sm:$0xff]
    %v556 = vld [vmem:[%s1 + $0xfc0] sm:$0xff]
    %v557 = vld [vmem:[%s1 + $0xfc8] sm:$0xff]
    %v558 = vld [vmem:[%s1 + $0xfd0] sm:$0xff]
    %v559 = vld [vmem:[%s1 + $0xfd8] sm:$0xff]
    %v560 = vld [vmem:[%s1 + $0xfe0] sm:$0xff]
    %v561 = vld [vmem:[%s1 + $0xfe8] sm:$0xff]
    %v562 = vld [vmem:[%s1 + $0xff0] sm:$0xff]
    %v563 = vld [vmem:[%s1 + $0xff8] sm:$0xff]
    %v564 = vld [vmem:[%s1 + $0x1000] sm:$0xff]
    %v565 = vld [vmem:[%s1 + $0x1008] sm:$0xff]
    %v566 = vld [vmem:[%s1 + $0x1010] sm:$0xff]
    %v567 = vld [vmem:[%s1 + $0x1018] sm:$0xff]
    %v568 = vld [vmem:[%s1 + $0x1020] sm:$0xff]
    %v569 = vld [vmem:[%s1 + $0x1028] sm:$0xff]
    %v570 = vld [vmem:[%s1 + $0x1030] sm:$0xff]
    %v571 = vld [vmem:[%s1 + $0x1038] sm:$0xff]
    %v572 = vld [vmem:[%s1 + $0x1040] sm:$0xff]
    %v573 = vld [vmem:[%s1 + $0x1048] sm:$0xff]
    %v574 = vld [vmem:[%s1 + $0x1050] sm:$0xff]
    %v575 = vld [vmem:[%s1 + $0x1058] sm:$0xff]
    %v576 = vld [vmem:[%s1 + $0x1060] sm:$0xff]
    %v577 = vld [vmem:[%s1 + $0x1068] sm:$0xff]
    %v578 = vld [vmem:[%s1 + $0x1070] sm:$0xff]
    %v579 = vld [vmem:[%s1 + $0x1078] sm:$0xff]
    %v580 = vld [vmem:[%s1 + $0x1080] sm:$0xff]
    %v581 = vld [vmem:[%s1 + $0x1088] sm:$0xff]
    %v582 = vld [vmem:[%s1 + $0x1090] sm:$0xff]
    %v583 = vld [vmem:[%s1 + $0x1098] sm:$0xff]
    %v584 = vld [vmem:[%s1 + $0x10a0] sm:$0xff]
    %v585 = vld [vmem:[%s1 + $0x10a8] sm:$0xff]
    %v586 = vld [vmem:[%s1 + $0x10b0] sm:$0xff]
    %v587 = vld [vmem:[%s1 + $0x10b8] sm:$0xff]
    %v588 = vld [vmem:[%s1 + $0x10c0] sm:$0xff]
    %v589 = vld [vmem:[%s1 + $0x10c8] sm:$0xff]
    %v590 = vld [vmem:[%s1 + $0x10d0] sm:$0xff]
    %v591 = vld [vmem:[%s1 + $0x10d8] sm:$0xff]
    %v592 = vld [vmem:[%s1 + $0x10e0] sm:$0xff]
    %v593 = vld [vmem:[%s1 + $0x10e8] sm:$0xff]
    %v594 = vld [vmem:[%s1 + $0x10f0] sm:$0xff]
    %v595 = vld [vmem:[%s1 + $0x10f8] sm:$0xff]
    %v596 = vld [vmem:[%s1 + $0x1100] sm:$0xff]
    %v597 = vld [vmem:[%s1 + $0x1108] sm:$0xff]
    %v598 = vld [vmem:[%s1 + $0x1110] sm:$0xff]
    %v599 = vld [vmem:[%s1 + $0x1118] sm:$0xff]
    %v600 = vld [vmem:[%s1 + $0x1120] sm:$0xff]
    %v601 = vld [vmem:[%s1 + $0x1128] sm:$0xff]
    %v602 = vld [vmem:[%s1 + $0x1130] sm:$0xff]
    %v603 = vld [vmem:[%s1 + $0x1138] sm:$0xff]
    %v604 = vld [vmem:[%s1 + $0x1140] sm:$0xff]
    %v605 = vld [vmem:[%s1 + $0x1148] sm:$0xff]
    %v606 = vld [vmem:[%s1 + $0x1150] sm:$0xff]
    %v607 = vld [vmem:[%s1 + $0x1158] sm:$0xff]
    %v608 = vld [vmem:[%s1 + $0x1160] sm:$0xff]
    %v609 = vld [vmem:[%s1 + $0x1168] sm:$0xff]
    %v610 = vld [vmem:[%s1 + $0x1170] sm:$0xff]
    %v611 = vld [vmem:[%s1 + $0x1178] sm:$0xff]
    %v612 = vld [vmem:[%s1 + $0x1180] sm:$0xff]
    %v613 = vld [vmem:[%s1 + $0x1188] sm:$0xff]
    %v614 = vld [vmem:[%s1 + $0x1190] sm:$0xff]
    %v615 = vld [vmem:[%s1 + $0x1198] sm:$0xff]
    %v616 = vld [vmem:[%s1 + $0x11a0] sm:$0xff]
    %v617 = vld [vmem:[%s1 + $0x11a8] sm:$0xff]
    %v618 = vld [vmem:[%s1 + $0x11b0] sm:$0xff]
    %v619 = vld [vmem:[%s1 + $0x11b8] sm:$0xff]
    %v620 = vld [vmem:[%s1 + $0x11c0] sm:$0xff]
    %v621 = vld [vmem:[%s1 + $0x11c8] sm:$0xff]
    %v622 = vld [vmem:[%s1 + $0x11d0] sm:$0xff]
    %v623 = vld [vmem:[%s1 + $0x11d8] sm:$0xff]
    %v624 = vld [vmem:[%s1 + $0x11e0] sm:$0xff]
    %v625 = vld [vmem:[%s1 + $0x11e8] sm:$0xff]
    %v626 = vld [vmem:[%s1 + $0x11f0] sm:$0xff]
    %v627 = vld [vmem:[%s1 + $0x11f8] sm:$0xff]
    %v1204 = vunpack.c.l.b16 %v52
    %v1205 = vunpack.c.h.b16 %v52
    %v1206 = vunpack.c.l.b16 %v53
    %v1207 = vunpack.c.h.b16 %v53
    %v1208 = vunpack.c.l.b16 %v54
    %v1209 = vunpack.c.h.b16 %v54
    %v1210 = vunpack.c.l.b16 %v55
    %v1211 = vunpack.c.h.b16 %v55
    %v1212 = vunpack.c.l.b16 %v56
    %v1213 = vunpack.c.h.b16 %v56
    %v1214 = vunpack.c.l.b16 %v57
    %v1215 = vunpack.c.h.b16 %v57
    %v1216 = vunpack.c.l.b16 %v58
    %v1217 = vunpack.c.h.b16 %v58
    %v1218 = vunpack.c.l.b16 %v59
    %v1219 = vunpack.c.h.b16 %v59
    %v1220 = vunpack.c.l.b16 %v60
    %v1221 = vunpack.c.h.b16 %v60
    %v1222 = vunpack.c.l.b16 %v61
    %v1223 = vunpack.c.h.b16 %v61
    %v1224 = vunpack.c.l.b16 %v62
    %v1225 = vunpack.c.h.b16 %v62
    %v1226 = vunpack.c.l.b16 %v63
    %v1227 = vunpack.c.h.b16 %v63
    %v1228 = vunpack.c.l.b16 %v64
    %v1229 = vunpack.c.h.b16 %v64
    %v1230 = vunpack.c.l.b16 %v65
    %v1231 = vunpack.c.h.b16 %v65
    %v1232 = vunpack.c.l.b16 %v66
    %v1233 = vunpack.c.h.b16 %v66
    %v1234 = vunpack.c.l.b16 %v67
    %v1235 = vunpack.c.h.b16 %v67
    %v1236 = vunpack.c.l.b16 %v68
    %v1237 = vunpack.c.h.b16 %v68
    %v1238 = vunpack.c.l.b16 %v69
    %v1239 = vunpack.c.h.b16 %v69
    %v1240 = vunpack.c.l.b16 %v70
    %v1241 = vunpack.c.h.b16 %v70
    %v1242 = vunpack.c.l.b16 %v71
    %v1243 = vunpack.c.h.b16 %v71
    %v1244 = vunpack.c.l.b16 %v72
    %v1245 = vunpack.c.h.b16 %v72
    %v1246 = vunpack.c.l.b16 %v73
    %v1247 = vunpack.c.h.b16 %v73
    %v1248 = vunpack.c.l.b16 %v74
    %v1249 = vunpack.c.h.b16 %v74
    %v1250 = vunpack.c.l.b16 %v75
    %v1251 = vunpack.c.h.b16 %v75
    %v1252 = vunpack.c.l.b16 %v76
    %v1253 = vunpack.c.h.b16 %v76
    %v1254 = vunpack.c.l.b16 %v77
    %v1255 = vunpack.c.h.b16 %v77
    %v1256 = vunpack.c.l.b16 %v78
    %v1257 = vunpack.c.h.b16 %v78
    %v1258 = vunpack.c.l.b16 %v79
    %v1259 = vunpack.c.h.b16 %v79
    %v1260 = vunpack.c.l.b16 %v80
    %v1261 = vunpack.c.h.b16 %v80
    %v1262 = vunpack.c.l.b16 %v81
    %v1263 = vunpack.c.h.b16 %v81
    %v1264 = vunpack.c.l.b16 %v82
    %v1265 = vunpack.c.h.b16 %v82
    %v1266 = vunpack.c.l.b16 %v83
    %v1267 = vunpack.c.h.b16 %v83
    %v1268 = vunpack.c.l.b16 %v84
    %v1269 = vunpack.c.h.b16 %v84
    %v1270 = vunpack.c.l.b16 %v85
    %v1271 = vunpack.c.h.b16 %v85
    %v1272 = vunpack.c.l.b16 %v86
    %v1273 = vunpack.c.h.b16 %v86
    %v1274 = vunpack.c.l.b16 %v87
    %v1275 = vunpack.c.h.b16 %v87
    %v1276 = vunpack.c.l.b16 %v88
    %v1277 = vunpack.c.h.b16 %v88
    %v1278 = vunpack.c.l.b16 %v89
    %v1279 = vunpack.c.h.b16 %v89
    %v1280 = vunpack.c.l.b16 %v90
    %v1281 = vunpack.c.h.b16 %v90
    %v1282 = vunpack.c.l.b16 %v91
    %v1283 = vunpack.c.h.b16 %v91
    %v1284 = vunpack.c.l.b16 %v92
    %v1285 = vunpack.c.h.b16 %v92
    %v1286 = vunpack.c.l.b16 %v93
    %v1287 = vunpack.c.h.b16 %v93
    %v1288 = vunpack.c.l.b16 %v94
    %v1289 = vunpack.c.h.b16 %v94
    %v1290 = vunpack.c.l.b16 %v95
    %v1291 = vunpack.c.h.b16 %v95
    %v1292 = vunpack.c.l.b16 %v96
    %v1293 = vunpack.c.h.b16 %v96
    %v1294 = vunpack.c.l.b16 %v97
    %v1295 = vunpack.c.h.b16 %v97
    %v1296 = vunpack.c.l.b16 %v98
    %v1297 = vunpack.c.h.b16 %v98
    %v1298 = vunpack.c.l.b16 %v99
    %v1299 = vunpack.c.h.b16 %v99
    %v1300 = vunpack.c.l.b16 %v100
    %v1301 = vunpack.c.h.b16 %v100
    %v1302 = vunpack.c.l.b16 %v101
    %v1303 = vunpack.c.h.b16 %v101
    %v1304 = vunpack.c.l.b16 %v102
    %v1305 = vunpack.c.h.b16 %v102
    %v1306 = vunpack.c.l.b16 %v103
    %v1307 = vunpack.c.h.b16 %v103
    %v1308 = vunpack.c.l.b16 %v104
    %v1309 = vunpack.c.h.b16 %v104
    %v1310 = vunpack.c.l.b16 %v105
    %v1311 = vunpack.c.h.b16 %v105
    %v1312 = vunpack.c.l.b16 %v106
    %v1313 = vunpack.c.h.b16 %v106
    %v1314 = vunpack.c.l.b16 %v107
    %v1315 = vunpack.c.h.b16 %v107
    %v1316 = vunpack.c.l.b16 %v108
    %v1317 = vunpack.c.h.b16 %v108
    %v1318 = vunpack.c.l.b16 %v109
    %v1319 = vunpack.c.h.b16 %v109
    %v1320 = vunpack.c.l.b16 %v110
    %v1321 = vunpack.c.h.b16 %v110
    %v1322 = vunpack.c.l.b16 %v111
    %v1323 = vunpack.c.h.b16 %v111
    %v1324 = vunpack.c.l.b16 %v112
    %v1325 = vunpack.c.h.b16 %v112
    %v1326 = vunpack.c.l.b16 %v113
    %v1327 = vunpack.c.h.b16 %v113
    %v1328 = vunpack.c.l.b16 %v114
    %v1329 = vunpack.c.h.b16 %v114
    %v1330 = vunpack.c.l.b16 %v115
    %v1331 = vunpack.c.h.b16 %v115
    %v1332 = vunpack.c.l.b16 %v116
    %v1333 = vunpack.c.h.b16 %v116
    %v1334 = vunpack.c.l.b16 %v117
    %v1335 = vunpack.c.h.b16 %v117
    %v1336 = vunpack.c.l.b16 %v118
    %v1337 = vunpack.c.h.b16 %v118
    %v1338 = vunpack.c.l.b16 %v119
    %v1339 = vunpack.c.h.b16 %v119
    %v1340 = vunpack.c.l.b16 %v120
    %v1341 = vunpack.c.h.b16 %v120
    %v1342 = vunpack.c.l.b16 %v121
    %v1343 = vunpack.c.h.b16 %v121
    %v1344 = vunpack.c.l.b16 %v122
    %v1345 = vunpack.c.h.b16 %v122
    %v1346 = vunpack.c.l.b16 %v123
    %v1347 = vunpack.c.h.b16 %v123
    %v1348 = vunpack.c.l.b16 %v124
    %v1349 = vunpack.c.h.b16 %v124
    %v1350 = vunpack.c.l.b16 %v125
    %v1351 = vunpack.c.h.b16 %v125
    %v1352 = vunpack.c.l.b16 %v126
    %v1353 = vunpack.c.h.b16 %v126
    %v1354 = vunpack.c.l.b16 %v127
    %v1355 = vunpack.c.h.b16 %v127
    %v1356 = vunpack.c.l.b16 %v128
    %v1357 = vunpack.c.h.b16 %v128
    %v1358 = vunpack.c.l.b16 %v129
    %v1359 = vunpack.c.h.b16 %v129
    %v1360 = vunpack.c.l.b16 %v130
    %v1361 = vunpack.c.h.b16 %v130
    %v1362 = vunpack.c.l.b16 %v131
    %v1363 = vunpack.c.h.b16 %v131
    %v1364 = vunpack.c.l.b16 %v132
    %v1365 = vunpack.c.h.b16 %v132
    %v1366 = vunpack.c.l.b16 %v133
    %v1367 = vunpack.c.h.b16 %v133
    %v1368 = vunpack.c.l.b16 %v134
    %v1369 = vunpack.c.h.b16 %v134
    %v1370 = vunpack.c.l.b16 %v135
    %v1371 = vunpack.c.h.b16 %v135
    %v1372 = vunpack.c.l.b16 %v136
    %v1373 = vunpack.c.h.b16 %v136
    %v1374 = vunpack.c.l.b16 %v137
    %v1375 = vunpack.c.h.b16 %v137
    %v1376 = vunpack.c.l.b16 %v138
    %v1377 = vunpack.c.h.b16 %v138
    %v1378 = vunpack.c.l.b16 %v139
    %v1379 = vunpack.c.h.b16 %v139
    %v1380 = vunpack.c.l.b16 %v140
    %v1381 = vunpack.c.h.b16 %v140
    %v1382 = vunpack.c.l.b16 %v141
    %v1383 = vunpack.c.h.b16 %v141
    %v1384 = vunpack.c.l.b16 %v142
    %v1385 = vunpack.c.h.b16 %v142
    %v1386 = vunpack.c.l.b16 %v143
    %v1387 = vunpack.c.h.b16 %v143
    %v1388 = vunpack.c.l.b16 %v144
    %v1389 = vunpack.c.h.b16 %v144
    %v1390 = vunpack.c.l.b16 %v145
    %v1391 = vunpack.c.h.b16 %v145
    %v1392 = vunpack.c.l.b16 %v146
    %v1393 = vunpack.c.h.b16 %v146
    %v1394 = vunpack.c.l.b16 %v147
    %v1395 = vunpack.c.h.b16 %v147
    %v1396 = vunpack.c.l.b16 %v148
    %v1397 = vunpack.c.h.b16 %v148
    %v1398 = vunpack.c.l.b16 %v149
    %v1399 = vunpack.c.h.b16 %v149
    %v1400 = vunpack.c.l.b16 %v150
    %v1401 = vunpack.c.h.b16 %v150
    %v1402 = vunpack.c.l.b16 %v151
    %v1403 = vunpack.c.h.b16 %v151
    %v1404 = vunpack.c.l.b16 %v152
    %v1405 = vunpack.c.h.b16 %v152
    %v1406 = vunpack.c.l.b16 %v153
    %v1407 = vunpack.c.h.b16 %v153
    %v1408 = vunpack.c.l.b16 %v154
    %v1409 = vunpack.c.h.b16 %v154
    %v1410 = vunpack.c.l.b16 %v155
    %v1411 = vunpack.c.h.b16 %v155
    %v1412 = vunpack.c.l.b16 %v156
    %v1413 = vunpack.c.h.b16 %v156
    %v1414 = vunpack.c.l.b16 %v157
    %v1415 = vunpack.c.h.b16 %v157
    %v1416 = vunpack.c.l.b16 %v158
    %v1417 = vunpack.c.h.b16 %v158
    %v1418 = vunpack.c.l.b16 %v159
    %v1419 = vunpack.c.h.b16 %v159
    %v1420 = vunpack.c.l.b16 %v160
    %v1421 = vunpack.c.h.b16 %v160
    %v1422 = vunpack.c.l.b16 %v161
    %v1423 = vunpack.c.h.b16 %v161
    %v1424 = vunpack.c.l.b16 %v162
    %v1425 = vunpack.c.h.b16 %v162
    %v1426 = vunpack.c.l.b16 %v163
    %v1427 = vunpack.c.h.b16 %v163
    %v1428 = vunpack.c.l.b16 %v164
    %v1429 = vunpack.c.h.b16 %v164
    %v1430 = vunpack.c.l.b16 %v165
    %v1431 = vunpack.c.h.b16 %v165
    %v1432 = vunpack.c.l.b16 %v166
    %v1433 = vunpack.c.h.b16 %v166
    %v1434 = vunpack.c.l.b16 %v167
    %v1435 = vunpack.c.h.b16 %v167
    %v1436 = vunpack.c.l.b16 %v168
    %v1437 = vunpack.c.h.b16 %v168
    %v1438 = vunpack.c.l.b16 %v169
    %v1439 = vunpack.c.h.b16 %v169
    %v1440 = vunpack.c.l.b16 %v170
    %v1441 = vunpack.c.h.b16 %v170
    %v1442 = vunpack.c.l.b16 %v171
    %v1443 = vunpack.c.h.b16 %v171
    %v1444 = vunpack.c.l.b16 %v172
    %v1445 = vunpack.c.h.b16 %v172
    %v1446 = vunpack.c.l.b16 %v173
    %v1447 = vunpack.c.h.b16 %v173
    %v1448 = vunpack.c.l.b16 %v174
    %v1449 = vunpack.c.h.b16 %v174
    %v1450 = vunpack.c.l.b16 %v175
    %v1451 = vunpack.c.h.b16 %v175
    %v1452 = vunpack.c.l.b16 %v176
    %v1453 = vunpack.c.h.b16 %v176
    %v1454 = vunpack.c.l.b16 %v177
    %v1455 = vunpack.c.h.b16 %v177
    %v1456 = vunpack.c.l.b16 %v178
    %v1457 = vunpack.c.h.b16 %v178
    %v1458 = vunpack.c.l.b16 %v179
    %v1459 = vunpack.c.h.b16 %v179
    %v1460 = vunpack.c.l.b16 %v180
    %v1461 = vunpack.c.h.b16 %v180
    %v1462 = vunpack.c.l.b16 %v181
    %v1463 = vunpack.c.h.b16 %v181
    %v1464 = vunpack.c.l.b16 %v182
    %v1465 = vunpack.c.h.b16 %v182
    %v1466 = vunpack.c.l.b16 %v183
    %v1467 = vunpack.c.h.b16 %v183
    %v1468 = vunpack.c.l.b16 %v184
    %v1469 = vunpack.c.h.b16 %v184
    %v1470 = vunpack.c.l.b16 %v185
    %v1471 = vunpack.c.h.b16 %v185
    %v1472 = vunpack.c.l.b16 %v186
    %v1473 = vunpack.c.h.b16 %v186
    %v1474 = vunpack.c.l.b16 %v187
    %v1475 = vunpack.c.h.b16 %v187
    %v1476 = vunpack.c.l.b16 %v188
    %v1477 = vunpack.c.h.b16 %v188
    %v1478 = vunpack.c.l.b16 %v189
    %v1479 = vunpack.c.h.b16 %v189
    %v1480 = vunpack.c.l.b16 %v190
    %v1481 = vunpack.c.h.b16 %v190
    %v1482 = vunpack.c.l.b16 %v191
    %v1483 = vunpack.c.h.b16 %v191
    %v1484 = vunpack.c.l.b16 %v192
    %v1485 = vunpack.c.h.b16 %v192
    %v1486 = vunpack.c.l.b16 %v193
    %v1487 = vunpack.c.h.b16 %v193
    %v1488 = vunpack.c.l.b16 %v194
    %v1489 = vunpack.c.h.b16 %v194
    %v1490 = vunpack.c.l.b16 %v195
    %v1491 = vunpack.c.h.b16 %v195
    %v1492 = vunpack.c.l.b16 %v196
    %v1493 = vunpack.c.h.b16 %v196
    %v1494 = vunpack.c.l.b16 %v197
    %v1495 = vunpack.c.h.b16 %v197
    %v1496 = vunpack.c.l.b16 %v198
    %v1497 = vunpack.c.h.b16 %v198
    %v1498 = vunpack.c.l.b16 %v199
    %v1499 = vunpack.c.h.b16 %v199
    %v1500 = vunpack.c.l.b16 %v200
    %v1501 = vunpack.c.h.b16 %v200
    %v1502 = vunpack.c.l.b16 %v201
    %v1503 = vunpack.c.h.b16 %v201
    %v1504 = vunpack.c.l.b16 %v202
    %v1505 = vunpack.c.h.b16 %v202
    %v1506 = vunpack.c.l.b16 %v203
    %v1507 = vunpack.c.h.b16 %v203
    %v1508 = vunpack.c.l.b16 %v204
    %v1509 = vunpack.c.h.b16 %v204
    %v1510 = vunpack.c.l.b16 %v205
    %v1511 = vunpack.c.h.b16 %v205
    %v1512 = vunpack.c.l.b16 %v206
    %v1513 = vunpack.c.h.b16 %v206
    %v1514 = vunpack.c.l.b16 %v207
    %v1515 = vunpack.c.h.b16 %v207
    %v1516 = vunpack.c.l.b16 %v208
    %v1517 = vunpack.c.h.b16 %v208
    %v1518 = vunpack.c.l.b16 %v209
    %v1519 = vunpack.c.h.b16 %v209
    %v1520 = vunpack.c.l.b16 %v210
    %v1521 = vunpack.c.h.b16 %v210
    %v1522 = vunpack.c.l.b16 %v211
    %v1523 = vunpack.c.h.b16 %v211
    %v1524 = vunpack.c.l.b16 %v212
    %v1525 = vunpack.c.h.b16 %v212
    %v1526 = vunpack.c.l.b16 %v213
    %v1527 = vunpack.c.h.b16 %v213
    %v1528 = vunpack.c.l.b16 %v214
    %v1529 = vunpack.c.h.b16 %v214
    %v1530 = vunpack.c.l.b16 %v215
    %v1531 = vunpack.c.h.b16 %v215
    %v1532 = vunpack.c.l.b16 %v216
    %v1533 = vunpack.c.h.b16 %v216
    %v1534 = vunpack.c.l.b16 %v217
    %v1535 = vunpack.c.h.b16 %v217
    %v1536 = vunpack.c.l.b16 %v218
    %v1537 = vunpack.c.h.b16 %v218
    %v1538 = vunpack.c.l.b16 %v219
    %v1539 = vunpack.c.h.b16 %v219
    %v1540 = vunpack.c.l.b16 %v220
    %v1541 = vunpack.c.h.b16 %v220
    %v1542 = vunpack.c.l.b16 %v221
    %v1543 = vunpack.c.h.b16 %v221
    %v1544 = vunpack.c.l.b16 %v222
    %v1545 = vunpack.c.h.b16 %v222
    %v1546 = vunpack.c.l.b16 %v223
    %v1547 = vunpack.c.h.b16 %v223
    %v1548 = vunpack.c.l.b16 %v224
    %v1549 = vunpack.c.h.b16 %v224
    %v1550 = vunpack.c.l.b16 %v225
    %v1551 = vunpack.c.h.b16 %v225
    %v1552 = vunpack.c.l.b16 %v226
    %v1553 = vunpack.c.h.b16 %v226
    %v1554 = vunpack.c.l.b16 %v227
    %v1555 = vunpack.c.h.b16 %v227
    %v1556 = vunpack.c.l.b16 %v228
    %v1557 = vunpack.c.h.b16 %v228
    %v1558 = vunpack.c.l.b16 %v229
    %v1559 = vunpack.c.h.b16 %v229
    %v1560 = vunpack.c.l.b16 %v230
    %v1561 = vunpack.c.h.b16 %v230
    %v1562 = vunpack.c.l.b16 %v231
    %v1563 = vunpack.c.h.b16 %v231
    %v1564 = vunpack.c.l.b16 %v232
    %v1565 = vunpack.c.h.b16 %v232
    %v1566 = vunpack.c.l.b16 %v233
    %v1567 = vunpack.c.h.b16 %v233
    %v1568 = vunpack.c.l.b16 %v234
    %v1569 = vunpack.c.h.b16 %v234
    %v1570 = vunpack.c.l.b16 %v235
    %v1571 = vunpack.c.h.b16 %v235
    %v1572 = vunpack.c.l.b16 %v236
    %v1573 = vunpack.c.h.b16 %v236
    %v1574 = vunpack.c.l.b16 %v237
    %v1575 = vunpack.c.h.b16 %v237
    %v1576 = vunpack.c.l.b16 %v238
    %v1577 = vunpack.c.h.b16 %v238
    %v1578 = vunpack.c.l.b16 %v239
    %v1579 = vunpack.c.h.b16 %v239
    %v1580 = vunpack.c.l.b16 %v240
    %v1581 = vunpack.c.h.b16 %v240
    %v1582 = vunpack.c.l.b16 %v241
    %v1583 = vunpack.c.h.b16 %v241
    %v1584 = vunpack.c.l.b16 %v242
    %v1585 = vunpack.c.h.b16 %v242
    %v1586 = vunpack.c.l.b16 %v243
    %v1587 = vunpack.c.h.b16 %v243
    %v1588 = vunpack.c.l.b16 %v244
    %v1589 = vunpack.c.h.b16 %v244
    %v1590 = vunpack.c.l.b16 %v245
    %v1591 = vunpack.c.h.b16 %v245
    %v1592 = vunpack.c.l.b16 %v246
    %v1593 = vunpack.c.h.b16 %v246
    %v1594 = vunpack.c.l.b16 %v247
    %v1595 = vunpack.c.h.b16 %v247
    %v1596 = vunpack.c.l.b16 %v248
    %v1597 = vunpack.c.h.b16 %v248
    %v1598 = vunpack.c.l.b16 %v249
    %v1599 = vunpack.c.h.b16 %v249
    %v1600 = vunpack.c.l.b16 %v250
    %v1601 = vunpack.c.h.b16 %v250
    %v1602 = vunpack.c.l.b16 %v251
    %v1603 = vunpack.c.h.b16 %v251
    %v1604 = vunpack.c.l.b16 %v252
    %v1605 = vunpack.c.h.b16 %v252
    %v1606 = vunpack.c.l.b16 %v253
    %v1607 = vunpack.c.h.b16 %v253
    %v1608 = vunpack.c.l.b16 %v254
    %v1609 = vunpack.c.h.b16 %v254
    %v1610 = vunpack.c.l.b16 %v255
    %v1611 = vunpack.c.h.b16 %v255
    %v1612 = vunpack.c.l.b16 %v256
    %v1613 = vunpack.c.h.b16 %v256
    %v1614 = vunpack.c.l.b16 %v257
    %v1615 = vunpack.c.h.b16 %v257
    %v1616 = vunpack.c.l.b16 %v258
    %v1617 = vunpack.c.h.b16 %v258
    %v1618 = vunpack.c.l.b16 %v259
    %v1619 = vunpack.c.h.b16 %v259
    %v1620 = vunpack.c.l.b16 %v260
    %v1621 = vunpack.c.h.b16 %v260
    %v1622 = vunpack.c.l.b16 %v261
    %v1623 = vunpack.c.h.b16 %v261
    %v1624 = vunpack.c.l.b16 %v262
    %v1625 = vunpack.c.h.b16 %v262
    %v1626 = vunpack.c.l.b16 %v263
    %v1627 = vunpack.c.h.b16 %v263
    %v1628 = vunpack.c.l.b16 %v264
    %v1629 = vunpack.c.h.b16 %v264
    %v1630 = vunpack.c.l.b16 %v265
    %v1631 = vunpack.c.h.b16 %v265
    %v1632 = vunpack.c.l.b16 %v266
    %v1633 = vunpack.c.h.b16 %v266
    %v1634 = vunpack.c.l.b16 %v267
    %v1635 = vunpack.c.h.b16 %v267
    %v1636 = vunpack.c.l.b16 %v268
    %v1637 = vunpack.c.h.b16 %v268
    %v1638 = vunpack.c.l.b16 %v269
    %v1639 = vunpack.c.h.b16 %v269
    %v1640 = vunpack.c.l.b16 %v270
    %v1641 = vunpack.c.h.b16 %v270
    %v1642 = vunpack.c.l.b16 %v271
    %v1643 = vunpack.c.h.b16 %v271
    %v1644 = vunpack.c.l.b16 %v272
    %v1645 = vunpack.c.h.b16 %v272
    %v1646 = vunpack.c.l.b16 %v273
    %v1647 = vunpack.c.h.b16 %v273
    %v1648 = vunpack.c.l.b16 %v274
    %v1649 = vunpack.c.h.b16 %v274
    %v1650 = vunpack.c.l.b16 %v275
    %v1651 = vunpack.c.h.b16 %v275
    %v1652 = vunpack.c.l.b16 %v276
    %v1653 = vunpack.c.h.b16 %v276
    %v1654 = vunpack.c.l.b16 %v277
    %v1655 = vunpack.c.h.b16 %v277
    %v1656 = vunpack.c.l.b16 %v278
    %v1657 = vunpack.c.h.b16 %v278
    %v1658 = vunpack.c.l.b16 %v279
    %v1659 = vunpack.c.h.b16 %v279
    %v1660 = vunpack.c.l.b16 %v280
    %v1661 = vunpack.c.h.b16 %v280
    %v1662 = vunpack.c.l.b16 %v281
    %v1663 = vunpack.c.h.b16 %v281
    %v1664 = vunpack.c.l.b16 %v282
    %v1665 = vunpack.c.h.b16 %v282
    %v1666 = vunpack.c.l.b16 %v283
    %v1667 = vunpack.c.h.b16 %v283
    %v1668 = vunpack.c.l.b16 %v284
    %v1669 = vunpack.c.h.b16 %v284
    %v1670 = vunpack.c.l.b16 %v285
    %v1671 = vunpack.c.h.b16 %v285
    %v1672 = vunpack.c.l.b16 %v286
    %v1673 = vunpack.c.h.b16 %v286
    %v1674 = vunpack.c.l.b16 %v287
    %v1675 = vunpack.c.h.b16 %v287
    %v1676 = vunpack.c.l.b16 %v288
    %v1677 = vunpack.c.h.b16 %v288
    %v1678 = vunpack.c.l.b16 %v289
    %v1679 = vunpack.c.h.b16 %v289
    %v1680 = vunpack.c.l.b16 %v290
    %v1681 = vunpack.c.h.b16 %v290
    %v1682 = vunpack.c.l.b16 %v291
    %v1683 = vunpack.c.h.b16 %v291
    %v1684 = vunpack.c.l.b16 %v292
    %v1685 = vunpack.c.h.b16 %v292
    %v1686 = vunpack.c.l.b16 %v293
    %v1687 = vunpack.c.h.b16 %v293
    %v1688 = vunpack.c.l.b16 %v294
    %v1689 = vunpack.c.h.b16 %v294
    %v1690 = vunpack.c.l.b16 %v295
    %v1691 = vunpack.c.h.b16 %v295
    %v1692 = vunpack.c.l.b16 %v296
    %v1693 = vunpack.c.h.b16 %v296
    %v1694 = vunpack.c.l.b16 %v297
    %v1695 = vunpack.c.h.b16 %v297
    %v1696 = vunpack.c.l.b16 %v298
    %v1697 = vunpack.c.h.b16 %v298
    %v1698 = vunpack.c.l.b16 %v299
    %v1699 = vunpack.c.h.b16 %v299
    %v1700 = vunpack.c.l.b16 %v300
    %v1701 = vunpack.c.h.b16 %v300
    %v1702 = vunpack.c.l.b16 %v301
    %v1703 = vunpack.c.h.b16 %v301
    %v1704 = vunpack.c.l.b16 %v302
    %v1705 = vunpack.c.h.b16 %v302
    %v1706 = vunpack.c.l.b16 %v303
    %v1707 = vunpack.c.h.b16 %v303
    %v1708 = vunpack.c.l.b16 %v304
    %v1709 = vunpack.c.h.b16 %v304
    %v1710 = vunpack.c.l.b16 %v305
    %v1711 = vunpack.c.h.b16 %v305
    %v1712 = vunpack.c.l.b16 %v306
    %v1713 = vunpack.c.h.b16 %v306
    %v1714 = vunpack.c.l.b16 %v307
    %v1715 = vunpack.c.h.b16 %v307
    %v1716 = vunpack.c.l.b16 %v308
    %v1717 = vunpack.c.h.b16 %v308
    %v1718 = vunpack.c.l.b16 %v309
    %v1719 = vunpack.c.h.b16 %v309
    %v1720 = vunpack.c.l.b16 %v310
    %v1721 = vunpack.c.h.b16 %v310
    %v1722 = vunpack.c.l.b16 %v311
    %v1723 = vunpack.c.h.b16 %v311
    %v1724 = vunpack.c.l.b16 %v312
    %v1725 = vunpack.c.h.b16 %v312
    %v1726 = vunpack.c.l.b16 %v313
    %v1727 = vunpack.c.h.b16 %v313
    %v1728 = vunpack.c.l.b16 %v314
    %v1729 = vunpack.c.h.b16 %v314
    %v1730 = vunpack.c.l.b16 %v315
    %v1731 = vunpack.c.h.b16 %v315
    %v1732 = vunpack.c.l.b16 %v316
    %v1733 = vunpack.c.h.b16 %v316
    %v1734 = vunpack.c.l.b16 %v317
    %v1735 = vunpack.c.h.b16 %v317
    %v1736 = vunpack.c.l.b16 %v318
    %v1737 = vunpack.c.h.b16 %v318
    %v1738 = vunpack.c.l.b16 %v319
    %v1739 = vunpack.c.h.b16 %v319
    %v1740 = vunpack.c.l.b16 %v320
    %v1741 = vunpack.c.h.b16 %v320
    %v1742 = vunpack.c.l.b16 %v321
    %v1743 = vunpack.c.h.b16 %v321
    %v1744 = vunpack.c.l.b16 %v322
    %v1745 = vunpack.c.h.b16 %v322
    %v1746 = vunpack.c.l.b16 %v323
    %v1747 = vunpack.c.h.b16 %v323
    %v1748 = vunpack.c.l.b16 %v324
    %v1749 = vunpack.c.h.b16 %v324
    %v1750 = vunpack.c.l.b16 %v325
    %v1751 = vunpack.c.h.b16 %v325
    %v1752 = vunpack.c.l.b16 %v326
    %v1753 = vunpack.c.h.b16 %v326
    %v1754 = vunpack.c.l.b16 %v327
    %v1755 = vunpack.c.h.b16 %v327
    %v1756 = vunpack.c.l.b16 %v328
    %v1757 = vunpack.c.h.b16 %v328
    %v1758 = vunpack.c.l.b16 %v329
    %v1759 = vunpack.c.h.b16 %v329
    %v1760 = vunpack.c.l.b16 %v330
    %v1761 = vunpack.c.h.b16 %v330
    %v1762 = vunpack.c.l.b16 %v331
    %v1763 = vunpack.c.h.b16 %v331
    %v1764 = vunpack.c.l.b16 %v332
    %v1765 = vunpack.c.h.b16 %v332
    %v1766 = vunpack.c.l.b16 %v333
    %v1767 = vunpack.c.h.b16 %v333
    %v1768 = vunpack.c.l.b16 %v334
    %v1769 = vunpack.c.h.b16 %v334
    %v1770 = vunpack.c.l.b16 %v335
    %v1771 = vunpack.c.h.b16 %v335
    %v1772 = vunpack.c.l.b16 %v336
    %v1773 = vunpack.c.h.b16 %v336
    %v1774 = vunpack.c.l.b16 %v337
    %v1775 = vunpack.c.h.b16 %v337
    %v1776 = vunpack.c.l.b16 %v338
    %v1777 = vunpack.c.h.b16 %v338
    %v1778 = vunpack.c.l.b16 %v339
    %v1779 = vunpack.c.h.b16 %v339
    %v1780 = vunpack.c.l.b16 %v340
    %v1781 = vunpack.c.h.b16 %v340
    %v1782 = vunpack.c.l.b16 %v341
    %v1783 = vunpack.c.h.b16 %v341
    %v1784 = vunpack.c.l.b16 %v342
    %v1785 = vunpack.c.h.b16 %v342
    %v1786 = vunpack.c.l.b16 %v343
    %v1787 = vunpack.c.h.b16 %v343
    %v1788 = vunpack.c.l.b16 %v344
    %v1789 = vunpack.c.h.b16 %v344
    %v1790 = vunpack.c.l.b16 %v345
    %v1791 = vunpack.c.h.b16 %v345
    %v1792 = vunpack.c.l.b16 %v346
    %v1793 = vunpack.c.h.b16 %v346
    %v1794 = vunpack.c.l.b16 %v347
    %v1795 = vunpack.c.h.b16 %v347
    %v1796 = vunpack.c.l.b16 %v348
    %v1797 = vunpack.c.h.b16 %v348
    %v1798 = vunpack.c.l.b16 %v349
    %v1799 = vunpack.c.h.b16 %v349
    %v1800 = vunpack.c.l.b16 %v350
    %v1801 = vunpack.c.h.b16 %v350
    %v1802 = vunpack.c.l.b16 %v351
    %v1803 = vunpack.c.h.b16 %v351
    %v1804 = vunpack.c.l.b16 %v352
    %v1805 = vunpack.c.h.b16 %v352
    %v1806 = vunpack.c.l.b16 %v353
    %v1807 = vunpack.c.h.b16 %v353
    %v1808 = vunpack.c.l.b16 %v354
    %v1809 = vunpack.c.h.b16 %v354
    %v1810 = vunpack.c.l.b16 %v355
    %v1811 = vunpack.c.h.b16 %v355
    %v1812 = vunpack.c.l.b16 %v356
    %v1813 = vunpack.c.h.b16 %v356
    %v1814 = vunpack.c.l.b16 %v357
    %v1815 = vunpack.c.h.b16 %v357
    %v1816 = vunpack.c.l.b16 %v358
    %v1817 = vunpack.c.h.b16 %v358
    %v1818 = vunpack.c.l.b16 %v359
    %v1819 = vunpack.c.h.b16 %v359
    %v1820 = vunpack.c.l.b16 %v360
    %v1821 = vunpack.c.h.b16 %v360
    %v1822 = vunpack.c.l.b16 %v361
    %v1823 = vunpack.c.h.b16 %v361
    %v1824 = vunpack.c.l.b16 %v362
    %v1825 = vunpack.c.h.b16 %v362
    %v1826 = vunpack.c.l.b16 %v363
    %v1827 = vunpack.c.h.b16 %v363
    %v1828 = vunpack.c.l.b16 %v364
    %v1829 = vunpack.c.h.b16 %v364
    %v1830 = vunpack.c.l.b16 %v365
    %v1831 = vunpack.c.h.b16 %v365
    %v1832 = vunpack.c.l.b16 %v366
    %v1833 = vunpack.c.h.b16 %v366
    %v1834 = vunpack.c.l.b16 %v367
    %v1835 = vunpack.c.h.b16 %v367
    %v1836 = vunpack.c.l.b16 %v368
    %v1837 = vunpack.c.h.b16 %v368
    %v1838 = vunpack.c.l.b16 %v369
    %v1839 = vunpack.c.h.b16 %v369
    %v1840 = vunpack.c.l.b16 %v370
    %v1841 = vunpack.c.h.b16 %v370
    %v1842 = vunpack.c.l.b16 %v371
    %v1843 = vunpack.c.h.b16 %v371
    %v1844 = vunpack.c.l.b16 %v372
    %v1845 = vunpack.c.h.b16 %v372
    %v1846 = vunpack.c.l.b16 %v373
    %v1847 = vunpack.c.h.b16 %v373
    %v1848 = vunpack.c.l.b16 %v374
    %v1849 = vunpack.c.h.b16 %v374
    %v1850 = vunpack.c.l.b16 %v375
    %v1851 = vunpack.c.h.b16 %v375
    %v1852 = vunpack.c.l.b16 %v376
    %v1853 = vunpack.c.h.b16 %v376
    %v1854 = vunpack.c.l.b16 %v377
    %v1855 = vunpack.c.h.b16 %v377
    %v1856 = vunpack.c.l.b16 %v378
    %v1857 = vunpack.c.h.b16 %v378
    %v1858 = vunpack.c.l.b16 %v379
    %v1859 = vunpack.c.h.b16 %v379
    %v1860 = vunpack.c.l.b16 %v380
    %v1861 = vunpack.c.h.b16 %v380
    %v1862 = vunpack.c.l.b16 %v381
    %v1863 = vunpack.c.h.b16 %v381
    %v1864 = vunpack.c.l.b16 %v382
    %v1865 = vunpack.c.h.b16 %v382
    %v1866 = vunpack.c.l.b16 %v383
    %v1867 = vunpack.c.h.b16 %v383
    %v1868 = vunpack.c.l.b16 %v384
    %v1869 = vunpack.c.h.b16 %v384
    %v1870 = vunpack.c.l.b16 %v385
    %v1871 = vunpack.c.h.b16 %v385
    %v1872 = vunpack.c.l.b16 %v386
    %v1873 = vunpack.c.h.b16 %v386
    %v1874 = vunpack.c.l.b16 %v387
    %v1875 = vunpack.c.h.b16 %v387
    %v1876 = vunpack.c.l.b16 %v388
    %v1877 = vunpack.c.h.b16 %v388
    %v1878 = vunpack.c.l.b16 %v389
    %v1879 = vunpack.c.h.b16 %v389
    %v1880 = vunpack.c.l.b16 %v390
    %v1881 = vunpack.c.h.b16 %v390
    %v1882 = vunpack.c.l.b16 %v391
    %v1883 = vunpack.c.h.b16 %v391
    %v1884 = vunpack.c.l.b16 %v392
    %v1885 = vunpack.c.h.b16 %v392
    %v1886 = vunpack.c.l.b16 %v393
    %v1887 = vunpack.c.h.b16 %v393
    %v1888 = vunpack.c.l.b16 %v394
    %v1889 = vunpack.c.h.b16 %v394
    %v1890 = vunpack.c.l.b16 %v395
    %v1891 = vunpack.c.h.b16 %v395
    %v1892 = vunpack.c.l.b16 %v396
    %v1893 = vunpack.c.h.b16 %v396
    %v1894 = vunpack.c.l.b16 %v397
    %v1895 = vunpack.c.h.b16 %v397
    %v1896 = vunpack.c.l.b16 %v398
    %v1897 = vunpack.c.h.b16 %v398
    %v1898 = vunpack.c.l.b16 %v399
    %v1899 = vunpack.c.h.b16 %v399
    %v1900 = vunpack.c.l.b16 %v400
    %v1901 = vunpack.c.h.b16 %v400
    %v1902 = vunpack.c.l.b16 %v401
    %v1903 = vunpack.c.h.b16 %v401
    %v1904 = vunpack.c.l.b16 %v402
    %v1905 = vunpack.c.h.b16 %v402
    %v1906 = vunpack.c.l.b16 %v403
    %v1907 = vunpack.c.h.b16 %v403
    %v1908 = vunpack.c.l.b16 %v404
    %v1909 = vunpack.c.h.b16 %v404
    %v1910 = vunpack.c.l.b16 %v405
    %v1911 = vunpack.c.h.b16 %v405
    %v1912 = vunpack.c.l.b16 %v406
    %v1913 = vunpack.c.h.b16 %v406
    %v1914 = vunpack.c.l.b16 %v407
    %v1915 = vunpack.c.h.b16 %v407
    %v1916 = vunpack.c.l.b16 %v408
    %v1917 = vunpack.c.h.b16 %v408
    %v1918 = vunpack.c.l.b16 %v409
    %v1919 = vunpack.c.h.b16 %v409
    %v1920 = vunpack.c.l.b16 %v410
    %v1921 = vunpack.c.h.b16 %v410
    %v1922 = vunpack.c.l.b16 %v411
    %v1923 = vunpack.c.h.b16 %v411
    %v1924 = vunpack.c.l.b16 %v412
    %v1925 = vunpack.c.h.b16 %v412
    %v1926 = vunpack.c.l.b16 %v413
    %v1927 = vunpack.c.h.b16 %v413
    %v1928 = vunpack.c.l.b16 %v414
    %v1929 = vunpack.c.h.b16 %v414
    %v1930 = vunpack.c.l.b16 %v415
    %v1931 = vunpack.c.h.b16 %v415
    %v1932 = vunpack.c.l.b16 %v416
    %v1933 = vunpack.c.h.b16 %v416
    %v1934 = vunpack.c.l.b16 %v417
    %v1935 = vunpack.c.h.b16 %v417
    %v1936 = vunpack.c.l.b16 %v418
    %v1937 = vunpack.c.h.b16 %v418
    %v1938 = vunpack.c.l.b16 %v419
    %v1939 = vunpack.c.h.b16 %v419
    %v1940 = vunpack.c.l.b16 %v420
    %v1941 = vunpack.c.h.b16 %v420
    %v1942 = vunpack.c.l.b16 %v421
    %v1943 = vunpack.c.h.b16 %v421
    %v1944 = vunpack.c.l.b16 %v422
    %v1945 = vunpack.c.h.b16 %v422
    %v1946 = vunpack.c.l.b16 %v423
    %v1947 = vunpack.c.h.b16 %v423
    %v1948 = vunpack.c.l.b16 %v424
    %v1949 = vunpack.c.h.b16 %v424
    %v1950 = vunpack.c.l.b16 %v425
    %v1951 = vunpack.c.h.b16 %v425
    %v1952 = vunpack.c.l.b16 %v426
    %v1953 = vunpack.c.h.b16 %v426
    %v1954 = vunpack.c.l.b16 %v427
    %v1955 = vunpack.c.h.b16 %v427
    %v1956 = vunpack.c.l.b16 %v428
    %v1957 = vunpack.c.h.b16 %v428
    %v1958 = vunpack.c.l.b16 %v429
    %v1959 = vunpack.c.h.b16 %v429
    %v1960 = vunpack.c.l.b16 %v430
    %v1961 = vunpack.c.h.b16 %v430
    %v1962 = vunpack.c.l.b16 %v431
    %v1963 = vunpack.c.h.b16 %v431
    %v1964 = vunpack.c.l.b16 %v432
    %v1965 = vunpack.c.h.b16 %v432
    %v1966 = vunpack.c.l.b16 %v433
    %v1967 = vunpack.c.h.b16 %v433
    %v1968 = vunpack.c.l.b16 %v434
    %v1969 = vunpack.c.h.b16 %v434
    %v1970 = vunpack.c.l.b16 %v435
    %v1971 = vunpack.c.h.b16 %v435
    %v1972 = vunpack.c.l.b16 %v436
    %v1973 = vunpack.c.h.b16 %v436
    %v1974 = vunpack.c.l.b16 %v437
    %v1975 = vunpack.c.h.b16 %v437
    %v1976 = vunpack.c.l.b16 %v438
    %v1977 = vunpack.c.h.b16 %v438
    %v1978 = vunpack.c.l.b16 %v439
    %v1979 = vunpack.c.h.b16 %v439
    %v1980 = vunpack.c.l.b16 %v440
    %v1981 = vunpack.c.h.b16 %v440
    %v1982 = vunpack.c.l.b16 %v441
    %v1983 = vunpack.c.h.b16 %v441
    %v1984 = vunpack.c.l.b16 %v442
    %v1985 = vunpack.c.h.b16 %v442
    %v1986 = vunpack.c.l.b16 %v443
    %v1987 = vunpack.c.h.b16 %v443
    %v1988 = vunpack.c.l.b16 %v444
    %v1989 = vunpack.c.h.b16 %v444
    %v1990 = vunpack.c.l.b16 %v445
    %v1991 = vunpack.c.h.b16 %v445
    %v1992 = vunpack.c.l.b16 %v446
    %v1993 = vunpack.c.h.b16 %v446
    %v1994 = vunpack.c.l.b16 %v447
    %v1995 = vunpack.c.h.b16 %v447
    %v1996 = vunpack.c.l.b16 %v448
    %v1997 = vunpack.c.h.b16 %v448
    %v1998 = vunpack.c.l.b16 %v449
    %v1999 = vunpack.c.h.b16 %v449
    %v2000 = vunpack.c.l.b16 %v450
    %v2001 = vunpack.c.h.b16 %v450
    %v2002 = vunpack.c.l.b16 %v451
    %v2003 = vunpack.c.h.b16 %v451
    %v2004 = vunpack.c.l.b16 %v452
    %v2005 = vunpack.c.h.b16 %v452
    %v2006 = vunpack.c.l.b16 %v453
    %v2007 = vunpack.c.h.b16 %v453
    %v2008 = vunpack.c.l.b16 %v454
    %v2009 = vunpack.c.h.b16 %v454
    %v2010 = vunpack.c.l.b16 %v455
    %v2011 = vunpack.c.h.b16 %v455
    %v2012 = vunpack.c.l.b16 %v456
    %v2013 = vunpack.c.h.b16 %v456
    %v2014 = vunpack.c.l.b16 %v457
    %v2015 = vunpack.c.h.b16 %v457
    %v2016 = vunpack.c.l.b16 %v458
    %v2017 = vunpack.c.h.b16 %v458
    %v2018 = vunpack.c.l.b16 %v459
    %v2019 = vunpack.c.h.b16 %v459
    %v2020 = vunpack.c.l.b16 %v460
    %v2021 = vunpack.c.h.b16 %v460
    %v2022 = vunpack.c.l.b16 %v461
    %v2023 = vunpack.c.h.b16 %v461
    %v2024 = vunpack.c.l.b16 %v462
    %v2025 = vunpack.c.h.b16 %v462
    %v2026 = vunpack.c.l.b16 %v463
    %v2027 = vunpack.c.h.b16 %v463
    %v2028 = vunpack.c.l.b16 %v464
    %v2029 = vunpack.c.h.b16 %v464
    %v2030 = vunpack.c.l.b16 %v465
    %v2031 = vunpack.c.h.b16 %v465
    %v2032 = vunpack.c.l.b16 %v466
    %v2033 = vunpack.c.h.b16 %v466
    %v2034 = vunpack.c.l.b16 %v467
    %v2035 = vunpack.c.h.b16 %v467
    %v2036 = vunpack.c.l.b16 %v468
    %v2037 = vunpack.c.h.b16 %v468
    %v2038 = vunpack.c.l.b16 %v469
    %v2039 = vunpack.c.h.b16 %v469
    %v2040 = vunpack.c.l.b16 %v470
    %v2041 = vunpack.c.h.b16 %v470
    %v2042 = vunpack.c.l.b16 %v471
    %v2043 = vunpack.c.h.b16 %v471
    %v2044 = vunpack.c.l.b16 %v472
    %v2045 = vunpack.c.h.b16 %v472
    %v2046 = vunpack.c.l.b16 %v473
    %v2047 = vunpack.c.h.b16 %v473
    %v2048 = vunpack.c.l.b16 %v474
    %v2049 = vunpack.c.h.b16 %v474
    %v2050 = vunpack.c.l.b16 %v475
    %v2051 = vunpack.c.h.b16 %v475
    %v2052 = vunpack.c.l.b16 %v476
    %v2053 = vunpack.c.h.b16 %v476
    %v2054 = vunpack.c.l.b16 %v477
    %v2055 = vunpack.c.h.b16 %v477
    %v2056 = vunpack.c.l.b16 %v478
    %v2057 = vunpack.c.h.b16 %v478
    %v2058 = vunpack.c.l.b16 %v479
    %v2059 = vunpack.c.h.b16 %v479
    %v2060 = vunpack.c.l.b16 %v480
    %v2061 = vunpack.c.h.b16 %v480
    %v2062 = vunpack.c.l.b16 %v481
    %v2063 = vunpack.c.h.b16 %v481
    %v2064 = vunpack.c.l.b16 %v482
    %v2065 = vunpack.c.h.b16 %v482
    %v2066 = vunpack.c.l.b16 %v483
    %v2067 = vunpack.c.h.b16 %v483
    %v2068 = vunpack.c.l.b16 %v484
    %v2069 = vunpack.c.h.b16 %v484
    %v2070 = vunpack.c.l.b16 %v485
    %v2071 = vunpack.c.h.b16 %v485
    %v2072 = vunpack.c.l.b16 %v486
    %v2073 = vunpack.c.h.b16 %v486
    %v2074 = vunpack.c.l.b16 %v487
    %v2075 = vunpack.c.h.b16 %v487
    %v2076 = vunpack.c.l.b16 %v488
    %v2077 = vunpack.c.h.b16 %v488
    %v2078 = vunpack.c.l.b16 %v489
    %v2079 = vunpack.c.h.b16 %v489
    %v2080 = vunpack.c.l.b16 %v490
    %v2081 = vunpack.c.h.b16 %v490
    %v2082 = vunpack.c.l.b16 %v491
    %v2083 = vunpack.c.h.b16 %v491
    %v2084 = vunpack.c.l.b16 %v492
    %v2085 = vunpack.c.h.b16 %v492
    %v2086 = vunpack.c.l.b16 %v493
    %v2087 = vunpack.c.h.b16 %v493
    %v2088 = vunpack.c.l.b16 %v494
    %v2089 = vunpack.c.h.b16 %v494
    %v2090 = vunpack.c.l.b16 %v495
    %v2091 = vunpack.c.h.b16 %v495
    %v2092 = vunpack.c.l.b16 %v496
    %v2093 = vunpack.c.h.b16 %v496
    %v2094 = vunpack.c.l.b16 %v497
    %v2095 = vunpack.c.h.b16 %v497
    %v2096 = vunpack.c.l.b16 %v498
    %v2097 = vunpack.c.h.b16 %v498
    %v2098 = vunpack.c.l.b16 %v499
    %v2099 = vunpack.c.h.b16 %v499
    %v2100 = vunpack.c.l.b16 %v500
    %v2101 = vunpack.c.h.b16 %v500
    %v2102 = vunpack.c.l.b16 %v501
    %v2103 = vunpack.c.h.b16 %v501
    %v2104 = vunpack.c.l.b16 %v502
    %v2105 = vunpack.c.h.b16 %v502
    %v2106 = vunpack.c.l.b16 %v503
    %v2107 = vunpack.c.h.b16 %v503
    %v2108 = vunpack.c.l.b16 %v504
    %v2109 = vunpack.c.h.b16 %v504
    %v2110 = vunpack.c.l.b16 %v505
    %v2111 = vunpack.c.h.b16 %v505
    %v2112 = vunpack.c.l.b16 %v506
    %v2113 = vunpack.c.h.b16 %v506
    %v2114 = vunpack.c.l.b16 %v507
    %v2115 = vunpack.c.h.b16 %v507
    %v2116 = vunpack.c.l.b16 %v508
    %v2117 = vunpack.c.h.b16 %v508
    %v2118 = vunpack.c.l.b16 %v509
    %v2119 = vunpack.c.h.b16 %v509
    %v2120 = vunpack.c.l.b16 %v510
    %v2121 = vunpack.c.h.b16 %v510
    %v2122 = vunpack.c.l.b16 %v511
    %v2123 = vunpack.c.h.b16 %v511
    %v2124 = vunpack.c.l.b16 %v512
    %v2125 = vunpack.c.h.b16 %v512
    %v2126 = vunpack.c.l.b16 %v513
    %v2127 = vunpack.c.h.b16 %v513
    %v2128 = vunpack.c.l.b16 %v514
    %v2129 = vunpack.c.h.b16 %v514
    %v2130 = vunpack.c.l.b16 %v515
    %v2131 = vunpack.c.h.b16 %v515
    %v2132 = vunpack.c.l.b16 %v516
    %v2133 = vunpack.c.h.b16 %v516
    %v2134 = vunpack.c.l.b16 %v517
    %v2135 = vunpack.c.h.b16 %v517
    %v2136 = vunpack.c.l.b16 %v518
    %v2137 = vunpack.c.h.b16 %v518
    %v2138 = vunpack.c.l.b16 %v519
    %v2139 = vunpack.c.h.b16 %v519
    %v2140 = vunpack.c.l.b16 %v520
    %v2141 = vunpack.c.h.b16 %v520
    %v2142 = vunpack.c.l.b16 %v521
    %v2143 = vunpack.c.h.b16 %v521
    %v2144 = vunpack.c.l.b16 %v522
    %v2145 = vunpack.c.h.b16 %v522
    %v2146 = vunpack.c.l.b16 %v523
    %v2147 = vunpack.c.h.b16 %v523
    %v2148 = vunpack.c.l.b16 %v524
    %v2149 = vunpack.c.h.b16 %v524
    %v2150 = vunpack.c.l.b16 %v525
    %v2151 = vunpack.c.h.b16 %v525
    %v2152 = vunpack.c.l.b16 %v526
    %v2153 = vunpack.c.h.b16 %v526
    %v2154 = vunpack.c.l.b16 %v527
    %v2155 = vunpack.c.h.b16 %v527
    %v2156 = vunpack.c.l.b16 %v528
    %v2157 = vunpack.c.h.b16 %v528
    %v2158 = vunpack.c.l.b16 %v529
    %v2159 = vunpack.c.h.b16 %v529
    %v2160 = vunpack.c.l.b16 %v530
    %v2161 = vunpack.c.h.b16 %v530
    %v2162 = vunpack.c.l.b16 %v531
    %v2163 = vunpack.c.h.b16 %v531
    %v2164 = vunpack.c.l.b16 %v532
    %v2165 = vunpack.c.h.b16 %v532
    %v2166 = vunpack.c.l.b16 %v533
    %v2167 = vunpack.c.h.b16 %v533
    %v2168 = vunpack.c.l.b16 %v534
    %v2169 = vunpack.c.h.b16 %v534
    %v2170 = vunpack.c.l.b16 %v535
    %v2171 = vunpack.c.h.b16 %v535
    %v2172 = vunpack.c.l.b16 %v536
    %v2173 = vunpack.c.h.b16 %v536
    %v2174 = vunpack.c.l.b16 %v537
    %v2175 = vunpack.c.h.b16 %v537
    %v2176 = vunpack.c.l.b16 %v538
    %v2177 = vunpack.c.h.b16 %v538
    %v2178 = vunpack.c.l.b16 %v539
    %v2179 = vunpack.c.h.b16 %v539
    %v2180 = vunpack.c.l.b16 %v540
    %v2181 = vunpack.c.h.b16 %v540
    %v2182 = vunpack.c.l.b16 %v541
    %v2183 = vunpack.c.h.b16 %v541
    %v2184 = vunpack.c.l.b16 %v542
    %v2185 = vunpack.c.h.b16 %v542
    %v2186 = vunpack.c.l.b16 %v543
    %v2187 = vunpack.c.h.b16 %v543
    %v2188 = vunpack.c.l.b16 %v544
    %v2189 = vunpack.c.h.b16 %v544
    %v2190 = vunpack.c.l.b16 %v545
    %v2191 = vunpack.c.h.b16 %v545
    %v2192 = vunpack.c.l.b16 %v546
    %v2193 = vunpack.c.h.b16 %v546
    %v2194 = vunpack.c.l.b16 %v547
    %v2195 = vunpack.c.h.b16 %v547
    %v2196 = vunpack.c.l.b16 %v548
    %v2197 = vunpack.c.h.b16 %v548
    %v2198 = vunpack.c.l.b16 %v549
    %v2199 = vunpack.c.h.b16 %v549
    %v2200 = vunpack.c.l.b16 %v550
    %v2201 = vunpack.c.h.b16 %v550
    %v2202 = vunpack.c.l.b16 %v551
    %v2203 = vunpack.c.h.b16 %v551
    %v2204 = vunpack.c.l.b16 %v552
    %v2205 = vunpack.c.h.b16 %v552
    %v2206 = vunpack.c.l.b16 %v553
    %v2207 = vunpack.c.h.b16 %v553
    %v2208 = vunpack.c.l.b16 %v554
    %v2209 = vunpack.c.h.b16 %v554
    %v2210 = vunpack.c.l.b16 %v555
    %v2211 = vunpack.c.h.b16 %v555
    %v2212 = vunpack.c.l.b16 %v556
    %v2213 = vunpack.c.h.b16 %v556
    %v2214 = vunpack.c.l.b16 %v557
    %v2215 = vunpack.c.h.b16 %v557
    %v2216 = vunpack.c.l.b16 %v558
    %v2217 = vunpack.c.h.b16 %v558
    %v2218 = vunpack.c.l.b16 %v559
    %v2219 = vunpack.c.h.b16 %v559
    %v2220 = vunpack.c.l.b16 %v560
    %v2221 = vunpack.c.h.b16 %v560
    %v2222 = vunpack.c.l.b16 %v561
    %v2223 = vunpack.c.h.b16 %v561
    %v2224 = vunpack.c.l.b16 %v562
    %v2225 = vunpack.c.h.b16 %v562
    %v2226 = vunpack.c.l.b16 %v563
    %v2227 = vunpack.c.h.b16 %v563
    %v2228 = vunpack.c.l.b16 %v564
    %v2229 = vunpack.c.h.b16 %v564
    %v2230 = vunpack.c.l.b16 %v565
    %v2231 = vunpack.c.h.b16 %v565
    %v2232 = vunpack.c.l.b16 %v566
    %v2233 = vunpack.c.h.b16 %v566
    %v2234 = vunpack.c.l.b16 %v567
    %v2235 = vunpack.c.h.b16 %v567
    %v2236 = vunpack.c.l.b16 %v568
    %v2237 = vunpack.c.h.b16 %v568
    %v2238 = vunpack.c.l.b16 %v569
    %v2239 = vunpack.c.h.b16 %v569
    %v2240 = vunpack.c.l.b16 %v570
    %v2241 = vunpack.c.h.b16 %v570
    %v2242 = vunpack.c.l.b16 %v571
    %v2243 = vunpack.c.h.b16 %v571
    %v2244 = vunpack.c.l.b16 %v572
    %v2245 = vunpack.c.h.b16 %v572
    %v2246 = vunpack.c.l.b16 %v573
    %v2247 = vunpack.c.h.b16 %v573
    %v2248 = vunpack.c.l.b16 %v574
    %v2249 = vunpack.c.h.b16 %v574
    %v2250 = vunpack.c.l.b16 %v575
    %v2251 = vunpack.c.h.b16 %v575
    %v2252 = vunpack.c.l.b16 %v576
    %v2253 = vunpack.c.h.b16 %v576
    %v2254 = vunpack.c.l.b16 %v577
    %v2255 = vunpack.c.h.b16 %v577
    %v2256 = vunpack.c.l.b16 %v578
    %v2257 = vunpack.c.h.b16 %v578
    %v2258 = vunpack.c.l.b16 %v579
    %v2259 = vunpack.c.h.b16 %v579
    %v2260 = vunpack.c.l.b16 %v580
    %v2261 = vunpack.c.h.b16 %v580
    %v2262 = vunpack.c.l.b16 %v581
    %v2263 = vunpack.c.h.b16 %v581
    %v2264 = vunpack.c.l.b16 %v582
    %v2265 = vunpack.c.h.b16 %v582
    %v2266 = vunpack.c.l.b16 %v583
    %v2267 = vunpack.c.h.b16 %v583
    %v2268 = vunpack.c.l.b16 %v584
    %v2269 = vunpack.c.h.b16 %v584
    %v2270 = vunpack.c.l.b16 %v585
    %v2271 = vunpack.c.h.b16 %v585
    %v2272 = vunpack.c.l.b16 %v586
    %v2273 = vunpack.c.h.b16 %v586
    %v2274 = vunpack.c.l.b16 %v587
    %v2275 = vunpack.c.h.b16 %v587
    %v2276 = vunpack.c.l.b16 %v588
    %v2277 = vunpack.c.h.b16 %v588
    %v2278 = vunpack.c.l.b16 %v589
    %v2279 = vunpack.c.h.b16 %v589
    %v2280 = vunpack.c.l.b16 %v590
    %v2281 = vunpack.c.h.b16 %v590
    %v2282 = vunpack.c.l.b16 %v591
    %v2283 = vunpack.c.h.b16 %v591
    %v2284 = vunpack.c.l.b16 %v592
    %v2285 = vunpack.c.h.b16 %v592
    %v2286 = vunpack.c.l.b16 %v593
    %v2287 = vunpack.c.h.b16 %v593
    %v2288 = vunpack.c.l.b16 %v594
    %v2289 = vunpack.c.h.b16 %v594
    %v2290 = vunpack.c.l.b16 %v595
    %v2291 = vunpack.c.h.b16 %v595
    %v2292 = vunpack.c.l.b16 %v596
    %v2293 = vunpack.c.h.b16 %v596
    %v2294 = vunpack.c.l.b16 %v597
    %v2295 = vunpack.c.h.b16 %v597
    %v2296 = vunpack.c.l.b16 %v598
    %v2297 = vunpack.c.h.b16 %v598
    %v2298 = vunpack.c.l.b16 %v599
    %v2299 = vunpack.c.h.b16 %v599
    %v2300 = vunpack.c.l.b16 %v600
    %v2301 = vunpack.c.h.b16 %v600
    %v2302 = vunpack.c.l.b16 %v601
    %v2303 = vunpack.c.h.b16 %v601
    %v2304 = vunpack.c.l.b16 %v602
    %v2305 = vunpack.c.h.b16 %v602
    %v2306 = vunpack.c.l.b16 %v603
    %v2307 = vunpack.c.h.b16 %v603
    %v2308 = vunpack.c.l.b16 %v604
    %v2309 = vunpack.c.h.b16 %v604
    %v2310 = vunpack.c.l.b16 %v605
    %v2311 = vunpack.c.h.b16 %v605
    %v2312 = vunpack.c.l.b16 %v606
    %v2313 = vunpack.c.h.b16 %v606
    %v2314 = vunpack.c.l.b16 %v607
    %v2315 = vunpack.c.h.b16 %v607
    %v2316 = vunpack.c.l.b16 %v608
    %v2317 = vunpack.c.h.b16 %v608
    %v2318 = vunpack.c.l.b16 %v609
    %v2319 = vunpack.c.h.b16 %v609
    %v2320 = vunpack.c.l.b16 %v610
    %v2321 = vunpack.c.h.b16 %v610
    %v2322 = vunpack.c.l.b16 %v611
    %v2323 = vunpack.c.h.b16 %v611
    %v2324 = vunpack.c.l.b16 %v612
    %v2325 = vunpack.c.h.b16 %v612
    %v2326 = vunpack.c.l.b16 %v613
    %v2327 = vunpack.c.h.b16 %v613
    %v2328 = vunpack.c.l.b16 %v614
    %v2329 = vunpack.c.h.b16 %v614
    %v2330 = vunpack.c.l.b16 %v615
    %v2331 = vunpack.c.h.b16 %v615
    %v2332 = vunpack.c.l.b16 %v616
    %v2333 = vunpack.c.h.b16 %v616
    %v2334 = vunpack.c.l.b16 %v617
    %v2335 = vunpack.c.h.b16 %v617
    %v2336 = vunpack.c.l.b16 %v618
    %v2337 = vunpack.c.h.b16 %v618
    %v2338 = vunpack.c.l.b16 %v619
    %v2339 = vunpack.c.h.b16 %v619
    %v2340 = vunpack.c.l.b16 %v620
    %v2341 = vunpack.c.h.b16 %v620
    %v2342 = vunpack.c.l.b16 %v621
    %v2343 = vunpack.c.h.b16 %v621
    %v2344 = vunpack.c.l.b16 %v622
    %v2345 = vunpack.c.h.b16 %v622
    %v2346 = vunpack.c.l.b16 %v623
    %v2347 = vunpack.c.h.b16 %v623
    %v2348 = vunpack.c.l.b16 %v624
    %v2349 = vunpack.c.h.b16 %v624
    %v2350 = vunpack.c.l.b16 %v625
    %v2351 = vunpack.c.h.b16 %v625
    %v2352 = vunpack.c.l.b16 %v626
    %v2353 = vunpack.c.h.b16 %v626
    %v2354 = vunpack.c.l.b16 %v627
    %v2355 = vunpack.c.h.b16 %v627
    %v2356 = vpack.c.b16 %v1206, %v1204
    %v2357 = vpack.c.b16 %v1207, %v1205
    %v2358 = vpack.c.b16 %v1210, %v1208
    %v2359 = vpack.c.b16 %v1211, %v1209
    %v2360 = vpack.c.b16 %v1214, %v1212
    %v2361 = vpack.c.b16 %v1215, %v1213
    %v2362 = vpack.c.b16 %v1218, %v1216
    %v2363 = vpack.c.b16 %v1219, %v1217
    %v2364 = vpack.c.b16 %v1222, %v1220
    %v2365 = vpack.c.b16 %v1223, %v1221
    %v2366 = vpack.c.b16 %v1226, %v1224
    %v2367 = vpack.c.b16 %v1227, %v1225
    %v2368 = vpack.c.b16 %v1230, %v1228
    %v2369 = vpack.c.b16 %v1231, %v1229
    %v2370 = vpack.c.b16 %v1234, %v1232
    %v2371 = vpack.c.b16 %v1235, %v1233
    %v2372 = vpack.c.b16 %v1238, %v1236
    %v2373 = vpack.c.b16 %v1239, %v1237
    %v2374 = vpack.c.b16 %v1242, %v1240
    %v2375 = vpack.c.b16 %v1243, %v1241
    %v2376 = vpack.c.b16 %v1246, %v1244
    %v2377 = vpack.c.b16 %v1247, %v1245
    %v2378 = vpack.c.b16 %v1250, %v1248
    %v2379 = vpack.c.b16 %v1251, %v1249
    %v2380 = vpack.c.b16 %v1254, %v1252
    %v2381 = vpack.c.b16 %v1255, %v1253
    %v2382 = vpack.c.b16 %v1258, %v1256
    %v2383 = vpack.c.b16 %v1259, %v1257
    %v2384 = vpack.c.b16 %v1262, %v1260
    %v2385 = vpack.c.b16 %v1263, %v1261
    %v2386 = vpack.c.b16 %v1266, %v1264
    %v2387 = vpack.c.b16 %v1267, %v1265
    %v2388 = vpack.c.b16 %v1270, %v1268
    %v2389 = vpack.c.b16 %v1271, %v1269
    %v2390 = vpack.c.b16 %v1274, %v1272
    %v2391 = vpack.c.b16 %v1275, %v1273
    %v2392 = vpack.c.b16 %v1278, %v1276
    %v2393 = vpack.c.b16 %v1279, %v1277
    %v2394 = vpack.c.b16 %v1282, %v1280
    %v2395 = vpack.c.b16 %v1283, %v1281
    %v2396 = vpack.c.b16 %v1286, %v1284
    %v2397 = vpack.c.b16 %v1287, %v1285
    %v2398 = vpack.c.b16 %v1290, %v1288
    %v2399 = vpack.c.b16 %v1291, %v1289
    %v2400 = vpack.c.b16 %v1294, %v1292
    %v2401 = vpack.c.b16 %v1295, %v1293
    %v2402 = vpack.c.b16 %v1298, %v1296
    %v2403 = vpack.c.b16 %v1299, %v1297
    %v2404 = vpack.c.b16 %v1302, %v1300
    %v2405 = vpack.c.b16 %v1303, %v1301
    %v2406 = vpack.c.b16 %v1306, %v1304
    %v2407 = vpack.c.b16 %v1307, %v1305
    %v2408 = vpack.c.b16 %v1310, %v1308
    %v2409 = vpack.c.b16 %v1311, %v1309
    %v2410 = vpack.c.b16 %v1314, %v1312
    %v2411 = vpack.c.b16 %v1315, %v1313
    %v2412 = vpack.c.b16 %v1318, %v1316
    %v2413 = vpack.c.b16 %v1319, %v1317
    %v2414 = vpack.c.b16 %v1322, %v1320
    %v2415 = vpack.c.b16 %v1323, %v1321
    %v2416 = vpack.c.b16 %v1326, %v1324
    %v2417 = vpack.c.b16 %v1327, %v1325
    %v2418 = vpack.c.b16 %v1330, %v1328
    %v2419 = vpack.c.b16 %v1331, %v1329
    %v2420 = vpack.c.b16 %v1334, %v1332
    %v2421 = vpack.c.b16 %v1335, %v1333
    %v2422 = vpack.c.b16 %v1338, %v1336
    %v2423 = vpack.c.b16 %v1339, %v1337
    %v2424 = vpack.c.b16 %v1342, %v1340
    %v2425 = vpack.c.b16 %v1343, %v1341
    %v2426 = vpack.c.b16 %v1346, %v1344
    %v2427 = vpack.c.b16 %v1347, %v1345
    %v2428 = vpack.c.b16 %v1350, %v1348
    %v2429 = vpack.c.b16 %v1351, %v1349
    %v2430 = vpack.c.b16 %v1354, %v1352
    %v2431 = vpack.c.b16 %v1355, %v1353
    %v2432 = vpack.c.b16 %v1358, %v1356
    %v2433 = vpack.c.b16 %v1359, %v1357
    %v2434 = vpack.c.b16 %v1362, %v1360
    %v2435 = vpack.c.b16 %v1363, %v1361
    %v2436 = vpack.c.b16 %v1366, %v1364
    %v2437 = vpack.c.b16 %v1367, %v1365
    %v2438 = vpack.c.b16 %v1370, %v1368
    %v2439 = vpack.c.b16 %v1371, %v1369
    %v2440 = vpack.c.b16 %v1374, %v1372
    %v2441 = vpack.c.b16 %v1375, %v1373
    %v2442 = vpack.c.b16 %v1378, %v1376
    %v2443 = vpack.c.b16 %v1379, %v1377
    %v2444 = vpack.c.b16 %v1382, %v1380
    %v2445 = vpack.c.b16 %v1383, %v1381
    %v2446 = vpack.c.b16 %v1386, %v1384
    %v2447 = vpack.c.b16 %v1387, %v1385
    %v2448 = vpack.c.b16 %v1390, %v1388
    %v2449 = vpack.c.b16 %v1391, %v1389
    %v2450 = vpack.c.b16 %v1394, %v1392
    %v2451 = vpack.c.b16 %v1395, %v1393
    %v2452 = vpack.c.b16 %v1398, %v1396
    %v2453 = vpack.c.b16 %v1399, %v1397
    %v2454 = vpack.c.b16 %v1402, %v1400
    %v2455 = vpack.c.b16 %v1403, %v1401
    %v2456 = vpack.c.b16 %v1406, %v1404
    %v2457 = vpack.c.b16 %v1407, %v1405
    %v2458 = vpack.c.b16 %v1410, %v1408
    %v2459 = vpack.c.b16 %v1411, %v1409
    %v2460 = vpack.c.b16 %v1414, %v1412
    %v2461 = vpack.c.b16 %v1415, %v1413
    %v2462 = vpack.c.b16 %v1418, %v1416
    %v2463 = vpack.c.b16 %v1419, %v1417
    %v2464 = vpack.c.b16 %v1422, %v1420
    %v2465 = vpack.c.b16 %v1423, %v1421
    %v2466 = vpack.c.b16 %v1426, %v1424
    %v2467 = vpack.c.b16 %v1427, %v1425
    %v2468 = vpack.c.b16 %v1430, %v1428
    %v2469 = vpack.c.b16 %v1431, %v1429
    %v2470 = vpack.c.b16 %v1434, %v1432
    %v2471 = vpack.c.b16 %v1435, %v1433
    %v2472 = vpack.c.b16 %v1438, %v1436
    %v2473 = vpack.c.b16 %v1439, %v1437
    %v2474 = vpack.c.b16 %v1442, %v1440
    %v2475 = vpack.c.b16 %v1443, %v1441
    %v2476 = vpack.c.b16 %v1446, %v1444
    %v2477 = vpack.c.b16 %v1447, %v1445
    %v2478 = vpack.c.b16 %v1450, %v1448
    %v2479 = vpack.c.b16 %v1451, %v1449
    %v2480 = vpack.c.b16 %v1454, %v1452
    %v2481 = vpack.c.b16 %v1455, %v1453
    %v2482 = vpack.c.b16 %v1458, %v1456
    %v2483 = vpack.c.b16 %v1459, %v1457
    %v2484 = vpack.c.b16 %v1462, %v1460
    %v2485 = vpack.c.b16 %v1463, %v1461
    %v2486 = vpack.c.b16 %v1466, %v1464
    %v2487 = vpack.c.b16 %v1467, %v1465
    %v2488 = vpack.c.b16 %v1470, %v1468
    %v2489 = vpack.c.b16 %v1471, %v1469
    %v2490 = vpack.c.b16 %v1474, %v1472
    %v2491 = vpack.c.b16 %v1475, %v1473
    %v2492 = vpack.c.b16 %v1478, %v1476
    %v2493 = vpack.c.b16 %v1479, %v1477
    %v2494 = vpack.c.b16 %v1482, %v1480
    %v2495 = vpack.c.b16 %v1483, %v1481
    %v2496 = vpack.c.b16 %v1486, %v1484
    %v2497 = vpack.c.b16 %v1487, %v1485
    %v2498 = vpack.c.b16 %v1490, %v1488
    %v2499 = vpack.c.b16 %v1491, %v1489
    %v2500 = vpack.c.b16 %v1494, %v1492
    %v2501 = vpack.c.b16 %v1495, %v1493
    %v2502 = vpack.c.b16 %v1498, %v1496
    %v2503 = vpack.c.b16 %v1499, %v1497
    %v2504 = vpack.c.b16 %v1502, %v1500
    %v2505 = vpack.c.b16 %v1503, %v1501
    %v2506 = vpack.c.b16 %v1506, %v1504
    %v2507 = vpack.c.b16 %v1507, %v1505
    %v2508 = vpack.c.b16 %v1510, %v1508
    %v2509 = vpack.c.b16 %v1511, %v1509
    %v2510 = vpack.c.b16 %v1514, %v1512
    %v2511 = vpack.c.b16 %v1515, %v1513
    %v2512 = vpack.c.b16 %v1518, %v1516
    %v2513 = vpack.c.b16 %v1519, %v1517
    %v2514 = vpack.c.b16 %v1522, %v1520
    %v2515 = vpack.c.b16 %v1523, %v1521
    %v2516 = vpack.c.b16 %v1526, %v1524
    %v2517 = vpack.c.b16 %v1527, %v1525
    %v2518 = vpack.c.b16 %v1530, %v1528
    %v2519 = vpack.c.b16 %v1531, %v1529
    %v2520 = vpack.c.b16 %v1534, %v1532
    %v2521 = vpack.c.b16 %v1535, %v1533
    %v2522 = vpack.c.b16 %v1538, %v1536
    %v2523 = vpack.c.b16 %v1539, %v1537
    %v2524 = vpack.c.b16 %v1542, %v1540
    %v2525 = vpack.c.b16 %v1543, %v1541
    %v2526 = vpack.c.b16 %v1546, %v1544
    %v2527 = vpack.c.b16 %v1547, %v1545
    %v2528 = vpack.c.b16 %v1550, %v1548
    %v2529 = vpack.c.b16 %v1551, %v1549
    %v2530 = vpack.c.b16 %v1554, %v1552
    %v2531 = vpack.c.b16 %v1555, %v1553
    %v2532 = vpack.c.b16 %v1558, %v1556
    %v2533 = vpack.c.b16 %v1559, %v1557
    %v2534 = vpack.c.b16 %v1562, %v1560
    %v2535 = vpack.c.b16 %v1563, %v1561
    %v2536 = vpack.c.b16 %v1566, %v1564
    %v2537 = vpack.c.b16 %v1567, %v1565
    %v2538 = vpack.c.b16 %v1570, %v1568
    %v2539 = vpack.c.b16 %v1571, %v1569
    %v2540 = vpack.c.b16 %v1574, %v1572
    %v2541 = vpack.c.b16 %v1575, %v1573
    %v2542 = vpack.c.b16 %v1578, %v1576
    %v2543 = vpack.c.b16 %v1579, %v1577
    %v2544 = vpack.c.b16 %v1582, %v1580
    %v2545 = vpack.c.b16 %v1583, %v1581
    %v2546 = vpack.c.b16 %v1586, %v1584
    %v2547 = vpack.c.b16 %v1587, %v1585
    %v2548 = vpack.c.b16 %v1590, %v1588
    %v2549 = vpack.c.b16 %v1591, %v1589
    %v2550 = vpack.c.b16 %v1594, %v1592
    %v2551 = vpack.c.b16 %v1595, %v1593
    %v2552 = vpack.c.b16 %v1598, %v1596
    %v2553 = vpack.c.b16 %v1599, %v1597
    %v2554 = vpack.c.b16 %v1602, %v1600
    %v2555 = vpack.c.b16 %v1603, %v1601
    %v2556 = vpack.c.b16 %v1606, %v1604
    %v2557 = vpack.c.b16 %v1607, %v1605
    %v2558 = vpack.c.b16 %v1610, %v1608
    %v2559 = vpack.c.b16 %v1611, %v1609
    %v2560 = vpack.c.b16 %v1614, %v1612
    %v2561 = vpack.c.b16 %v1615, %v1613
    %v2562 = vpack.c.b16 %v1618, %v1616
    %v2563 = vpack.c.b16 %v1619, %v1617
    %v2564 = vpack.c.b16 %v1622, %v1620
    %v2565 = vpack.c.b16 %v1623, %v1621
    %v2566 = vpack.c.b16 %v1626, %v1624
    %v2567 = vpack.c.b16 %v1627, %v1625
    %v2568 = vpack.c.b16 %v1630, %v1628
    %v2569 = vpack.c.b16 %v1631, %v1629
    %v2570 = vpack.c.b16 %v1634, %v1632
    %v2571 = vpack.c.b16 %v1635, %v1633
    %v2572 = vpack.c.b16 %v1638, %v1636
    %v2573 = vpack.c.b16 %v1639, %v1637
    %v2574 = vpack.c.b16 %v1642, %v1640
    %v2575 = vpack.c.b16 %v1643, %v1641
    %v2576 = vpack.c.b16 %v1646, %v1644
    %v2577 = vpack.c.b16 %v1647, %v1645
    %v2578 = vpack.c.b16 %v1650, %v1648
    %v2579 = vpack.c.b16 %v1651, %v1649
    %v2580 = vpack.c.b16 %v1654, %v1652
    %v2581 = vpack.c.b16 %v1655, %v1653
    %v2582 = vpack.c.b16 %v1658, %v1656
    %v2583 = vpack.c.b16 %v1659, %v1657
    %v2584 = vpack.c.b16 %v1662, %v1660
    %v2585 = vpack.c.b16 %v1663, %v1661
    %v2586 = vpack.c.b16 %v1666, %v1664
    %v2587 = vpack.c.b16 %v1667, %v1665
    %v2588 = vpack.c.b16 %v1670, %v1668
    %v2589 = vpack.c.b16 %v1671, %v1669
    %v2590 = vpack.c.b16 %v1674, %v1672
    %v2591 = vpack.c.b16 %v1675, %v1673
    %v2592 = vpack.c.b16 %v1678, %v1676
    %v2593 = vpack.c.b16 %v1679, %v1677
    %v2594 = vpack.c.b16 %v1682, %v1680
    %v2595 = vpack.c.b16 %v1683, %v1681
    %v2596 = vpack.c.b16 %v1686, %v1684
    %v2597 = vpack.c.b16 %v1687, %v1685
    %v2598 = vpack.c.b16 %v1690, %v1688
    %v2599 = vpack.c.b16 %v1691, %v1689
    %v2600 = vpack.c.b16 %v1694, %v1692
    %v2601 = vpack.c.b16 %v1695, %v1693
    %v2602 = vpack.c.b16 %v1698, %v1696
    %v2603 = vpack.c.b16 %v1699, %v1697
    %v2604 = vpack.c.b16 %v1702, %v1700
    %v2605 = vpack.c.b16 %v1703, %v1701
    %v2606 = vpack.c.b16 %v1706, %v1704
    %v2607 = vpack.c.b16 %v1707, %v1705
    %v2608 = vpack.c.b16 %v1710, %v1708
    %v2609 = vpack.c.b16 %v1711, %v1709
    %v2610 = vpack.c.b16 %v1714, %v1712
    %v2611 = vpack.c.b16 %v1715, %v1713
    %v2612 = vpack.c.b16 %v1718, %v1716
    %v2613 = vpack.c.b16 %v1719, %v1717
    %v2614 = vpack.c.b16 %v1722, %v1720
    %v2615 = vpack.c.b16 %v1723, %v1721
    %v2616 = vpack.c.b16 %v1726, %v1724
    %v2617 = vpack.c.b16 %v1727, %v1725
    %v2618 = vpack.c.b16 %v1730, %v1728
    %v2619 = vpack.c.b16 %v1731, %v1729
    %v2620 = vpack.c.b16 %v1734, %v1732
    %v2621 = vpack.c.b16 %v1735, %v1733
    %v2622 = vpack.c.b16 %v1738, %v1736
    %v2623 = vpack.c.b16 %v1739, %v1737
    %v2624 = vpack.c.b16 %v1742, %v1740
    %v2625 = vpack.c.b16 %v1743, %v1741
    %v2626 = vpack.c.b16 %v1746, %v1744
    %v2627 = vpack.c.b16 %v1747, %v1745
    %v2628 = vpack.c.b16 %v1750, %v1748
    %v2629 = vpack.c.b16 %v1751, %v1749
    %v2630 = vpack.c.b16 %v1754, %v1752
    %v2631 = vpack.c.b16 %v1755, %v1753
    %v2632 = vpack.c.b16 %v1758, %v1756
    %v2633 = vpack.c.b16 %v1759, %v1757
    %v2634 = vpack.c.b16 %v1762, %v1760
    %v2635 = vpack.c.b16 %v1763, %v1761
    %v2636 = vpack.c.b16 %v1766, %v1764
    %v2637 = vpack.c.b16 %v1767, %v1765
    %v2638 = vpack.c.b16 %v1770, %v1768
    %v2639 = vpack.c.b16 %v1771, %v1769
    %v2640 = vpack.c.b16 %v1774, %v1772
    %v2641 = vpack.c.b16 %v1775, %v1773
    %v2642 = vpack.c.b16 %v1778, %v1776
    %v2643 = vpack.c.b16 %v1779, %v1777
    %v2644 = vpack.c.b16 %v1782, %v1780
    %v2645 = vpack.c.b16 %v1783, %v1781
    %v2646 = vpack.c.b16 %v1786, %v1784
    %v2647 = vpack.c.b16 %v1787, %v1785
    %v2648 = vpack.c.b16 %v1790, %v1788
    %v2649 = vpack.c.b16 %v1791, %v1789
    %v2650 = vpack.c.b16 %v1794, %v1792
    %v2651 = vpack.c.b16 %v1795, %v1793
    %v2652 = vpack.c.b16 %v1798, %v1796
    %v2653 = vpack.c.b16 %v1799, %v1797
    %v2654 = vpack.c.b16 %v1802, %v1800
    %v2655 = vpack.c.b16 %v1803, %v1801
    %v2656 = vpack.c.b16 %v1806, %v1804
    %v2657 = vpack.c.b16 %v1807, %v1805
    %v2658 = vpack.c.b16 %v1810, %v1808
    %v2659 = vpack.c.b16 %v1811, %v1809
    %v2660 = vpack.c.b16 %v1814, %v1812
    %v2661 = vpack.c.b16 %v1815, %v1813
    %v2662 = vpack.c.b16 %v1818, %v1816
    %v2663 = vpack.c.b16 %v1819, %v1817
    %v2664 = vpack.c.b16 %v1822, %v1820
    %v2665 = vpack.c.b16 %v1823, %v1821
    %v2666 = vpack.c.b16 %v1826, %v1824
    %v2667 = vpack.c.b16 %v1827, %v1825
    %v2668 = vpack.c.b16 %v1830, %v1828
    %v2669 = vpack.c.b16 %v1831, %v1829
    %v2670 = vpack.c.b16 %v1834, %v1832
    %v2671 = vpack.c.b16 %v1835, %v1833
    %v2672 = vpack.c.b16 %v1838, %v1836
    %v2673 = vpack.c.b16 %v1839, %v1837
    %v2674 = vpack.c.b16 %v1842, %v1840
    %v2675 = vpack.c.b16 %v1843, %v1841
    %v2676 = vpack.c.b16 %v1846, %v1844
    %v2677 = vpack.c.b16 %v1847, %v1845
    %v2678 = vpack.c.b16 %v1850, %v1848
    %v2679 = vpack.c.b16 %v1851, %v1849
    %v2680 = vpack.c.b16 %v1854, %v1852
    %v2681 = vpack.c.b16 %v1855, %v1853
    %v2682 = vpack.c.b16 %v1858, %v1856
    %v2683 = vpack.c.b16 %v1859, %v1857
    %v2684 = vpack.c.b16 %v1862, %v1860
    %v2685 = vpack.c.b16 %v1863, %v1861
    %v2686 = vpack.c.b16 %v1866, %v1864
    %v2687 = vpack.c.b16 %v1867, %v1865
    %v2688 = vpack.c.b16 %v1870, %v1868
    %v2689 = vpack.c.b16 %v1871, %v1869
    %v2690 = vpack.c.b16 %v1874, %v1872
    %v2691 = vpack.c.b16 %v1875, %v1873
    %v2692 = vpack.c.b16 %v1878, %v1876
    %v2693 = vpack.c.b16 %v1879, %v1877
    %v2694 = vpack.c.b16 %v1882, %v1880
    %v2695 = vpack.c.b16 %v1883, %v1881
    %v2696 = vpack.c.b16 %v1886, %v1884
    %v2697 = vpack.c.b16 %v1887, %v1885
    %v2698 = vpack.c.b16 %v1890, %v1888
    %v2699 = vpack.c.b16 %v1891, %v1889
    %v2700 = vpack.c.b16 %v1894, %v1892
    %v2701 = vpack.c.b16 %v1895, %v1893
    %v2702 = vpack.c.b16 %v1898, %v1896
    %v2703 = vpack.c.b16 %v1899, %v1897
    %v2704 = vpack.c.b16 %v1902, %v1900
    %v2705 = vpack.c.b16 %v1903, %v1901
    %v2706 = vpack.c.b16 %v1906, %v1904
    %v2707 = vpack.c.b16 %v1907, %v1905
    %v2708 = vpack.c.b16 %v1910, %v1908
    %v2709 = vpack.c.b16 %v1911, %v1909
    %v2710 = vpack.c.b16 %v1914, %v1912
    %v2711 = vpack.c.b16 %v1915, %v1913
    %v2712 = vpack.c.b16 %v1918, %v1916
    %v2713 = vpack.c.b16 %v1919, %v1917
    %v2714 = vpack.c.b16 %v1922, %v1920
    %v2715 = vpack.c.b16 %v1923, %v1921
    %v2716 = vpack.c.b16 %v1926, %v1924
    %v2717 = vpack.c.b16 %v1927, %v1925
    %v2718 = vpack.c.b16 %v1930, %v1928
    %v2719 = vpack.c.b16 %v1931, %v1929
    %v2720 = vpack.c.b16 %v1934, %v1932
    %v2721 = vpack.c.b16 %v1935, %v1933
    %v2722 = vpack.c.b16 %v1938, %v1936
    %v2723 = vpack.c.b16 %v1939, %v1937
    %v2724 = vpack.c.b16 %v1942, %v1940
    %v2725 = vpack.c.b16 %v1943, %v1941
    %v2726 = vpack.c.b16 %v1946, %v1944
    %v2727 = vpack.c.b16 %v1947, %v1945
    %v2728 = vpack.c.b16 %v1950, %v1948
    %v2729 = vpack.c.b16 %v1951, %v1949
    %v2730 = vpack.c.b16 %v1954, %v1952
    %v2731 = vpack.c.b16 %v1955, %v1953
    %v2732 = vpack.c.b16 %v1958, %v1956
    %v2733 = vpack.c.b16 %v1959, %v1957
    %v2734 = vpack.c.b16 %v1962, %v1960
    %v2735 = vpack.c.b16 %v1963, %v1961
    %v2736 = vpack.c.b16 %v1966, %v1964
    %v2737 = vpack.c.b16 %v1967, %v1965
    %v2738 = vpack.c.b16 %v1970, %v1968
    %v2739 = vpack.c.b16 %v1971, %v1969
    %v2740 = vpack.c.b16 %v1974, %v1972
    %v2741 = vpack.c.b16 %v1975, %v1973
    %v2742 = vpack.c.b16 %v1978, %v1976
    %v2743 = vpack.c.b16 %v1979, %v1977
    %v2744 = vpack.c.b16 %v1982, %v1980
    %v2745 = vpack.c.b16 %v1983, %v1981
    %v2746 = vpack.c.b16 %v1986, %v1984
    %v2747 = vpack.c.b16 %v1987, %v1985
    %v2748 = vpack.c.b16 %v1990, %v1988
    %v2749 = vpack.c.b16 %v1991, %v1989
    %v2750 = vpack.c.b16 %v1994, %v1992
    %v2751 = vpack.c.b16 %v1995, %v1993
    %v2752 = vpack.c.b16 %v1998, %v1996
    %v2753 = vpack.c.b16 %v1999, %v1997
    %v2754 = vpack.c.b16 %v2002, %v2000
    %v2755 = vpack.c.b16 %v2003, %v2001
    %v2756 = vpack.c.b16 %v2006, %v2004
    %v2757 = vpack.c.b16 %v2007, %v2005
    %v2758 = vpack.c.b16 %v2010, %v2008
    %v2759 = vpack.c.b16 %v2011, %v2009
    %v2760 = vpack.c.b16 %v2014, %v2012
    %v2761 = vpack.c.b16 %v2015, %v2013
    %v2762 = vpack.c.b16 %v2018, %v2016
    %v2763 = vpack.c.b16 %v2019, %v2017
    %v2764 = vpack.c.b16 %v2022, %v2020
    %v2765 = vpack.c.b16 %v2023, %v2021
    %v2766 = vpack.c.b16 %v2026, %v2024
    %v2767 = vpack.c.b16 %v2027, %v2025
    %v2768 = vpack.c.b16 %v2030, %v2028
    %v2769 = vpack.c.b16 %v2031, %v2029
    %v2770 = vpack.c.b16 %v2034, %v2032
    %v2771 = vpack.c.b16 %v2035, %v2033
    %v2772 = vpack.c.b16 %v2038, %v2036
    %v2773 = vpack.c.b16 %v2039, %v2037
    %v2774 = vpack.c.b16 %v2042, %v2040
    %v2775 = vpack.c.b16 %v2043, %v2041
    %v2776 = vpack.c.b16 %v2046, %v2044
    %v2777 = vpack.c.b16 %v2047, %v2045
    %v2778 = vpack.c.b16 %v2050, %v2048
    %v2779 = vpack.c.b16 %v2051, %v2049
    %v2780 = vpack.c.b16 %v2054, %v2052
    %v2781 = vpack.c.b16 %v2055, %v2053
    %v2782 = vpack.c.b16 %v2058, %v2056
    %v2783 = vpack.c.b16 %v2059, %v2057
    %v2784 = vpack.c.b16 %v2062, %v2060
    %v2785 = vpack.c.b16 %v2063, %v2061
    %v2786 = vpack.c.b16 %v2066, %v2064
    %v2787 = vpack.c.b16 %v2067, %v2065
    %v2788 = vpack.c.b16 %v2070, %v2068
    %v2789 = vpack.c.b16 %v2071, %v2069
    %v2790 = vpack.c.b16 %v2074, %v2072
    %v2791 = vpack.c.b16 %v2075, %v2073
    %v2792 = vpack.c.b16 %v2078, %v2076
    %v2793 = vpack.c.b16 %v2079, %v2077
    %v2794 = vpack.c.b16 %v2082, %v2080
    %v2795 = vpack.c.b16 %v2083, %v2081
    %v2796 = vpack.c.b16 %v2086, %v2084
    %v2797 = vpack.c.b16 %v2087, %v2085
    %v2798 = vpack.c.b16 %v2090, %v2088
    %v2799 = vpack.c.b16 %v2091, %v2089
    %v2800 = vpack.c.b16 %v2094, %v2092
    %v2801 = vpack.c.b16 %v2095, %v2093
    %v2802 = vpack.c.b16 %v2098, %v2096
    %v2803 = vpack.c.b16 %v2099, %v2097
    %v2804 = vpack.c.b16 %v2102, %v2100
    %v2805 = vpack.c.b16 %v2103, %v2101
    %v2806 = vpack.c.b16 %v2106, %v2104
    %v2807 = vpack.c.b16 %v2107, %v2105
    %v2808 = vpack.c.b16 %v2110, %v2108
    %v2809 = vpack.c.b16 %v2111, %v2109
    %v2810 = vpack.c.b16 %v2114, %v2112
    %v2811 = vpack.c.b16 %v2115, %v2113
    %v2812 = vpack.c.b16 %v2118, %v2116
    %v2813 = vpack.c.b16 %v2119, %v2117
    %v2814 = vpack.c.b16 %v2122, %v2120
    %v2815 = vpack.c.b16 %v2123, %v2121
    %v2816 = vpack.c.b16 %v2126, %v2124
    %v2817 = vpack.c.b16 %v2127, %v2125
    %v2818 = vpack.c.b16 %v2130, %v2128
    %v2819 = vpack.c.b16 %v2131, %v2129
    %v2820 = vpack.c.b16 %v2134, %v2132
    %v2821 = vpack.c.b16 %v2135, %v2133
    %v2822 = vpack.c.b16 %v2138, %v2136
    %v2823 = vpack.c.b16 %v2139, %v2137
    %v2824 = vpack.c.b16 %v2142, %v2140
    %v2825 = vpack.c.b16 %v2143, %v2141
    %v2826 = vpack.c.b16 %v2146, %v2144
    %v2827 = vpack.c.b16 %v2147, %v2145
    %v2828 = vpack.c.b16 %v2150, %v2148
    %v2829 = vpack.c.b16 %v2151, %v2149
    %v2830 = vpack.c.b16 %v2154, %v2152
    %v2831 = vpack.c.b16 %v2155, %v2153
    %v2832 = vpack.c.b16 %v2158, %v2156
    %v2833 = vpack.c.b16 %v2159, %v2157
    %v2834 = vpack.c.b16 %v2162, %v2160
    %v2835 = vpack.c.b16 %v2163, %v2161
    %v2836 = vpack.c.b16 %v2166, %v2164
    %v2837 = vpack.c.b16 %v2167, %v2165
    %v2838 = vpack.c.b16 %v2170, %v2168
    %v2839 = vpack.c.b16 %v2171, %v2169
    %v2840 = vpack.c.b16 %v2174, %v2172
    %v2841 = vpack.c.b16 %v2175, %v2173
    %v2842 = vpack.c.b16 %v2178, %v2176
    %v2843 = vpack.c.b16 %v2179, %v2177
    %v2844 = vpack.c.b16 %v2182, %v2180
    %v2845 = vpack.c.b16 %v2183, %v2181
    %v2846 = vpack.c.b16 %v2186, %v2184
    %v2847 = vpack.c.b16 %v2187, %v2185
    %v2848 = vpack.c.b16 %v2190, %v2188
    %v2849 = vpack.c.b16 %v2191, %v2189
    %v2850 = vpack.c.b16 %v2194, %v2192
    %v2851 = vpack.c.b16 %v2195, %v2193
    %v2852 = vpack.c.b16 %v2198, %v2196
    %v2853 = vpack.c.b16 %v2199, %v2197
    %v2854 = vpack.c.b16 %v2202, %v2200
    %v2855 = vpack.c.b16 %v2203, %v2201
    %v2856 = vpack.c.b16 %v2206, %v2204
    %v2857 = vpack.c.b16 %v2207, %v2205
    %v2858 = vpack.c.b16 %v2210, %v2208
    %v2859 = vpack.c.b16 %v2211, %v2209
    %v2860 = vpack.c.b16 %v2214, %v2212
    %v2861 = vpack.c.b16 %v2215, %v2213
    %v2862 = vpack.c.b16 %v2218, %v2216
    %v2863 = vpack.c.b16 %v2219, %v2217
    %v2864 = vpack.c.b16 %v2222, %v2220
    %v2865 = vpack.c.b16 %v2223, %v2221
    %v2866 = vpack.c.b16 %v2226, %v2224
    %v2867 = vpack.c.b16 %v2227, %v2225
    %v2868 = vpack.c.b16 %v2230, %v2228
    %v2869 = vpack.c.b16 %v2231, %v2229
    %v2870 = vpack.c.b16 %v2234, %v2232
    %v2871 = vpack.c.b16 %v2235, %v2233
    %v2872 = vpack.c.b16 %v2238, %v2236
    %v2873 = vpack.c.b16 %v2239, %v2237
    %v2874 = vpack.c.b16 %v2242, %v2240
    %v2875 = vpack.c.b16 %v2243, %v2241
    %v2876 = vpack.c.b16 %v2246, %v2244
    %v2877 = vpack.c.b16 %v2247, %v2245
    %v2878 = vpack.c.b16 %v2250, %v2248
    %v2879 = vpack.c.b16 %v2251, %v2249
    %v2880 = vpack.c.b16 %v2254, %v2252
    %v2881 = vpack.c.b16 %v2255, %v2253
    %v2882 = vpack.c.b16 %v2258, %v2256
    %v2883 = vpack.c.b16 %v2259, %v2257
    %v2884 = vpack.c.b16 %v2262, %v2260
    %v2885 = vpack.c.b16 %v2263, %v2261
    %v2886 = vpack.c.b16 %v2266, %v2264
    %v2887 = vpack.c.b16 %v2267, %v2265
    %v2888 = vpack.c.b16 %v2270, %v2268
    %v2889 = vpack.c.b16 %v2271, %v2269
    %v2890 = vpack.c.b16 %v2274, %v2272
    %v2891 = vpack.c.b16 %v2275, %v2273
    %v2892 = vpack.c.b16 %v2278, %v2276
    %v2893 = vpack.c.b16 %v2279, %v2277
    %v2894 = vpack.c.b16 %v2282, %v2280
    %v2895 = vpack.c.b16 %v2283, %v2281
    %v2896 = vpack.c.b16 %v2286, %v2284
    %v2897 = vpack.c.b16 %v2287, %v2285
    %v2898 = vpack.c.b16 %v2290, %v2288
    %v2899 = vpack.c.b16 %v2291, %v2289
    %v2900 = vpack.c.b16 %v2294, %v2292
    %v2901 = vpack.c.b16 %v2295, %v2293
    %v2902 = vpack.c.b16 %v2298, %v2296
    %v2903 = vpack.c.b16 %v2299, %v2297
    %v2904 = vpack.c.b16 %v2302, %v2300
    %v2905 = vpack.c.b16 %v2303, %v2301
    %v2906 = vpack.c.b16 %v2306, %v2304
    %v2907 = vpack.c.b16 %v2307, %v2305
    %v2908 = vpack.c.b16 %v2310, %v2308
    %v2909 = vpack.c.b16 %v2311, %v2309
    %v2910 = vpack.c.b16 %v2314, %v2312
    %v2911 = vpack.c.b16 %v2315, %v2313
    %v2912 = vpack.c.b16 %v2318, %v2316
    %v2913 = vpack.c.b16 %v2319, %v2317
    %v2914 = vpack.c.b16 %v2322, %v2320
    %v2915 = vpack.c.b16 %v2323, %v2321
    %v2916 = vpack.c.b16 %v2326, %v2324
    %v2917 = vpack.c.b16 %v2327, %v2325
    %v2918 = vpack.c.b16 %v2330, %v2328
    %v2919 = vpack.c.b16 %v2331, %v2329
    %v2920 = vpack.c.b16 %v2334, %v2332
    %v2921 = vpack.c.b16 %v2335, %v2333
    %v2922 = vpack.c.b16 %v2338, %v2336
    %v2923 = vpack.c.b16 %v2339, %v2337
    %v2924 = vpack.c.b16 %v2342, %v2340
    %v2925 = vpack.c.b16 %v2343, %v2341
    %v2926 = vpack.c.b16 %v2346, %v2344
    %v2927 = vpack.c.b16 %v2347, %v2345
    %v2928 = vpack.c.b16 %v2350, %v2348
    %v2929 = vpack.c.b16 %v2351, %v2349
    %v2930 = vpack.c.b16 %v2354, %v2352
    %v2931 = vpack.c.b16 %v2355, %v2353
    %vm3220 = vcmask 392192
    %v3222 = vsel %vm3220, %v2357, 0
    %v3225 = vsel %vm3220, %v2359, 0
    %v3228 = vsel %vm3220, %v2361, 0
    %v3231 = vsel %vm3220, %v2363, 0
    %v3234 = vsel %vm3220, %v2365, 0
    %v3237 = vsel %vm3220, %v2367, 0
    %v3240 = vsel %vm3220, %v2369, 0
    %v3243 = vsel %vm3220, %v2371, 0
    %v3246 = vsel %vm3220, %v2373, 0
    %v3249 = vsel %vm3220, %v2375, 0
    %v3252 = vsel %vm3220, %v2377, 0
    %v3255 = vsel %vm3220, %v2379, 0
    %v3258 = vsel %vm3220, %v2381, 0
    %v3261 = vsel %vm3220, %v2383, 0
    %v3264 = vsel %vm3220, %v2385, 0
    %v3267 = vsel %vm3220, %v2387, 0
    %v3270 = vsel %vm3220, %v2389, 0
    %v3273 = vsel %vm3220, %v2391, 0
    %v3276 = vsel %vm3220, %v2393, 0
    %v3279 = vsel %vm3220, %v2395, 0
    %v3282 = vsel %vm3220, %v2397, 0
    %v3285 = vsel %vm3220, %v2399, 0
    %v3288 = vsel %vm3220, %v2401, 0
    %v3291 = vsel %vm3220, %v2403, 0
    %v3294 = vsel %vm3220, %v2405, 0
    %v3297 = vsel %vm3220, %v2407, 0
    %v3300 = vsel %vm3220, %v2409, 0
    %v3303 = vsel %vm3220, %v2411, 0
    %v3306 = vsel %vm3220, %v2413, 0
    %v3309 = vsel %vm3220, %v2415, 0
    %v3312 = vsel %vm3220, %v2417, 0
    %v3315 = vsel %vm3220, %v2419, 0
    %v3318 = vsel %vm3220, %v2421, 0
    %v3321 = vsel %vm3220, %v2423, 0
    %v3324 = vsel %vm3220, %v2425, 0
    %v3327 = vsel %vm3220, %v2427, 0
    %v3330 = vsel %vm3220, %v2429, 0
    %v3333 = vsel %vm3220, %v2431, 0
    %v3336 = vsel %vm3220, %v2433, 0
    %v3339 = vsel %vm3220, %v2435, 0
    %v3342 = vsel %vm3220, %v2437, 0
    %v3345 = vsel %vm3220, %v2439, 0
    %v3348 = vsel %vm3220, %v2441, 0
    %v3351 = vsel %vm3220, %v2443, 0
    %v3354 = vsel %vm3220, %v2445, 0
    %v3357 = vsel %vm3220, %v2447, 0
    %v3360 = vsel %vm3220, %v2449, 0
    %v3363 = vsel %vm3220, %v2451, 0
    %v3366 = vsel %vm3220, %v2453, 0
    %v3369 = vsel %vm3220, %v2455, 0
    %v3372 = vsel %vm3220, %v2457, 0
    %v3375 = vsel %vm3220, %v2459, 0
    %v3378 = vsel %vm3220, %v2461, 0
    %v3381 = vsel %vm3220, %v2463, 0
    %v3384 = vsel %vm3220, %v2465, 0
    %v3387 = vsel %vm3220, %v2467, 0
    %v3390 = vsel %vm3220, %v2469, 0
    %v3393 = vsel %vm3220, %v2471, 0
    %v3396 = vsel %vm3220, %v2473, 0
    %v3399 = vsel %vm3220, %v2475, 0
    %v3402 = vsel %vm3220, %v2477, 0
    %v3405 = vsel %vm3220, %v2479, 0
    %v3408 = vsel %vm3220, %v2481, 0
    %v3411 = vsel %vm3220, %v2483, 0
    %v3414 = vsel %vm3220, %v2485, 0
    %v3417 = vsel %vm3220, %v2487, 0
    %v3420 = vsel %vm3220, %v2489, 0
    %v3423 = vsel %vm3220, %v2491, 0
    %v3426 = vsel %vm3220, %v2493, 0
    %v3429 = vsel %vm3220, %v2495, 0
    %v3432 = vsel %vm3220, %v2497, 0
    %v3435 = vsel %vm3220, %v2499, 0
    %v3438 = vsel %vm3220, %v2501, 0
    %v3441 = vsel %vm3220, %v2503, 0
    %v3444 = vsel %vm3220, %v2505, 0
    %v3447 = vsel %vm3220, %v2507, 0
    %v3450 = vsel %vm3220, %v2509, 0
    %v3453 = vsel %vm3220, %v2511, 0
    %v3456 = vsel %vm3220, %v2513, 0
    %v3459 = vsel %vm3220, %v2515, 0
    %v3462 = vsel %vm3220, %v2517, 0
    %v3465 = vsel %vm3220, %v2519, 0
    %v3468 = vsel %vm3220, %v2521, 0
    %v3471 = vsel %vm3220, %v2523, 0
    %v3474 = vsel %vm3220, %v2525, 0
    %v3477 = vsel %vm3220, %v2527, 0
    %v3480 = vsel %vm3220, %v2529, 0
    %v3483 = vsel %vm3220, %v2531, 0
    %v3486 = vsel %vm3220, %v2533, 0
    %v3489 = vsel %vm3220, %v2535, 0
    %v3492 = vsel %vm3220, %v2537, 0
    %v3495 = vsel %vm3220, %v2539, 0
    %v3498 = vsel %vm3220, %v2541, 0
    %v3501 = vsel %vm3220, %v2543, 0
    %v3504 = vsel %vm3220, %v2545, 0
    %v3507 = vsel %vm3220, %v2547, 0
    %v3510 = vsel %vm3220, %v2549, 0
    %v3513 = vsel %vm3220, %v2551, 0
    %v3516 = vsel %vm3220, %v2553, 0
    %v3519 = vsel %vm3220, %v2555, 0
    %v3522 = vsel %vm3220, %v2557, 0
    %v3525 = vsel %vm3220, %v2559, 0
    %v3528 = vsel %vm3220, %v2561, 0
    %v3531 = vsel %vm3220, %v2563, 0
    %v3534 = vsel %vm3220, %v2565, 0
    %v3537 = vsel %vm3220, %v2567, 0
    %v3540 = vsel %vm3220, %v2569, 0
    %v3543 = vsel %vm3220, %v2571, 0
    %v3546 = vsel %vm3220, %v2573, 0
    %v3549 = vsel %vm3220, %v2575, 0
    %v3552 = vsel %vm3220, %v2577, 0
    %v3555 = vsel %vm3220, %v2579, 0
    %v3558 = vsel %vm3220, %v2581, 0
    %v3561 = vsel %vm3220, %v2583, 0
    %v3564 = vsel %vm3220, %v2585, 0
    %v3567 = vsel %vm3220, %v2587, 0
    %v3570 = vsel %vm3220, %v2589, 0
    %v3573 = vsel %vm3220, %v2591, 0
    %v3576 = vsel %vm3220, %v2593, 0
    %v3579 = vsel %vm3220, %v2595, 0
    %v3582 = vsel %vm3220, %v2597, 0
    %v3585 = vsel %vm3220, %v2599, 0
    %v3588 = vsel %vm3220, %v2601, 0
    %v3591 = vsel %vm3220, %v2603, 0
    %v3594 = vsel %vm3220, %v2605, 0
    %v3597 = vsel %vm3220, %v2607, 0
    %v3600 = vsel %vm3220, %v2609, 0
    %v3603 = vsel %vm3220, %v2611, 0
    %v3606 = vsel %vm3220, %v2613, 0
    %v3609 = vsel %vm3220, %v2615, 0
    %v3612 = vsel %vm3220, %v2617, 0
    %v3615 = vsel %vm3220, %v2619, 0
    %v3618 = vsel %vm3220, %v2621, 0
    %v3621 = vsel %vm3220, %v2623, 0
    %v3624 = vsel %vm3220, %v2625, 0
    %v3627 = vsel %vm3220, %v2627, 0
    %v3630 = vsel %vm3220, %v2629, 0
    %v3633 = vsel %vm3220, %v2631, 0
    %v3636 = vsel %vm3220, %v2633, 0
    %v3639 = vsel %vm3220, %v2635, 0
    %v3642 = vsel %vm3220, %v2637, 0
    %v3645 = vsel %vm3220, %v2639, 0
    %v3648 = vsel %vm3220, %v2641, 0
    %v3651 = vsel %vm3220, %v2643, 0
    %v3654 = vsel %vm3220, %v2645, 0
    %v3657 = vsel %vm3220, %v2647, 0
    %v3660 = vsel %vm3220, %v2649, 0
    %v3663 = vsel %vm3220, %v2651, 0
    %v3666 = vsel %vm3220, %v2653, 0
    %v3669 = vsel %vm3220, %v2655, 0
    %v3672 = vsel %vm3220, %v2657, 0
    %v3675 = vsel %vm3220, %v2659, 0
    %v3678 = vsel %vm3220, %v2661, 0
    %v3681 = vsel %vm3220, %v2663, 0
    %v3684 = vsel %vm3220, %v2665, 0
    %v3687 = vsel %vm3220, %v2667, 0
    %v3690 = vsel %vm3220, %v2669, 0
    %v3693 = vsel %vm3220, %v2671, 0
    %v3696 = vsel %vm3220, %v2673, 0
    %v3699 = vsel %vm3220, %v2675, 0
    %v3702 = vsel %vm3220, %v2677, 0
    %v3705 = vsel %vm3220, %v2679, 0
    %v3708 = vsel %vm3220, %v2681, 0
    %v3711 = vsel %vm3220, %v2683, 0
    %v3714 = vsel %vm3220, %v2685, 0
    %v3717 = vsel %vm3220, %v2687, 0
    %v3720 = vsel %vm3220, %v2689, 0
    %v3723 = vsel %vm3220, %v2691, 0
    %v3726 = vsel %vm3220, %v2693, 0
    %v3729 = vsel %vm3220, %v2695, 0
    %v3732 = vsel %vm3220, %v2697, 0
    %v3735 = vsel %vm3220, %v2699, 0
    %v3738 = vsel %vm3220, %v2701, 0
    %v3741 = vsel %vm3220, %v2703, 0
    %v3744 = vsel %vm3220, %v2705, 0
    %v3747 = vsel %vm3220, %v2707, 0
    %v3750 = vsel %vm3220, %v2709, 0
    %v3753 = vsel %vm3220, %v2711, 0
    %v3756 = vsel %vm3220, %v2713, 0
    %v3759 = vsel %vm3220, %v2715, 0
    %v3762 = vsel %vm3220, %v2717, 0
    %v3765 = vsel %vm3220, %v2719, 0
    %v3768 = vsel %vm3220, %v2721, 0
    %v3771 = vsel %vm3220, %v2723, 0
    %v3774 = vsel %vm3220, %v2725, 0
    %v3777 = vsel %vm3220, %v2727, 0
    %v3780 = vsel %vm3220, %v2729, 0
    %v3783 = vsel %vm3220, %v2731, 0
    %v3786 = vsel %vm3220, %v2733, 0
    %v3789 = vsel %vm3220, %v2735, 0
    %v3792 = vsel %vm3220, %v2737, 0
    %v3795 = vsel %vm3220, %v2739, 0
    %v3798 = vsel %vm3220, %v2741, 0
    %v3801 = vsel %vm3220, %v2743, 0
    %v3804 = vsel %vm3220, %v2745, 0
    %v3807 = vsel %vm3220, %v2747, 0
    %v3810 = vsel %vm3220, %v2749, 0
    %v3813 = vsel %vm3220, %v2751, 0
    %v3816 = vsel %vm3220, %v2753, 0
    %v3819 = vsel %vm3220, %v2755, 0
    %v3822 = vsel %vm3220, %v2757, 0
    %v3825 = vsel %vm3220, %v2759, 0
    %v3828 = vsel %vm3220, %v2761, 0
    %v3831 = vsel %vm3220, %v2763, 0
    %v3834 = vsel %vm3220, %v2765, 0
    %v3837 = vsel %vm3220, %v2767, 0
    %v3840 = vsel %vm3220, %v2769, 0
    %v3843 = vsel %vm3220, %v2771, 0
    %v3846 = vsel %vm3220, %v2773, 0
    %v3849 = vsel %vm3220, %v2775, 0
    %v3852 = vsel %vm3220, %v2777, 0
    %v3855 = vsel %vm3220, %v2779, 0
    %v3858 = vsel %vm3220, %v2781, 0
    %v3861 = vsel %vm3220, %v2783, 0
    %v3864 = vsel %vm3220, %v2785, 0
    %v3867 = vsel %vm3220, %v2787, 0
    %v3870 = vsel %vm3220, %v2789, 0
    %v3873 = vsel %vm3220, %v2791, 0
    %v3876 = vsel %vm3220, %v2793, 0
    %v3879 = vsel %vm3220, %v2795, 0
    %v3882 = vsel %vm3220, %v2797, 0
    %v3885 = vsel %vm3220, %v2799, 0
    %v3888 = vsel %vm3220, %v2801, 0
    %v3891 = vsel %vm3220, %v2803, 0
    %v3894 = vsel %vm3220, %v2805, 0
    %v3897 = vsel %vm3220, %v2807, 0
    %v3900 = vsel %vm3220, %v2809, 0
    %v3903 = vsel %vm3220, %v2811, 0
    %v3906 = vsel %vm3220, %v2813, 0
    %v3909 = vsel %vm3220, %v2815, 0
    %v3912 = vsel %vm3220, %v2817, 0
    %v3915 = vsel %vm3220, %v2819, 0
    %v3918 = vsel %vm3220, %v2821, 0
    %v3921 = vsel %vm3220, %v2823, 0
    %v3924 = vsel %vm3220, %v2825, 0
    %v3927 = vsel %vm3220, %v2827, 0
    %v3930 = vsel %vm3220, %v2829, 0
    %v3933 = vsel %vm3220, %v2831, 0
    %v3936 = vsel %vm3220, %v2833, 0
    %v3939 = vsel %vm3220, %v2835, 0
    %v3942 = vsel %vm3220, %v2837, 0
    %v3945 = vsel %vm3220, %v2839, 0
    %v3948 = vsel %vm3220, %v2841, 0
    %v3951 = vsel %vm3220, %v2843, 0
    %v3954 = vsel %vm3220, %v2845, 0
    %v3957 = vsel %vm3220, %v2847, 0
    %v3960 = vsel %vm3220, %v2849, 0
    %v3963 = vsel %vm3220, %v2851, 0
    %v3966 = vsel %vm3220, %v2853, 0
    %v3969 = vsel %vm3220, %v2855, 0
    %v3972 = vsel %vm3220, %v2857, 0
    %v3975 = vsel %vm3220, %v2859, 0
    %v3978 = vsel %vm3220, %v2861, 0
    %v3981 = vsel %vm3220, %v2863, 0
    %v3984 = vsel %vm3220, %v2865, 0
    %v3987 = vsel %vm3220, %v2867, 0
    %v3990 = vsel %vm3220, %v2869, 0
    %v3993 = vsel %vm3220, %v2871, 0
    %v3996 = vsel %vm3220, %v2873, 0
    %v3999 = vsel %vm3220, %v2875, 0
    %v4002 = vsel %vm3220, %v2877, 0
    %v4005 = vsel %vm3220, %v2879, 0
    %v4008 = vsel %vm3220, %v2881, 0
    %v4011 = vsel %vm3220, %v2883, 0
    %v4014 = vsel %vm3220, %v2885, 0
    %v4017 = vsel %vm3220, %v2887, 0
    %v4020 = vsel %vm3220, %v2889, 0
    %v4023 = vsel %vm3220, %v2891, 0
    %v4026 = vsel %vm3220, %v2893, 0
    %v4029 = vsel %vm3220, %v2895, 0
    %v4032 = vsel %vm3220, %v2897, 0
    %v4035 = vsel %vm3220, %v2899, 0
    %v4038 = vsel %vm3220, %v2901, 0
    %v4041 = vsel %vm3220, %v2903, 0
    %v4044 = vsel %vm3220, %v2905, 0
    %v4047 = vsel %vm3220, %v2907, 0
    %v4050 = vsel %vm3220, %v2909, 0
    %v4053 = vsel %vm3220, %v2911, 0
    %v4056 = vsel %vm3220, %v2913, 0
    %v4059 = vsel %vm3220, %v2915, 0
    %v4062 = vsel %vm3220, %v2917, 0
    %v4065 = vsel %vm3220, %v2919, 0
    %v4068 = vsel %vm3220, %v2921, 0
    %v4071 = vsel %vm3220, %v2923, 0
    %v4074 = vsel %vm3220, %v2925, 0
    %v4077 = vsel %vm3220, %v2927, 0
    %v4080 = vsel %vm3220, %v2929, 0
    %v4083 = vsel %vm3220, %v2931, 0
    %4085 = vmatprep.subr.bf16.mxu0 0
    %4086 = vmatpush1.bf16.msra.mxu0 %v41
    %4087 = vmatprep.subr.bf16.mxu0 0
    %4088 = vmatpush1.bf16.msra.mxu0 %v42
    %4089 = vmatprep.subr.bf16.mxu0 0
    %4090 = vmatpush1.bf16.msra.mxu0 %v43
    %4091 = vmatprep.subr.bf16.mxu0 0
    %4092 = vmatpush1.bf16.msra.mxu0 %v44
    %4093 = vmatprep.subr.bf16.mxu0 0
    %4094 = vmatpush1.bf16.msra.mxu0 %v45
    %4095 = vmatprep.subr.bf16.mxu0 0
    %4096 = vmatpush1.bf16.msra.mxu0 %v46
    %4097 = vmatprep.subr.bf16.mxu0 0
    %4098 = vmatpush1.bf16.msra.mxu0 %v47
    %4099 = vmatprep.subr.bf16.mxu0 0
    %4100 = vmatpush1.bf16.msra.mxu0 %v48
    %4101 = vmatprep.subr.bf16.mxu0 0
    %4102 = vmatpush1.bf16.msra.mxu0 %v49
    %4103 = vmatprep.subr.bf16.mxu0 0
    %4104 = vmatpush1.bf16.msra.mxu0 %v50
    %4105 = vmatprep.subr.bf16.mxu0 0
    %4106 = vmatpush1.bf16.msra.mxu0 %v51
    %4107 = vmatprep.subr.bf16.mxu0 0
    %4108 = vmatpush1.bf16.msra.mxu0 0
    %4109 = vmatprep.subr.bf16.mxu0 0
    %4110 = vmatpush1.bf16.msra.mxu0 0
    %4111 = vmatprep.subr.bf16.mxu0 0
    %4112 = vmatpush1.bf16.msra.mxu0 0
    %4113 = vmatprep.subr.bf16.mxu0 0
    %4114 = vmatpush1.bf16.msra.mxu0 0
    %4115 = vmatprep.subr.bf16.mxu0 0
    %4116 = vmatpush1.bf16.msra.mxu0 0
    %4117 = vmatprep.mubr.bf16.mxu0 %v3222
    %4118 = vmatmul.mubr.bf16.gmra.mrb[0].mxu0 %v2356
    %v4119 = vpop.f32.mrb[0].mxu0
    %v4120 = vadd.f32 0.0, %v4119
    %v4121 = vpop.f32.mrb[0].mxu0
    %v4122 = vpop.f32.mrb[0].mxu0
    %v4123 = vadd.f32 0.0, %v4122
    %v4124 = vpop.f32.mrb[0].mxu0
    %4125 = vmatprep.mubr.bf16.mxu0 %v3225
    %4126 = vmatmul.mubr.bf16.gmra.mrb[0].mxu0 %v2358
    %v4127 = vpop.f32.mrb[0].mxu0
    %v4128 = vadd.f32 0.0, %v4127
    %v4129 = vpop.f32.mrb[0].mxu0
    %v4130 = vpop.f32.mrb[0].mxu0
    %v4131 = vadd.f32 0.0, %v4130
    %v4132 = vpop.f32.mrb[0].mxu0
    %4133 = vmatprep.mubr.bf16.mxu0 %v3228
    %4134 = vmatmul.mubr.bf16.gmra.mrb[0].mxu0 %v2360
    %v4135 = vpop.f32.mrb[0].mxu0
    %v4136 = vadd.f32 0.0, %v4135
    %v4137 = vpop.f32.mrb[0].mxu0
    %v4138 = vpop.f32.mrb[0].mxu0
    %v4139 = vadd.f32 0.0, %v4138
    %v4140 = vpop.f32.mrb[0].mxu0
    %4141 = vmatprep.mubr.bf16.mxu0 %v3231
    %4142 = vmatmul.mubr.bf16.gmra.mrb[0].mxu0 %v2362
    %v4143 = vpop.f32.mrb[0].mxu0
    %v4144 = vadd.f32 0.0, %v4143
    %v4145 = vpop.f32.mrb[0].mxu0
    %v4146 = vpop.f32.mrb[0].mxu0
    %v4147 = vadd.f32 0.0, %v4146
    %v4148 = vpop.f32.mrb[0].mxu0
    %4149 = vmatprep.mubr.bf16.mxu0 %v3234
    %4150 = vmatmul.mubr.bf16.gmra.mrb[0].mxu0 %v2364
    %v4151 = vpop.f32.mrb[0].mxu0
    %v4152 = vadd.f32 0.0, %v4151
    %v4153 = vpop.f32.mrb[0].mxu0
    %v4154 = vpop.f32.mrb[0].mxu0
    %v4155 = vadd.f32 0.0, %v4154
    %v4156 = vpop.f32.mrb[0].mxu0
    %4157 = vmatprep.mubr.bf16.mxu0 %v3237
    %4158 = vmatmul.mubr.bf16.gmra.mrb[0].mxu0 %v2366
    %v4159 = vpop.f32.mrb[0].mxu0
    %v4160 = vadd.f32 0.0, %v4159
    %v4161 = vpop.f32.mrb[0].mxu0
    %v4162 = vpop.f32.mrb[0].mxu0
    %v4163 = vadd.f32 0.0, %v4162
    %v4164 = vpop.f32.mrb[0].mxu0
    %4165 = vmatprep.mubr.bf16.mxu0 %v3240
    %4166 = vmatmul.mubr.bf16.gmra.mrb[0].mxu0 %v2368
    %v4167 = vpop.f32.mrb[0].mxu0
    %v4168 = vadd.f32 0.0, %v4167
    %v4169 = vpop.f32.mrb[0].mxu0
    %v4170 = vpop.f32.mrb[0].mxu0
    %v4171 = vadd.f32 0.0, %v4170
    %v4172 = vpop.f32.mrb[0].mxu0
    %4173 = vmatprep.mubr.bf16.mxu0 %v3243
    %4174 = vmatmul.mubr.bf16.gmra.mrb[0].mxu0 %v2370
    %v4175 = vpop.f32.mrb[0].mxu0
    %v4176 = vadd.f32 0.0, %v4175
    %v4177 = vpop.f32.mrb[0].mxu0
    %v4178 = vpop.f32.mrb[0].mxu0
    %v4179 = vadd.f32 0.0, %v4178
    %v4180 = vpop.f32.mrb[0].mxu0
    %4181 = vmatprep.mubr.bf16.mxu0 %v3246
    %4182 = vmatmul.mubr.bf16.gmra.mrb[0].mxu0 %v2372
    %v4183 = vpop.f32.mrb[0].mxu0
    %v4184 = vadd.f32 0.0, %v4183
    %v4185 = vpop.f32.mrb[0].mxu0
    %v4186 = vpop.f32.mrb[0].mxu0
    %v4187 = vadd.f32 0.0, %v4186
    %v4188 = vpop.f32.mrb[0].mxu0
    %4189 = vmatprep.mubr.bf16.mxu0 %v3249
    %4190 = vmatmul.mubr.bf16.gmra.mrb[0].mxu0 %v2374
    %v4191 = vpop.f32.mrb[0].mxu0
    %v4192 = vadd.f32 0.0, %v4191
    %v4193 = vpop.f32.mrb[0].mxu0
    %v4194 = vpop.f32.mrb[0].mxu0
    %v4195 = vadd.f32 0.0, %v4194
    %v4196 = vpop.f32.mrb[0].mxu0
    %4197 = vmatprep.mubr.bf16.mxu0 %v3252
    %4198 = vmatmul.mubr.bf16.gmra.mrb[0].mxu0 %v2376
    %v4199 = vpop.f32.mrb[0].mxu0
    %v4200 = vadd.f32 0.0, %v4199
    %v4201 = vpop.f32.mrb[0].mxu0
    %v4202 = vpop.f32.mrb[0].mxu0
    %v4203 = vadd.f32 0.0, %v4202
    %v4204 = vpop.f32.mrb[0].mxu0
    %4205 = vmatprep.mubr.bf16.mxu0 %v3255
    %4206 = vmatmul.mubr.bf16.gmra.mrb[0].mxu0 %v2378
    %v4207 = vpop.f32.mrb[0].mxu0
    %v4208 = vadd.f32 0.0, %v4207
    %v4209 = vpop.f32.mrb[0].mxu0
    %v4210 = vpop.f32.mrb[0].mxu0
    %v4211 = vadd.f32 0.0, %v4210
    %v4212 = vpop.f32.mrb[0].mxu0
    %4213 = vmatprep.mubr.bf16.mxu0 %v3258
    %4214 = vmatmul.mubr.bf16.gmra.mrb[0].mxu0 %v2380
    %v4215 = vpop.f32.mrb[0].mxu0
    %v4216 = vadd.f32 0.0, %v4215
    %v4217 = vpop.f32.mrb[0].mxu0
    %v4218 = vpop.f32.mrb[0].mxu0
    %v4219 = vadd.f32 0.0, %v4218
    %v4220 = vpop.f32.mrb[0].mxu0
    %4221 = vmatprep.mubr.bf16.mxu0 %v3261
    %4222 = vmatmul.mubr.bf16.gmra.mrb[0].mxu0 %v2382
    %v4223 = vpop.f32.mrb[0].mxu0
    %v4224 = vadd.f32 0.0, %v4223
    %v4225 = vpop.f32.mrb[0].mxu0
    %v4226 = vpop.f32.mrb[0].mxu0
    %v4227 = vadd.f32 0.0, %v4226
    %v4228 = vpop.f32.mrb[0].mxu0
    %4229 = vmatprep.mubr.bf16.mxu0 %v3264
    %4230 = vmatmul.mubr.bf16.gmra.mrb[0].mxu0 %v2384
    %v4231 = vpop.f32.mrb[0].mxu0
    %v4232 = vadd.f32 0.0, %v4231
    %v4233 = vpop.f32.mrb[0].mxu0
    %v4234 = vpop.f32.mrb[0].mxu0
    %v4235 = vadd.f32 0.0, %v4234
    %v4236 = vpop.f32.mrb[0].mxu0
    %4237 = vmatprep.mubr.bf16.mxu0 %v3267
    %4238 = vmatmul.mubr.bf16.gmra.mrb[0].mxu0 %v2386
    %v4239 = vpop.f32.mrb[0].mxu0
    %v4240 = vadd.f32 0.0, %v4239
    %v4241 = vpop.f32.mrb[0].mxu0
    %v4242 = vpop.f32.mrb[0].mxu0
    %v4243 = vadd.f32 0.0, %v4242
    %v4244 = vpop.f32.mrb[0].mxu0
    %4245 = vmatprep.mubr.bf16.mxu0 %v3270
    %4246 = vmatmul.mubr.bf16.gmra.mrb[0].mxu0 %v2388
    %v4247 = vpop.f32.mrb[0].mxu0
    %v4248 = vadd.f32 0.0, %v4247
    %v4249 = vpop.f32.mrb[0].mxu0
    %v4250 = vpop.f32.mrb[0].mxu0
    %v4251 = vadd.f32 0.0, %v4250
    %v4252 = vpop.f32.mrb[0].mxu0
    %4253 = vmatprep.mubr.bf16.mxu0 %v3273
    %4254 = vmatmul.mubr.bf16.gmra.mrb[0].mxu0 %v2390
    %v4255 = vpop.f32.mrb[0].mxu0
    %v4256 = vadd.f32 0.0, %v4255
    %v4257 = vpop.f32.mrb[0].mxu0
    %v4258 = vpop.f32.mrb[0].mxu0
    %v4259 = vadd.f32 0.0, %v4258
    %v4260 = vpop.f32.mrb[0].mxu0
    %4261 = vmatprep.mubr.bf16.mxu0 %v3276
    %4262 = vmatmul.mubr.bf16.gmra.mrb[0].mxu0 %v2392
    %v4263 = vpop.f32.mrb[0].mxu0
    %v4264 = vadd.f32 0.0, %v4263
    %v4265 = vpop.f32.mrb[0].mxu0
    %v4266 = vpop.f32.mrb[0].mxu0
    %v4267 = vadd.f32 0.0, %v4266
    %v4268 = vpop.f32.mrb[0].mxu0
    %4269 = vmatprep.mubr.bf16.mxu0 %v3279
    %4270 = vmatmul.mubr.bf16.gmra.mrb[0].mxu0 %v2394
    %v4271 = vpop.f32.mrb[0].mxu0
    %v4272 = vadd.f32 0.0, %v4271
    %v4273 = vpop.f32.mrb[0].mxu0
    %v4274 = vpop.f32.mrb[0].mxu0
    %v4275 = vadd.f32 0.0, %v4274
    %v4276 = vpop.f32.mrb[0].mxu0
    %4277 = vmatprep.mubr.bf16.mxu0 %v3282
    %4278 = vmatmul.mubr.bf16.gmra.mrb[0].mxu0 %v2396
    %v4279 = vpop.f32.mrb[0].mxu0
    %v4280 = vadd.f32 0.0, %v4279
    %v4281 = vpop.f32.mrb[0].mxu0
    %v4282 = vpop.f32.mrb[0].mxu0
    %v4283 = vadd.f32 0.0, %v4282
    %v4284 = vpop.f32.mrb[0].mxu0
    %4285 = vmatprep.mubr.bf16.mxu0 %v3285
    %4286 = vmatmul.mubr.bf16.gmra.mrb[0].mxu0 %v2398
    %v4287 = vpop.f32.mrb[0].mxu0
    %v4288 = vadd.f32 0.0, %v4287
    %v4289 = vpop.f32.mrb[0].mxu0
    %v4290 = vpop.f32.mrb[0].mxu0
    %v4291 = vadd.f32 0.0, %v4290
    %v4292 = vpop.f32.mrb[0].mxu0
    %4293 = vmatprep.mubr.bf16.mxu0 %v3288
    %4294 = vmatmul.mubr.bf16.gmra.mrb[0].mxu0 %v2400
    %v4295 = vpop.f32.mrb[0].mxu0
    %v4296 = vadd.f32 0.0, %v4295
    %v4297 = vpop.f32.mrb[0].mxu0
    %v4298 = vpop.f32.mrb[0].mxu0
    %v4299 = vadd.f32 0.0, %v4298
    %v4300 = vpop.f32.mrb[0].mxu0
    %4301 = vmatprep.mubr.bf16.mxu0 %v3291
    %4302 = vmatmul.mubr.bf16.gmra.mrb[0].mxu0 %v2402
    %v4303 = vpop.f32.mrb[0].mxu0
    %v4304 = vadd.f32 0.0, %v4303
    %v4305 = vpop.f32.mrb[0].mxu0
    %v4306 = vpop.f32.mrb[0].mxu0
    %v4307 = vadd.f32 0.0, %v4306
    %v4308 = vpop.f32.mrb[0].mxu0
    %4309 = vmatprep.mubr.bf16.mxu0 %v3294
    %4310 = vmatmul.mubr.bf16.gmra.mrb[0].mxu0 %v2404
    %v4311 = vpop.f32.mrb[0].mxu0
    %v4312 = vadd.f32 0.0, %v4311
    %v4313 = vpop.f32.mrb[0].mxu0
    %v4314 = vpop.f32.mrb[0].mxu0
    %v4315 = vadd.f32 0.0, %v4314
    %v4316 = vpop.f32.mrb[0].mxu0
    %4317 = vmatprep.mubr.bf16.mxu0 %v3297
    %4318 = vmatmul.mubr.bf16.gmra.mrb[0].mxu0 %v2406
    %v4319 = vpop.f32.mrb[0].mxu0
    %v4320 = vadd.f32 0.0, %v4319
    %v4321 = vpop.f32.mrb[0].mxu0
    %v4322 = vpop.f32.mrb[0].mxu0
    %v4323 = vadd.f32 0.0, %v4322
    %v4324 = vpop.f32.mrb[0].mxu0
    %4325 = vmatprep.mubr.bf16.mxu0 %v3300
    %4326 = vmatmul.mubr.bf16.gmra.mrb[0].mxu0 %v2408
    %v4327 = vpop.f32.mrb[0].mxu0
    %v4328 = vadd.f32 0.0, %v4327
    %v4329 = vpop.f32.mrb[0].mxu0
    %v4330 = vpop.f32.mrb[0].mxu0
    %v4331 = vadd.f32 0.0, %v4330
    %v4332 = vpop.f32.mrb[0].mxu0
    %4333 = vmatprep.mubr.bf16.mxu0 %v3303
    %4334 = vmatmul.mubr.bf16.gmra.mrb[0].mxu0 %v2410
    %v4335 = vpop.f32.mrb[0].mxu0
    %v4336 = vadd.f32 0.0, %v4335
    %v4337 = vpop.f32.mrb[0].mxu0
    %v4338 = vpop.f32.mrb[0].mxu0
    %v4339 = vadd.f32 0.0, %v4338
    %v4340 = vpop.f32.mrb[0].mxu0
    %4341 = vmatprep.mubr.bf16.mxu0 %v3306
    %4342 = vmatmul.mubr.bf16.gmra.mrb[0].mxu0 %v2412
    %v4343 = vpop.f32.mrb[0].mxu0
    %v4344 = vadd.f32 0.0, %v4343
    %v4345 = vpop.f32.mrb[0].mxu0
    %v4346 = vpop.f32.mrb[0].mxu0
    %v4347 = vadd.f32 0.0, %v4346
    %v4348 = vpop.f32.mrb[0].mxu0
    %4349 = vmatprep.mubr.bf16.mxu0 %v3309
    %4350 = vmatmul.mubr.bf16.gmra.mrb[0].mxu0 %v2414
    %v4351 = vpop.f32.mrb[0].mxu0
    %v4352 = vadd.f32 0.0, %v4351
    %v4353 = vpop.f32.mrb[0].mxu0
    %v4354 = vpop.f32.mrb[0].mxu0
    %v4355 = vadd.f32 0.0, %v4354
    %v4356 = vpop.f32.mrb[0].mxu0
    %4357 = vmatprep.mubr.bf16.mxu0 %v3312
    %4358 = vmatmul.mubr.bf16.gmra.mrb[0].mxu0 %v2416
    %v4359 = vpop.f32.mrb[0].mxu0
    %v4360 = vadd.f32 0.0, %v4359
    %v4361 = vpop.f32.mrb[0].mxu0
    %v4362 = vpop.f32.mrb[0].mxu0
    %v4363 = vadd.f32 0.0, %v4362
    %v4364 = vpop.f32.mrb[0].mxu0
    %4365 = vmatprep.mubr.bf16.mxu0 %v3315
    %4366 = vmatmul.mubr.bf16.gmra.mrb[0].mxu0 %v2418
    %v4367 = vpop.f32.mrb[0].mxu0
    %v4368 = vadd.f32 0.0, %v4367
    %v4369 = vpop.f32.mrb[0].mxu0
    %v4370 = vpop.f32.mrb[0].mxu0
    %v4371 = vadd.f32 0.0, %v4370
    %v4372 = vpop.f32.mrb[0].mxu0
    %4373 = vmatprep.mubr.bf16.mxu0 %v3318
    %4374 = vmatmul.mubr.bf16.gmra.mrb[0].mxu0 %v2420
    %v4375 = vpop.f32.mrb[0].mxu0
    %v4376 = vadd.f32 0.0, %v4375
    %v4377 = vpop.f32.mrb[0].mxu0
    %v4378 = vpop.f32.mrb[0].mxu0
    %v4379 = vadd.f32 0.0, %v4378
    %v4380 = vpop.f32.mrb[0].mxu0
    %4381 = vmatprep.mubr.bf16.mxu0 %v3321
    %4382 = vmatmul.mubr.bf16.gmra.mrb[0].mxu0 %v2422
    %v4383 = vpop.f32.mrb[0].mxu0
    %v4384 = vadd.f32 0.0, %v4383
    %v4385 = vpop.f32.mrb[0].mxu0
    %v4386 = vpop.f32.mrb[0].mxu0
    %v4387 = vadd.f32 0.0, %v4386
    %v4388 = vpop.f32.mrb[0].mxu0
    %4389 = vmatprep.mubr.bf16.mxu0 %v3324
    %4390 = vmatmul.mubr.bf16.gmra.mrb[0].mxu0 %v2424
    %v4391 = vpop.f32.mrb[0].mxu0
    %v4392 = vadd.f32 0.0, %v4391
    %v4393 = vpop.f32.mrb[0].mxu0
    %v4394 = vpop.f32.mrb[0].mxu0
    %v4395 = vadd.f32 0.0, %v4394
    %v4396 = vpop.f32.mrb[0].mxu0
    %4397 = vmatprep.mubr.bf16.mxu0 %v3327
    %4398 = vmatmul.mubr.bf16.gmra.mrb[0].mxu0 %v2426
    %v4399 = vpop.f32.mrb[0].mxu0
    %v4400 = vadd.f32 0.0, %v4399
    %v4401 = vpop.f32.mrb[0].mxu0
    %v4402 = vpop.f32.mrb[0].mxu0
    %v4403 = vadd.f32 0.0, %v4402
    %v4404 = vpop.f32.mrb[0].mxu0
    %4405 = vmatprep.mubr.bf16.mxu0 %v3330
    %4406 = vmatmul.mubr.bf16.gmra.mrb[0].mxu0 %v2428
    %v4407 = vpop.f32.mrb[0].mxu0
    %v4408 = vadd.f32 0.0, %v4407
    %v4409 = vpop.f32.mrb[0].mxu0
    %v4410 = vpop.f32.mrb[0].mxu0
    %v4411 = vadd.f32 0.0, %v4410
    %v4412 = vpop.f32.mrb[0].mxu0
    %4413 = vmatprep.mubr.bf16.mxu0 %v3333
    %4414 = vmatmul.mubr.bf16.gmra.mrb[0].mxu0 %v2430
    %v4415 = vpop.f32.mrb[0].mxu0
    %v4416 = vadd.f32 0.0, %v4415
    %v4417 = vpop.f32.mrb[0].mxu0
    %v4418 = vpop.f32.mrb[0].mxu0
    %v4419 = vadd.f32 0.0, %v4418
    %v4420 = vpop.f32.mrb[0].mxu0
    %4421 = vmatprep.mubr.bf16.mxu0 %v3336
    %4422 = vmatmul.mubr.bf16.gmra.mrb[0].mxu0 %v2432
    %v4423 = vpop.f32.mrb[0].mxu0
    %v4424 = vadd.f32 0.0, %v4423
    %v4425 = vpop.f32.mrb[0].mxu0
    %v4426 = vpop.f32.mrb[0].mxu0
    %v4427 = vadd.f32 0.0, %v4426
    %v4428 = vpop.f32.mrb[0].mxu0
    %4429 = vmatprep.mubr.bf16.mxu0 %v3339
    %4430 = vmatmul.mubr.bf16.gmra.mrb[0].mxu0 %v2434
    %v4431 = vpop.f32.mrb[0].mxu0
    %v4432 = vadd.f32 0.0, %v4431
    %v4433 = vpop.f32.mrb[0].mxu0
    %v4434 = vpop.f32.mrb[0].mxu0
    %v4435 = vadd.f32 0.0, %v4434
    %v4436 = vpop.f32.mrb[0].mxu0
    %4437 = vmatprep.mubr.bf16.mxu0 %v3342
    %4438 = vmatmul.mubr.bf16.gmra.mrb[0].mxu0 %v2436
    %v4439 = vpop.f32.mrb[0].mxu0
    %v4440 = vadd.f32 0.0, %v4439
    %v4441 = vpop.f32.mrb[0].mxu0
    %v4442 = vpop.f32.mrb[0].mxu0
    %v4443 = vadd.f32 0.0, %v4442
    %v4444 = vpop.f32.mrb[0].mxu0
    %4445 = vmatprep.mubr.bf16.mxu0 %v3345
    %4446 = vmatmul.mubr.bf16.gmra.mrb[0].mxu0 %v2438
    %v4447 = vpop.f32.mrb[0].mxu0
    %v4448 = vadd.f32 0.0, %v4447
    %v4449 = vpop.f32.mrb[0].mxu0
    %v4450 = vpop.f32.mrb[0].mxu0
    %v4451 = vadd.f32 0.0, %v4450
    %v4452 = vpop.f32.mrb[0].mxu0
    %4453 = vmatprep.mubr.bf16.mxu0 %v3348
    %4454 = vmatmul.mubr.bf16.gmra.mrb[0].mxu0 %v2440
    %v4455 = vpop.f32.mrb[0].mxu0
    %v4456 = vadd.f32 0.0, %v4455
    %v4457 = vpop.f32.mrb[0].mxu0
    %v4458 = vpop.f32.mrb[0].mxu0
    %v4459 = vadd.f32 0.0, %v4458
    %v4460 = vpop.f32.mrb[0].mxu0
    %4461 = vmatprep.mubr.bf16.mxu0 %v3351
    %4462 = vmatmul.mubr.bf16.gmra.mrb[0].mxu0 %v2442
    %v4463 = vpop.f32.mrb[0].mxu0
    %v4464 = vadd.f32 0.0, %v4463
    %v4465 = vpop.f32.mrb[0].mxu0
    %v4466 = vpop.f32.mrb[0].mxu0
    %v4467 = vadd.f32 0.0, %v4466
    %v4468 = vpop.f32.mrb[0].mxu0
    %4469 = vmatprep.mubr.bf16.mxu0 %v3354
    %4470 = vmatmul.mubr.bf16.gmra.mrb[0].mxu0 %v2444
    %v4471 = vpop.f32.mrb[0].mxu0
    %v4472 = vadd.f32 0.0, %v4471
    %v4473 = vpop.f32.mrb[0].mxu0
    %v4474 = vpop.f32.mrb[0].mxu0
    %v4475 = vadd.f32 0.0, %v4474
    %v4476 = vpop.f32.mrb[0].mxu0
    %4477 = vmatprep.mubr.bf16.mxu0 %v3357
    %4478 = vmatmul.mubr.bf16.gmra.mrb[0].mxu0 %v2446
    %v4479 = vpop.f32.mrb[0].mxu0
    %v4480 = vadd.f32 0.0, %v4479
    %v4481 = vpop.f32.mrb[0].mxu0
    %v4482 = vpop.f32.mrb[0].mxu0
    %v4483 = vadd.f32 0.0, %v4482
    %v4484 = vpop.f32.mrb[0].mxu0
    %4485 = vmatprep.mubr.bf16.mxu0 %v3360
    %4486 = vmatmul.mubr.bf16.gmra.mrb[0].mxu0 %v2448
    %v4487 = vpop.f32.mrb[0].mxu0
    %v4488 = vadd.f32 0.0, %v4487
    %v4489 = vpop.f32.mrb[0].mxu0
    %v4490 = vpop.f32.mrb[0].mxu0
    %v4491 = vadd.f32 0.0, %v4490
    %v4492 = vpop.f32.mrb[0].mxu0
    %4493 = vmatprep.mubr.bf16.mxu0 %v3363
    %4494 = vmatmul.mubr.bf16.gmra.mrb[0].mxu0 %v2450
    %v4495 = vpop.f32.mrb[0].mxu0
    %v4496 = vadd.f32 0.0, %v4495
    %v4497 = vpop.f32.mrb[0].mxu0
    %v4498 = vpop.f32.mrb[0].mxu0
    %v4499 = vadd.f32 0.0, %v4498
    %v4500 = vpop.f32.mrb[0].mxu0
    %4501 = vmatprep.mubr.bf16.mxu0 %v3366
    %4502 = vmatmul.mubr.bf16.gmra.mrb[0].mxu0 %v2452
    %v4503 = vpop.f32.mrb[0].mxu0
    %v4504 = vadd.f32 0.0, %v4503
    %v4505 = vpop.f32.mrb[0].mxu0
    %v4506 = vpop.f32.mrb[0].mxu0
    %v4507 = vadd.f32 0.0, %v4506
    %v4508 = vpop.f32.mrb[0].mxu0
    %4509 = vmatprep.mubr.bf16.mxu0 %v3369
    %4510 = vmatmul.mubr.bf16.gmra.mrb[0].mxu0 %v2454
    %v4511 = vpop.f32.mrb[0].mxu0
    %v4512 = vadd.f32 0.0, %v4511
    %v4513 = vpop.f32.mrb[0].mxu0
    %v4514 = vpop.f32.mrb[0].mxu0
    %v4515 = vadd.f32 0.0, %v4514
    %v4516 = vpop.f32.mrb[0].mxu0
    %4517 = vmatprep.mubr.bf16.mxu0 %v3372
    %4518 = vmatmul.mubr.bf16.gmra.mrb[0].mxu0 %v2456
    %v4519 = vpop.f32.mrb[0].mxu0
    %v4520 = vadd.f32 0.0, %v4519
    %v4521 = vpop.f32.mrb[0].mxu0
    %v4522 = vpop.f32.mrb[0].mxu0
    %v4523 = vadd.f32 0.0, %v4522
    %v4524 = vpop.f32.mrb[0].mxu0
    %4525 = vmatprep.mubr.bf16.mxu0 %v3375
    %4526 = vmatmul.mubr.bf16.gmra.mrb[0].mxu0 %v2458
    %v4527 = vpop.f32.mrb[0].mxu0
    %v4528 = vadd.f32 0.0, %v4527
    %v4529 = vpop.f32.mrb[0].mxu0
    %v4530 = vpop.f32.mrb[0].mxu0
    %v4531 = vadd.f32 0.0, %v4530
    %v4532 = vpop.f32.mrb[0].mxu0
    %4533 = vmatprep.mubr.bf16.mxu0 %v3378
    %4534 = vmatmul.mubr.bf16.gmra.mrb[0].mxu0 %v2460
    %v4535 = vpop.f32.mrb[0].mxu0
    %v4536 = vadd.f32 0.0, %v4535
    %v4537 = vpop.f32.mrb[0].mxu0
    %v4538 = vpop.f32.mrb[0].mxu0
    %v4539 = vadd.f32 0.0, %v4538
    %v4540 = vpop.f32.mrb[0].mxu0
    %4541 = vmatprep.mubr.bf16.mxu0 %v3381
    %4542 = vmatmul.mubr.bf16.gmra.mrb[0].mxu0 %v2462
    %v4543 = vpop.f32.mrb[0].mxu0
    %v4544 = vadd.f32 0.0, %v4543
    %v4545 = vpop.f32.mrb[0].mxu0
    %v4546 = vpop.f32.mrb[0].mxu0
    %v4547 = vadd.f32 0.0, %v4546
    %v4548 = vpop.f32.mrb[0].mxu0
    %4549 = vmatprep.mubr.bf16.mxu0 %v3384
    %4550 = vmatmul.mubr.bf16.gmra.mrb[0].mxu0 %v2464
    %v4551 = vpop.f32.mrb[0].mxu0
    %v4552 = vadd.f32 0.0, %v4551
    %v4553 = vpop.f32.mrb[0].mxu0
    %v4554 = vpop.f32.mrb[0].mxu0
    %v4555 = vadd.f32 0.0, %v4554
    %v4556 = vpop.f32.mrb[0].mxu0
    %4557 = vmatprep.mubr.bf16.mxu0 %v3387
    %4558 = vmatmul.mubr.bf16.gmra.mrb[0].mxu0 %v2466
    %v4559 = vpop.f32.mrb[0].mxu0
    %v4560 = vadd.f32 0.0, %v4559
    %v4561 = vpop.f32.mrb[0].mxu0
    %v4562 = vpop.f32.mrb[0].mxu0
    %v4563 = vadd.f32 0.0, %v4562
    %v4564 = vpop.f32.mrb[0].mxu0
    %4565 = vmatprep.mubr.bf16.mxu0 %v3390
    %4566 = vmatmul.mubr.bf16.gmra.mrb[0].mxu0 %v2468
    %v4567 = vpop.f32.mrb[0].mxu0
    %v4568 = vadd.f32 0.0, %v4567
    %v4569 = vpop.f32.mrb[0].mxu0
    %v4570 = vpop.f32.mrb[0].mxu0
    %v4571 = vadd.f32 0.0, %v4570
    %v4572 = vpop.f32.mrb[0].mxu0
    %4573 = vmatprep.mubr.bf16.mxu0 %v3393
    %4574 = vmatmul.mubr.bf16.gmra.mrb[0].mxu0 %v2470
    %v4575 = vpop.f32.mrb[0].mxu0
    %v4576 = vadd.f32 0.0, %v4575
    %v4577 = vpop.f32.mrb[0].mxu0
    %v4578 = vpop.f32.mrb[0].mxu0
    %v4579 = vadd.f32 0.0, %v4578
    %v4580 = vpop.f32.mrb[0].mxu0
    %4581 = vmatprep.mubr.bf16.mxu0 %v3396
    %4582 = vmatmul.mubr.bf16.gmra.mrb[0].mxu0 %v2472
    %v4583 = vpop.f32.mrb[0].mxu0
    %v4584 = vadd.f32 0.0, %v4583
    %v4585 = vpop.f32.mrb[0].mxu0
    %v4586 = vpop.f32.mrb[0].mxu0
    %v4587 = vadd.f32 0.0, %v4586
    %v4588 = vpop.f32.mrb[0].mxu0
    %4589 = vmatprep.mubr.bf16.mxu0 %v3399
    %4590 = vmatmul.mubr.bf16.gmra.mrb[0].mxu0 %v2474
    %v4591 = vpop.f32.mrb[0].mxu0
    %v4592 = vadd.f32 0.0, %v4591
    %v4593 = vpop.f32.mrb[0].mxu0
    %v4594 = vpop.f32.mrb[0].mxu0
    %v4595 = vadd.f32 0.0, %v4594
    %v4596 = vpop.f32.mrb[0].mxu0
    %4597 = vmatprep.mubr.bf16.mxu0 %v3402
    %4598 = vmatmul.mubr.bf16.gmra.mrb[0].mxu0 %v2476
    %v4599 = vpop.f32.mrb[0].mxu0
    %v4600 = vadd.f32 0.0, %v4599
    %v4601 = vpop.f32.mrb[0].mxu0
    %v4602 = vpop.f32.mrb[0].mxu0
    %v4603 = vadd.f32 0.0, %v4602
    %v4604 = vpop.f32.mrb[0].mxu0
    %4605 = vmatprep.mubr.bf16.mxu0 %v3405
    %4606 = vmatmul.mubr.bf16.gmra.mrb[0].mxu0 %v2478
    %v4607 = vpop.f32.mrb[0].mxu0
    %v4608 = vadd.f32 0.0, %v4607
    %v4609 = vpop.f32.mrb[0].mxu0
    %v4610 = vpop.f32.mrb[0].mxu0
    %v4611 = vadd.f32 0.0, %v4610
    %v4612 = vpop.f32.mrb[0].mxu0
    %4613 = vmatprep.mubr.bf16.mxu0 %v3408
    %4614 = vmatmul.mubr.bf16.gmra.mrb[0].mxu0 %v2480
    %v4615 = vpop.f32.mrb[0].mxu0
    %v4616 = vadd.f32 0.0, %v4615
    %v4617 = vpop.f32.mrb[0].mxu0
    %v4618 = vpop.f32.mrb[0].mxu0
    %v4619 = vadd.f32 0.0, %v4618
    %v4620 = vpop.f32.mrb[0].mxu0
    %4621 = vmatprep.mubr.bf16.mxu0 %v3411
    %4622 = vmatmul.mubr.bf16.gmra.mrb[0].mxu0 %v2482
    %v4623 = vpop.f32.mrb[0].mxu0
    %v4624 = vadd.f32 0.0, %v4623
    %v4625 = vpop.f32.mrb[0].mxu0
    %v4626 = vpop.f32.mrb[0].mxu0
    %v4627 = vadd.f32 0.0, %v4626
    %v4628 = vpop.f32.mrb[0].mxu0
    %4629 = vmatprep.mubr.bf16.mxu0 %v3414
    %4630 = vmatmul.mubr.bf16.gmra.mrb[0].mxu0 %v2484
    %v4631 = vpop.f32.mrb[0].mxu0
    %v4632 = vadd.f32 0.0, %v4631
    %v4633 = vpop.f32.mrb[0].mxu0
    %v4634 = vpop.f32.mrb[0].mxu0
    %v4635 = vadd.f32 0.0, %v4634
    %v4636 = vpop.f32.mrb[0].mxu0
    %4637 = vmatprep.mubr.bf16.mxu0 %v3417
    %4638 = vmatmul.mubr.bf16.gmra.mrb[0].mxu0 %v2486
    %v4639 = vpop.f32.mrb[0].mxu0
    %v4640 = vadd.f32 0.0, %v4639
    %v4641 = vpop.f32.mrb[0].mxu0
    %v4642 = vpop.f32.mrb[0].mxu0
    %v4643 = vadd.f32 0.0, %v4642
    %v4644 = vpop.f32.mrb[0].mxu0
    %4645 = vmatprep.mubr.bf16.mxu0 %v3420
    %4646 = vmatmul.mubr.bf16.gmra.mrb[0].mxu0 %v2488
    %v4647 = vpop.f32.mrb[0].mxu0
    %v4648 = vadd.f32 0.0, %v4647
    %v4649 = vpop.f32.mrb[0].mxu0
    %v4650 = vpop.f32.mrb[0].mxu0
    %v4651 = vadd.f32 0.0, %v4650
    %v4652 = vpop.f32.mrb[0].mxu0
    %4653 = vmatprep.mubr.bf16.mxu0 %v3423
    %4654 = vmatmul.mubr.bf16.gmra.mrb[0].mxu0 %v2490
    %v4655 = vpop.f32.mrb[0].mxu0
    %v4656 = vadd.f32 0.0, %v4655
    %v4657 = vpop.f32.mrb[0].mxu0
    %v4658 = vpop.f32.mrb[0].mxu0
    %v4659 = vadd.f32 0.0, %v4658
    %v4660 = vpop.f32.mrb[0].mxu0
    %4661 = vmatprep.mubr.bf16.mxu0 %v3426
    %4662 = vmatmul.mubr.bf16.gmra.mrb[0].mxu0 %v2492
    %v4663 = vpop.f32.mrb[0].mxu0
    %v4664 = vadd.f32 0.0, %v4663
    %v4665 = vpop.f32.mrb[0].mxu0
    %v4666 = vpop.f32.mrb[0].mxu0
    %v4667 = vadd.f32 0.0, %v4666
    %v4668 = vpop.f32.mrb[0].mxu0
    %4669 = vmatprep.mubr.bf16.mxu0 %v3429
    %4670 = vmatmul.mubr.bf16.gmra.mrb[0].mxu0 %v2494
    %v4671 = vpop.f32.mrb[0].mxu0
    %v4672 = vadd.f32 0.0, %v4671
    %v4673 = vpop.f32.mrb[0].mxu0
    %v4674 = vpop.f32.mrb[0].mxu0
    %v4675 = vadd.f32 0.0, %v4674
    %v4676 = vpop.f32.mrb[0].mxu0
    %4677 = vmatprep.mubr.bf16.mxu0 %v3432
    %4678 = vmatmul.mubr.bf16.gmra.mrb[0].mxu0 %v2496
    %v4679 = vpop.f32.mrb[0].mxu0
    %v4680 = vadd.f32 0.0, %v4679
    %v4681 = vpop.f32.mrb[0].mxu0
    %v4682 = vpop.f32.mrb[0].mxu0
    %v4683 = vadd.f32 0.0, %v4682
    %v4684 = vpop.f32.mrb[0].mxu0
    %4685 = vmatprep.mubr.bf16.mxu0 %v3435
    %4686 = vmatmul.mubr.bf16.gmra.mrb[0].mxu0 %v2498
    %v4687 = vpop.f32.mrb[0].mxu0
    %v4688 = vadd.f32 0.0, %v4687
    %v4689 = vpop.f32.mrb[0].mxu0
    %v4690 = vpop.f32.mrb[0].mxu0
    %v4691 = vadd.f32 0.0, %v4690
    %v4692 = vpop.f32.mrb[0].mxu0
    %4693 = vmatprep.mubr.bf16.mxu0 %v3438
    %4694 = vmatmul.mubr.bf16.gmra.mrb[0].mxu0 %v2500
    %v4695 = vpop.f32.mrb[0].mxu0
    %v4696 = vadd.f32 0.0, %v4695
    %v4697 = vpop.f32.mrb[0].mxu0
    %v4698 = vpop.f32.mrb[0].mxu0
    %v4699 = vadd.f32 0.0, %v4698
    %v4700 = vpop.f32.mrb[0].mxu0
    %4701 = vmatprep.mubr.bf16.mxu0 %v3441
    %4702 = vmatmul.mubr.bf16.gmra.mrb[0].mxu0 %v2502
    %v4703 = vpop.f32.mrb[0].mxu0
    %v4704 = vadd.f32 0.0, %v4703
    %v4705 = vpop.f32.mrb[0].mxu0
    %v4706 = vpop.f32.mrb[0].mxu0
    %v4707 = vadd.f32 0.0, %v4706
    %v4708 = vpop.f32.mrb[0].mxu0
    %4709 = vmatprep.mubr.bf16.mxu0 %v3444
    %4710 = vmatmul.mubr.bf16.gmra.mrb[0].mxu0 %v2504
    %v4711 = vpop.f32.mrb[0].mxu0
    %v4712 = vadd.f32 0.0, %v4711
    %v4713 = vpop.f32.mrb[0].mxu0
    %v4714 = vpop.f32.mrb[0].mxu0
    %v4715 = vadd.f32 0.0, %v4714
    %v4716 = vpop.f32.mrb[0].mxu0
    %4717 = vmatprep.mubr.bf16.mxu0 %v3447
    %4718 = vmatmul.mubr.bf16.gmra.mrb[0].mxu0 %v2506
    %v4719 = vpop.f32.mrb[0].mxu0
    %v4720 = vadd.f32 0.0, %v4719
    %v4721 = vpop.f32.mrb[0].mxu0
    %v4722 = vpop.f32.mrb[0].mxu0
    %v4723 = vadd.f32 0.0, %v4722
    %v4724 = vpop.f32.mrb[0].mxu0
    %4725 = vmatprep.mubr.bf16.mxu0 %v3450
    %4726 = vmatmul.mubr.bf16.gmra.mrb[0].mxu0 %v2508
    %v4727 = vpop.f32.mrb[0].mxu0
    %v4728 = vadd.f32 0.0, %v4727
    %v4729 = vpop.f32.mrb[0].mxu0
    %v4730 = vpop.f32.mrb[0].mxu0
    %v4731 = vadd.f32 0.0, %v4730
    %v4732 = vpop.f32.mrb[0].mxu0
    %4733 = vmatprep.mubr.bf16.mxu0 %v3453
    %4734 = vmatmul.mubr.bf16.gmra.mrb[0].mxu0 %v2510
    %v4735 = vpop.f32.mrb[0].mxu0
    %v4736 = vadd.f32 0.0, %v4735
    %v4737 = vpop.f32.mrb[0].mxu0
    %v4738 = vpop.f32.mrb[0].mxu0
    %v4739 = vadd.f32 0.0, %v4738
    %v4740 = vpop.f32.mrb[0].mxu0
    %4741 = vmatprep.mubr.bf16.mxu0 %v3456
    %4742 = vmatmul.mubr.bf16.gmra.mrb[0].mxu0 %v2512
    %v4743 = vpop.f32.mrb[0].mxu0
    %v4744 = vadd.f32 0.0, %v4743
    %v4745 = vpop.f32.mrb[0].mxu0
    %v4746 = vpop.f32.mrb[0].mxu0
    %v4747 = vadd.f32 0.0, %v4746
    %v4748 = vpop.f32.mrb[0].mxu0
    %4749 = vmatprep.mubr.bf16.mxu0 %v3459
    %4750 = vmatmul.mubr.bf16.gmra.mrb[0].mxu0 %v2514
    %v4751 = vpop.f32.mrb[0].mxu0
    %v4752 = vadd.f32 0.0, %v4751
    %v4753 = vpop.f32.mrb[0].mxu0
    %v4754 = vpop.f32.mrb[0].mxu0
    %v4755 = vadd.f32 0.0, %v4754
    %v4756 = vpop.f32.mrb[0].mxu0
    %4757 = vmatprep.mubr.bf16.mxu0 %v3462
    %4758 = vmatmul.mubr.bf16.gmra.mrb[0].mxu0 %v2516
    %v4759 = vpop.f32.mrb[0].mxu0
    %v4760 = vadd.f32 0.0, %v4759
    %v4761 = vpop.f32.mrb[0].mxu0
    %v4762 = vpop.f32.mrb[0].mxu0
    %v4763 = vadd.f32 0.0, %v4762
    %v4764 = vpop.f32.mrb[0].mxu0
    %4765 = vmatprep.mubr.bf16.mxu0 %v3465
    %4766 = vmatmul.mubr.bf16.gmra.mrb[0].mxu0 %v2518
    %v4767 = vpop.f32.mrb[0].mxu0
    %v4768 = vadd.f32 0.0, %v4767
    %v4769 = vpop.f32.mrb[0].mxu0
    %v4770 = vpop.f32.mrb[0].mxu0
    %v4771 = vadd.f32 0.0, %v4770
    %v4772 = vpop.f32.mrb[0].mxu0
    %4773 = vmatprep.mubr.bf16.mxu0 %v3468
    %4774 = vmatmul.mubr.bf16.gmra.mrb[0].mxu0 %v2520
    %v4775 = vpop.f32.mrb[0].mxu0
    %v4776 = vadd.f32 0.0, %v4775
    %v4777 = vpop.f32.mrb[0].mxu0
    %v4778 = vpop.f32.mrb[0].mxu0
    %v4779 = vadd.f32 0.0, %v4778
    %v4780 = vpop.f32.mrb[0].mxu0
    %4781 = vmatprep.mubr.bf16.mxu0 %v3471
    %4782 = vmatmul.mubr.bf16.gmra.mrb[0].mxu0 %v2522
    %v4783 = vpop.f32.mrb[0].mxu0
    %v4784 = vadd.f32 0.0, %v4783
    %v4785 = vpop.f32.mrb[0].mxu0
    %v4786 = vpop.f32.mrb[0].mxu0
    %v4787 = vadd.f32 0.0, %v4786
    %v4788 = vpop.f32.mrb[0].mxu0
    %4789 = vmatprep.mubr.bf16.mxu0 %v3474
    %4790 = vmatmul.mubr.bf16.gmra.mrb[0].mxu0 %v2524
    %v4791 = vpop.f32.mrb[0].mxu0
    %v4792 = vadd.f32 0.0, %v4791
    %v4793 = vpop.f32.mrb[0].mxu0
    %v4794 = vpop.f32.mrb[0].mxu0
    %v4795 = vadd.f32 0.0, %v4794
    %v4796 = vpop.f32.mrb[0].mxu0
    %4797 = vmatprep.mubr.bf16.mxu0 %v3477
    %4798 = vmatmul.mubr.bf16.gmra.mrb[0].mxu0 %v2526
    %v4799 = vpop.f32.mrb[0].mxu0
    %v4800 = vadd.f32 0.0, %v4799
    %v4801 = vpop.f32.mrb[0].mxu0
    %v4802 = vpop.f32.mrb[0].mxu0
    %v4803 = vadd.f32 0.0, %v4802
    %v4804 = vpop.f32.mrb[0].mxu0
    %4805 = vmatprep.mubr.bf16.mxu0 %v3480
    %4806 = vmatmul.mubr.bf16.gmra.mrb[0].mxu0 %v2528
    %v4807 = vpop.f32.mrb[0].mxu0
    %v4808 = vadd.f32 0.0, %v4807
    %v4809 = vpop.f32.mrb[0].mxu0
    %v4810 = vpop.f32.mrb[0].mxu0
    %v4811 = vadd.f32 0.0, %v4810
    %v4812 = vpop.f32.mrb[0].mxu0
    %4813 = vmatprep.mubr.bf16.mxu0 %v3483
    %4814 = vmatmul.mubr.bf16.gmra.mrb[0].mxu0 %v2530
    %v4815 = vpop.f32.mrb[0].mxu0
    %v4816 = vadd.f32 0.0, %v4815
    %v4817 = vpop.f32.mrb[0].mxu0
    %v4818 = vpop.f32.mrb[0].mxu0
    %v4819 = vadd.f32 0.0, %v4818
    %v4820 = vpop.f32.mrb[0].mxu0
    %4821 = vmatprep.mubr.bf16.mxu0 %v3486
    %4822 = vmatmul.mubr.bf16.gmra.mrb[0].mxu0 %v2532
    %v4823 = vpop.f32.mrb[0].mxu0
    %v4824 = vadd.f32 0.0, %v4823
    %v4825 = vpop.f32.mrb[0].mxu0
    %v4826 = vpop.f32.mrb[0].mxu0
    %v4827 = vadd.f32 0.0, %v4826
    %v4828 = vpop.f32.mrb[0].mxu0
    %4829 = vmatprep.mubr.bf16.mxu0 %v3489
    %4830 = vmatmul.mubr.bf16.gmra.mrb[0].mxu0 %v2534
    %v4831 = vpop.f32.mrb[0].mxu0
    %v4832 = vadd.f32 0.0, %v4831
    %v4833 = vpop.f32.mrb[0].mxu0
    %v4834 = vpop.f32.mrb[0].mxu0
    %v4835 = vadd.f32 0.0, %v4834
    %v4836 = vpop.f32.mrb[0].mxu0
    %4837 = vmatprep.mubr.bf16.mxu0 %v3492
    %4838 = vmatmul.mubr.bf16.gmra.mrb[0].mxu0 %v2536
    %v4839 = vpop.f32.mrb[0].mxu0
    %v4840 = vadd.f32 0.0, %v4839
    %v4841 = vpop.f32.mrb[0].mxu0
    %v4842 = vpop.f32.mrb[0].mxu0
    %v4843 = vadd.f32 0.0, %v4842
    %v4844 = vpop.f32.mrb[0].mxu0
    %4845 = vmatprep.mubr.bf16.mxu0 %v3495
    %4846 = vmatmul.mubr.bf16.gmra.mrb[0].mxu0 %v2538
    %v4847 = vpop.f32.mrb[0].mxu0
    %v4848 = vadd.f32 0.0, %v4847
    %v4849 = vpop.f32.mrb[0].mxu0
    %v4850 = vpop.f32.mrb[0].mxu0
    %v4851 = vadd.f32 0.0, %v4850
    %v4852 = vpop.f32.mrb[0].mxu0
    %4853 = vmatprep.mubr.bf16.mxu0 %v3498
    %4854 = vmatmul.mubr.bf16.gmra.mrb[0].mxu0 %v2540
    %v4855 = vpop.f32.mrb[0].mxu0
    %v4856 = vadd.f32 0.0, %v4855
    %v4857 = vpop.f32.mrb[0].mxu0
    %v4858 = vpop.f32.mrb[0].mxu0
    %v4859 = vadd.f32 0.0, %v4858
    %v4860 = vpop.f32.mrb[0].mxu0
    %4861 = vmatprep.mubr.bf16.mxu0 %v3501
    %4862 = vmatmul.mubr.bf16.gmra.mrb[0].mxu0 %v2542
    %v4863 = vpop.f32.mrb[0].mxu0
    %v4864 = vadd.f32 0.0, %v4863
    %v4865 = vpop.f32.mrb[0].mxu0
    %v4866 = vpop.f32.mrb[0].mxu0
    %v4867 = vadd.f32 0.0, %v4866
    %v4868 = vpop.f32.mrb[0].mxu0
    %4869 = vmatprep.mubr.bf16.mxu0 %v3504
    %4870 = vmatmul.mubr.bf16.gmra.mrb[0].mxu0 %v2544
    %v4871 = vpop.f32.mrb[0].mxu0
    %v4872 = vadd.f32 0.0, %v4871
    %v4873 = vpop.f32.mrb[0].mxu0
    %v4874 = vpop.f32.mrb[0].mxu0
    %v4875 = vadd.f32 0.0, %v4874
    %v4876 = vpop.f32.mrb[0].mxu0
    %4877 = vmatprep.mubr.bf16.mxu0 %v3507
    %4878 = vmatmul.mubr.bf16.gmra.mrb[0].mxu0 %v2546
    %v4879 = vpop.f32.mrb[0].mxu0
    %v4880 = vadd.f32 0.0, %v4879
    %v4881 = vpop.f32.mrb[0].mxu0
    %v4882 = vpop.f32.mrb[0].mxu0
    %v4883 = vadd.f32 0.0, %v4882
    %v4884 = vpop.f32.mrb[0].mxu0
    %4885 = vmatprep.mubr.bf16.mxu0 %v3510
    %4886 = vmatmul.mubr.bf16.gmra.mrb[0].mxu0 %v2548
    %v4887 = vpop.f32.mrb[0].mxu0
    %v4888 = vadd.f32 0.0, %v4887
    %v4889 = vpop.f32.mrb[0].mxu0
    %v4890 = vpop.f32.mrb[0].mxu0
    %v4891 = vadd.f32 0.0, %v4890
    %v4892 = vpop.f32.mrb[0].mxu0
    %4893 = vmatprep.mubr.bf16.mxu0 %v3513
    %4894 = vmatmul.mubr.bf16.gmra.mrb[0].mxu0 %v2550
    %v4895 = vpop.f32.mrb[0].mxu0
    %v4896 = vadd.f32 0.0, %v4895
    %v4897 = vpop.f32.mrb[0].mxu0
    %v4898 = vpop.f32.mrb[0].mxu0
    %v4899 = vadd.f32 0.0, %v4898
    %v4900 = vpop.f32.mrb[0].mxu0
    %4901 = vmatprep.mubr.bf16.mxu0 %v3516
    %4902 = vmatmul.mubr.bf16.gmra.mrb[0].mxu0 %v2552
    %v4903 = vpop.f32.mrb[0].mxu0
    %v4904 = vadd.f32 0.0, %v4903
    %v4905 = vpop.f32.mrb[0].mxu0
    %v4906 = vpop.f32.mrb[0].mxu0
    %v4907 = vadd.f32 0.0, %v4906
    %v4908 = vpop.f32.mrb[0].mxu0
    %4909 = vmatprep.mubr.bf16.mxu0 %v3519
    %4910 = vmatmul.mubr.bf16.gmra.mrb[0].mxu0 %v2554
    %v4911 = vpop.f32.mrb[0].mxu0
    %v4912 = vadd.f32 0.0, %v4911
    %v4913 = vpop.f32.mrb[0].mxu0
    %v4914 = vpop.f32.mrb[0].mxu0
    %v4915 = vadd.f32 0.0, %v4914
    %v4916 = vpop.f32.mrb[0].mxu0
    %4917 = vmatprep.mubr.bf16.mxu0 %v3522
    %4918 = vmatmul.mubr.bf16.gmra.mrb[0].mxu0 %v2556
    %v4919 = vpop.f32.mrb[0].mxu0
    %v4920 = vadd.f32 0.0, %v4919
    %v4921 = vpop.f32.mrb[0].mxu0
    %v4922 = vpop.f32.mrb[0].mxu0
    %v4923 = vadd.f32 0.0, %v4922
    %v4924 = vpop.f32.mrb[0].mxu0
    %4925 = vmatprep.mubr.bf16.mxu0 %v3525
    %4926 = vmatmul.mubr.bf16.gmra.mrb[0].mxu0 %v2558
    %v4927 = vpop.f32.mrb[0].mxu0
    %v4928 = vadd.f32 0.0, %v4927
    %v4929 = vpop.f32.mrb[0].mxu0
    %v4930 = vpop.f32.mrb[0].mxu0
    %v4931 = vadd.f32 0.0, %v4930
    %v4932 = vpop.f32.mrb[0].mxu0
    %4933 = vmatprep.mubr.bf16.mxu0 %v3528
    %4934 = vmatmul.mubr.bf16.gmra.mrb[0].mxu0 %v2560
    %v4935 = vpop.f32.mrb[0].mxu0
    %v4936 = vadd.f32 0.0, %v4935
    %v4937 = vpop.f32.mrb[0].mxu0
    %v4938 = vpop.f32.mrb[0].mxu0
    %v4939 = vadd.f32 0.0, %v4938
    %v4940 = vpop.f32.mrb[0].mxu0
    %4941 = vmatprep.mubr.bf16.mxu0 %v3531
    %4942 = vmatmul.mubr.bf16.gmra.mrb[0].mxu0 %v2562
    %v4943 = vpop.f32.mrb[0].mxu0
    %v4944 = vadd.f32 0.0, %v4943
    %v4945 = vpop.f32.mrb[0].mxu0
    %v4946 = vpop.f32.mrb[0].mxu0
    %v4947 = vadd.f32 0.0, %v4946
    %v4948 = vpop.f32.mrb[0].mxu0
    %4949 = vmatprep.mubr.bf16.mxu0 %v3534
    %4950 = vmatmul.mubr.bf16.gmra.mrb[0].mxu0 %v2564
    %v4951 = vpop.f32.mrb[0].mxu0
    %v4952 = vadd.f32 0.0, %v4951
    %v4953 = vpop.f32.mrb[0].mxu0
    %v4954 = vpop.f32.mrb[0].mxu0
    %v4955 = vadd.f32 0.0, %v4954
    %v4956 = vpop.f32.mrb[0].mxu0
    %4957 = vmatprep.mubr.bf16.mxu0 %v3537
    %4958 = vmatmul.mubr.bf16.gmra.mrb[0].mxu0 %v2566
    %v4959 = vpop.f32.mrb[0].mxu0
    %v4960 = vadd.f32 0.0, %v4959
    %v4961 = vpop.f32.mrb[0].mxu0
    %v4962 = vpop.f32.mrb[0].mxu0
    %v4963 = vadd.f32 0.0, %v4962
    %v4964 = vpop.f32.mrb[0].mxu0
    %4965 = vmatprep.mubr.bf16.mxu0 %v3540
    %4966 = vmatmul.mubr.bf16.gmra.mrb[0].mxu0 %v2568
    %v4967 = vpop.f32.mrb[0].mxu0
    %v4968 = vadd.f32 0.0, %v4967
    %v4969 = vpop.f32.mrb[0].mxu0
    %v4970 = vpop.f32.mrb[0].mxu0
    %v4971 = vadd.f32 0.0, %v4970
    %v4972 = vpop.f32.mrb[0].mxu0
    %4973 = vmatprep.mubr.bf16.mxu0 %v3543
    %4974 = vmatmul.mubr.bf16.gmra.mrb[0].mxu0 %v2570
    %v4975 = vpop.f32.mrb[0].mxu0
    %v4976 = vadd.f32 0.0, %v4975
    %v4977 = vpop.f32.mrb[0].mxu0
    %v4978 = vpop.f32.mrb[0].mxu0
    %v4979 = vadd.f32 0.0, %v4978
    %v4980 = vpop.f32.mrb[0].mxu0
    %4981 = vmatprep.mubr.bf16.mxu0 %v3546
    %4982 = vmatmul.mubr.bf16.gmra.mrb[0].mxu0 %v2572
    %v4983 = vpop.f32.mrb[0].mxu0
    %v4984 = vadd.f32 0.0, %v4983
    %v4985 = vpop.f32.mrb[0].mxu0
    %v4986 = vpop.f32.mrb[0].mxu0
    %v4987 = vadd.f32 0.0, %v4986
    %v4988 = vpop.f32.mrb[0].mxu0
    %4989 = vmatprep.mubr.bf16.mxu0 %v3549
    %4990 = vmatmul.mubr.bf16.gmra.mrb[0].mxu0 %v2574
    %v4991 = vpop.f32.mrb[0].mxu0
    %v4992 = vadd.f32 0.0, %v4991
    %v4993 = vpop.f32.mrb[0].mxu0
    %v4994 = vpop.f32.mrb[0].mxu0
    %v4995 = vadd.f32 0.0, %v4994
    %v4996 = vpop.f32.mrb[0].mxu0
    %4997 = vmatprep.mubr.bf16.mxu0 %v3552
    %4998 = vmatmul.mubr.bf16.gmra.mrb[0].mxu0 %v2576
    %v4999 = vpop.f32.mrb[0].mxu0
    %v5000 = vadd.f32 0.0, %v4999
    %v5001 = vpop.f32.mrb[0].mxu0
    %v5002 = vpop.f32.mrb[0].mxu0
    %v5003 = vadd.f32 0.0, %v5002
    %v5004 = vpop.f32.mrb[0].mxu0
    %5005 = vmatprep.mubr.bf16.mxu0 %v3555
    %5006 = vmatmul.mubr.bf16.gmra.mrb[0].mxu0 %v2578
    %v5007 = vpop.f32.mrb[0].mxu0
    %v5008 = vadd.f32 0.0, %v5007
    %v5009 = vpop.f32.mrb[0].mxu0
    %v5010 = vpop.f32.mrb[0].mxu0
    %v5011 = vadd.f32 0.0, %v5010
    %v5012 = vpop.f32.mrb[0].mxu0
    %5013 = vmatprep.mubr.bf16.mxu0 %v3558
    %5014 = vmatmul.mubr.bf16.gmra.mrb[0].mxu0 %v2580
    %v5015 = vpop.f32.mrb[0].mxu0
    %v5016 = vadd.f32 0.0, %v5015
    %v5017 = vpop.f32.mrb[0].mxu0
    %v5018 = vpop.f32.mrb[0].mxu0
    %v5019 = vadd.f32 0.0, %v5018
    %v5020 = vpop.f32.mrb[0].mxu0
    %5021 = vmatprep.mubr.bf16.mxu0 %v3561
    %5022 = vmatmul.mubr.bf16.gmra.mrb[0].mxu0 %v2582
    %v5023 = vpop.f32.mrb[0].mxu0
    %v5024 = vadd.f32 0.0, %v5023
    %v5025 = vpop.f32.mrb[0].mxu0
    %v5026 = vpop.f32.mrb[0].mxu0
    %v5027 = vadd.f32 0.0, %v5026
    %v5028 = vpop.f32.mrb[0].mxu0
    %5029 = vmatprep.mubr.bf16.mxu0 %v3564
    %5030 = vmatmul.mubr.bf16.gmra.mrb[0].mxu0 %v2584
    %v5031 = vpop.f32.mrb[0].mxu0
    %v5032 = vadd.f32 0.0, %v5031
    %v5033 = vpop.f32.mrb[0].mxu0
    %v5034 = vpop.f32.mrb[0].mxu0
    %v5035 = vadd.f32 0.0, %v5034
    %v5036 = vpop.f32.mrb[0].mxu0
    %5037 = vmatprep.mubr.bf16.mxu0 %v3567
    %5038 = vmatmul.mubr.bf16.gmra.mrb[0].mxu0 %v2586
    %v5039 = vpop.f32.mrb[0].mxu0
    %v5040 = vadd.f32 0.0, %v5039
    %v5041 = vpop.f32.mrb[0].mxu0
    %v5042 = vpop.f32.mrb[0].mxu0
    %v5043 = vadd.f32 0.0, %v5042
    %v5044 = vpop.f32.mrb[0].mxu0
    %5045 = vmatprep.mubr.bf16.mxu0 %v3570
    %5046 = vmatmul.mubr.bf16.gmra.mrb[0].mxu0 %v2588
    %v5047 = vpop.f32.mrb[0].mxu0
    %v5048 = vadd.f32 0.0, %v5047
    %v5049 = vpop.f32.mrb[0].mxu0
    %v5050 = vpop.f32.mrb[0].mxu0
    %v5051 = vadd.f32 0.0, %v5050
    %v5052 = vpop.f32.mrb[0].mxu0
    %5053 = vmatprep.mubr.bf16.mxu0 %v3573
    %5054 = vmatmul.mubr.bf16.gmra.mrb[0].mxu0 %v2590
    %v5055 = vpop.f32.mrb[0].mxu0
    %v5056 = vadd.f32 0.0, %v5055
    %v5057 = vpop.f32.mrb[0].mxu0
    %v5058 = vpop.f32.mrb[0].mxu0
    %v5059 = vadd.f32 0.0, %v5058
    %v5060 = vpop.f32.mrb[0].mxu0
    %5061 = vmatprep.mubr.bf16.mxu0 %v3576
    %5062 = vmatmul.mubr.bf16.gmra.mrb[0].mxu0 %v2592
    %v5063 = vpop.f32.mrb[0].mxu0
    %v5064 = vadd.f32 0.0, %v5063
    %v5065 = vpop.f32.mrb[0].mxu0
    %v5066 = vpop.f32.mrb[0].mxu0
    %v5067 = vadd.f32 0.0, %v5066
    %v5068 = vpop.f32.mrb[0].mxu0
    %5069 = vmatprep.mubr.bf16.mxu0 %v3579
    %5070 = vmatmul.mubr.bf16.gmra.mrb[0].mxu0 %v2594
    %v5071 = vpop.f32.mrb[0].mxu0
    %v5072 = vadd.f32 0.0, %v5071
    %v5073 = vpop.f32.mrb[0].mxu0
    %v5074 = vpop.f32.mrb[0].mxu0
    %v5075 = vadd.f32 0.0, %v5074
    %v5076 = vpop.f32.mrb[0].mxu0
    %5077 = vmatprep.mubr.bf16.mxu0 %v3582
    %5078 = vmatmul.mubr.bf16.gmra.mrb[0].mxu0 %v2596
    %v5079 = vpop.f32.mrb[0].mxu0
    %v5080 = vadd.f32 0.0, %v5079
    %v5081 = vpop.f32.mrb[0].mxu0
    %v5082 = vpop.f32.mrb[0].mxu0
    %v5083 = vadd.f32 0.0, %v5082
    %v5084 = vpop.f32.mrb[0].mxu0
    %5085 = vmatprep.mubr.bf16.mxu0 %v3585
    %5086 = vmatmul.mubr.bf16.gmra.mrb[0].mxu0 %v2598
    %v5087 = vpop.f32.mrb[0].mxu0
    %v5088 = vadd.f32 0.0, %v5087
    %v5089 = vpop.f32.mrb[0].mxu0
    %v5090 = vpop.f32.mrb[0].mxu0
    %v5091 = vadd.f32 0.0, %v5090
    %v5092 = vpop.f32.mrb[0].mxu0
    %5093 = vmatprep.mubr.bf16.mxu0 %v3588
    %5094 = vmatmul.mubr.bf16.gmra.mrb[0].mxu0 %v2600
    %v5095 = vpop.f32.mrb[0].mxu0
    %v5096 = vadd.f32 0.0, %v5095
    %v5097 = vpop.f32.mrb[0].mxu0
    %v5098 = vpop.f32.mrb[0].mxu0
    %v5099 = vadd.f32 0.0, %v5098
    %v5100 = vpop.f32.mrb[0].mxu0
    %5101 = vmatprep.mubr.bf16.mxu0 %v3591
    %5102 = vmatmul.mubr.bf16.gmra.mrb[0].mxu0 %v2602
    %v5103 = vpop.f32.mrb[0].mxu0
    %v5104 = vadd.f32 0.0, %v5103
    %v5105 = vpop.f32.mrb[0].mxu0
    %v5106 = vpop.f32.mrb[0].mxu0
    %v5107 = vadd.f32 0.0, %v5106
    %v5108 = vpop.f32.mrb[0].mxu0
    %5109 = vmatprep.mubr.bf16.mxu0 %v3594
    %5110 = vmatmul.mubr.bf16.gmra.mrb[0].mxu0 %v2604
    %v5111 = vpop.f32.mrb[0].mxu0
    %v5112 = vadd.f32 0.0, %v5111
    %v5113 = vpop.f32.mrb[0].mxu0
    %v5114 = vpop.f32.mrb[0].mxu0
    %v5115 = vadd.f32 0.0, %v5114
    %v5116 = vpop.f32.mrb[0].mxu0
    %5117 = vmatprep.mubr.bf16.mxu0 %v3597
    %5118 = vmatmul.mubr.bf16.gmra.mrb[0].mxu0 %v2606
    %v5119 = vpop.f32.mrb[0].mxu0
    %v5120 = vadd.f32 0.0, %v5119
    %v5121 = vpop.f32.mrb[0].mxu0
    %v5122 = vpop.f32.mrb[0].mxu0
    %v5123 = vadd.f32 0.0, %v5122
    %v5124 = vpop.f32.mrb[0].mxu0
    %5125 = vmatprep.mubr.bf16.mxu0 %v3600
    %5126 = vmatmul.mubr.bf16.gmra.mrb[0].mxu0 %v2608
    %v5127 = vpop.f32.mrb[0].mxu0
    %v5128 = vadd.f32 0.0, %v5127
    %v5129 = vpop.f32.mrb[0].mxu0
    %v5130 = vpop.f32.mrb[0].mxu0
    %v5131 = vadd.f32 0.0, %v5130
    %v5132 = vpop.f32.mrb[0].mxu0
    %5133 = vmatprep.mubr.bf16.mxu0 %v3603
    %5134 = vmatmul.mubr.bf16.gmra.mrb[0].mxu0 %v2610
    %v5135 = vpop.f32.mrb[0].mxu0
    %v5136 = vadd.f32 0.0, %v5135
    %v5137 = vpop.f32.mrb[0].mxu0
    %v5138 = vpop.f32.mrb[0].mxu0
    %v5139 = vadd.f32 0.0, %v5138
    %v5140 = vpop.f32.mrb[0].mxu0
    %5141 = vmatprep.mubr.bf16.mxu0 %v3606
    %5142 = vmatmul.mubr.bf16.gmra.mrb[0].mxu0 %v2612
    %v5143 = vpop.f32.mrb[0].mxu0
    %v5144 = vadd.f32 0.0, %v5143
    %v5145 = vpop.f32.mrb[0].mxu0
    %v5146 = vpop.f32.mrb[0].mxu0
    %v5147 = vadd.f32 0.0, %v5146
    %v5148 = vpop.f32.mrb[0].mxu0
    %5149 = vmatprep.mubr.bf16.mxu0 %v3609
    %5150 = vmatmul.mubr.bf16.gmra.mrb[0].mxu0 %v2614
    %v5151 = vpop.f32.mrb[0].mxu0
    %v5152 = vadd.f32 0.0, %v5151
    %v5153 = vpop.f32.mrb[0].mxu0
    %v5154 = vpop.f32.mrb[0].mxu0
    %v5155 = vadd.f32 0.0, %v5154
    %v5156 = vpop.f32.mrb[0].mxu0
    %5157 = vmatprep.mubr.bf16.mxu0 %v3612
    %5158 = vmatmul.mubr.bf16.gmra.mrb[0].mxu0 %v2616
    %v5159 = vpop.f32.mrb[0].mxu0
    %v5160 = vadd.f32 0.0, %v5159
    %v5161 = vpop.f32.mrb[0].mxu0
    %v5162 = vpop.f32.mrb[0].mxu0
    %v5163 = vadd.f32 0.0, %v5162
    %v5164 = vpop.f32.mrb[0].mxu0
    %5165 = vmatprep.mubr.bf16.mxu0 %v3615
    %5166 = vmatmul.mubr.bf16.gmra.mrb[0].mxu0 %v2618
    %v5167 = vpop.f32.mrb[0].mxu0
    %v5168 = vadd.f32 0.0, %v5167
    %v5169 = vpop.f32.mrb[0].mxu0
    %v5170 = vpop.f32.mrb[0].mxu0
    %v5171 = vadd.f32 0.0, %v5170
    %v5172 = vpop.f32.mrb[0].mxu0
    %5173 = vmatprep.mubr.bf16.mxu0 %v3618
    %5174 = vmatmul.mubr.bf16.gmra.mrb[0].mxu0 %v2620
    %v5175 = vpop.f32.mrb[0].mxu0
    %v5176 = vadd.f32 0.0, %v5175
    %v5177 = vpop.f32.mrb[0].mxu0
    %v5178 = vpop.f32.mrb[0].mxu0
    %v5179 = vadd.f32 0.0, %v5178
    %v5180 = vpop.f32.mrb[0].mxu0
    %5181 = vmatprep.mubr.bf16.mxu0 %v3621
    %5182 = vmatmul.mubr.bf16.gmra.mrb[0].mxu0 %v2622
    %v5183 = vpop.f32.mrb[0].mxu0
    %v5184 = vadd.f32 0.0, %v5183
    %v5185 = vpop.f32.mrb[0].mxu0
    %v5186 = vpop.f32.mrb[0].mxu0
    %v5187 = vadd.f32 0.0, %v5186
    %v5188 = vpop.f32.mrb[0].mxu0
    %5189 = vmatprep.mubr.bf16.mxu0 %v3624
    %5190 = vmatmul.mubr.bf16.gmra.mrb[0].mxu0 %v2624
    %v5191 = vpop.f32.mrb[0].mxu0
    %v5192 = vadd.f32 0.0, %v5191
    %v5193 = vpop.f32.mrb[0].mxu0
    %v5194 = vpop.f32.mrb[0].mxu0
    %v5195 = vadd.f32 0.0, %v5194
    %v5196 = vpop.f32.mrb[0].mxu0
    %5197 = vmatprep.mubr.bf16.mxu0 %v3627
    %5198 = vmatmul.mubr.bf16.gmra.mrb[0].mxu0 %v2626
    %v5199 = vpop.f32.mrb[0].mxu0
    %v5200 = vadd.f32 0.0, %v5199
    %v5201 = vpop.f32.mrb[0].mxu0
    %v5202 = vpop.f32.mrb[0].mxu0
    %v5203 = vadd.f32 0.0, %v5202
    %v5204 = vpop.f32.mrb[0].mxu0
    %5205 = vmatprep.mubr.bf16.mxu0 %v3630
    %5206 = vmatmul.mubr.bf16.gmra.mrb[0].mxu0 %v2628
    %v5207 = vpop.f32.mrb[0].mxu0
    %v5208 = vadd.f32 0.0, %v5207
    %v5209 = vpop.f32.mrb[0].mxu0
    %v5210 = vpop.f32.mrb[0].mxu0
    %v5211 = vadd.f32 0.0, %v5210
    %v5212 = vpop.f32.mrb[0].mxu0
    %5213 = vmatprep.mubr.bf16.mxu0 %v3633
    %5214 = vmatmul.mubr.bf16.gmra.mrb[0].mxu0 %v2630
    %v5215 = vpop.f32.mrb[0].mxu0
    %v5216 = vadd.f32 0.0, %v5215
    %v5217 = vpop.f32.mrb[0].mxu0
    %v5218 = vpop.f32.mrb[0].mxu0
    %v5219 = vadd.f32 0.0, %v5218
    %v5220 = vpop.f32.mrb[0].mxu0
    %5221 = vmatprep.mubr.bf16.mxu0 %v3636
    %5222 = vmatmul.mubr.bf16.gmra.mrb[0].mxu0 %v2632
    %v5223 = vpop.f32.mrb[0].mxu0
    %v5224 = vadd.f32 0.0, %v5223
    %v5225 = vpop.f32.mrb[0].mxu0
    %v5226 = vpop.f32.mrb[0].mxu0
    %v5227 = vadd.f32 0.0, %v5226
    %v5228 = vpop.f32.mrb[0].mxu0
    %5229 = vmatprep.mubr.bf16.mxu0 %v3639
    %5230 = vmatmul.mubr.bf16.gmra.mrb[0].mxu0 %v2634
    %v5231 = vpop.f32.mrb[0].mxu0
    %v5232 = vadd.f32 0.0, %v5231
    %v5233 = vpop.f32.mrb[0].mxu0
    %v5234 = vpop.f32.mrb[0].mxu0
    %v5235 = vadd.f32 0.0, %v5234
    %v5236 = vpop.f32.mrb[0].mxu0
    %5237 = vmatprep.mubr.bf16.mxu0 %v3642
    %5238 = vmatmul.mubr.bf16.gmra.mrb[0].mxu0 %v2636
    %v5239 = vpop.f32.mrb[0].mxu0
    %v5240 = vadd.f32 0.0, %v5239
    %v5241 = vpop.f32.mrb[0].mxu0
    %v5242 = vpop.f32.mrb[0].mxu0
    %v5243 = vadd.f32 0.0, %v5242
    %v5244 = vpop.f32.mrb[0].mxu0
    %5245 = vmatprep.mubr.bf16.mxu0 %v3645
    %5246 = vmatmul.mubr.bf16.gmra.mrb[0].mxu0 %v2638
    %v5247 = vpop.f32.mrb[0].mxu0
    %v5248 = vadd.f32 0.0, %v5247
    %v5249 = vpop.f32.mrb[0].mxu0
    %v5250 = vpop.f32.mrb[0].mxu0
    %v5251 = vadd.f32 0.0, %v5250
    %v5252 = vpop.f32.mrb[0].mxu0
    %5253 = vmatprep.mubr.bf16.mxu0 %v3648
    %5254 = vmatmul.mubr.bf16.gmra.mrb[0].mxu0 %v2640
    %v5255 = vpop.f32.mrb[0].mxu0
    %v5256 = vadd.f32 0.0, %v5255
    %v5257 = vpop.f32.mrb[0].mxu0
    %v5258 = vpop.f32.mrb[0].mxu0
    %v5259 = vadd.f32 0.0, %v5258
    %v5260 = vpop.f32.mrb[0].mxu0
    %5261 = vmatprep.mubr.bf16.mxu0 %v3651
    %5262 = vmatmul.mubr.bf16.gmra.mrb[0].mxu0 %v2642
    %v5263 = vpop.f32.mrb[0].mxu0
    %v5264 = vadd.f32 0.0, %v5263
    %v5265 = vpop.f32.mrb[0].mxu0
    %v5266 = vpop.f32.mrb[0].mxu0
    %v5267 = vadd.f32 0.0, %v5266
    %v5268 = vpop.f32.mrb[0].mxu0
    %5269 = vmatprep.mubr.bf16.mxu0 %v3654
    %5270 = vmatmul.mubr.bf16.gmra.mrb[0].mxu0 %v2644
    %v5271 = vpop.f32.mrb[0].mxu0
    %v5272 = vadd.f32 0.0, %v5271
    %v5273 = vpop.f32.mrb[0].mxu0
    %v5274 = vpop.f32.mrb[0].mxu0
    %v5275 = vadd.f32 0.0, %v5274
    %v5276 = vpop.f32.mrb[0].mxu0
    %5277 = vmatprep.mubr.bf16.mxu0 %v3657
    %5278 = vmatmul.mubr.bf16.gmra.mrb[0].mxu0 %v2646
    %v5279 = vpop.f32.mrb[0].mxu0
    %v5280 = vadd.f32 0.0, %v5279
    %v5281 = vpop.f32.mrb[0].mxu0
    %v5282 = vpop.f32.mrb[0].mxu0
    %v5283 = vadd.f32 0.0, %v5282
    %v5284 = vpop.f32.mrb[0].mxu0
    %5285 = vmatprep.mubr.bf16.mxu0 %v3660
    %5286 = vmatmul.mubr.bf16.gmra.mrb[0].mxu0 %v2648
    %v5287 = vpop.f32.mrb[0].mxu0
    %v5288 = vadd.f32 0.0, %v5287
    %v5289 = vpop.f32.mrb[0].mxu0
    %v5290 = vpop.f32.mrb[0].mxu0
    %v5291 = vadd.f32 0.0, %v5290
    %v5292 = vpop.f32.mrb[0].mxu0
    %5293 = vmatprep.mubr.bf16.mxu0 %v3663
    %5294 = vmatmul.mubr.bf16.gmra.mrb[0].mxu0 %v2650
    %v5295 = vpop.f32.mrb[0].mxu0
    %v5296 = vadd.f32 0.0, %v5295
    %v5297 = vpop.f32.mrb[0].mxu0
    %v5298 = vpop.f32.mrb[0].mxu0
    %v5299 = vadd.f32 0.0, %v5298
    %v5300 = vpop.f32.mrb[0].mxu0
    %5301 = vmatprep.mubr.bf16.mxu0 %v3666
    %5302 = vmatmul.mubr.bf16.gmra.mrb[0].mxu0 %v2652
    %v5303 = vpop.f32.mrb[0].mxu0
    %v5304 = vadd.f32 0.0, %v5303
    %v5305 = vpop.f32.mrb[0].mxu0
    %v5306 = vpop.f32.mrb[0].mxu0
    %v5307 = vadd.f32 0.0, %v5306
    %v5308 = vpop.f32.mrb[0].mxu0
    %5309 = vmatprep.mubr.bf16.mxu0 %v3669
    %5310 = vmatmul.mubr.bf16.gmra.mrb[0].mxu0 %v2654
    %v5311 = vpop.f32.mrb[0].mxu0
    %v5312 = vadd.f32 0.0, %v5311
    %v5313 = vpop.f32.mrb[0].mxu0
    %v5314 = vpop.f32.mrb[0].mxu0
    %v5315 = vadd.f32 0.0, %v5314
    %v5316 = vpop.f32.mrb[0].mxu0
    %5317 = vmatprep.mubr.bf16.mxu0 %v3672
    %5318 = vmatmul.mubr.bf16.gmra.mrb[0].mxu0 %v2656
    %v5319 = vpop.f32.mrb[0].mxu0
    %v5320 = vadd.f32 0.0, %v5319
    %v5321 = vpop.f32.mrb[0].mxu0
    %v5322 = vpop.f32.mrb[0].mxu0
    %v5323 = vadd.f32 0.0, %v5322
    %v5324 = vpop.f32.mrb[0].mxu0
    %5325 = vmatprep.mubr.bf16.mxu0 %v3675
    %5326 = vmatmul.mubr.bf16.gmra.mrb[0].mxu0 %v2658
    %v5327 = vpop.f32.mrb[0].mxu0
    %v5328 = vadd.f32 0.0, %v5327
    %v5329 = vpop.f32.mrb[0].mxu0
    %v5330 = vpop.f32.mrb[0].mxu0
    %v5331 = vadd.f32 0.0, %v5330
    %v5332 = vpop.f32.mrb[0].mxu0
    %5333 = vmatprep.mubr.bf16.mxu0 %v3678
    %5334 = vmatmul.mubr.bf16.gmra.mrb[0].mxu0 %v2660
    %v5335 = vpop.f32.mrb[0].mxu0
    %v5336 = vadd.f32 0.0, %v5335
    %v5337 = vpop.f32.mrb[0].mxu0
    %v5338 = vpop.f32.mrb[0].mxu0
    %v5339 = vadd.f32 0.0, %v5338
    %v5340 = vpop.f32.mrb[0].mxu0
    %5341 = vmatprep.mubr.bf16.mxu0 %v3681
    %5342 = vmatmul.mubr.bf16.gmra.mrb[0].mxu0 %v2662
    %v5343 = vpop.f32.mrb[0].mxu0
    %v5344 = vadd.f32 0.0, %v5343
    %v5345 = vpop.f32.mrb[0].mxu0
    %v5346 = vpop.f32.mrb[0].mxu0
    %v5347 = vadd.f32 0.0, %v5346
    %v5348 = vpop.f32.mrb[0].mxu0
    %5349 = vmatprep.mubr.bf16.mxu0 %v3684
    %5350 = vmatmul.mubr.bf16.gmra.mrb[0].mxu0 %v2664
    %v5351 = vpop.f32.mrb[0].mxu0
    %v5352 = vadd.f32 0.0, %v5351
    %v5353 = vpop.f32.mrb[0].mxu0
    %v5354 = vpop.f32.mrb[0].mxu0
    %v5355 = vadd.f32 0.0, %v5354
    %v5356 = vpop.f32.mrb[0].mxu0
    %5357 = vmatprep.mubr.bf16.mxu0 %v3687
    %5358 = vmatmul.mubr.bf16.gmra.mrb[0].mxu0 %v2666
    %v5359 = vpop.f32.mrb[0].mxu0
    %v5360 = vadd.f32 0.0, %v5359
    %v5361 = vpop.f32.mrb[0].mxu0
    %v5362 = vpop.f32.mrb[0].mxu0
    %v5363 = vadd.f32 0.0, %v5362
    %v5364 = vpop.f32.mrb[0].mxu0
    %5365 = vmatprep.mubr.bf16.mxu0 %v3690
    %5366 = vmatmul.mubr.bf16.gmra.mrb[0].mxu0 %v2668
    %v5367 = vpop.f32.mrb[0].mxu0
    %v5368 = vadd.f32 0.0, %v5367
    %v5369 = vpop.f32.mrb[0].mxu0
    %v5370 = vpop.f32.mrb[0].mxu0
    %v5371 = vadd.f32 0.0, %v5370
    %v5372 = vpop.f32.mrb[0].mxu0
    %5373 = vmatprep.mubr.bf16.mxu0 %v3693
    %5374 = vmatmul.mubr.bf16.gmra.mrb[0].mxu0 %v2670
    %v5375 = vpop.f32.mrb[0].mxu0
    %v5376 = vadd.f32 0.0, %v5375
    %v5377 = vpop.f32.mrb[0].mxu0
    %v5378 = vpop.f32.mrb[0].mxu0
    %v5379 = vadd.f32 0.0, %v5378
    %v5380 = vpop.f32.mrb[0].mxu0
    %5381 = vmatprep.mubr.bf16.mxu0 %v3696
    %5382 = vmatmul.mubr.bf16.gmra.mrb[0].mxu0 %v2672
    %v5383 = vpop.f32.mrb[0].mxu0
    %v5384 = vadd.f32 0.0, %v5383
    %v5385 = vpop.f32.mrb[0].mxu0
    %v5386 = vpop.f32.mrb[0].mxu0
    %v5387 = vadd.f32 0.0, %v5386
    %v5388 = vpop.f32.mrb[0].mxu0
    %5389 = vmatprep.mubr.bf16.mxu0 %v3699
    %5390 = vmatmul.mubr.bf16.gmra.mrb[0].mxu0 %v2674
    %v5391 = vpop.f32.mrb[0].mxu0
    %v5392 = vadd.f32 0.0, %v5391
    %v5393 = vpop.f32.mrb[0].mxu0
    %v5394 = vpop.f32.mrb[0].mxu0
    %v5395 = vadd.f32 0.0, %v5394
    %v5396 = vpop.f32.mrb[0].mxu0
    %5397 = vmatprep.mubr.bf16.mxu0 %v3702
    %5398 = vmatmul.mubr.bf16.gmra.mrb[0].mxu0 %v2676
    %v5399 = vpop.f32.mrb[0].mxu0
    %v5400 = vadd.f32 0.0, %v5399
    %v5401 = vpop.f32.mrb[0].mxu0
    %v5402 = vpop.f32.mrb[0].mxu0
    %v5403 = vadd.f32 0.0, %v5402
    %v5404 = vpop.f32.mrb[0].mxu0
    %5405 = vmatprep.mubr.bf16.mxu0 %v3705
    %5406 = vmatmul.mubr.bf16.gmra.mrb[0].mxu0 %v2678
    %v5407 = vpop.f32.mrb[0].mxu0
    %v5408 = vadd.f32 0.0, %v5407
    %v5409 = vpop.f32.mrb[0].mxu0
    %v5410 = vpop.f32.mrb[0].mxu0
    %v5411 = vadd.f32 0.0, %v5410
    %v5412 = vpop.f32.mrb[0].mxu0
    %5413 = vmatprep.mubr.bf16.mxu0 %v3708
    %5414 = vmatmul.mubr.bf16.gmra.mrb[0].mxu0 %v2680
    %v5415 = vpop.f32.mrb[0].mxu0
    %v5416 = vadd.f32 0.0, %v5415
    %v5417 = vpop.f32.mrb[0].mxu0
    %v5418 = vpop.f32.mrb[0].mxu0
    %v5419 = vadd.f32 0.0, %v5418
    %v5420 = vpop.f32.mrb[0].mxu0
    %5421 = vmatprep.mubr.bf16.mxu0 %v3711
    %5422 = vmatmul.mubr.bf16.gmra.mrb[0].mxu0 %v2682
    %v5423 = vpop.f32.mrb[0].mxu0
    %v5424 = vadd.f32 0.0, %v5423
    %v5425 = vpop.f32.mrb[0].mxu0
    %v5426 = vpop.f32.mrb[0].mxu0
    %v5427 = vadd.f32 0.0, %v5426
    %v5428 = vpop.f32.mrb[0].mxu0
    %5429 = vmatprep.mubr.bf16.mxu0 %v3714
    %5430 = vmatmul.mubr.bf16.gmra.mrb[0].mxu0 %v2684
    %v5431 = vpop.f32.mrb[0].mxu0
    %v5432 = vadd.f32 0.0, %v5431
    %v5433 = vpop.f32.mrb[0].mxu0
    %v5434 = vpop.f32.mrb[0].mxu0
    %v5435 = vadd.f32 0.0, %v5434
    %v5436 = vpop.f32.mrb[0].mxu0
    %5437 = vmatprep.mubr.bf16.mxu0 %v3717
    %5438 = vmatmul.mubr.bf16.gmra.mrb[0].mxu0 %v2686
    %v5439 = vpop.f32.mrb[0].mxu0
    %v5440 = vadd.f32 0.0, %v5439
    %v5441 = vpop.f32.mrb[0].mxu0
    %v5442 = vpop.f32.mrb[0].mxu0
    %v5443 = vadd.f32 0.0, %v5442
    %v5444 = vpop.f32.mrb[0].mxu0
    %5445 = vmatprep.mubr.bf16.mxu0 %v3720
    %5446 = vmatmul.mubr.bf16.gmra.mrb[0].mxu0 %v2688
    %v5447 = vpop.f32.mrb[0].mxu0
    %v5448 = vadd.f32 0.0, %v5447
    %v5449 = vpop.f32.mrb[0].mxu0
    %v5450 = vpop.f32.mrb[0].mxu0
    %v5451 = vadd.f32 0.0, %v5450
    %v5452 = vpop.f32.mrb[0].mxu0
    %5453 = vmatprep.mubr.bf16.mxu0 %v3723
    %5454 = vmatmul.mubr.bf16.gmra.mrb[0].mxu0 %v2690
    %v5455 = vpop.f32.mrb[0].mxu0
    %v5456 = vadd.f32 0.0, %v5455
    %v5457 = vpop.f32.mrb[0].mxu0
    %v5458 = vpop.f32.mrb[0].mxu0
    %v5459 = vadd.f32 0.0, %v5458
    %v5460 = vpop.f32.mrb[0].mxu0
    %5461 = vmatprep.mubr.bf16.mxu0 %v3726
    %5462 = vmatmul.mubr.bf16.gmra.mrb[0].mxu0 %v2692
    %v5463 = vpop.f32.mrb[0].mxu0
    %v5464 = vadd.f32 0.0, %v5463
    %v5465 = vpop.f32.mrb[0].mxu0
    %v5466 = vpop.f32.mrb[0].mxu0
    %v5467 = vadd.f32 0.0, %v5466
    %v5468 = vpop.f32.mrb[0].mxu0
    %5469 = vmatprep.mubr.bf16.mxu0 %v3729
    %5470 = vmatmul.mubr.bf16.gmra.mrb[0].mxu0 %v2694
    %v5471 = vpop.f32.mrb[0].mxu0
    %v5472 = vadd.f32 0.0, %v5471
    %v5473 = vpop.f32.mrb[0].mxu0
    %v5474 = vpop.f32.mrb[0].mxu0
    %v5475 = vadd.f32 0.0, %v5474
    %v5476 = vpop.f32.mrb[0].mxu0
    %5477 = vmatprep.mubr.bf16.mxu0 %v3732
    %5478 = vmatmul.mubr.bf16.gmra.mrb[0].mxu0 %v2696
    %v5479 = vpop.f32.mrb[0].mxu0
    %v5480 = vadd.f32 0.0, %v5479
    %v5481 = vpop.f32.mrb[0].mxu0
    %v5482 = vpop.f32.mrb[0].mxu0
    %v5483 = vadd.f32 0.0, %v5482
    %v5484 = vpop.f32.mrb[0].mxu0
    %5485 = vmatprep.mubr.bf16.mxu0 %v3735
    %5486 = vmatmul.mubr.bf16.gmra.mrb[0].mxu0 %v2698
    %v5487 = vpop.f32.mrb[0].mxu0
    %v5488 = vadd.f32 0.0, %v5487
    %v5489 = vpop.f32.mrb[0].mxu0
    %v5490 = vpop.f32.mrb[0].mxu0
    %v5491 = vadd.f32 0.0, %v5490
    %v5492 = vpop.f32.mrb[0].mxu0
    %5493 = vmatprep.mubr.bf16.mxu0 %v3738
    %5494 = vmatmul.mubr.bf16.gmra.mrb[0].mxu0 %v2700
    %v5495 = vpop.f32.mrb[0].mxu0
    %v5496 = vadd.f32 0.0, %v5495
    %v5497 = vpop.f32.mrb[0].mxu0
    %v5498 = vpop.f32.mrb[0].mxu0
    %v5499 = vadd.f32 0.0, %v5498
    %v5500 = vpop.f32.mrb[0].mxu0
    %5501 = vmatprep.mubr.bf16.mxu0 %v3741
    %5502 = vmatmul.mubr.bf16.gmra.mrb[0].mxu0 %v2702
    %v5503 = vpop.f32.mrb[0].mxu0
    %v5504 = vadd.f32 0.0, %v5503
    %v5505 = vpop.f32.mrb[0].mxu0
    %v5506 = vpop.f32.mrb[0].mxu0
    %v5507 = vadd.f32 0.0, %v5506
    %v5508 = vpop.f32.mrb[0].mxu0
    %5509 = vmatprep.mubr.bf16.mxu0 %v3744
    %5510 = vmatmul.mubr.bf16.gmra.mrb[0].mxu0 %v2704
    %v5511 = vpop.f32.mrb[0].mxu0
    %v5512 = vadd.f32 0.0, %v5511
    %v5513 = vpop.f32.mrb[0].mxu0
    %v5514 = vpop.f32.mrb[0].mxu0
    %v5515 = vadd.f32 0.0, %v5514
    %v5516 = vpop.f32.mrb[0].mxu0
    %5517 = vmatprep.mubr.bf16.mxu0 %v3747
    %5518 = vmatmul.mubr.bf16.gmra.mrb[0].mxu0 %v2706
    %v5519 = vpop.f32.mrb[0].mxu0
    %v5520 = vadd.f32 0.0, %v5519
    %v5521 = vpop.f32.mrb[0].mxu0
    %v5522 = vpop.f32.mrb[0].mxu0
    %v5523 = vadd.f32 0.0, %v5522
    %v5524 = vpop.f32.mrb[0].mxu0
    %5525 = vmatprep.mubr.bf16.mxu0 %v3750
    %5526 = vmatmul.mubr.bf16.gmra.mrb[0].mxu0 %v2708
    %v5527 = vpop.f32.mrb[0].mxu0
    %v5528 = vadd.f32 0.0, %v5527
    %v5529 = vpop.f32.mrb[0].mxu0
    %v5530 = vpop.f32.mrb[0].mxu0
    %v5531 = vadd.f32 0.0, %v5530
    %v5532 = vpop.f32.mrb[0].mxu0
    %5533 = vmatprep.mubr.bf16.mxu0 %v3753
    %5534 = vmatmul.mubr.bf16.gmra.mrb[0].mxu0 %v2710
    %v5535 = vpop.f32.mrb[0].mxu0
    %v5536 = vadd.f32 0.0, %v5535
    %v5537 = vpop.f32.mrb[0].mxu0
    %v5538 = vpop.f32.mrb[0].mxu0
    %v5539 = vadd.f32 0.0, %v5538
    %v5540 = vpop.f32.mrb[0].mxu0
    %5541 = vmatprep.mubr.bf16.mxu0 %v3756
    %5542 = vmatmul.mubr.bf16.gmra.mrb[0].mxu0 %v2712
    %v5543 = vpop.f32.mrb[0].mxu0
    %v5544 = vadd.f32 0.0, %v5543
    %v5545 = vpop.f32.mrb[0].mxu0
    %v5546 = vpop.f32.mrb[0].mxu0
    %v5547 = vadd.f32 0.0, %v5546
    %v5548 = vpop.f32.mrb[0].mxu0
    %5549 = vmatprep.mubr.bf16.mxu0 %v3759
    %5550 = vmatmul.mubr.bf16.gmra.mrb[0].mxu0 %v2714
    %v5551 = vpop.f32.mrb[0].mxu0
    %v5552 = vadd.f32 0.0, %v5551
    %v5553 = vpop.f32.mrb[0].mxu0
    %v5554 = vpop.f32.mrb[0].mxu0
    %v5555 = vadd.f32 0.0, %v5554
    %v5556 = vpop.f32.mrb[0].mxu0
    %5557 = vmatprep.mubr.bf16.mxu0 %v3762
    %5558 = vmatmul.mubr.bf16.gmra.mrb[0].mxu0 %v2716
    %v5559 = vpop.f32.mrb[0].mxu0
    %v5560 = vadd.f32 0.0, %v5559
    %v5561 = vpop.f32.mrb[0].mxu0
    %v5562 = vpop.f32.mrb[0].mxu0
    %v5563 = vadd.f32 0.0, %v5562
    %v5564 = vpop.f32.mrb[0].mxu0
    %5565 = vmatprep.mubr.bf16.mxu0 %v3765
    %5566 = vmatmul.mubr.bf16.gmra.mrb[0].mxu0 %v2718
    %v5567 = vpop.f32.mrb[0].mxu0
    %v5568 = vadd.f32 0.0, %v5567
    %v5569 = vpop.f32.mrb[0].mxu0
    %v5570 = vpop.f32.mrb[0].mxu0
    %v5571 = vadd.f32 0.0, %v5570
    %v5572 = vpop.f32.mrb[0].mxu0
    %5573 = vmatprep.mubr.bf16.mxu0 %v3768
    %5574 = vmatmul.mubr.bf16.gmra.mrb[0].mxu0 %v2720
    %v5575 = vpop.f32.mrb[0].mxu0
    %v5576 = vadd.f32 0.0, %v5575
    %v5577 = vpop.f32.mrb[0].mxu0
    %v5578 = vpop.f32.mrb[0].mxu0
    %v5579 = vadd.f32 0.0, %v5578
    %v5580 = vpop.f32.mrb[0].mxu0
    %5581 = vmatprep.mubr.bf16.mxu0 %v3771
    %5582 = vmatmul.mubr.bf16.gmra.mrb[0].mxu0 %v2722
    %v5583 = vpop.f32.mrb[0].mxu0
    %v5584 = vadd.f32 0.0, %v5583
    %v5585 = vpop.f32.mrb[0].mxu0
    %v5586 = vpop.f32.mrb[0].mxu0
    %v5587 = vadd.f32 0.0, %v5586
    %v5588 = vpop.f32.mrb[0].mxu0
    %5589 = vmatprep.mubr.bf16.mxu0 %v3774
    %5590 = vmatmul.mubr.bf16.gmra.mrb[0].mxu0 %v2724
    %v5591 = vpop.f32.mrb[0].mxu0
    %v5592 = vadd.f32 0.0, %v5591
    %v5593 = vpop.f32.mrb[0].mxu0
    %v5594 = vpop.f32.mrb[0].mxu0
    %v5595 = vadd.f32 0.0, %v5594
    %v5596 = vpop.f32.mrb[0].mxu0
    %5597 = vmatprep.mubr.bf16.mxu0 %v3777
    %5598 = vmatmul.mubr.bf16.gmra.mrb[0].mxu0 %v2726
    %v5599 = vpop.f32.mrb[0].mxu0
    %v5600 = vadd.f32 0.0, %v5599
    %v5601 = vpop.f32.mrb[0].mxu0
    %v5602 = vpop.f32.mrb[0].mxu0
    %v5603 = vadd.f32 0.0, %v5602
    %v5604 = vpop.f32.mrb[0].mxu0
    %5605 = vmatprep.mubr.bf16.mxu0 %v3780
    %5606 = vmatmul.mubr.bf16.gmra.mrb[0].mxu0 %v2728
    %v5607 = vpop.f32.mrb[0].mxu0
    %v5608 = vadd.f32 0.0, %v5607
    %v5609 = vpop.f32.mrb[0].mxu0
    %v5610 = vpop.f32.mrb[0].mxu0
    %v5611 = vadd.f32 0.0, %v5610
    %v5612 = vpop.f32.mrb[0].mxu0
    %5613 = vmatprep.mubr.bf16.mxu0 %v3783
    %5614 = vmatmul.mubr.bf16.gmra.mrb[0].mxu0 %v2730
    %v5615 = vpop.f32.mrb[0].mxu0
    %v5616 = vadd.f32 0.0, %v5615
    %v5617 = vpop.f32.mrb[0].mxu0
    %v5618 = vpop.f32.mrb[0].mxu0
    %v5619 = vadd.f32 0.0, %v5618
    %v5620 = vpop.f32.mrb[0].mxu0
    %5621 = vmatprep.mubr.bf16.mxu0 %v3786
    %5622 = vmatmul.mubr.bf16.gmra.mrb[0].mxu0 %v2732
    %v5623 = vpop.f32.mrb[0].mxu0
    %v5624 = vadd.f32 0.0, %v5623
    %v5625 = vpop.f32.mrb[0].mxu0
    %v5626 = vpop.f32.mrb[0].mxu0
    %v5627 = vadd.f32 0.0, %v5626
    %v5628 = vpop.f32.mrb[0].mxu0
    %5629 = vmatprep.mubr.bf16.mxu0 %v3789
    %5630 = vmatmul.mubr.bf16.gmra.mrb[0].mxu0 %v2734
    %v5631 = vpop.f32.mrb[0].mxu0
    %v5632 = vadd.f32 0.0, %v5631
    %v5633 = vpop.f32.mrb[0].mxu0
    %v5634 = vpop.f32.mrb[0].mxu0
    %v5635 = vadd.f32 0.0, %v5634
    %v5636 = vpop.f32.mrb[0].mxu0
    %5637 = vmatprep.mubr.bf16.mxu0 %v3792
    %5638 = vmatmul.mubr.bf16.gmra.mrb[0].mxu0 %v2736
    %v5639 = vpop.f32.mrb[0].mxu0
    %v5640 = vadd.f32 0.0, %v5639
    %v5641 = vpop.f32.mrb[0].mxu0
    %v5642 = vpop.f32.mrb[0].mxu0
    %v5643 = vadd.f32 0.0, %v5642
    %v5644 = vpop.f32.mrb[0].mxu0
    %5645 = vmatprep.mubr.bf16.mxu0 %v3795
    %5646 = vmatmul.mubr.bf16.gmra.mrb[0].mxu0 %v2738
    %v5647 = vpop.f32.mrb[0].mxu0
    %v5648 = vadd.f32 0.0, %v5647
    %v5649 = vpop.f32.mrb[0].mxu0
    %v5650 = vpop.f32.mrb[0].mxu0
    %v5651 = vadd.f32 0.0, %v5650
    %v5652 = vpop.f32.mrb[0].mxu0
    %5653 = vmatprep.mubr.bf16.mxu0 %v3798
    %5654 = vmatmul.mubr.bf16.gmra.mrb[0].mxu0 %v2740
    %v5655 = vpop.f32.mrb[0].mxu0
    %v5656 = vadd.f32 0.0, %v5655
    %v5657 = vpop.f32.mrb[0].mxu0
    %v5658 = vpop.f32.mrb[0].mxu0
    %v5659 = vadd.f32 0.0, %v5658
    %v5660 = vpop.f32.mrb[0].mxu0
    %5661 = vmatprep.mubr.bf16.mxu0 %v3801
    %5662 = vmatmul.mubr.bf16.gmra.mrb[0].mxu0 %v2742
    %v5663 = vpop.f32.mrb[0].mxu0
    %v5664 = vadd.f32 0.0, %v5663
    %v5665 = vpop.f32.mrb[0].mxu0
    %v5666 = vpop.f32.mrb[0].mxu0
    %v5667 = vadd.f32 0.0, %v5666
    %v5668 = vpop.f32.mrb[0].mxu0
    %5669 = vmatprep.mubr.bf16.mxu0 %v3804
    %5670 = vmatmul.mubr.bf16.gmra.mrb[0].mxu0 %v2744
    %v5671 = vpop.f32.mrb[0].mxu0
    %v5672 = vadd.f32 0.0, %v5671
    %v5673 = vpop.f32.mrb[0].mxu0
    %v5674 = vpop.f32.mrb[0].mxu0
    %v5675 = vadd.f32 0.0, %v5674
    %v5676 = vpop.f32.mrb[0].mxu0
    %5677 = vmatprep.mubr.bf16.mxu0 %v3807
    %5678 = vmatmul.mubr.bf16.gmra.mrb[0].mxu0 %v2746
    %v5679 = vpop.f32.mrb[0].mxu0
    %v5680 = vadd.f32 0.0, %v5679
    %v5681 = vpop.f32.mrb[0].mxu0
    %v5682 = vpop.f32.mrb[0].mxu0
    %v5683 = vadd.f32 0.0, %v5682
    %v5684 = vpop.f32.mrb[0].mxu0
    %5685 = vmatprep.mubr.bf16.mxu0 %v3810
    %5686 = vmatmul.mubr.bf16.gmra.mrb[0].mxu0 %v2748
    %v5687 = vpop.f32.mrb[0].mxu0
    %v5688 = vadd.f32 0.0, %v5687
    %v5689 = vpop.f32.mrb[0].mxu0
    %v5690 = vpop.f32.mrb[0].mxu0
    %v5691 = vadd.f32 0.0, %v5690
    %v5692 = vpop.f32.mrb[0].mxu0
    %5693 = vmatprep.mubr.bf16.mxu0 %v3813
    %5694 = vmatmul.mubr.bf16.gmra.mrb[0].mxu0 %v2750
    %v5695 = vpop.f32.mrb[0].mxu0
    %v5696 = vadd.f32 0.0, %v5695
    %v5697 = vpop.f32.mrb[0].mxu0
    %v5698 = vpop.f32.mrb[0].mxu0
    %v5699 = vadd.f32 0.0, %v5698
    %v5700 = vpop.f32.mrb[0].mxu0
    %5701 = vmatprep.mubr.bf16.mxu0 %v3816
    %5702 = vmatmul.mubr.bf16.gmra.mrb[0].mxu0 %v2752
    %v5703 = vpop.f32.mrb[0].mxu0
    %v5704 = vadd.f32 0.0, %v5703
    %v5705 = vpop.f32.mrb[0].mxu0
    %v5706 = vpop.f32.mrb[0].mxu0
    %v5707 = vadd.f32 0.0, %v5706
    %v5708 = vpop.f32.mrb[0].mxu0
    %5709 = vmatprep.mubr.bf16.mxu0 %v3819
    %5710 = vmatmul.mubr.bf16.gmra.mrb[0].mxu0 %v2754
    %v5711 = vpop.f32.mrb[0].mxu0
    %v5712 = vadd.f32 0.0, %v5711
    %v5713 = vpop.f32.mrb[0].mxu0
    %v5714 = vpop.f32.mrb[0].mxu0
    %v5715 = vadd.f32 0.0, %v5714
    %v5716 = vpop.f32.mrb[0].mxu0
    %5717 = vmatprep.mubr.bf16.mxu0 %v3822
    %5718 = vmatmul.mubr.bf16.gmra.mrb[0].mxu0 %v2756
    %v5719 = vpop.f32.mrb[0].mxu0
    %v5720 = vadd.f32 0.0, %v5719
    %v5721 = vpop.f32.mrb[0].mxu0
    %v5722 = vpop.f32.mrb[0].mxu0
    %v5723 = vadd.f32 0.0, %v5722
    %v5724 = vpop.f32.mrb[0].mxu0
    %5725 = vmatprep.mubr.bf16.mxu0 %v3825
    %5726 = vmatmul.mubr.bf16.gmra.mrb[0].mxu0 %v2758
    %v5727 = vpop.f32.mrb[0].mxu0
    %v5728 = vadd.f32 0.0, %v5727
    %v5729 = vpop.f32.mrb[0].mxu0
    %v5730 = vpop.f32.mrb[0].mxu0
    %v5731 = vadd.f32 0.0, %v5730
    %v5732 = vpop.f32.mrb[0].mxu0
    %5733 = vmatprep.mubr.bf16.mxu0 %v3828
    %5734 = vmatmul.mubr.bf16.gmra.mrb[0].mxu0 %v2760
    %v5735 = vpop.f32.mrb[0].mxu0
    %v5736 = vadd.f32 0.0, %v5735
    %v5737 = vpop.f32.mrb[0].mxu0
    %v5738 = vpop.f32.mrb[0].mxu0
    %v5739 = vadd.f32 0.0, %v5738
    %v5740 = vpop.f32.mrb[0].mxu0
    %5741 = vmatprep.mubr.bf16.mxu0 %v3831
    %5742 = vmatmul.mubr.bf16.gmra.mrb[0].mxu0 %v2762
    %v5743 = vpop.f32.mrb[0].mxu0
    %v5744 = vadd.f32 0.0, %v5743
    %v5745 = vpop.f32.mrb[0].mxu0
    %v5746 = vpop.f32.mrb[0].mxu0
    %v5747 = vadd.f32 0.0, %v5746
    %v5748 = vpop.f32.mrb[0].mxu0
    %5749 = vmatprep.mubr.bf16.mxu0 %v3834
    %5750 = vmatmul.mubr.bf16.gmra.mrb[0].mxu0 %v2764
    %v5751 = vpop.f32.mrb[0].mxu0
    %v5752 = vadd.f32 0.0, %v5751
    %v5753 = vpop.f32.mrb[0].mxu0
    %v5754 = vpop.f32.mrb[0].mxu0
    %v5755 = vadd.f32 0.0, %v5754
    %v5756 = vpop.f32.mrb[0].mxu0
    %5757 = vmatprep.mubr.bf16.mxu0 %v3837
    %5758 = vmatmul.mubr.bf16.gmra.mrb[0].mxu0 %v2766
    %v5759 = vpop.f32.mrb[0].mxu0
    %v5760 = vadd.f32 0.0, %v5759
    %v5761 = vpop.f32.mrb[0].mxu0
    %v5762 = vpop.f32.mrb[0].mxu0
    %v5763 = vadd.f32 0.0, %v5762
    %v5764 = vpop.f32.mrb[0].mxu0
    %5765 = vmatprep.mubr.bf16.mxu0 %v3840
    %5766 = vmatmul.mubr.bf16.gmra.mrb[0].mxu0 %v2768
    %v5767 = vpop.f32.mrb[0].mxu0
    %v5768 = vadd.f32 0.0, %v5767
    %v5769 = vpop.f32.mrb[0].mxu0
    %v5770 = vpop.f32.mrb[0].mxu0
    %v5771 = vadd.f32 0.0, %v5770
    %v5772 = vpop.f32.mrb[0].mxu0
    %5773 = vmatprep.mubr.bf16.mxu0 %v3843
    %5774 = vmatmul.mubr.bf16.gmra.mrb[0].mxu0 %v2770
    %v5775 = vpop.f32.mrb[0].mxu0
    %v5776 = vadd.f32 0.0, %v5775
    %v5777 = vpop.f32.mrb[0].mxu0
    %v5778 = vpop.f32.mrb[0].mxu0
    %v5779 = vadd.f32 0.0, %v5778
    %v5780 = vpop.f32.mrb[0].mxu0
    %5781 = vmatprep.mubr.bf16.mxu0 %v3846
    %5782 = vmatmul.mubr.bf16.gmra.mrb[0].mxu0 %v2772
    %v5783 = vpop.f32.mrb[0].mxu0
    %v5784 = vadd.f32 0.0, %v5783
    %v5785 = vpop.f32.mrb[0].mxu0
    %v5786 = vpop.f32.mrb[0].mxu0
    %v5787 = vadd.f32 0.0, %v5786
    %v5788 = vpop.f32.mrb[0].mxu0
    %5789 = vmatprep.mubr.bf16.mxu0 %v3849
    %5790 = vmatmul.mubr.bf16.gmra.mrb[0].mxu0 %v2774
    %v5791 = vpop.f32.mrb[0].mxu0
    %v5792 = vadd.f32 0.0, %v5791
    %v5793 = vpop.f32.mrb[0].mxu0
    %v5794 = vpop.f32.mrb[0].mxu0
    %v5795 = vadd.f32 0.0, %v5794
    %v5796 = vpop.f32.mrb[0].mxu0
    %5797 = vmatprep.mubr.bf16.mxu0 %v3852
    %5798 = vmatmul.mubr.bf16.gmra.mrb[0].mxu0 %v2776
    %v5799 = vpop.f32.mrb[0].mxu0
    %v5800 = vadd.f32 0.0, %v5799
    %v5801 = vpop.f32.mrb[0].mxu0
    %v5802 = vpop.f32.mrb[0].mxu0
    %v5803 = vadd.f32 0.0, %v5802
    %v5804 = vpop.f32.mrb[0].mxu0
    %5805 = vmatprep.mubr.bf16.mxu0 %v3855
    %5806 = vmatmul.mubr.bf16.gmra.mrb[0].mxu0 %v2778
    %v5807 = vpop.f32.mrb[0].mxu0
    %v5808 = vadd.f32 0.0, %v5807
    %v5809 = vpop.f32.mrb[0].mxu0
    %v5810 = vpop.f32.mrb[0].mxu0
    %v5811 = vadd.f32 0.0, %v5810
    %v5812 = vpop.f32.mrb[0].mxu0
    %5813 = vmatprep.mubr.bf16.mxu0 %v3858
    %5814 = vmatmul.mubr.bf16.gmra.mrb[0].mxu0 %v2780
    %v5815 = vpop.f32.mrb[0].mxu0
    %v5816 = vadd.f32 0.0, %v5815
    %v5817 = vpop.f32.mrb[0].mxu0
    %v5818 = vpop.f32.mrb[0].mxu0
    %v5819 = vadd.f32 0.0, %v5818
    %v5820 = vpop.f32.mrb[0].mxu0
    %5821 = vmatprep.mubr.bf16.mxu0 %v3861
    %5822 = vmatmul.mubr.bf16.gmra.mrb[0].mxu0 %v2782
    %v5823 = vpop.f32.mrb[0].mxu0
    %v5824 = vadd.f32 0.0, %v5823
    %v5825 = vpop.f32.mrb[0].mxu0
    %v5826 = vpop.f32.mrb[0].mxu0
    %v5827 = vadd.f32 0.0, %v5826
    %v5828 = vpop.f32.mrb[0].mxu0
    %5829 = vmatprep.mubr.bf16.mxu0 %v3864
    %5830 = vmatmul.mubr.bf16.gmra.mrb[0].mxu0 %v2784
    %v5831 = vpop.f32.mrb[0].mxu0
    %v5832 = vadd.f32 0.0, %v5831
    %v5833 = vpop.f32.mrb[0].mxu0
    %v5834 = vpop.f32.mrb[0].mxu0
    %v5835 = vadd.f32 0.0, %v5834
    %v5836 = vpop.f32.mrb[0].mxu0
    %5837 = vmatprep.mubr.bf16.mxu0 %v3867
    %5838 = vmatmul.mubr.bf16.gmra.mrb[0].mxu0 %v2786
    %v5839 = vpop.f32.mrb[0].mxu0
    %v5840 = vadd.f32 0.0, %v5839
    %v5841 = vpop.f32.mrb[0].mxu0
    %v5842 = vpop.f32.mrb[0].mxu0
    %v5843 = vadd.f32 0.0, %v5842
    %v5844 = vpop.f32.mrb[0].mxu0
    %5845 = vmatprep.mubr.bf16.mxu0 %v3870
    %5846 = vmatmul.mubr.bf16.gmra.mrb[0].mxu0 %v2788
    %v5847 = vpop.f32.mrb[0].mxu0
    %v5848 = vadd.f32 0.0, %v5847
    %v5849 = vpop.f32.mrb[0].mxu0
    %v5850 = vpop.f32.mrb[0].mxu0
    %v5851 = vadd.f32 0.0, %v5850
    %v5852 = vpop.f32.mrb[0].mxu0
    %5853 = vmatprep.mubr.bf16.mxu0 %v3873
    %5854 = vmatmul.mubr.bf16.gmra.mrb[0].mxu0 %v2790
    %v5855 = vpop.f32.mrb[0].mxu0
    %v5856 = vadd.f32 0.0, %v5855
    %v5857 = vpop.f32.mrb[0].mxu0
    %v5858 = vpop.f32.mrb[0].mxu0
    %v5859 = vadd.f32 0.0, %v5858
    %v5860 = vpop.f32.mrb[0].mxu0
    %5861 = vmatprep.mubr.bf16.mxu0 %v3876
    %5862 = vmatmul.mubr.bf16.gmra.mrb[0].mxu0 %v2792
    %v5863 = vpop.f32.mrb[0].mxu0
    %v5864 = vadd.f32 0.0, %v5863
    %v5865 = vpop.f32.mrb[0].mxu0
    %v5866 = vpop.f32.mrb[0].mxu0
    %v5867 = vadd.f32 0.0, %v5866
    %v5868 = vpop.f32.mrb[0].mxu0
    %5869 = vmatprep.mubr.bf16.mxu0 %v3879
    %5870 = vmatmul.mubr.bf16.gmra.mrb[0].mxu0 %v2794
    %v5871 = vpop.f32.mrb[0].mxu0
    %v5872 = vadd.f32 0.0, %v5871
    %v5873 = vpop.f32.mrb[0].mxu0
    %v5874 = vpop.f32.mrb[0].mxu0
    %v5875 = vadd.f32 0.0, %v5874
    %v5876 = vpop.f32.mrb[0].mxu0
    %5877 = vmatprep.mubr.bf16.mxu0 %v3882
    %5878 = vmatmul.mubr.bf16.gmra.mrb[0].mxu0 %v2796
    %v5879 = vpop.f32.mrb[0].mxu0
    %v5880 = vadd.f32 0.0, %v5879
    %v5881 = vpop.f32.mrb[0].mxu0
    %v5882 = vpop.f32.mrb[0].mxu0
    %v5883 = vadd.f32 0.0, %v5882
    %v5884 = vpop.f32.mrb[0].mxu0
    %5885 = vmatprep.mubr.bf16.mxu0 %v3885
    %5886 = vmatmul.mubr.bf16.gmra.mrb[0].mxu0 %v2798
    %v5887 = vpop.f32.mrb[0].mxu0
    %v5888 = vadd.f32 0.0, %v5887
    %v5889 = vpop.f32.mrb[0].mxu0
    %v5890 = vpop.f32.mrb[0].mxu0
    %v5891 = vadd.f32 0.0, %v5890
    %v5892 = vpop.f32.mrb[0].mxu0
    %5893 = vmatprep.mubr.bf16.mxu0 %v3888
    %5894 = vmatmul.mubr.bf16.gmra.mrb[0].mxu0 %v2800
    %v5895 = vpop.f32.mrb[0].mxu0
    %v5896 = vadd.f32 0.0, %v5895
    %v5897 = vpop.f32.mrb[0].mxu0
    %v5898 = vpop.f32.mrb[0].mxu0
    %v5899 = vadd.f32 0.0, %v5898
    %v5900 = vpop.f32.mrb[0].mxu0
    %5901 = vmatprep.mubr.bf16.mxu0 %v3891
    %5902 = vmatmul.mubr.bf16.gmra.mrb[0].mxu0 %v2802
    %v5903 = vpop.f32.mrb[0].mxu0
    %v5904 = vadd.f32 0.0, %v5903
    %v5905 = vpop.f32.mrb[0].mxu0
    %v5906 = vpop.f32.mrb[0].mxu0
    %v5907 = vadd.f32 0.0, %v5906
    %v5908 = vpop.f32.mrb[0].mxu0
    %5909 = vmatprep.mubr.bf16.mxu0 %v3894
    %5910 = vmatmul.mubr.bf16.gmra.mrb[0].mxu0 %v2804
    %v5911 = vpop.f32.mrb[0].mxu0
    %v5912 = vadd.f32 0.0, %v5911
    %v5913 = vpop.f32.mrb[0].mxu0
    %v5914 = vpop.f32.mrb[0].mxu0
    %v5915 = vadd.f32 0.0, %v5914
    %v5916 = vpop.f32.mrb[0].mxu0
    %5917 = vmatprep.mubr.bf16.mxu0 %v3897
    %5918 = vmatmul.mubr.bf16.gmra.mrb[0].mxu0 %v2806
    %v5919 = vpop.f32.mrb[0].mxu0
    %v5920 = vadd.f32 0.0, %v5919
    %v5921 = vpop.f32.mrb[0].mxu0
    %v5922 = vpop.f32.mrb[0].mxu0
    %v5923 = vadd.f32 0.0, %v5922
    %v5924 = vpop.f32.mrb[0].mxu0
    %5925 = vmatprep.mubr.bf16.mxu0 %v3900
    %5926 = vmatmul.mubr.bf16.gmra.mrb[0].mxu0 %v2808
    %v5927 = vpop.f32.mrb[0].mxu0
    %v5928 = vadd.f32 0.0, %v5927
    %v5929 = vpop.f32.mrb[0].mxu0
    %v5930 = vpop.f32.mrb[0].mxu0
    %v5931 = vadd.f32 0.0, %v5930
    %v5932 = vpop.f32.mrb[0].mxu0
    %5933 = vmatprep.mubr.bf16.mxu0 %v3903
    %5934 = vmatmul.mubr.bf16.gmra.mrb[0].mxu0 %v2810
    %v5935 = vpop.f32.mrb[0].mxu0
    %v5936 = vadd.f32 0.0, %v5935
    %v5937 = vpop.f32.mrb[0].mxu0
    %v5938 = vpop.f32.mrb[0].mxu0
    %v5939 = vadd.f32 0.0, %v5938
    %v5940 = vpop.f32.mrb[0].mxu0
    %5941 = vmatprep.mubr.bf16.mxu0 %v3906
    %5942 = vmatmul.mubr.bf16.gmra.mrb[0].mxu0 %v2812
    %v5943 = vpop.f32.mrb[0].mxu0
    %v5944 = vadd.f32 0.0, %v5943
    %v5945 = vpop.f32.mrb[0].mxu0
    %v5946 = vpop.f32.mrb[0].mxu0
    %v5947 = vadd.f32 0.0, %v5946
    %v5948 = vpop.f32.mrb[0].mxu0
    %5949 = vmatprep.mubr.bf16.mxu0 %v3909
    %5950 = vmatmul.mubr.bf16.gmra.mrb[0].mxu0 %v2814
    %v5951 = vpop.f32.mrb[0].mxu0
    %v5952 = vadd.f32 0.0, %v5951
    %v5953 = vpop.f32.mrb[0].mxu0
    %v5954 = vpop.f32.mrb[0].mxu0
    %v5955 = vadd.f32 0.0, %v5954
    %v5956 = vpop.f32.mrb[0].mxu0
    %5957 = vmatprep.mubr.bf16.mxu0 %v3912
    %5958 = vmatmul.mubr.bf16.gmra.mrb[0].mxu0 %v2816
    %v5959 = vpop.f32.mrb[0].mxu0
    %v5960 = vadd.f32 0.0, %v5959
    %v5961 = vpop.f32.mrb[0].mxu0
    %v5962 = vpop.f32.mrb[0].mxu0
    %v5963 = vadd.f32 0.0, %v5962
    %v5964 = vpop.f32.mrb[0].mxu0
    %5965 = vmatprep.mubr.bf16.mxu0 %v3915
    %5966 = vmatmul.mubr.bf16.gmra.mrb[0].mxu0 %v2818
    %v5967 = vpop.f32.mrb[0].mxu0
    %v5968 = vadd.f32 0.0, %v5967
    %v5969 = vpop.f32.mrb[0].mxu0
    %v5970 = vpop.f32.mrb[0].mxu0
    %v5971 = vadd.f32 0.0, %v5970
    %v5972 = vpop.f32.mrb[0].mxu0
    %5973 = vmatprep.mubr.bf16.mxu0 %v3918
    %5974 = vmatmul.mubr.bf16.gmra.mrb[0].mxu0 %v2820
    %v5975 = vpop.f32.mrb[0].mxu0
    %v5976 = vadd.f32 0.0, %v5975
    %v5977 = vpop.f32.mrb[0].mxu0
    %v5978 = vpop.f32.mrb[0].mxu0
    %v5979 = vadd.f32 0.0, %v5978
    %v5980 = vpop.f32.mrb[0].mxu0
    %5981 = vmatprep.mubr.bf16.mxu0 %v3921
    %5982 = vmatmul.mubr.bf16.gmra.mrb[0].mxu0 %v2822
    %v5983 = vpop.f32.mrb[0].mxu0
    %v5984 = vadd.f32 0.0, %v5983
    %v5985 = vpop.f32.mrb[0].mxu0
    %v5986 = vpop.f32.mrb[0].mxu0
    %v5987 = vadd.f32 0.0, %v5986
    %v5988 = vpop.f32.mrb[0].mxu0
    %5989 = vmatprep.mubr.bf16.mxu0 %v3924
    %5990 = vmatmul.mubr.bf16.gmra.mrb[0].mxu0 %v2824
    %v5991 = vpop.f32.mrb[0].mxu0
    %v5992 = vadd.f32 0.0, %v5991
    %v5993 = vpop.f32.mrb[0].mxu0
    %v5994 = vpop.f32.mrb[0].mxu0
    %v5995 = vadd.f32 0.0, %v5994
    %v5996 = vpop.f32.mrb[0].mxu0
    %5997 = vmatprep.mubr.bf16.mxu0 %v3927
    %5998 = vmatmul.mubr.bf16.gmra.mrb[0].mxu0 %v2826
    %v5999 = vpop.f32.mrb[0].mxu0
    %v6000 = vadd.f32 0.0, %v5999
    %v6001 = vpop.f32.mrb[0].mxu0
    %v6002 = vpop.f32.mrb[0].mxu0
    %v6003 = vadd.f32 0.0, %v6002
    %v6004 = vpop.f32.mrb[0].mxu0
    %6005 = vmatprep.mubr.bf16.mxu0 %v3930
    %6006 = vmatmul.mubr.bf16.gmra.mrb[0].mxu0 %v2828
    %v6007 = vpop.f32.mrb[0].mxu0
    %v6008 = vadd.f32 0.0, %v6007
    %v6009 = vpop.f32.mrb[0].mxu0
    %v6010 = vpop.f32.mrb[0].mxu0
    %v6011 = vadd.f32 0.0, %v6010
    %v6012 = vpop.f32.mrb[0].mxu0
    %6013 = vmatprep.mubr.bf16.mxu0 %v3933
    %6014 = vmatmul.mubr.bf16.gmra.mrb[0].mxu0 %v2830
    %v6015 = vpop.f32.mrb[0].mxu0
    %v6016 = vadd.f32 0.0, %v6015
    %v6017 = vpop.f32.mrb[0].mxu0
    %v6018 = vpop.f32.mrb[0].mxu0
    %v6019 = vadd.f32 0.0, %v6018
    %v6020 = vpop.f32.mrb[0].mxu0
    %6021 = vmatprep.mubr.bf16.mxu0 %v3936
    %6022 = vmatmul.mubr.bf16.gmra.mrb[0].mxu0 %v2832
    %v6023 = vpop.f32.mrb[0].mxu0
    %v6024 = vadd.f32 0.0, %v6023
    %v6025 = vpop.f32.mrb[0].mxu0
    %v6026 = vpop.f32.mrb[0].mxu0
    %v6027 = vadd.f32 0.0, %v6026
    %v6028 = vpop.f32.mrb[0].mxu0
    %6029 = vmatprep.mubr.bf16.mxu0 %v3939
    %6030 = vmatmul.mubr.bf16.gmra.mrb[0].mxu0 %v2834
    %v6031 = vpop.f32.mrb[0].mxu0
    %v6032 = vadd.f32 0.0, %v6031
    %v6033 = vpop.f32.mrb[0].mxu0
    %v6034 = vpop.f32.mrb[0].mxu0
    %v6035 = vadd.f32 0.0, %v6034
    %v6036 = vpop.f32.mrb[0].mxu0
    %6037 = vmatprep.mubr.bf16.mxu0 %v3942
    %6038 = vmatmul.mubr.bf16.gmra.mrb[0].mxu0 %v2836
    %v6039 = vpop.f32.mrb[0].mxu0
    %v6040 = vadd.f32 0.0, %v6039
    %v6041 = vpop.f32.mrb[0].mxu0
    %v6042 = vpop.f32.mrb[0].mxu0
    %v6043 = vadd.f32 0.0, %v6042
    %v6044 = vpop.f32.mrb[0].mxu0
    %6045 = vmatprep.mubr.bf16.mxu0 %v3945
    %6046 = vmatmul.mubr.bf16.gmra.mrb[0].mxu0 %v2838
    %v6047 = vpop.f32.mrb[0].mxu0
    %v6048 = vadd.f32 0.0, %v6047
    %v6049 = vpop.f32.mrb[0].mxu0
    %v6050 = vpop.f32.mrb[0].mxu0
    %v6051 = vadd.f32 0.0, %v6050
    %v6052 = vpop.f32.mrb[0].mxu0
    %6053 = vmatprep.mubr.bf16.mxu0 %v3948
    %6054 = vmatmul.mubr.bf16.gmra.mrb[0].mxu0 %v2840
    %v6055 = vpop.f32.mrb[0].mxu0
    %v6056 = vadd.f32 0.0, %v6055
    %v6057 = vpop.f32.mrb[0].mxu0
    %v6058 = vpop.f32.mrb[0].mxu0
    %v6059 = vadd.f32 0.0, %v6058
    %v6060 = vpop.f32.mrb[0].mxu0
    %6061 = vmatprep.mubr.bf16.mxu0 %v3951
    %6062 = vmatmul.mubr.bf16.gmra.mrb[0].mxu0 %v2842
    %v6063 = vpop.f32.mrb[0].mxu0
    %v6064 = vadd.f32 0.0, %v6063
    %v6065 = vpop.f32.mrb[0].mxu0
    %v6066 = vpop.f32.mrb[0].mxu0
    %v6067 = vadd.f32 0.0, %v6066
    %v6068 = vpop.f32.mrb[0].mxu0
    %6069 = vmatprep.mubr.bf16.mxu0 %v3954
    %6070 = vmatmul.mubr.bf16.gmra.mrb[0].mxu0 %v2844
    %v6071 = vpop.f32.mrb[0].mxu0
    %v6072 = vadd.f32 0.0, %v6071
    %v6073 = vpop.f32.mrb[0].mxu0
    %v6074 = vpop.f32.mrb[0].mxu0
    %v6075 = vadd.f32 0.0, %v6074
    %v6076 = vpop.f32.mrb[0].mxu0
    %6077 = vmatprep.mubr.bf16.mxu0 %v3957
    %6078 = vmatmul.mubr.bf16.gmra.mrb[0].mxu0 %v2846
    %v6079 = vpop.f32.mrb[0].mxu0
    %v6080 = vadd.f32 0.0, %v6079
    %v6081 = vpop.f32.mrb[0].mxu0
    %v6082 = vpop.f32.mrb[0].mxu0
    %v6083 = vadd.f32 0.0, %v6082
    %v6084 = vpop.f32.mrb[0].mxu0
    %6085 = vmatprep.mubr.bf16.mxu0 %v3960
    %6086 = vmatmul.mubr.bf16.gmra.mrb[0].mxu0 %v2848
    %v6087 = vpop.f32.mrb[0].mxu0
    %v6088 = vadd.f32 0.0, %v6087
    %v6089 = vpop.f32.mrb[0].mxu0
    %v6090 = vpop.f32.mrb[0].mxu0
    %v6091 = vadd.f32 0.0, %v6090
    %v6092 = vpop.f32.mrb[0].mxu0
    %6093 = vmatprep.mubr.bf16.mxu0 %v3963
    %6094 = vmatmul.mubr.bf16.gmra.mrb[0].mxu0 %v2850
    %v6095 = vpop.f32.mrb[0].mxu0
    %v6096 = vadd.f32 0.0, %v6095
    %v6097 = vpop.f32.mrb[0].mxu0
    %v6098 = vpop.f32.mrb[0].mxu0
    %v6099 = vadd.f32 0.0, %v6098
    %v6100 = vpop.f32.mrb[0].mxu0
    %6101 = vmatprep.mubr.bf16.mxu0 %v3966
    %6102 = vmatmul.mubr.bf16.gmra.mrb[0].mxu0 %v2852
    %v6103 = vpop.f32.mrb[0].mxu0
    %v6104 = vadd.f32 0.0, %v6103
    %v6105 = vpop.f32.mrb[0].mxu0
    %v6106 = vpop.f32.mrb[0].mxu0
    %v6107 = vadd.f32 0.0, %v6106
    %v6108 = vpop.f32.mrb[0].mxu0
    %6109 = vmatprep.mubr.bf16.mxu0 %v3969
    %6110 = vmatmul.mubr.bf16.gmra.mrb[0].mxu0 %v2854
    %v6111 = vpop.f32.mrb[0].mxu0
    %v6112 = vadd.f32 0.0, %v6111
    %v6113 = vpop.f32.mrb[0].mxu0
    %v6114 = vpop.f32.mrb[0].mxu0
    %v6115 = vadd.f32 0.0, %v6114
    %v6116 = vpop.f32.mrb[0].mxu0
    %6117 = vmatprep.mubr.bf16.mxu0 %v3972
    %6118 = vmatmul.mubr.bf16.gmra.mrb[0].mxu0 %v2856
    %v6119 = vpop.f32.mrb[0].mxu0
    %v6120 = vadd.f32 0.0, %v6119
    %v6121 = vpop.f32.mrb[0].mxu0
    %v6122 = vpop.f32.mrb[0].mxu0
    %v6123 = vadd.f32 0.0, %v6122
    %v6124 = vpop.f32.mrb[0].mxu0
    %6125 = vmatprep.mubr.bf16.mxu0 %v3975
    %6126 = vmatmul.mubr.bf16.gmra.mrb[0].mxu0 %v2858
    %v6127 = vpop.f32.mrb[0].mxu0
    %v6128 = vadd.f32 0.0, %v6127
    %v6129 = vpop.f32.mrb[0].mxu0
    %v6130 = vpop.f32.mrb[0].mxu0
    %v6131 = vadd.f32 0.0, %v6130
    %v6132 = vpop.f32.mrb[0].mxu0
    %6133 = vmatprep.mubr.bf16.mxu0 %v3978
    %6134 = vmatmul.mubr.bf16.gmra.mrb[0].mxu0 %v2860
    %v6135 = vpop.f32.mrb[0].mxu0
    %v6136 = vadd.f32 0.0, %v6135
    %v6137 = vpop.f32.mrb[0].mxu0
    %v6138 = vpop.f32.mrb[0].mxu0
    %v6139 = vadd.f32 0.0, %v6138
    %v6140 = vpop.f32.mrb[0].mxu0
    %6141 = vmatprep.mubr.bf16.mxu0 %v3981
    %6142 = vmatmul.mubr.bf16.gmra.mrb[0].mxu0 %v2862
    %v6143 = vpop.f32.mrb[0].mxu0
    %v6144 = vadd.f32 0.0, %v6143
    %v6145 = vpop.f32.mrb[0].mxu0
    %v6146 = vpop.f32.mrb[0].mxu0
    %v6147 = vadd.f32 0.0, %v6146
    %v6148 = vpop.f32.mrb[0].mxu0
    %6149 = vmatprep.mubr.bf16.mxu0 %v3984
    %6150 = vmatmul.mubr.bf16.gmra.mrb[0].mxu0 %v2864
    %v6151 = vpop.f32.mrb[0].mxu0
    %v6152 = vadd.f32 0.0, %v6151
    %v6153 = vpop.f32.mrb[0].mxu0
    %v6154 = vpop.f32.mrb[0].mxu0
    %v6155 = vadd.f32 0.0, %v6154
    %v6156 = vpop.f32.mrb[0].mxu0
    %6157 = vmatprep.mubr.bf16.mxu0 %v3987
    %6158 = vmatmul.mubr.bf16.gmra.mrb[0].mxu0 %v2866
    %v6159 = vpop.f32.mrb[0].mxu0
    %v6160 = vadd.f32 0.0, %v6159
    %v6161 = vpop.f32.mrb[0].mxu0
    %v6162 = vpop.f32.mrb[0].mxu0
    %v6163 = vadd.f32 0.0, %v6162
    %v6164 = vpop.f32.mrb[0].mxu0
    %6165 = vmatprep.mubr.bf16.mxu0 %v3990
    %6166 = vmatmul.mubr.bf16.gmra.mrb[0].mxu0 %v2868
    %v6167 = vpop.f32.mrb[0].mxu0
    %v6168 = vadd.f32 0.0, %v6167
    %v6169 = vpop.f32.mrb[0].mxu0
    %v6170 = vpop.f32.mrb[0].mxu0
    %v6171 = vadd.f32 0.0, %v6170
    %v6172 = vpop.f32.mrb[0].mxu0
    %6173 = vmatprep.mubr.bf16.mxu0 %v3993
    %6174 = vmatmul.mubr.bf16.gmra.mrb[0].mxu0 %v2870
    %v6175 = vpop.f32.mrb[0].mxu0
    %v6176 = vadd.f32 0.0, %v6175
    %v6177 = vpop.f32.mrb[0].mxu0
    %v6178 = vpop.f32.mrb[0].mxu0
    %v6179 = vadd.f32 0.0, %v6178
    %v6180 = vpop.f32.mrb[0].mxu0
    %6181 = vmatprep.mubr.bf16.mxu0 %v3996
    %6182 = vmatmul.mubr.bf16.gmra.mrb[0].mxu0 %v2872
    %v6183 = vpop.f32.mrb[0].mxu0
    %v6184 = vadd.f32 0.0, %v6183
    %v6185 = vpop.f32.mrb[0].mxu0
    %v6186 = vpop.f32.mrb[0].mxu0
    %v6187 = vadd.f32 0.0, %v6186
    %v6188 = vpop.f32.mrb[0].mxu0
    %6189 = vmatprep.mubr.bf16.mxu0 %v3999
    %6190 = vmatmul.mubr.bf16.gmra.mrb[0].mxu0 %v2874
    %v6191 = vpop.f32.mrb[0].mxu0
    %v6192 = vadd.f32 0.0, %v6191
    %v6193 = vpop.f32.mrb[0].mxu0
    %v6194 = vpop.f32.mrb[0].mxu0
    %v6195 = vadd.f32 0.0, %v6194
    %v6196 = vpop.f32.mrb[0].mxu0
    %6197 = vmatprep.mubr.bf16.mxu0 %v4002
    %6198 = vmatmul.mubr.bf16.gmra.mrb[0].mxu0 %v2876
    %v6199 = vpop.f32.mrb[0].mxu0
    %v6200 = vadd.f32 0.0, %v6199
    %v6201 = vpop.f32.mrb[0].mxu0
    %v6202 = vpop.f32.mrb[0].mxu0
    %v6203 = vadd.f32 0.0, %v6202
    %v6204 = vpop.f32.mrb[0].mxu0
    %6205 = vmatprep.mubr.bf16.mxu0 %v4005
    %6206 = vmatmul.mubr.bf16.gmra.mrb[0].mxu0 %v2878
    %v6207 = vpop.f32.mrb[0].mxu0
    %v6208 = vadd.f32 0.0, %v6207
    %v6209 = vpop.f32.mrb[0].mxu0
    %v6210 = vpop.f32.mrb[0].mxu0
    %v6211 = vadd.f32 0.0, %v6210
    %v6212 = vpop.f32.mrb[0].mxu0
    %6213 = vmatprep.mubr.bf16.mxu0 %v4008
    %6214 = vmatmul.mubr.bf16.gmra.mrb[0].mxu0 %v2880
    %v6215 = vpop.f32.mrb[0].mxu0
    %v6216 = vadd.f32 0.0, %v6215
    %v6217 = vpop.f32.mrb[0].mxu0
    %v6218 = vpop.f32.mrb[0].mxu0
    %v6219 = vadd.f32 0.0, %v6218
    %v6220 = vpop.f32.mrb[0].mxu0
    %6221 = vmatprep.mubr.bf16.mxu0 %v4011
    %6222 = vmatmul.mubr.bf16.gmra.mrb[0].mxu0 %v2882
    %v6223 = vpop.f32.mrb[0].mxu0
    %v6224 = vadd.f32 0.0, %v6223
    %v6225 = vpop.f32.mrb[0].mxu0
    %v6226 = vpop.f32.mrb[0].mxu0
    %v6227 = vadd.f32 0.0, %v6226
    %v6228 = vpop.f32.mrb[0].mxu0
    %6229 = vmatprep.mubr.bf16.mxu0 %v4014
    %6230 = vmatmul.mubr.bf16.gmra.mrb[0].mxu0 %v2884
    %v6231 = vpop.f32.mrb[0].mxu0
    %v6232 = vadd.f32 0.0, %v6231
    %v6233 = vpop.f32.mrb[0].mxu0
    %v6234 = vpop.f32.mrb[0].mxu0
    %v6235 = vadd.f32 0.0, %v6234
    %v6236 = vpop.f32.mrb[0].mxu0
    %6237 = vmatprep.mubr.bf16.mxu0 %v4017
    %6238 = vmatmul.mubr.bf16.gmra.mrb[0].mxu0 %v2886
    %v6239 = vpop.f32.mrb[0].mxu0
    %v6240 = vadd.f32 0.0, %v6239
    %v6241 = vpop.f32.mrb[0].mxu0
    %v6242 = vpop.f32.mrb[0].mxu0
    %v6243 = vadd.f32 0.0, %v6242
    %v6244 = vpop.f32.mrb[0].mxu0
    %6245 = vmatprep.mubr.bf16.mxu0 %v4020
    %6246 = vmatmul.mubr.bf16.gmra.mrb[0].mxu0 %v2888
    %v6247 = vpop.f32.mrb[0].mxu0
    %v6248 = vadd.f32 0.0, %v6247
    %v6249 = vpop.f32.mrb[0].mxu0
    %v6250 = vpop.f32.mrb[0].mxu0
    %v6251 = vadd.f32 0.0, %v6250
    %v6252 = vpop.f32.mrb[0].mxu0
    %6253 = vmatprep.mubr.bf16.mxu0 %v4023
    %6254 = vmatmul.mubr.bf16.gmra.mrb[0].mxu0 %v2890
    %v6255 = vpop.f32.mrb[0].mxu0
    %v6256 = vadd.f32 0.0, %v6255
    %v6257 = vpop.f32.mrb[0].mxu0
    %v6258 = vpop.f32.mrb[0].mxu0
    %v6259 = vadd.f32 0.0, %v6258
    %v6260 = vpop.f32.mrb[0].mxu0
    %6261 = vmatprep.mubr.bf16.mxu0 %v4026
    %6262 = vmatmul.mubr.bf16.gmra.mrb[0].mxu0 %v2892
    %v6263 = vpop.f32.mrb[0].mxu0
    %v6264 = vadd.f32 0.0, %v6263
    %v6265 = vpop.f32.mrb[0].mxu0
    %v6266 = vpop.f32.mrb[0].mxu0
    %v6267 = vadd.f32 0.0, %v6266
    %v6268 = vpop.f32.mrb[0].mxu0
    %6269 = vmatprep.mubr.bf16.mxu0 %v4029
    %6270 = vmatmul.mubr.bf16.gmra.mrb[0].mxu0 %v2894
    %v6271 = vpop.f32.mrb[0].mxu0
    %v6272 = vadd.f32 0.0, %v6271
    %v6273 = vpop.f32.mrb[0].mxu0
    %v6274 = vpop.f32.mrb[0].mxu0
    %v6275 = vadd.f32 0.0, %v6274
    %v6276 = vpop.f32.mrb[0].mxu0
    %6277 = vmatprep.mubr.bf16.mxu0 %v4032
    %6278 = vmatmul.mubr.bf16.gmra.mrb[0].mxu0 %v2896
    %v6279 = vpop.f32.mrb[0].mxu0
    %v6280 = vadd.f32 0.0, %v6279
    %v6281 = vpop.f32.mrb[0].mxu0
    %v6282 = vpop.f32.mrb[0].mxu0
    %v6283 = vadd.f32 0.0, %v6282
    %v6284 = vpop.f32.mrb[0].mxu0
    %6285 = vmatprep.mubr.bf16.mxu0 %v4035
    %6286 = vmatmul.mubr.bf16.gmra.mrb[0].mxu0 %v2898
    %v6287 = vpop.f32.mrb[0].mxu0
    %v6288 = vadd.f32 0.0, %v6287
    %v6289 = vpop.f32.mrb[0].mxu0
    %v6290 = vpop.f32.mrb[0].mxu0
    %v6291 = vadd.f32 0.0, %v6290
    %v6292 = vpop.f32.mrb[0].mxu0
    %6293 = vmatprep.mubr.bf16.mxu0 %v4038
    %6294 = vmatmul.mubr.bf16.gmra.mrb[0].mxu0 %v2900
    %v6295 = vpop.f32.mrb[0].mxu0
    %v6296 = vadd.f32 0.0, %v6295
    %v6297 = vpop.f32.mrb[0].mxu0
    %v6298 = vpop.f32.mrb[0].mxu0
    %v6299 = vadd.f32 0.0, %v6298
    %v6300 = vpop.f32.mrb[0].mxu0
    %6301 = vmatprep.mubr.bf16.mxu0 %v4041
    %6302 = vmatmul.mubr.bf16.gmra.mrb[0].mxu0 %v2902
    %v6303 = vpop.f32.mrb[0].mxu0
    %v6304 = vadd.f32 0.0, %v6303
    %v6305 = vpop.f32.mrb[0].mxu0
    %v6306 = vpop.f32.mrb[0].mxu0
    %v6307 = vadd.f32 0.0, %v6306
    %v6308 = vpop.f32.mrb[0].mxu0
    %6309 = vmatprep.mubr.bf16.mxu0 %v4044
    %6310 = vmatmul.mubr.bf16.gmra.mrb[0].mxu0 %v2904
    %v6311 = vpop.f32.mrb[0].mxu0
    %v6312 = vadd.f32 0.0, %v6311
    %v6313 = vpop.f32.mrb[0].mxu0
    %v6314 = vpop.f32.mrb[0].mxu0
    %v6315 = vadd.f32 0.0, %v6314
    %v6316 = vpop.f32.mrb[0].mxu0
    %6317 = vmatprep.mubr.bf16.mxu0 %v4047
    %6318 = vmatmul.mubr.bf16.gmra.mrb[0].mxu0 %v2906
    %v6319 = vpop.f32.mrb[0].mxu0
    %v6320 = vadd.f32 0.0, %v6319
    %v6321 = vpop.f32.mrb[0].mxu0
    %v6322 = vpop.f32.mrb[0].mxu0
    %v6323 = vadd.f32 0.0, %v6322
    %v6324 = vpop.f32.mrb[0].mxu0
    %6325 = vmatprep.mubr.bf16.mxu0 %v4050
    %6326 = vmatmul.mubr.bf16.gmra.mrb[0].mxu0 %v2908
    %v6327 = vpop.f32.mrb[0].mxu0
    %v6328 = vadd.f32 0.0, %v6327
    %v6329 = vpop.f32.mrb[0].mxu0
    %v6330 = vpop.f32.mrb[0].mxu0
    %v6331 = vadd.f32 0.0, %v6330
    %v6332 = vpop.f32.mrb[0].mxu0
    %6333 = vmatprep.mubr.bf16.mxu0 %v4053
    %6334 = vmatmul.mubr.bf16.gmra.mrb[0].mxu0 %v2910
    %v6335 = vpop.f32.mrb[0].mxu0
    %v6336 = vadd.f32 0.0, %v6335
    %v6337 = vpop.f32.mrb[0].mxu0
    %v6338 = vpop.f32.mrb[0].mxu0
    %v6339 = vadd.f32 0.0, %v6338
    %v6340 = vpop.f32.mrb[0].mxu0
    %6341 = vmatprep.mubr.bf16.mxu0 %v4056
    %6342 = vmatmul.mubr.bf16.gmra.mrb[0].mxu0 %v2912
    %v6343 = vpop.f32.mrb[0].mxu0
    %v6344 = vadd.f32 0.0, %v6343
    %v6345 = vpop.f32.mrb[0].mxu0
    %v6346 = vpop.f32.mrb[0].mxu0
    %v6347 = vadd.f32 0.0, %v6346
    %v6348 = vpop.f32.mrb[0].mxu0
    %6349 = vmatprep.mubr.bf16.mxu0 %v4059
    %6350 = vmatmul.mubr.bf16.gmra.mrb[0].mxu0 %v2914
    %v6351 = vpop.f32.mrb[0].mxu0
    %v6352 = vadd.f32 0.0, %v6351
    %v6353 = vpop.f32.mrb[0].mxu0
    %v6354 = vpop.f32.mrb[0].mxu0
    %v6355 = vadd.f32 0.0, %v6354
    %v6356 = vpop.f32.mrb[0].mxu0
    %6357 = vmatprep.mubr.bf16.mxu0 %v4062
    %6358 = vmatmul.mubr.bf16.gmra.mrb[0].mxu0 %v2916
    %v6359 = vpop.f32.mrb[0].mxu0
    %v6360 = vadd.f32 0.0, %v6359
    %v6361 = vpop.f32.mrb[0].mxu0
    %v6362 = vpop.f32.mrb[0].mxu0
    %v6363 = vadd.f32 0.0, %v6362
    %v6364 = vpop.f32.mrb[0].mxu0
    %6365 = vmatprep.mubr.bf16.mxu0 %v4065
    %6366 = vmatmul.mubr.bf16.gmra.mrb[0].mxu0 %v2918
    %v6367 = vpop.f32.mrb[0].mxu0
    %v6368 = vadd.f32 0.0, %v6367
    %v6369 = vpop.f32.mrb[0].mxu0
    %v6370 = vpop.f32.mrb[0].mxu0
    %v6371 = vadd.f32 0.0, %v6370
    %v6372 = vpop.f32.mrb[0].mxu0
    %6373 = vmatprep.mubr.bf16.mxu0 %v4068
    %6374 = vmatmul.mubr.bf16.gmra.mrb[0].mxu0 %v2920
    %v6375 = vpop.f32.mrb[0].mxu0
    %v6376 = vadd.f32 0.0, %v6375
    %v6377 = vpop.f32.mrb[0].mxu0
    %v6378 = vpop.f32.mrb[0].mxu0
    %v6379 = vadd.f32 0.0, %v6378
    %v6380 = vpop.f32.mrb[0].mxu0
    %6381 = vmatprep.mubr.bf16.mxu0 %v4071
    %6382 = vmatmul.mubr.bf16.gmra.mrb[0].mxu0 %v2922
    %v6383 = vpop.f32.mrb[0].mxu0
    %v6384 = vadd.f32 0.0, %v6383
    %v6385 = vpop.f32.mrb[0].mxu0
    %v6386 = vpop.f32.mrb[0].mxu0
    %v6387 = vadd.f32 0.0, %v6386
    %v6388 = vpop.f32.mrb[0].mxu0
    %6389 = vmatprep.mubr.bf16.mxu0 %v4074
    %6390 = vmatmul.mubr.bf16.gmra.mrb[0].mxu0 %v2924
    %v6391 = vpop.f32.mrb[0].mxu0
    %v6392 = vadd.f32 0.0, %v6391
    %v6393 = vpop.f32.mrb[0].mxu0
    %v6394 = vpop.f32.mrb[0].mxu0
    %v6395 = vadd.f32 0.0, %v6394
    %v6396 = vpop.f32.mrb[0].mxu0
    %6397 = vmatprep.mubr.bf16.mxu0 %v4077
    %6398 = vmatmul.mubr.bf16.gmra.mrb[0].mxu0 %v2926
    %v6399 = vpop.f32.mrb[0].mxu0
    %v6400 = vadd.f32 0.0, %v6399
    %v6401 = vpop.f32.mrb[0].mxu0
    %v6402 = vpop.f32.mrb[0].mxu0
    %v6403 = vadd.f32 0.0, %v6402
    %v6404 = vpop.f32.mrb[0].mxu0
    %6405 = vmatprep.mubr.bf16.mxu0 %v4080
    %6406 = vmatmul.mubr.bf16.gmra.mrb[0].mxu0 %v2928
    %v6407 = vpop.f32.mrb[0].mxu0
    %v6408 = vadd.f32 0.0, %v6407
    %v6409 = vpop.f32.mrb[0].mxu0
    %v6410 = vpop.f32.mrb[0].mxu0
    %v6411 = vadd.f32 0.0, %v6410
    %v6412 = vpop.f32.mrb[0].mxu0
    %6413 = vmatprep.mubr.bf16.mxu0 %v4083
    %6414 = vmatmul.mubr.bf16.gmra.mrb[0].mxu0 %v2930
    %v6415 = vpop.f32.mrb[0].mxu0
    %v6416 = vadd.f32 0.0, %v6415
    %v6417 = vpop.f32.mrb[0].mxu0
    %v6418 = vpop.f32.mrb[0].mxu0
    %v6419 = vadd.f32 0.0, %v6418
    %v6420 = vpop.f32.mrb[0].mxu0
    %6421 = vdwg.mxu0
    %v6422 = vmax.f32 %v4120, 0.0
    %v6423 = vmax.f32 %v4123, 0.0
    %v6424 = vmax.f32 %v4128, 0.0
    %v6425 = vmax.f32 %v4131, 0.0
    %v6426 = vmax.f32 %v4136, 0.0
    %v6427 = vmax.f32 %v4139, 0.0
    %v6428 = vmax.f32 %v4144, 0.0
    %v6429 = vmax.f32 %v4147, 0.0
    %v6430 = vmax.f32 %v4152, 0.0
    %v6431 = vmax.f32 %v4155, 0.0
    %v6432 = vmax.f32 %v4160, 0.0
    %v6433 = vmax.f32 %v4163, 0.0
    %v6434 = vmax.f32 %v4168, 0.0
    %v6435 = vmax.f32 %v4171, 0.0
    %v6436 = vmax.f32 %v4176, 0.0
    %v6437 = vmax.f32 %v4179, 0.0
    %v6438 = vmax.f32 %v4184, 0.0
    %v6439 = vmax.f32 %v4187, 0.0
    %v6440 = vmax.f32 %v4192, 0.0
    %v6441 = vmax.f32 %v4195, 0.0
    %v6442 = vmax.f32 %v4200, 0.0
    %v6443 = vmax.f32 %v4203, 0.0
    %v6444 = vmax.f32 %v4208, 0.0
    %v6445 = vmax.f32 %v4211, 0.0
    %v6446 = vmax.f32 %v4216, 0.0
    %v6447 = vmax.f32 %v4219, 0.0
    %v6448 = vmax.f32 %v4224, 0.0
    %v6449 = vmax.f32 %v4227, 0.0
    %v6450 = vmax.f32 %v4232, 0.0
    %v6451 = vmax.f32 %v4235, 0.0
    %v6452 = vmax.f32 %v4240, 0.0
    %v6453 = vmax.f32 %v4243, 0.0
    %v6454 = vmax.f32 %v4248, 0.0
    %v6455 = vmax.f32 %v4251, 0.0
    %v6456 = vmax.f32 %v4256, 0.0
    %v6457 = vmax.f32 %v4259, 0.0
    %v6458 = vmax.f32 %v4264, 0.0
    %v6459 = vmax.f32 %v4267, 0.0
    %v6460 = vmax.f32 %v4272, 0.0
    %v6461 = vmax.f32 %v4275, 0.0
    %v6462 = vmax.f32 %v4280, 0.0
    %v6463 = vmax.f32 %v4283, 0.0
    %v6464 = vmax.f32 %v4288, 0.0
    %v6465 = vmax.f32 %v4291, 0.0
    %v6466 = vmax.f32 %v4296, 0.0
    %v6467 = vmax.f32 %v4299, 0.0
    %v6468 = vmax.f32 %v4304, 0.0
    %v6469 = vmax.f32 %v4307, 0.0
    %v6470 = vmax.f32 %v4312, 0.0
    %v6471 = vmax.f32 %v4315, 0.0
    %v6472 = vmax.f32 %v4320, 0.0
    %v6473 = vmax.f32 %v4323, 0.0
    %v6474 = vmax.f32 %v4328, 0.0
    %v6475 = vmax.f32 %v4331, 0.0
    %v6476 = vmax.f32 %v4336, 0.0
    %v6477 = vmax.f32 %v4339, 0.0
    %v6478 = vmax.f32 %v4344, 0.0
    %v6479 = vmax.f32 %v4347, 0.0
    %v6480 = vmax.f32 %v4352, 0.0
    %v6481 = vmax.f32 %v4355, 0.0
    %v6482 = vmax.f32 %v4360, 0.0
    %v6483 = vmax.f32 %v4363, 0.0
    %v6484 = vmax.f32 %v4368, 0.0
    %v6485 = vmax.f32 %v4371, 0.0
    %v6486 = vmax.f32 %v4376, 0.0
    %v6487 = vmax.f32 %v4379, 0.0
    %v6488 = vmax.f32 %v4384, 0.0
    %v6489 = vmax.f32 %v4387, 0.0
    %v6490 = vmax.f32 %v4392, 0.0
    %v6491 = vmax.f32 %v4395, 0.0
    %v6492 = vmax.f32 %v4400, 0.0
    %v6493 = vmax.f32 %v4403, 0.0
    %v6494 = vmax.f32 %v4408, 0.0
    %v6495 = vmax.f32 %v4411, 0.0
    %v6496 = vmax.f32 %v4416, 0.0
    %v6497 = vmax.f32 %v4419, 0.0
    %v6498 = vmax.f32 %v4424, 0.0
    %v6499 = vmax.f32 %v4427, 0.0
    %v6500 = vmax.f32 %v4432, 0.0
    %v6501 = vmax.f32 %v4435, 0.0
    %v6502 = vmax.f32 %v4440, 0.0
    %v6503 = vmax.f32 %v4443, 0.0
    %v6504 = vmax.f32 %v4448, 0.0
    %v6505 = vmax.f32 %v4451, 0.0
    %v6506 = vmax.f32 %v4456, 0.0
    %v6507 = vmax.f32 %v4459, 0.0
    %v6508 = vmax.f32 %v4464, 0.0
    %v6509 = vmax.f32 %v4467, 0.0
    %v6510 = vmax.f32 %v4472, 0.0
    %v6511 = vmax.f32 %v4475, 0.0
    %v6512 = vmax.f32 %v4480, 0.0
    %v6513 = vmax.f32 %v4483, 0.0
    %v6514 = vmax.f32 %v4488, 0.0
    %v6515 = vmax.f32 %v4491, 0.0
    %v6516 = vmax.f32 %v4496, 0.0
    %v6517 = vmax.f32 %v4499, 0.0
    %v6518 = vmax.f32 %v4504, 0.0
    %v6519 = vmax.f32 %v4507, 0.0
    %v6520 = vmax.f32 %v4512, 0.0
    %v6521 = vmax.f32 %v4515, 0.0
    %v6522 = vmax.f32 %v4520, 0.0
    %v6523 = vmax.f32 %v4523, 0.0
    %v6524 = vmax.f32 %v4528, 0.0
    %v6525 = vmax.f32 %v4531, 0.0
    %v6526 = vmax.f32 %v4536, 0.0
    %v6527 = vmax.f32 %v4539, 0.0
    %v6528 = vmax.f32 %v4544, 0.0
    %v6529 = vmax.f32 %v4547, 0.0
    %v6530 = vmax.f32 %v4552, 0.0
    %v6531 = vmax.f32 %v4555, 0.0
    %v6532 = vmax.f32 %v4560, 0.0
    %v6533 = vmax.f32 %v4563, 0.0
    %v6534 = vmax.f32 %v4568, 0.0
    %v6535 = vmax.f32 %v4571, 0.0
    %v6536 = vmax.f32 %v4576, 0.0
    %v6537 = vmax.f32 %v4579, 0.0
    %v6538 = vmax.f32 %v4584, 0.0
    %v6539 = vmax.f32 %v4587, 0.0
    %v6540 = vmax.f32 %v4592, 0.0
    %v6541 = vmax.f32 %v4595, 0.0
    %v6542 = vmax.f32 %v4600, 0.0
    %v6543 = vmax.f32 %v4603, 0.0
    %v6544 = vmax.f32 %v4608, 0.0
    %v6545 = vmax.f32 %v4611, 0.0
    %v6546 = vmax.f32 %v4616, 0.0
    %v6547 = vmax.f32 %v4619, 0.0
    %v6548 = vmax.f32 %v4624, 0.0
    %v6549 = vmax.f32 %v4627, 0.0
    %v6550 = vmax.f32 %v4632, 0.0
    %v6551 = vmax.f32 %v4635, 0.0
    %v6552 = vmax.f32 %v4640, 0.0
    %v6553 = vmax.f32 %v4643, 0.0
    %v6554 = vmax.f32 %v4648, 0.0
    %v6555 = vmax.f32 %v4651, 0.0
    %v6556 = vmax.f32 %v4656, 0.0
    %v6557 = vmax.f32 %v4659, 0.0
    %v6558 = vmax.f32 %v4664, 0.0
    %v6559 = vmax.f32 %v4667, 0.0
    %v6560 = vmax.f32 %v4672, 0.0
    %v6561 = vmax.f32 %v4675, 0.0
    %v6562 = vmax.f32 %v4680, 0.0
    %v6563 = vmax.f32 %v4683, 0.0
    %v6564 = vmax.f32 %v4688, 0.0
    %v6565 = vmax.f32 %v4691, 0.0
    %v6566 = vmax.f32 %v4696, 0.0
    %v6567 = vmax.f32 %v4699, 0.0
    %v6568 = vmax.f32 %v4704, 0.0
    %v6569 = vmax.f32 %v4707, 0.0
    %v6570 = vmax.f32 %v4712, 0.0
    %v6571 = vmax.f32 %v4715, 0.0
    %v6572 = vmax.f32 %v4720, 0.0
    %v6573 = vmax.f32 %v4723, 0.0
    %v6574 = vmax.f32 %v4728, 0.0
    %v6575 = vmax.f32 %v4731, 0.0
    %v6576 = vmax.f32 %v4736, 0.0
    %v6577 = vmax.f32 %v4739, 0.0
    %v6578 = vmax.f32 %v4744, 0.0
    %v6579 = vmax.f32 %v4747, 0.0
    %v6580 = vmax.f32 %v4752, 0.0
    %v6581 = vmax.f32 %v4755, 0.0
    %v6582 = vmax.f32 %v4760, 0.0
    %v6583 = vmax.f32 %v4763, 0.0
    %v6584 = vmax.f32 %v4768, 0.0
    %v6585 = vmax.f32 %v4771, 0.0
    %v6586 = vmax.f32 %v4776, 0.0
    %v6587 = vmax.f32 %v4779, 0.0
    %v6588 = vmax.f32 %v4784, 0.0
    %v6589 = vmax.f32 %v4787, 0.0
    %v6590 = vmax.f32 %v4792, 0.0
    %v6591 = vmax.f32 %v4795, 0.0
    %v6592 = vmax.f32 %v4800, 0.0
    %v6593 = vmax.f32 %v4803, 0.0
    %v6594 = vmax.f32 %v4808, 0.0
    %v6595 = vmax.f32 %v4811, 0.0
    %v6596 = vmax.f32 %v4816, 0.0
    %v6597 = vmax.f32 %v4819, 0.0
    %v6598 = vmax.f32 %v4824, 0.0
    %v6599 = vmax.f32 %v4827, 0.0
    %v6600 = vmax.f32 %v4832, 0.0
    %v6601 = vmax.f32 %v4835, 0.0
    %v6602 = vmax.f32 %v4840, 0.0
    %v6603 = vmax.f32 %v4843, 0.0
    %v6604 = vmax.f32 %v4848, 0.0
    %v6605 = vmax.f32 %v4851, 0.0
    %v6606 = vmax.f32 %v4856, 0.0
    %v6607 = vmax.f32 %v4859, 0.0
    %v6608 = vmax.f32 %v4864, 0.0
    %v6609 = vmax.f32 %v4867, 0.0
    %v6610 = vmax.f32 %v4872, 0.0
    %v6611 = vmax.f32 %v4875, 0.0
    %v6612 = vmax.f32 %v4880, 0.0
    %v6613 = vmax.f32 %v4883, 0.0
    %v6614 = vmax.f32 %v4888, 0.0
    %v6615 = vmax.f32 %v4891, 0.0
    %v6616 = vmax.f32 %v4896, 0.0
    %v6617 = vmax.f32 %v4899, 0.0
    %v6618 = vmax.f32 %v4904, 0.0
    %v6619 = vmax.f32 %v4907, 0.0
    %v6620 = vmax.f32 %v4912, 0.0
    %v6621 = vmax.f32 %v4915, 0.0
    %v6622 = vmax.f32 %v4920, 0.0
    %v6623 = vmax.f32 %v4923, 0.0
    %v6624 = vmax.f32 %v4928, 0.0
    %v6625 = vmax.f32 %v4931, 0.0
    %v6626 = vmax.f32 %v4936, 0.0
    %v6627 = vmax.f32 %v4939, 0.0
    %v6628 = vmax.f32 %v4944, 0.0
    %v6629 = vmax.f32 %v4947, 0.0
    %v6630 = vmax.f32 %v4952, 0.0
    %v6631 = vmax.f32 %v4955, 0.0
    %v6632 = vmax.f32 %v4960, 0.0
    %v6633 = vmax.f32 %v4963, 0.0
    %v6634 = vmax.f32 %v4968, 0.0
    %v6635 = vmax.f32 %v4971, 0.0
    %v6636 = vmax.f32 %v4976, 0.0
    %v6637 = vmax.f32 %v4979, 0.0
    %v6638 = vmax.f32 %v4984, 0.0
    %v6639 = vmax.f32 %v4987, 0.0
    %v6640 = vmax.f32 %v4992, 0.0
    %v6641 = vmax.f32 %v4995, 0.0
    %v6642 = vmax.f32 %v5000, 0.0
    %v6643 = vmax.f32 %v5003, 0.0
    %v6644 = vmax.f32 %v5008, 0.0
    %v6645 = vmax.f32 %v5011, 0.0
    %v6646 = vmax.f32 %v5016, 0.0
    %v6647 = vmax.f32 %v5019, 0.0
    %v6648 = vmax.f32 %v5024, 0.0
    %v6649 = vmax.f32 %v5027, 0.0
    %v6650 = vmax.f32 %v5032, 0.0
    %v6651 = vmax.f32 %v5035, 0.0
    %v6652 = vmax.f32 %v5040, 0.0
    %v6653 = vmax.f32 %v5043, 0.0
    %v6654 = vmax.f32 %v5048, 0.0
    %v6655 = vmax.f32 %v5051, 0.0
    %v6656 = vmax.f32 %v5056, 0.0
    %v6657 = vmax.f32 %v5059, 0.0
    %v6658 = vmax.f32 %v5064, 0.0
    %v6659 = vmax.f32 %v5067, 0.0
    %v6660 = vmax.f32 %v5072, 0.0
    %v6661 = vmax.f32 %v5075, 0.0
    %v6662 = vmax.f32 %v5080, 0.0
    %v6663 = vmax.f32 %v5083, 0.0
    %v6664 = vmax.f32 %v5088, 0.0
    %v6665 = vmax.f32 %v5091, 0.0
    %v6666 = vmax.f32 %v5096, 0.0
    %v6667 = vmax.f32 %v5099, 0.0
    %v6668 = vmax.f32 %v5104, 0.0
    %v6669 = vmax.f32 %v5107, 0.0
    %v6670 = vmax.f32 %v5112, 0.0
    %v6671 = vmax.f32 %v5115, 0.0
    %v6672 = vmax.f32 %v5120, 0.0
    %v6673 = vmax.f32 %v5123, 0.0
    %v6674 = vmax.f32 %v5128, 0.0
    %v6675 = vmax.f32 %v5131, 0.0
    %v6676 = vmax.f32 %v5136, 0.0
    %v6677 = vmax.f32 %v5139, 0.0
    %v6678 = vmax.f32 %v5144, 0.0
    %v6679 = vmax.f32 %v5147, 0.0
    %v6680 = vmax.f32 %v5152, 0.0
    %v6681 = vmax.f32 %v5155, 0.0
    %v6682 = vmax.f32 %v5160, 0.0
    %v6683 = vmax.f32 %v5163, 0.0
    %v6684 = vmax.f32 %v5168, 0.0
    %v6685 = vmax.f32 %v5171, 0.0
    %v6686 = vmax.f32 %v5176, 0.0
    %v6687 = vmax.f32 %v5179, 0.0
    %v6688 = vmax.f32 %v5184, 0.0
    %v6689 = vmax.f32 %v5187, 0.0
    %v6690 = vmax.f32 %v5192, 0.0
    %v6691 = vmax.f32 %v5195, 0.0
    %v6692 = vmax.f32 %v5200, 0.0
    %v6693 = vmax.f32 %v5203, 0.0
    %v6694 = vmax.f32 %v5208, 0.0
    %v6695 = vmax.f32 %v5211, 0.0
    %v6696 = vmax.f32 %v5216, 0.0
    %v6697 = vmax.f32 %v5219, 0.0
    %v6698 = vmax.f32 %v5224, 0.0
    %v6699 = vmax.f32 %v5227, 0.0
    %v6700 = vmax.f32 %v5232, 0.0
    %v6701 = vmax.f32 %v5235, 0.0
    %v6702 = vmax.f32 %v5240, 0.0
    %v6703 = vmax.f32 %v5243, 0.0
    %v6704 = vmax.f32 %v5248, 0.0
    %v6705 = vmax.f32 %v5251, 0.0
    %v6706 = vmax.f32 %v5256, 0.0
    %v6707 = vmax.f32 %v5259, 0.0
    %v6708 = vmax.f32 %v5264, 0.0
    %v6709 = vmax.f32 %v5267, 0.0
    %v6710 = vmax.f32 %v5272, 0.0
    %v6711 = vmax.f32 %v5275, 0.0
    %v6712 = vmax.f32 %v5280, 0.0
    %v6713 = vmax.f32 %v5283, 0.0
    %v6714 = vmax.f32 %v5288, 0.0
    %v6715 = vmax.f32 %v5291, 0.0
    %v6716 = vmax.f32 %v5296, 0.0
    %v6717 = vmax.f32 %v5299, 0.0
    %v6718 = vmax.f32 %v5304, 0.0
    %v6719 = vmax.f32 %v5307, 0.0
    %v6720 = vmax.f32 %v5312, 0.0
    %v6721 = vmax.f32 %v5315, 0.0
    %v6722 = vmax.f32 %v5320, 0.0
    %v6723 = vmax.f32 %v5323, 0.0
    %v6724 = vmax.f32 %v5328, 0.0
    %v6725 = vmax.f32 %v5331, 0.0
    %v6726 = vmax.f32 %v5336, 0.0
    %v6727 = vmax.f32 %v5339, 0.0
    %v6728 = vmax.f32 %v5344, 0.0
    %v6729 = vmax.f32 %v5347, 0.0
    %v6730 = vmax.f32 %v5352, 0.0
    %v6731 = vmax.f32 %v5355, 0.0
    %v6732 = vmax.f32 %v5360, 0.0
    %v6733 = vmax.f32 %v5363, 0.0
    %v6734 = vmax.f32 %v5368, 0.0
    %v6735 = vmax.f32 %v5371, 0.0
    %v6736 = vmax.f32 %v5376, 0.0
    %v6737 = vmax.f32 %v5379, 0.0
    %v6738 = vmax.f32 %v5384, 0.0
    %v6739 = vmax.f32 %v5387, 0.0
    %v6740 = vmax.f32 %v5392, 0.0
    %v6741 = vmax.f32 %v5395, 0.0
    %v6742 = vmax.f32 %v5400, 0.0
    %v6743 = vmax.f32 %v5403, 0.0
    %v6744 = vmax.f32 %v5408, 0.0
    %v6745 = vmax.f32 %v5411, 0.0
    %v6746 = vmax.f32 %v5416, 0.0
    %v6747 = vmax.f32 %v5419, 0.0
    %v6748 = vmax.f32 %v5424, 0.0
    %v6749 = vmax.f32 %v5427, 0.0
    %v6750 = vmax.f32 %v5432, 0.0
    %v6751 = vmax.f32 %v5435, 0.0
    %v6752 = vmax.f32 %v5440, 0.0
    %v6753 = vmax.f32 %v5443, 0.0
    %v6754 = vmax.f32 %v5448, 0.0
    %v6755 = vmax.f32 %v5451, 0.0
    %v6756 = vmax.f32 %v5456, 0.0
    %v6757 = vmax.f32 %v5459, 0.0
    %v6758 = vmax.f32 %v5464, 0.0
    %v6759 = vmax.f32 %v5467, 0.0
    %v6760 = vmax.f32 %v5472, 0.0
    %v6761 = vmax.f32 %v5475, 0.0
    %v6762 = vmax.f32 %v5480, 0.0
    %v6763 = vmax.f32 %v5483, 0.0
    %v6764 = vmax.f32 %v5488, 0.0
    %v6765 = vmax.f32 %v5491, 0.0
    %v6766 = vmax.f32 %v5496, 0.0
    %v6767 = vmax.f32 %v5499, 0.0
    %v6768 = vmax.f32 %v5504, 0.0
    %v6769 = vmax.f32 %v5507, 0.0
    %v6770 = vmax.f32 %v5512, 0.0
    %v6771 = vmax.f32 %v5515, 0.0
    %v6772 = vmax.f32 %v5520, 0.0
    %v6773 = vmax.f32 %v5523, 0.0
    %v6774 = vmax.f32 %v5528, 0.0
    %v6775 = vmax.f32 %v5531, 0.0
    %v6776 = vmax.f32 %v5536, 0.0
    %v6777 = vmax.f32 %v5539, 0.0
    %v6778 = vmax.f32 %v5544, 0.0
    %v6779 = vmax.f32 %v5547, 0.0
    %v6780 = vmax.f32 %v5552, 0.0
    %v6781 = vmax.f32 %v5555, 0.0
    %v6782 = vmax.f32 %v5560, 0.0
    %v6783 = vmax.f32 %v5563, 0.0
    %v6784 = vmax.f32 %v5568, 0.0
    %v6785 = vmax.f32 %v5571, 0.0
    %v6786 = vmax.f32 %v5576, 0.0
    %v6787 = vmax.f32 %v5579, 0.0
    %v6788 = vmax.f32 %v5584, 0.0
    %v6789 = vmax.f32 %v5587, 0.0
    %v6790 = vmax.f32 %v5592, 0.0
    %v6791 = vmax.f32 %v5595, 0.0
    %v6792 = vmax.f32 %v5600, 0.0
    %v6793 = vmax.f32 %v5603, 0.0
    %v6794 = vmax.f32 %v5608, 0.0
    %v6795 = vmax.f32 %v5611, 0.0
    %v6796 = vmax.f32 %v5616, 0.0
    %v6797 = vmax.f32 %v5619, 0.0
    %v6798 = vmax.f32 %v5624, 0.0
    %v6799 = vmax.f32 %v5627, 0.0
    %v6800 = vmax.f32 %v5632, 0.0
    %v6801 = vmax.f32 %v5635, 0.0
    %v6802 = vmax.f32 %v5640, 0.0
    %v6803 = vmax.f32 %v5643, 0.0
    %v6804 = vmax.f32 %v5648, 0.0
    %v6805 = vmax.f32 %v5651, 0.0
    %v6806 = vmax.f32 %v5656, 0.0
    %v6807 = vmax.f32 %v5659, 0.0
    %v6808 = vmax.f32 %v5664, 0.0
    %v6809 = vmax.f32 %v5667, 0.0
    %v6810 = vmax.f32 %v5672, 0.0
    %v6811 = vmax.f32 %v5675, 0.0
    %v6812 = vmax.f32 %v5680, 0.0
    %v6813 = vmax.f32 %v5683, 0.0
    %v6814 = vmax.f32 %v5688, 0.0
    %v6815 = vmax.f32 %v5691, 0.0
    %v6816 = vmax.f32 %v5696, 0.0
    %v6817 = vmax.f32 %v5699, 0.0
    %v6818 = vmax.f32 %v5704, 0.0
    %v6819 = vmax.f32 %v5707, 0.0
    %v6820 = vmax.f32 %v5712, 0.0
    %v6821 = vmax.f32 %v5715, 0.0
    %v6822 = vmax.f32 %v5720, 0.0
    %v6823 = vmax.f32 %v5723, 0.0
    %v6824 = vmax.f32 %v5728, 0.0
    %v6825 = vmax.f32 %v5731, 0.0
    %v6826 = vmax.f32 %v5736, 0.0
    %v6827 = vmax.f32 %v5739, 0.0
    %v6828 = vmax.f32 %v5744, 0.0
    %v6829 = vmax.f32 %v5747, 0.0
    %v6830 = vmax.f32 %v5752, 0.0
    %v6831 = vmax.f32 %v5755, 0.0
    %v6832 = vmax.f32 %v5760, 0.0
    %v6833 = vmax.f32 %v5763, 0.0
    %v6834 = vmax.f32 %v5768, 0.0
    %v6835 = vmax.f32 %v5771, 0.0
    %v6836 = vmax.f32 %v5776, 0.0
    %v6837 = vmax.f32 %v5779, 0.0
    %v6838 = vmax.f32 %v5784, 0.0
    %v6839 = vmax.f32 %v5787, 0.0
    %v6840 = vmax.f32 %v5792, 0.0
    %v6841 = vmax.f32 %v5795, 0.0
    %v6842 = vmax.f32 %v5800, 0.0
    %v6843 = vmax.f32 %v5803, 0.0
    %v6844 = vmax.f32 %v5808, 0.0
    %v6845 = vmax.f32 %v5811, 0.0
    %v6846 = vmax.f32 %v5816, 0.0
    %v6847 = vmax.f32 %v5819, 0.0
    %v6848 = vmax.f32 %v5824, 0.0
    %v6849 = vmax.f32 %v5827, 0.0
    %v6850 = vmax.f32 %v5832, 0.0
    %v6851 = vmax.f32 %v5835, 0.0
    %v6852 = vmax.f32 %v5840, 0.0
    %v6853 = vmax.f32 %v5843, 0.0
    %v6854 = vmax.f32 %v5848, 0.0
    %v6855 = vmax.f32 %v5851, 0.0
    %v6856 = vmax.f32 %v5856, 0.0
    %v6857 = vmax.f32 %v5859, 0.0
    %v6858 = vmax.f32 %v5864, 0.0
    %v6859 = vmax.f32 %v5867, 0.0
    %v6860 = vmax.f32 %v5872, 0.0
    %v6861 = vmax.f32 %v5875, 0.0
    %v6862 = vmax.f32 %v5880, 0.0
    %v6863 = vmax.f32 %v5883, 0.0
    %v6864 = vmax.f32 %v5888, 0.0
    %v6865 = vmax.f32 %v5891, 0.0
    %v6866 = vmax.f32 %v5896, 0.0
    %v6867 = vmax.f32 %v5899, 0.0
    %v6868 = vmax.f32 %v5904, 0.0
    %v6869 = vmax.f32 %v5907, 0.0
    %v6870 = vmax.f32 %v5912, 0.0
    %v6871 = vmax.f32 %v5915, 0.0
    %v6872 = vmax.f32 %v5920, 0.0
    %v6873 = vmax.f32 %v5923, 0.0
    %v6874 = vmax.f32 %v5928, 0.0
    %v6875 = vmax.f32 %v5931, 0.0
    %v6876 = vmax.f32 %v5936, 0.0
    %v6877 = vmax.f32 %v5939, 0.0
    %v6878 = vmax.f32 %v5944, 0.0
    %v6879 = vmax.f32 %v5947, 0.0
    %v6880 = vmax.f32 %v5952, 0.0
    %v6881 = vmax.f32 %v5955, 0.0
    %v6882 = vmax.f32 %v5960, 0.0
    %v6883 = vmax.f32 %v5963, 0.0
    %v6884 = vmax.f32 %v5968, 0.0
    %v6885 = vmax.f32 %v5971, 0.0
    %v6886 = vmax.f32 %v5976, 0.0
    %v6887 = vmax.f32 %v5979, 0.0
    %v6888 = vmax.f32 %v5984, 0.0
    %v6889 = vmax.f32 %v5987, 0.0
    %v6890 = vmax.f32 %v5992, 0.0
    %v6891 = vmax.f32 %v5995, 0.0
    %v6892 = vmax.f32 %v6000, 0.0
    %v6893 = vmax.f32 %v6003, 0.0
    %v6894 = vmax.f32 %v6008, 0.0
    %v6895 = vmax.f32 %v6011, 0.0
    %v6896 = vmax.f32 %v6016, 0.0
    %v6897 = vmax.f32 %v6019, 0.0
    %v6898 = vmax.f32 %v6024, 0.0
    %v6899 = vmax.f32 %v6027, 0.0
    %v6900 = vmax.f32 %v6032, 0.0
    %v6901 = vmax.f32 %v6035, 0.0
    %v6902 = vmax.f32 %v6040, 0.0
    %v6903 = vmax.f32 %v6043, 0.0
    %v6904 = vmax.f32 %v6048, 0.0
    %v6905 = vmax.f32 %v6051, 0.0
    %v6906 = vmax.f32 %v6056, 0.0
    %v6907 = vmax.f32 %v6059, 0.0
    %v6908 = vmax.f32 %v6064, 0.0
    %v6909 = vmax.f32 %v6067, 0.0
    %v6910 = vmax.f32 %v6072, 0.0
    %v6911 = vmax.f32 %v6075, 0.0
    %v6912 = vmax.f32 %v6080, 0.0
    %v6913 = vmax.f32 %v6083, 0.0
    %v6914 = vmax.f32 %v6088, 0.0
    %v6915 = vmax.f32 %v6091, 0.0
    %v6916 = vmax.f32 %v6096, 0.0
    %v6917 = vmax.f32 %v6099, 0.0
    %v6918 = vmax.f32 %v6104, 0.0
    %v6919 = vmax.f32 %v6107, 0.0
    %v6920 = vmax.f32 %v6112, 0.0
    %v6921 = vmax.f32 %v6115, 0.0
    %v6922 = vmax.f32 %v6120, 0.0
    %v6923 = vmax.f32 %v6123, 0.0
    %v6924 = vmax.f32 %v6128, 0.0
    %v6925 = vmax.f32 %v6131, 0.0
    %v6926 = vmax.f32 %v6136, 0.0
    %v6927 = vmax.f32 %v6139, 0.0
    %v6928 = vmax.f32 %v6144, 0.0
    %v6929 = vmax.f32 %v6147, 0.0
    %v6930 = vmax.f32 %v6152, 0.0
    %v6931 = vmax.f32 %v6155, 0.0
    %v6932 = vmax.f32 %v6160, 0.0
    %v6933 = vmax.f32 %v6163, 0.0
    %v6934 = vmax.f32 %v6168, 0.0
    %v6935 = vmax.f32 %v6171, 0.0
    %v6936 = vmax.f32 %v6176, 0.0
    %v6937 = vmax.f32 %v6179, 0.0
    %v6938 = vmax.f32 %v6184, 0.0
    %v6939 = vmax.f32 %v6187, 0.0
    %v6940 = vmax.f32 %v6192, 0.0
    %v6941 = vmax.f32 %v6195, 0.0
    %v6942 = vmax.f32 %v6200, 0.0
    %v6943 = vmax.f32 %v6203, 0.0
    %v6944 = vmax.f32 %v6208, 0.0
    %v6945 = vmax.f32 %v6211, 0.0
    %v6946 = vmax.f32 %v6216, 0.0
    %v6947 = vmax.f32 %v6219, 0.0
    %v6948 = vmax.f32 %v6224, 0.0
    %v6949 = vmax.f32 %v6227, 0.0
    %v6950 = vmax.f32 %v6232, 0.0
    %v6951 = vmax.f32 %v6235, 0.0
    %v6952 = vmax.f32 %v6240, 0.0
    %v6953 = vmax.f32 %v6243, 0.0
    %v6954 = vmax.f32 %v6248, 0.0
    %v6955 = vmax.f32 %v6251, 0.0
    %v6956 = vmax.f32 %v6256, 0.0
    %v6957 = vmax.f32 %v6259, 0.0
    %v6958 = vmax.f32 %v6264, 0.0
    %v6959 = vmax.f32 %v6267, 0.0
    %v6960 = vmax.f32 %v6272, 0.0
    %v6961 = vmax.f32 %v6275, 0.0
    %v6962 = vmax.f32 %v6280, 0.0
    %v6963 = vmax.f32 %v6283, 0.0
    %v6964 = vmax.f32 %v6288, 0.0
    %v6965 = vmax.f32 %v6291, 0.0
    %v6966 = vmax.f32 %v6296, 0.0
    %v6967 = vmax.f32 %v6299, 0.0
    %v6968 = vmax.f32 %v6304, 0.0
    %v6969 = vmax.f32 %v6307, 0.0
    %v6970 = vmax.f32 %v6312, 0.0
    %v6971 = vmax.f32 %v6315, 0.0
    %v6972 = vmax.f32 %v6320, 0.0
    %v6973 = vmax.f32 %v6323, 0.0
    %v6974 = vmax.f32 %v6328, 0.0
    %v6975 = vmax.f32 %v6331, 0.0
    %v6976 = vmax.f32 %v6336, 0.0
    %v6977 = vmax.f32 %v6339, 0.0
    %v6978 = vmax.f32 %v6344, 0.0
    %v6979 = vmax.f32 %v6347, 0.0
    %v6980 = vmax.f32 %v6352, 0.0
    %v6981 = vmax.f32 %v6355, 0.0
    %v6982 = vmax.f32 %v6360, 0.0
    %v6983 = vmax.f32 %v6363, 0.0
    %v6984 = vmax.f32 %v6368, 0.0
    %v6985 = vmax.f32 %v6371, 0.0
    %v6986 = vmax.f32 %v6376, 0.0
    %v6987 = vmax.f32 %v6379, 0.0
    %v6988 = vmax.f32 %v6384, 0.0
    %v6989 = vmax.f32 %v6387, 0.0
    %v6990 = vmax.f32 %v6392, 0.0
    %v6991 = vmax.f32 %v6395, 0.0
    %v6992 = vmax.f32 %v6400, 0.0
    %v6993 = vmax.f32 %v6403, 0.0
    %v6994 = vmax.f32 %v6408, 0.0
    %v6995 = vmax.f32 %v6411, 0.0
    %v6996 = vmax.f32 %v6416, 0.0
    %v6997 = vmax.f32 %v6419, 0.0
    %v6998 = vpack.c.bf16 %v6423, %v6422
    %v6999 = vpack.c.bf16 %v6425, %v6424
    %v7000 = vpack.c.bf16 %v6427, %v6426
    %v7001 = vpack.c.bf16 %v6429, %v6428
    %v7002 = vpack.c.bf16 %v6431, %v6430
    %v7003 = vpack.c.bf16 %v6433, %v6432
    %v7004 = vpack.c.bf16 %v6435, %v6434
    %v7005 = vpack.c.bf16 %v6437, %v6436
    %v7006 = vpack.c.bf16 %v6439, %v6438
    %v7007 = vpack.c.bf16 %v6441, %v6440
    %v7008 = vpack.c.bf16 %v6443, %v6442
    %v7009 = vpack.c.bf16 %v6445, %v6444
    %v7010 = vpack.c.bf16 %v6447, %v6446
    %v7011 = vpack.c.bf16 %v6449, %v6448
    %v7012 = vpack.c.bf16 %v6451, %v6450
    %v7013 = vpack.c.bf16 %v6453, %v6452
    %v7014 = vpack.c.bf16 %v6455, %v6454
    %v7015 = vpack.c.bf16 %v6457, %v6456
    %v7016 = vpack.c.bf16 %v6459, %v6458
    %v7017 = vpack.c.bf16 %v6461, %v6460
    %v7018 = vpack.c.bf16 %v6463, %v6462
    %v7019 = vpack.c.bf16 %v6465, %v6464
    %v7020 = vpack.c.bf16 %v6467, %v6466
    %v7021 = vpack.c.bf16 %v6469, %v6468
    %v7022 = vpack.c.bf16 %v6471, %v6470
    %v7023 = vpack.c.bf16 %v6473, %v6472
    %v7024 = vpack.c.bf16 %v6475, %v6474
    %v7025 = vpack.c.bf16 %v6477, %v6476
    %v7026 = vpack.c.bf16 %v6479, %v6478
    %v7027 = vpack.c.bf16 %v6481, %v6480
    %v7028 = vpack.c.bf16 %v6483, %v6482
    %v7029 = vpack.c.bf16 %v6485, %v6484
    %v7030 = vpack.c.bf16 %v6487, %v6486
    %v7031 = vpack.c.bf16 %v6489, %v6488
    %v7032 = vpack.c.bf16 %v6491, %v6490
    %v7033 = vpack.c.bf16 %v6493, %v6492
    %v7034 = vpack.c.bf16 %v6495, %v6494
    %v7035 = vpack.c.bf16 %v6497, %v6496
    %v7036 = vpack.c.bf16 %v6499, %v6498
    %v7037 = vpack.c.bf16 %v6501, %v6500
    %v7038 = vpack.c.bf16 %v6503, %v6502
    %v7039 = vpack.c.bf16 %v6505, %v6504
    %v7040 = vpack.c.bf16 %v6507, %v6506
    %v7041 = vpack.c.bf16 %v6509, %v6508
    %v7042 = vpack.c.bf16 %v6511, %v6510
    %v7043 = vpack.c.bf16 %v6513, %v6512
    %v7044 = vpack.c.bf16 %v6515, %v6514
    %v7045 = vpack.c.bf16 %v6517, %v6516
    %v7046 = vpack.c.bf16 %v6519, %v6518
    %v7047 = vpack.c.bf16 %v6521, %v6520
    %v7048 = vpack.c.bf16 %v6523, %v6522
    %v7049 = vpack.c.bf16 %v6525, %v6524
    %v7050 = vpack.c.bf16 %v6527, %v6526
    %v7051 = vpack.c.bf16 %v6529, %v6528
    %v7052 = vpack.c.bf16 %v6531, %v6530
    %v7053 = vpack.c.bf16 %v6533, %v6532
    %v7054 = vpack.c.bf16 %v6535, %v6534
    %v7055 = vpack.c.bf16 %v6537, %v6536
    %v7056 = vpack.c.bf16 %v6539, %v6538
    %v7057 = vpack.c.bf16 %v6541, %v6540
    %v7058 = vpack.c.bf16 %v6543, %v6542
    %v7059 = vpack.c.bf16 %v6545, %v6544
    %v7060 = vpack.c.bf16 %v6547, %v6546
    %v7061 = vpack.c.bf16 %v6549, %v6548
    %v7062 = vpack.c.bf16 %v6551, %v6550
    %v7063 = vpack.c.bf16 %v6553, %v6552
    %v7064 = vpack.c.bf16 %v6555, %v6554
    %v7065 = vpack.c.bf16 %v6557, %v6556
    %v7066 = vpack.c.bf16 %v6559, %v6558
    %v7067 = vpack.c.bf16 %v6561, %v6560
    %v7068 = vpack.c.bf16 %v6563, %v6562
    %v7069 = vpack.c.bf16 %v6565, %v6564
    %v7070 = vpack.c.bf16 %v6567, %v6566
    %v7071 = vpack.c.bf16 %v6569, %v6568
    %v7072 = vpack.c.bf16 %v6571, %v6570
    %v7073 = vpack.c.bf16 %v6573, %v6572
    %v7074 = vpack.c.bf16 %v6575, %v6574
    %v7075 = vpack.c.bf16 %v6577, %v6576
    %v7076 = vpack.c.bf16 %v6579, %v6578
    %v7077 = vpack.c.bf16 %v6581, %v6580
    %v7078 = vpack.c.bf16 %v6583, %v6582
    %v7079 = vpack.c.bf16 %v6585, %v6584
    %v7080 = vpack.c.bf16 %v6587, %v6586
    %v7081 = vpack.c.bf16 %v6589, %v6588
    %v7082 = vpack.c.bf16 %v6591, %v6590
    %v7083 = vpack.c.bf16 %v6593, %v6592
    %v7084 = vpack.c.bf16 %v6595, %v6594
    %v7085 = vpack.c.bf16 %v6597, %v6596
    %v7086 = vpack.c.bf16 %v6599, %v6598
    %v7087 = vpack.c.bf16 %v6601, %v6600
    %v7088 = vpack.c.bf16 %v6603, %v6602
    %v7089 = vpack.c.bf16 %v6605, %v6604
    %v7090 = vpack.c.bf16 %v6607, %v6606
    %v7091 = vpack.c.bf16 %v6609, %v6608
    %v7092 = vpack.c.bf16 %v6611, %v6610
    %v7093 = vpack.c.bf16 %v6613, %v6612
    %v7094 = vpack.c.bf16 %v6615, %v6614
    %v7095 = vpack.c.bf16 %v6617, %v6616
    %v7096 = vpack.c.bf16 %v6619, %v6618
    %v7097 = vpack.c.bf16 %v6621, %v6620
    %v7098 = vpack.c.bf16 %v6623, %v6622
    %v7099 = vpack.c.bf16 %v6625, %v6624
    %v7100 = vpack.c.bf16 %v6627, %v6626
    %v7101 = vpack.c.bf16 %v6629, %v6628
    %v7102 = vpack.c.bf16 %v6631, %v6630
    %v7103 = vpack.c.bf16 %v6633, %v6632
    %v7104 = vpack.c.bf16 %v6635, %v6634
    %v7105 = vpack.c.bf16 %v6637, %v6636
    %v7106 = vpack.c.bf16 %v6639, %v6638
    %v7107 = vpack.c.bf16 %v6641, %v6640
    %v7108 = vpack.c.bf16 %v6643, %v6642
    %v7109 = vpack.c.bf16 %v6645, %v6644
    %v7110 = vpack.c.bf16 %v6647, %v6646
    %v7111 = vpack.c.bf16 %v6649, %v6648
    %v7112 = vpack.c.bf16 %v6651, %v6650
    %v7113 = vpack.c.bf16 %v6653, %v6652
    %v7114 = vpack.c.bf16 %v6655, %v6654
    %v7115 = vpack.c.bf16 %v6657, %v6656
    %v7116 = vpack.c.bf16 %v6659, %v6658
    %v7117 = vpack.c.bf16 %v6661, %v6660
    %v7118 = vpack.c.bf16 %v6663, %v6662
    %v7119 = vpack.c.bf16 %v6665, %v6664
    %v7120 = vpack.c.bf16 %v6667, %v6666
    %v7121 = vpack.c.bf16 %v6669, %v6668
    %v7122 = vpack.c.bf16 %v6671, %v6670
    %v7123 = vpack.c.bf16 %v6673, %v6672
    %v7124 = vpack.c.bf16 %v6675, %v6674
    %v7125 = vpack.c.bf16 %v6677, %v6676
    %v7126 = vpack.c.bf16 %v6679, %v6678
    %v7127 = vpack.c.bf16 %v6681, %v6680
    %v7128 = vpack.c.bf16 %v6683, %v6682
    %v7129 = vpack.c.bf16 %v6685, %v6684
    %v7130 = vpack.c.bf16 %v6687, %v6686
    %v7131 = vpack.c.bf16 %v6689, %v6688
    %v7132 = vpack.c.bf16 %v6691, %v6690
    %v7133 = vpack.c.bf16 %v6693, %v6692
    %v7134 = vpack.c.bf16 %v6695, %v6694
    %v7135 = vpack.c.bf16 %v6697, %v6696
    %v7136 = vpack.c.bf16 %v6699, %v6698
    %v7137 = vpack.c.bf16 %v6701, %v6700
    %v7138 = vpack.c.bf16 %v6703, %v6702
    %v7139 = vpack.c.bf16 %v6705, %v6704
    %v7140 = vpack.c.bf16 %v6707, %v6706
    %v7141 = vpack.c.bf16 %v6709, %v6708
    %v7142 = vpack.c.bf16 %v6711, %v6710
    %v7143 = vpack.c.bf16 %v6713, %v6712
    %v7144 = vpack.c.bf16 %v6715, %v6714
    %v7145 = vpack.c.bf16 %v6717, %v6716
    %v7146 = vpack.c.bf16 %v6719, %v6718
    %v7147 = vpack.c.bf16 %v6721, %v6720
    %v7148 = vpack.c.bf16 %v6723, %v6722
    %v7149 = vpack.c.bf16 %v6725, %v6724
    %v7150 = vpack.c.bf16 %v6727, %v6726
    %v7151 = vpack.c.bf16 %v6729, %v6728
    %v7152 = vpack.c.bf16 %v6731, %v6730
    %v7153 = vpack.c.bf16 %v6733, %v6732
    %v7154 = vpack.c.bf16 %v6735, %v6734
    %v7155 = vpack.c.bf16 %v6737, %v6736
    %v7156 = vpack.c.bf16 %v6739, %v6738
    %v7157 = vpack.c.bf16 %v6741, %v6740
    %v7158 = vpack.c.bf16 %v6743, %v6742
    %v7159 = vpack.c.bf16 %v6745, %v6744
    %v7160 = vpack.c.bf16 %v6747, %v6746
    %v7161 = vpack.c.bf16 %v6749, %v6748
    %v7162 = vpack.c.bf16 %v6751, %v6750
    %v7163 = vpack.c.bf16 %v6753, %v6752
    %v7164 = vpack.c.bf16 %v6755, %v6754
    %v7165 = vpack.c.bf16 %v6757, %v6756
    %v7166 = vpack.c.bf16 %v6759, %v6758
    %v7167 = vpack.c.bf16 %v6761, %v6760
    %v7168 = vpack.c.bf16 %v6763, %v6762
    %v7169 = vpack.c.bf16 %v6765, %v6764
    %v7170 = vpack.c.bf16 %v6767, %v6766
    %v7171 = vpack.c.bf16 %v6769, %v6768
    %v7172 = vpack.c.bf16 %v6771, %v6770
    %v7173 = vpack.c.bf16 %v6773, %v6772
    %v7174 = vpack.c.bf16 %v6775, %v6774
    %v7175 = vpack.c.bf16 %v6777, %v6776
    %v7176 = vpack.c.bf16 %v6779, %v6778
    %v7177 = vpack.c.bf16 %v6781, %v6780
    %v7178 = vpack.c.bf16 %v6783, %v6782
    %v7179 = vpack.c.bf16 %v6785, %v6784
    %v7180 = vpack.c.bf16 %v6787, %v6786
    %v7181 = vpack.c.bf16 %v6789, %v6788
    %v7182 = vpack.c.bf16 %v6791, %v6790
    %v7183 = vpack.c.bf16 %v6793, %v6792
    %v7184 = vpack.c.bf16 %v6795, %v6794
    %v7185 = vpack.c.bf16 %v6797, %v6796
    %v7186 = vpack.c.bf16 %v6799, %v6798
    %v7187 = vpack.c.bf16 %v6801, %v6800
    %v7188 = vpack.c.bf16 %v6803, %v6802
    %v7189 = vpack.c.bf16 %v6805, %v6804
    %v7190 = vpack.c.bf16 %v6807, %v6806
    %v7191 = vpack.c.bf16 %v6809, %v6808
    %v7192 = vpack.c.bf16 %v6811, %v6810
    %v7193 = vpack.c.bf16 %v6813, %v6812
    %v7194 = vpack.c.bf16 %v6815, %v6814
    %v7195 = vpack.c.bf16 %v6817, %v6816
    %v7196 = vpack.c.bf16 %v6819, %v6818
    %v7197 = vpack.c.bf16 %v6821, %v6820
    %v7198 = vpack.c.bf16 %v6823, %v6822
    %v7199 = vpack.c.bf16 %v6825, %v6824
    %v7200 = vpack.c.bf16 %v6827, %v6826
    %v7201 = vpack.c.bf16 %v6829, %v6828
    %v7202 = vpack.c.bf16 %v6831, %v6830
    %v7203 = vpack.c.bf16 %v6833, %v6832
    %v7204 = vpack.c.bf16 %v6835, %v6834
    %v7205 = vpack.c.bf16 %v6837, %v6836
    %v7206 = vpack.c.bf16 %v6839, %v6838
    %v7207 = vpack.c.bf16 %v6841, %v6840
    %v7208 = vpack.c.bf16 %v6843, %v6842
    %v7209 = vpack.c.bf16 %v6845, %v6844
    %v7210 = vpack.c.bf16 %v6847, %v6846
    %v7211 = vpack.c.bf16 %v6849, %v6848
    %v7212 = vpack.c.bf16 %v6851, %v6850
    %v7213 = vpack.c.bf16 %v6853, %v6852
    %v7214 = vpack.c.bf16 %v6855, %v6854
    %v7215 = vpack.c.bf16 %v6857, %v6856
    %v7216 = vpack.c.bf16 %v6859, %v6858
    %v7217 = vpack.c.bf16 %v6861, %v6860
    %v7218 = vpack.c.bf16 %v6863, %v6862
    %v7219 = vpack.c.bf16 %v6865, %v6864
    %v7220 = vpack.c.bf16 %v6867, %v6866
    %v7221 = vpack.c.bf16 %v6869, %v6868
    %v7222 = vpack.c.bf16 %v6871, %v6870
    %v7223 = vpack.c.bf16 %v6873, %v6872
    %v7224 = vpack.c.bf16 %v6875, %v6874
    %v7225 = vpack.c.bf16 %v6877, %v6876
    %v7226 = vpack.c.bf16 %v6879, %v6878
    %v7227 = vpack.c.bf16 %v6881, %v6880
    %v7228 = vpack.c.bf16 %v6883, %v6882
    %v7229 = vpack.c.bf16 %v6885, %v6884
    %v7230 = vpack.c.bf16 %v6887, %v6886
    %v7231 = vpack.c.bf16 %v6889, %v6888
    %v7232 = vpack.c.bf16 %v6891, %v6890
    %v7233 = vpack.c.bf16 %v6893, %v6892
    %v7234 = vpack.c.bf16 %v6895, %v6894
    %v7235 = vpack.c.bf16 %v6897, %v6896
    %v7236 = vpack.c.bf16 %v6899, %v6898
    %v7237 = vpack.c.bf16 %v6901, %v6900
    %v7238 = vpack.c.bf16 %v6903, %v6902
    %v7239 = vpack.c.bf16 %v6905, %v6904
    %v7240 = vpack.c.bf16 %v6907, %v6906
    %v7241 = vpack.c.bf16 %v6909, %v6908
    %v7242 = vpack.c.bf16 %v6911, %v6910
    %v7243 = vpack.c.bf16 %v6913, %v6912
    %v7244 = vpack.c.bf16 %v6915, %v6914
    %v7245 = vpack.c.bf16 %v6917, %v6916
    %v7246 = vpack.c.bf16 %v6919, %v6918
    %v7247 = vpack.c.bf16 %v6921, %v6920
    %v7248 = vpack.c.bf16 %v6923, %v6922
    %v7249 = vpack.c.bf16 %v6925, %v6924
    %v7250 = vpack.c.bf16 %v6927, %v6926
    %v7251 = vpack.c.bf16 %v6929, %v6928
    %v7252 = vpack.c.bf16 %v6931, %v6930
    %v7253 = vpack.c.bf16 %v6933, %v6932
    %v7254 = vpack.c.bf16 %v6935, %v6934
    %v7255 = vpack.c.bf16 %v6937, %v6936
    %v7256 = vpack.c.bf16 %v6939, %v6938
    %v7257 = vpack.c.bf16 %v6941, %v6940
    %v7258 = vpack.c.bf16 %v6943, %v6942
    %v7259 = vpack.c.bf16 %v6945, %v6944
    %v7260 = vpack.c.bf16 %v6947, %v6946
    %v7261 = vpack.c.bf16 %v6949, %v6948
    %v7262 = vpack.c.bf16 %v6951, %v6950
    %v7263 = vpack.c.bf16 %v6953, %v6952
    %v7264 = vpack.c.bf16 %v6955, %v6954
    %v7265 = vpack.c.bf16 %v6957, %v6956
    %v7266 = vpack.c.bf16 %v6959, %v6958
    %v7267 = vpack.c.bf16 %v6961, %v6960
    %v7268 = vpack.c.bf16 %v6963, %v6962
    %v7269 = vpack.c.bf16 %v6965, %v6964
    %v7270 = vpack.c.bf16 %v6967, %v6966
    %v7271 = vpack.c.bf16 %v6969, %v6968
    %v7272 = vpack.c.bf16 %v6971, %v6970
    %v7273 = vpack.c.bf16 %v6973, %v6972
    %v7274 = vpack.c.bf16 %v6975, %v6974
    %v7275 = vpack.c.bf16 %v6977, %v6976
    %v7276 = vpack.c.bf16 %v6979, %v6978
    %v7277 = vpack.c.bf16 %v6981, %v6980
    %v7278 = vpack.c.bf16 %v6983, %v6982
    %v7279 = vpack.c.bf16 %v6985, %v6984
    %v7280 = vpack.c.bf16 %v6987, %v6986
    %v7281 = vpack.c.bf16 %v6989, %v6988
    %v7282 = vpack.c.bf16 %v6991, %v6990
    %v7283 = vpack.c.bf16 %v6993, %v6992
    %v7284 = vpack.c.bf16 %v6995, %v6994
    %v7285 = vpack.c.bf16 %v6997, %v6996
    %7286 = vst [vmem:[#allocation2] sm:$0xff] %v6998
    %7287 = vst [vmem:[#allocation2 + $0x8] sm:$0xff] %v6999
    %7288 = vst [vmem:[#allocation2 + $0x10] sm:$0xff] %v7000
    %7289 = vst [vmem:[#allocation2 + $0x18] sm:$0xff] %v7001
    %7290 = vst [vmem:[#allocation2 + $0x20] sm:$0xff] %v7002
    %7291 = vst [vmem:[#allocation2 + $0x28] sm:$0xff] %v7003
    %7292 = vst [vmem:[#allocation2 + $0x30] sm:$0xff] %v7004
    %7293 = vst [vmem:[#allocation2 + $0x38] sm:$0xff] %v7005
    %7294 = vst [vmem:[#allocation2 + $0x40] sm:$0xff] %v7006
    %7295 = vst [vmem:[#allocation2 + $0x48] sm:$0xff] %v7007
    %7296 = vst [vmem:[#allocation2 + $0x50] sm:$0xff] %v7008
    %7297 = vst [vmem:[#allocation2 + $0x58] sm:$0xff] %v7009
    %7298 = vst [vmem:[#allocation2 + $0x60] sm:$0xff] %v7010
    %7299 = vst [vmem:[#allocation2 + $0x68] sm:$0xff] %v7011
    %7300 = vst [vmem:[#allocation2 + $0x70] sm:$0xff] %v7012
    %7301 = vst [vmem:[#allocation2 + $0x78] sm:$0xff] %v7013
    %7302 = vst [vmem:[#allocation2 + $0x80] sm:$0xff] %v7014
    %7303 = vst [vmem:[#allocation2 + $0x88] sm:$0xff] %v7015
    %7304 = vst [vmem:[#allocation2 + $0x90] sm:$0xff] %v7016
    %7305 = vst [vmem:[#allocation2 + $0x98] sm:$0xff] %v7017
    %7306 = vst [vmem:[#allocation2 + $0xa0] sm:$0xff] %v7018
    %7307 = vst [vmem:[#allocation2 + $0xa8] sm:$0xff] %v7019
    %7308 = vst [vmem:[#allocation2 + $0xb0] sm:$0xff] %v7020
    %7309 = vst [vmem:[#allocation2 + $0xb8] sm:$0xff] %v7021
    %7310 = vst [vmem:[#allocation2 + $0xc0] sm:$0xff] %v7022
    %7311 = vst [vmem:[#allocation2 + $0xc8] sm:$0xff] %v7023
    %7312 = vst [vmem:[#allocation2 + $0xd0] sm:$0xff] %v7024
    %7313 = vst [vmem:[#allocation2 + $0xd8] sm:$0xff] %v7025
    %7314 = vst [vmem:[#allocation2 + $0xe0] sm:$0xff] %v7026
    %7315 = vst [vmem:[#allocation2 + $0xe8] sm:$0xff] %v7027
    %7316 = vst [vmem:[#allocation2 + $0xf0] sm:$0xff] %v7028
    %7317 = vst [vmem:[#allocation2 + $0xf8] sm:$0xff] %v7029
    %7318 = vst [vmem:[#allocation2 + $0x100] sm:$0xff] %v7030
    %7319 = vst [vmem:[#allocation2 + $0x108] sm:$0xff] %v7031
    %7320 = vst [vmem:[#allocation2 + $0x110] sm:$0xff] %v7032
    %7321 = vst [vmem:[#allocation2 + $0x118] sm:$0xff] %v7033
    %7322 = vst [vmem:[#allocation2 + $0x120] sm:$0xff] %v7034
    %7323 = vst [vmem:[#allocation2 + $0x128] sm:$0xff] %v7035
    %7324 = vst [vmem:[#allocation2 + $0x130] sm:$0xff] %v7036
    %7325 = vst [vmem:[#allocation2 + $0x138] sm:$0xff] %v7037
    %7326 = vst [vmem:[#allocation2 + $0x140] sm:$0xff] %v7038
    %7327 = vst [vmem:[#allocation2 + $0x148] sm:$0xff] %v7039
    %7328 = vst [vmem:[#allocation2 + $0x150] sm:$0xff] %v7040
    %7329 = vst [vmem:[#allocation2 + $0x158] sm:$0xff] %v7041
    %7330 = vst [vmem:[#allocation2 + $0x160] sm:$0xff] %v7042
    %7331 = vst [vmem:[#allocation2 + $0x168] sm:$0xff] %v7043
    %7332 = vst [vmem:[#allocation2 + $0x170] sm:$0xff] %v7044
    %7333 = vst [vmem:[#allocation2 + $0x178] sm:$0xff] %v7045
    %7334 = vst [vmem:[#allocation2 + $0x180] sm:$0xff] %v7046
    %7335 = vst [vmem:[#allocation2 + $0x188] sm:$0xff] %v7047
    %7336 = vst [vmem:[#allocation2 + $0x190] sm:$0xff] %v7048
    %7337 = vst [vmem:[#allocation2 + $0x198] sm:$0xff] %v7049
    %7338 = vst [vmem:[#allocation2 + $0x1a0] sm:$0xff] %v7050
    %7339 = vst [vmem:[#allocation2 + $0x1a8] sm:$0xff] %v7051
    %7340 = vst [vmem:[#allocation2 + $0x1b0] sm:$0xff] %v7052
    %7341 = vst [vmem:[#allocation2 + $0x1b8] sm:$0xff] %v7053
    %7342 = vst [vmem:[#allocation2 + $0x1c0] sm:$0xff] %v7054
    %7343 = vst [vmem:[#allocation2 + $0x1c8] sm:$0xff] %v7055
    %7344 = vst [vmem:[#allocation2 + $0x1d0] sm:$0xff] %v7056
    %7345 = vst [vmem:[#allocation2 + $0x1d8] sm:$0xff] %v7057
    %7346 = vst [vmem:[#allocation2 + $0x1e0] sm:$0xff] %v7058
    %7347 = vst [vmem:[#allocation2 + $0x1e8] sm:$0xff] %v7059
    %7348 = vst [vmem:[#allocation2 + $0x1f0] sm:$0xff] %v7060
    %7349 = vst [vmem:[#allocation2 + $0x1f8] sm:$0xff] %v7061
    %7350 = vst [vmem:[#allocation2 + $0x200] sm:$0xff] %v7062
    %7351 = vst [vmem:[#allocation2 + $0x208] sm:$0xff] %v7063
    %7352 = vst [vmem:[#allocation2 + $0x210] sm:$0xff] %v7064
    %7353 = vst [vmem:[#allocation2 + $0x218] sm:$0xff] %v7065
    %7354 = vst [vmem:[#allocation2 + $0x220] sm:$0xff] %v7066
    %7355 = vst [vmem:[#allocation2 + $0x228] sm:$0xff] %v7067
    %7356 = vst [vmem:[#allocation2 + $0x230] sm:$0xff] %v7068
    %7357 = vst [vmem:[#allocation2 + $0x238] sm:$0xff] %v7069
    %7358 = vst [vmem:[#allocation2 + $0x240] sm:$0xff] %v7070
    %7359 = vst [vmem:[#allocation2 + $0x248] sm:$0xff] %v7071
    %7360 = vst [vmem:[#allocation2 + $0x250] sm:$0xff] %v7072
    %7361 = vst [vmem:[#allocation2 + $0x258] sm:$0xff] %v7073
    %7362 = vst [vmem:[#allocation2 + $0x260] sm:$0xff] %v7074
    %7363 = vst [vmem:[#allocation2 + $0x268] sm:$0xff] %v7075
    %7364 = vst [vmem:[#allocation2 + $0x270] sm:$0xff] %v7076
    %7365 = vst [vmem:[#allocation2 + $0x278] sm:$0xff] %v7077
    %7366 = vst [vmem:[#allocation2 + $0x280] sm:$0xff] %v7078
    %7367 = vst [vmem:[#allocation2 + $0x288] sm:$0xff] %v7079
    %7368 = vst [vmem:[#allocation2 + $0x290] sm:$0xff] %v7080
    %7369 = vst [vmem:[#allocation2 + $0x298] sm:$0xff] %v7081
    %7370 = vst [vmem:[#allocation2 + $0x2a0] sm:$0xff] %v7082
    %7371 = vst [vmem:[#allocation2 + $0x2a8] sm:$0xff] %v7083
    %7372 = vst [vmem:[#allocation2 + $0x2b0] sm:$0xff] %v7084
    %7373 = vst [vmem:[#allocation2 + $0x2b8] sm:$0xff] %v7085
    %7374 = vst [vmem:[#allocation2 + $0x2c0] sm:$0xff] %v7086
    %7375 = vst [vmem:[#allocation2 + $0x2c8] sm:$0xff] %v7087
    %7376 = vst [vmem:[#allocation2 + $0x2d0] sm:$0xff] %v7088
    %7377 = vst [vmem:[#allocation2 + $0x2d8] sm:$0xff] %v7089
    %7378 = vst [vmem:[#allocation2 + $0x2e0] sm:$0xff] %v7090
    %7379 = vst [vmem:[#allocation2 + $0x2e8] sm:$0xff] %v7091
    %7380 = vst [vmem:[#allocation2 + $0x2f0] sm:$0xff] %v7092
    %7381 = vst [vmem:[#allocation2 + $0x2f8] sm:$0xff] %v7093
    %7382 = vst [vmem:[#allocation2 + $0x300] sm:$0xff] %v7094
    %7383 = vst [vmem:[#allocation2 + $0x308] sm:$0xff] %v7095
    %7384 = vst [vmem:[#allocation2 + $0x310] sm:$0xff] %v7096
    %7385 = vst [vmem:[#allocation2 + $0x318] sm:$0xff] %v7097
    %7386 = vst [vmem:[#allocation2 + $0x320] sm:$0xff] %v7098
    %7387 = vst [vmem:[#allocation2 + $0x328] sm:$0xff] %v7099
    %7388 = vst [vmem:[#allocation2 + $0x330] sm:$0xff] %v7100
    %7389 = vst [vmem:[#allocation2 + $0x338] sm:$0xff] %v7101
    %7390 = vst [vmem:[#allocation2 + $0x340] sm:$0xff] %v7102
    %7391 = vst [vmem:[#allocation2 + $0x348] sm:$0xff] %v7103
    %7392 = vst [vmem:[#allocation2 + $0x350] sm:$0xff] %v7104
    %7393 = vst [vmem:[#allocation2 + $0x358] sm:$0xff] %v7105
    %7394 = vst [vmem:[#allocation2 + $0x360] sm:$0xff] %v7106
    %7395 = vst [vmem:[#allocation2 + $0x368] sm:$0xff] %v7107
    %7396 = vst [vmem:[#allocation2 + $0x370] sm:$0xff] %v7108
    %7397 = vst [vmem:[#allocation2 + $0x378] sm:$0xff] %v7109
    %7398 = vst [vmem:[#allocation2 + $0x380] sm:$0xff] %v7110
    %7399 = vst [vmem:[#allocation2 + $0x388] sm:$0xff] %v7111
    %7400 = vst [vmem:[#allocation2 + $0x390] sm:$0xff] %v7112
    %7401 = vst [vmem:[#allocation2 + $0x398] sm:$0xff] %v7113
    %7402 = vst [vmem:[#allocation2 + $0x3a0] sm:$0xff] %v7114
    %7403 = vst [vmem:[#allocation2 + $0x3a8] sm:$0xff] %v7115
    %7404 = vst [vmem:[#allocation2 + $0x3b0] sm:$0xff] %v7116
    %7405 = vst [vmem:[#allocation2 + $0x3b8] sm:$0xff] %v7117
    %7406 = vst [vmem:[#allocation2 + $0x3c0] sm:$0xff] %v7118
    %7407 = vst [vmem:[#allocation2 + $0x3c8] sm:$0xff] %v7119
    %7408 = vst [vmem:[#allocation2 + $0x3d0] sm:$0xff] %v7120
    %7409 = vst [vmem:[#allocation2 + $0x3d8] sm:$0xff] %v7121
    %7410 = vst [vmem:[#allocation2 + $0x3e0] sm:$0xff] %v7122
    %7411 = vst [vmem:[#allocation2 + $0x3e8] sm:$0xff] %v7123
    %7412 = vst [vmem:[#allocation2 + $0x3f0] sm:$0xff] %v7124
    %7413 = vst [vmem:[#allocation2 + $0x3f8] sm:$0xff] %v7125
    %7414 = vst [vmem:[#allocation2 + $0x400] sm:$0xff] %v7126
    %7415 = vst [vmem:[#allocation2 + $0x408] sm:$0xff] %v7127
    %7416 = vst [vmem:[#allocation2 + $0x410] sm:$0xff] %v7128
    %7417 = vst [vmem:[#allocation2 + $0x418] sm:$0xff] %v7129
    %7418 = vst [vmem:[#allocation2 + $0x420] sm:$0xff] %v7130
    %7419 = vst [vmem:[#allocation2 + $0x428] sm:$0xff] %v7131
    %7420 = vst [vmem:[#allocation2 + $0x430] sm:$0xff] %v7132
    %7421 = vst [vmem:[#allocation2 + $0x438] sm:$0xff] %v7133
    %7422 = vst [vmem:[#allocation2 + $0x440] sm:$0xff] %v7134
    %7423 = vst [vmem:[#allocation2 + $0x448] sm:$0xff] %v7135
    %7424 = vst [vmem:[#allocation2 + $0x450] sm:$0xff] %v7136
    %7425 = vst [vmem:[#allocation2 + $0x458] sm:$0xff] %v7137
    %7426 = vst [vmem:[#allocation2 + $0x460] sm:$0xff] %v7138
    %7427 = vst [vmem:[#allocation2 + $0x468] sm:$0xff] %v7139
    %7428 = vst [vmem:[#allocation2 + $0x470] sm:$0xff] %v7140
    %7429 = vst [vmem:[#allocation2 + $0x478] sm:$0xff] %v7141
    %7430 = vst [vmem:[#allocation2 + $0x480] sm:$0xff] %v7142
    %7431 = vst [vmem:[#allocation2 + $0x488] sm:$0xff] %v7143
    %7432 = vst [vmem:[#allocation2 + $0x490] sm:$0xff] %v7144
    %7433 = vst [vmem:[#allocation2 + $0x498] sm:$0xff] %v7145
    %7434 = vst [vmem:[#allocation2 + $0x4a0] sm:$0xff] %v7146
    %7435 = vst [vmem:[#allocation2 + $0x4a8] sm:$0xff] %v7147
    %7436 = vst [vmem:[#allocation2 + $0x4b0] sm:$0xff] %v7148
    %7437 = vst [vmem:[#allocation2 + $0x4b8] sm:$0xff] %v7149
    %7438 = vst [vmem:[#allocation2 + $0x4c0] sm:$0xff] %v7150
    %7439 = vst [vmem:[#allocation2 + $0x4c8] sm:$0xff] %v7151
    %7440 = vst [vmem:[#allocation2 + $0x4d0] sm:$0xff] %v7152
    %7441 = vst [vmem:[#allocation2 + $0x4d8] sm:$0xff] %v7153
    %7442 = vst [vmem:[#allocation2 + $0x4e0] sm:$0xff] %v7154
    %7443 = vst [vmem:[#allocation2 + $0x4e8] sm:$0xff] %v7155
    %7444 = vst [vmem:[#allocation2 + $0x4f0] sm:$0xff] %v7156
    %7445 = vst [vmem:[#allocation2 + $0x4f8] sm:$0xff] %v7157
    %7446 = vst [vmem:[#allocation2 + $0x500] sm:$0xff] %v7158
    %7447 = vst [vmem:[#allocation2 + $0x508] sm:$0xff] %v7159
    %7448 = vst [vmem:[#allocation2 + $0x510] sm:$0xff] %v7160
    %7449 = vst [vmem:[#allocation2 + $0x518] sm:$0xff] %v7161
    %7450 = vst [vmem:[#allocation2 + $0x520] sm:$0xff] %v7162
    %7451 = vst [vmem:[#allocation2 + $0x528] sm:$0xff] %v7163
    %7452 = vst [vmem:[#allocation2 + $0x530] sm:$0xff] %v7164
    %7453 = vst [vmem:[#allocation2 + $0x538] sm:$0xff] %v7165
    %7454 = vst [vmem:[#allocation2 + $0x540] sm:$0xff] %v7166
    %7455 = vst [vmem:[#allocation2 + $0x548] sm:$0xff] %v7167
    %7456 = vst [vmem:[#allocation2 + $0x550] sm:$0xff] %v7168
    %7457 = vst [vmem:[#allocation2 + $0x558] sm:$0xff] %v7169
    %7458 = vst [vmem:[#allocation2 + $0x560] sm:$0xff] %v7170
    %7459 = vst [vmem:[#allocation2 + $0x568] sm:$0xff] %v7171
    %7460 = vst [vmem:[#allocation2 + $0x570] sm:$0xff] %v7172
    %7461 = vst [vmem:[#allocation2 + $0x578] sm:$0xff] %v7173
    %7462 = vst [vmem:[#allocation2 + $0x580] sm:$0xff] %v7174
    %7463 = vst [vmem:[#allocation2 + $0x588] sm:$0xff] %v7175
    %7464 = vst [vmem:[#allocation2 + $0x590] sm:$0xff] %v7176
    %7465 = vst [vmem:[#allocation2 + $0x598] sm:$0xff] %v7177
    %7466 = vst [vmem:[#allocation2 + $0x5a0] sm:$0xff] %v7178
    %7467 = vst [vmem:[#allocation2 + $0x5a8] sm:$0xff] %v7179
    %7468 = vst [vmem:[#allocation2 + $0x5b0] sm:$0xff] %v7180
    %7469 = vst [vmem:[#allocation2 + $0x5b8] sm:$0xff] %v7181
    %7470 = vst [vmem:[#allocation2 + $0x5c0] sm:$0xff] %v7182
    %7471 = vst [vmem:[#allocation2 + $0x5c8] sm:$0xff] %v7183
    %7472 = vst [vmem:[#allocation2 + $0x5d0] sm:$0xff] %v7184
    %7473 = vst [vmem:[#allocation2 + $0x5d8] sm:$0xff] %v7185
    %7474 = vst [vmem:[#allocation2 + $0x5e0] sm:$0xff] %v7186
    %7475 = vst [vmem:[#allocation2 + $0x5e8] sm:$0xff] %v7187
    %7476 = vst [vmem:[#allocation2 + $0x5f0] sm:$0xff] %v7188
    %7477 = vst [vmem:[#allocation2 + $0x5f8] sm:$0xff] %v7189
    %7478 = vst [vmem:[#allocation2 + $0x600] sm:$0xff] %v7190
    %7479 = vst [vmem:[#allocation2 + $0x608] sm:$0xff] %v7191
    %7480 = vst [vmem:[#allocation2 + $0x610] sm:$0xff] %v7192
    %7481 = vst [vmem:[#allocation2 + $0x618] sm:$0xff] %v7193
    %7482 = vst [vmem:[#allocation2 + $0x620] sm:$0xff] %v7194
    %7483 = vst [vmem:[#allocation2 + $0x628] sm:$0xff] %v7195
    %7484 = vst [vmem:[#allocation2 + $0x630] sm:$0xff] %v7196
    %7485 = vst [vmem:[#allocation2 + $0x638] sm:$0xff] %v7197
    %7486 = vst [vmem:[#allocation2 + $0x640] sm:$0xff] %v7198
    %7487 = vst [vmem:[#allocation2 + $0x648] sm:$0xff] %v7199
    %7488 = vst [vmem:[#allocation2 + $0x650] sm:$0xff] %v7200
    %7489 = vst [vmem:[#allocation2 + $0x658] sm:$0xff] %v7201
    %7490 = vst [vmem:[#allocation2 + $0x660] sm:$0xff] %v7202
    %7491 = vst [vmem:[#allocation2 + $0x668] sm:$0xff] %v7203
    %7492 = vst [vmem:[#allocation2 + $0x670] sm:$0xff] %v7204
    %7493 = vst [vmem:[#allocation2 + $0x678] sm:$0xff] %v7205
    %7494 = vst [vmem:[#allocation2 + $0x680] sm:$0xff] %v7206
    %7495 = vst [vmem:[#allocation2 + $0x688] sm:$0xff] %v7207
    %7496 = vst [vmem:[#allocation2 + $0x690] sm:$0xff] %v7208
    %7497 = vst [vmem:[#allocation2 + $0x698] sm:$0xff] %v7209
    %7498 = vst [vmem:[#allocation2 + $0x6a0] sm:$0xff] %v7210
    %7499 = vst [vmem:[#allocation2 + $0x6a8] sm:$0xff] %v7211
    %7500 = vst [vmem:[#allocation2 + $0x6b0] sm:$0xff] %v7212
    %7501 = vst [vmem:[#allocation2 + $0x6b8] sm:$0xff] %v7213
    %7502 = vst [vmem:[#allocation2 + $0x6c0] sm:$0xff] %v7214
    %7503 = vst [vmem:[#allocation2 + $0x6c8] sm:$0xff] %v7215
    %7504 = vst [vmem:[#allocation2 + $0x6d0] sm:$0xff] %v7216
    %7505 = vst [vmem:[#allocation2 + $0x6d8] sm:$0xff] %v7217
    %7506 = vst [vmem:[#allocation2 + $0x6e0] sm:$0xff] %v7218
    %7507 = vst [vmem:[#allocation2 + $0x6e8] sm:$0xff] %v7219
    %7508 = vst [vmem:[#allocation2 + $0x6f0] sm:$0xff] %v7220
    %7509 = vst [vmem:[#allocation2 + $0x6f8] sm:$0xff] %v7221
    %7510 = vst [vmem:[#allocation2 + $0x700] sm:$0xff] %v7222
    %7511 = vst [vmem:[#allocation2 + $0x708] sm:$0xff] %v7223
    %7512 = vst [vmem:[#allocation2 + $0x710] sm:$0xff] %v7224
    %7513 = vst [vmem:[#allocation2 + $0x718] sm:$0xff] %v7225
    %7514 = vst [vmem:[#allocation2 + $0x720] sm:$0xff] %v7226
    %7515 = vst [vmem:[#allocation2 + $0x728] sm:$0xff] %v7227
    %7516 = vst [vmem:[#allocation2 + $0x730] sm:$0xff] %v7228
    %7517 = vst [vmem:[#allocation2 + $0x738] sm:$0xff] %v7229
    %7518 = vst [vmem:[#allocation2 + $0x740] sm:$0xff] %v7230
    %7519 = vst [vmem:[#allocation2 + $0x748] sm:$0xff] %v7231
    %7520 = vst [vmem:[#allocation2 + $0x750] sm:$0xff] %v7232
    %7521 = vst [vmem:[#allocation2 + $0x758] sm:$0xff] %v7233
    %7522 = vst [vmem:[#allocation2 + $0x760] sm:$0xff] %v7234
    %7523 = vst [vmem:[#allocation2 + $0x768] sm:$0xff] %v7235
    %7524 = vst [vmem:[#allocation2 + $0x770] sm:$0xff] %v7236
    %7525 = vst [vmem:[#allocation2 + $0x778] sm:$0xff] %v7237
    %7526 = vst [vmem:[#allocation2 + $0x780] sm:$0xff] %v7238
    %7527 = vst [vmem:[#allocation2 + $0x788] sm:$0xff] %v7239
    %7528 = vst [vmem:[#allocation2 + $0x790] sm:$0xff] %v7240
    %7529 = vst [vmem:[#allocation2 + $0x798] sm:$0xff] %v7241
    %7530 = vst [vmem:[#allocation2 + $0x7a0] sm:$0xff] %v7242
    %7531 = vst [vmem:[#allocation2 + $0x7a8] sm:$0xff] %v7243
    %7532 = vst [vmem:[#allocation2 + $0x7b0] sm:$0xff] %v7244
    %7533 = vst [vmem:[#allocation2 + $0x7b8] sm:$0xff] %v7245
    %7534 = vst [vmem:[#allocation2 + $0x7c0] sm:$0xff] %v7246
    %7535 = vst [vmem:[#allocation2 + $0x7c8] sm:$0xff] %v7247
    %7536 = vst [vmem:[#allocation2 + $0x7d0] sm:$0xff] %v7248
    %7537 = vst [vmem:[#allocation2 + $0x7d8] sm:$0xff] %v7249
    %7538 = vst [vmem:[#allocation2 + $0x7e0] sm:$0xff] %v7250
    %7539 = vst [vmem:[#allocation2 + $0x7e8] sm:$0xff] %v7251
    %7540 = vst [vmem:[#allocation2 + $0x7f0] sm:$0xff] %v7252
    %7541 = vst [vmem:[#allocation2 + $0x7f8] sm:$0xff] %v7253
    %7542 = vst [vmem:[#allocation2 + $0x800] sm:$0xff] %v7254
    %7543 = vst [vmem:[#allocation2 + $0x808] sm:$0xff] %v7255
    %7544 = vst [vmem:[#allocation2 + $0x810] sm:$0xff] %v7256
    %7545 = vst [vmem:[#allocation2 + $0x818] sm:$0xff] %v7257
    %7546 = vst [vmem:[#allocation2 + $0x820] sm:$0xff] %v7258
    %7547 = vst [vmem:[#allocation2 + $0x828] sm:$0xff] %v7259
    %7548 = vst [vmem:[#allocation2 + $0x830] sm:$0xff] %v7260
    %7549 = vst [vmem:[#allocation2 + $0x838] sm:$0xff] %v7261
    %7550 = vst [vmem:[#allocation2 + $0x840] sm:$0xff] %v7262
    %7551 = vst [vmem:[#allocation2 + $0x848] sm:$0xff] %v7263
    %7552 = vst [vmem:[#allocation2 + $0x850] sm:$0xff] %v7264
    %7553 = vst [vmem:[#allocation2 + $0x858] sm:$0xff] %v7265
    %7554 = vst [vmem:[#allocation2 + $0x860] sm:$0xff] %v7266
    %7555 = vst [vmem:[#allocation2 + $0x868] sm:$0xff] %v7267
    %7556 = vst [vmem:[#allocation2 + $0x870] sm:$0xff] %v7268
    %7557 = vst [vmem:[#allocation2 + $0x878] sm:$0xff] %v7269
    %7558 = vst [vmem:[#allocation2 + $0x880] sm:$0xff] %v7270
    %7559 = vst [vmem:[#allocation2 + $0x888] sm:$0xff] %v7271
    %7560 = vst [vmem:[#allocation2 + $0x890] sm:$0xff] %v7272
    %7561 = vst [vmem:[#allocation2 + $0x898] sm:$0xff] %v7273
    %7562 = vst [vmem:[#allocation2 + $0x8a0] sm:$0xff] %v7274
    %7563 = vst [vmem:[#allocation2 + $0x8a8] sm:$0xff] %v7275
    %7564 = vst [vmem:[#allocation2 + $0x8b0] sm:$0xff] %v7276
    %7565 = vst [vmem:[#allocation2 + $0x8b8] sm:$0xff] %v7277
    %7566 = vst [vmem:[#allocation2 + $0x8c0] sm:$0xff] %v7278
    %7567 = vst [vmem:[#allocation2 + $0x8c8] sm:$0xff] %v7279
    %7568 = vst [vmem:[#allocation2 + $0x8d0] sm:$0xff] %v7280
    %7569 = vst [vmem:[#allocation2 + $0x8d8] sm:$0xff] %v7281
    %7570 = vst [vmem:[#allocation2 + $0x8e0] sm:$0xff] %v7282
    %7571 = vst [vmem:[#allocation2 + $0x8e8] sm:$0xff] %v7283
    %7572 = vst [vmem:[#allocation2 + $0x8f0] sm:$0xff] %v7284
    %7573 = vst [vmem:[#allocation2 + $0x8f8] sm:$0xff] %v7285
    %v7574 = vld [vmem:[%s2] sm:$0xff]
    %v7575 = vld [vmem:[%s2 + $0x8] sm:$0xff]
    %v7576 = vld [vmem:[%s2 + $0x10] sm:$0xff]
    %v7577 = vld [vmem:[%s2 + $0x18] sm:$0xff]
    %v7578 = vld [vmem:[%s2 + $0x20] sm:$0xff]
    %v7579 = vld [vmem:[%s2 + $0x28] sm:$0xff]
    %v7580 = vld [vmem:[%s2 + $0x30] sm:$0xff]
    %v7581 = vld [vmem:[%s2 + $0x38] sm:$0xff]
    %v7582 = vld [vmem:[%s2 + $0x40] sm:$0xff]
    %v7583 = vld [vmem:[%s2 + $0x48] sm:$0xff]
    %v7584 = vld [vmem:[%s2 + $0x50] sm:$0xff]
    %v7585 = vld [vmem:[%s2 + $0x58] sm:$0xff]
    %v7586 = vld [vmem:[%s2 + $0x60] sm:$0xff]
    %v7587 = vld [vmem:[%s2 + $0x68] sm:$0xff]
    %v7588 = vld [vmem:[%s2 + $0x70] sm:$0xff]
    %v7589 = vld [vmem:[%s2 + $0x78] sm:$0xff]
    %v7590 = vld [vmem:[%s2 + $0x80] sm:$0xff]
    %v7591 = vld [vmem:[%s2 + $0x88] sm:$0xff]
    %v7592 = vld [vmem:[#allocation2] sm:$0xff]
    %v7593 = vld [vmem:[#allocation2 + $0x8] sm:$0xff]
    %v7594 = vld [vmem:[#allocation2 + $0x10] sm:$0xff]
    %v7595 = vld [vmem:[#allocation2 + $0x18] sm:$0xff]
    %v7596 = vld [vmem:[#allocation2 + $0x20] sm:$0xff]
    %v7597 = vld [vmem:[#allocation2 + $0x28] sm:$0xff]
    %v7598 = vld [vmem:[#allocation2 + $0x30] sm:$0xff]
    %v7599 = vld [vmem:[#allocation2 + $0x38] sm:$0xff]
    %v7600 = vld [vmem:[#allocation2 + $0x40] sm:$0xff]
    %v7601 = vld [vmem:[#allocation2 + $0x48] sm:$0xff]
    %v7602 = vld [vmem:[#allocation2 + $0x50] sm:$0xff]
    %v7603 = vld [vmem:[#allocation2 + $0x58] sm:$0xff]
    %v7604 = vld [vmem:[#allocation2 + $0x60] sm:$0xff]
    %v7605 = vld [vmem:[#allocation2 + $0x68] sm:$0xff]
    %v7606 = vld [vmem:[#allocation2 + $0x70] sm:$0xff]
    %v7607 = vld [vmem:[#allocation2 + $0x78] sm:$0xff]
    %v7608 = vld [vmem:[#allocation2 + $0x80] sm:$0xff]
    %v7609 = vld [vmem:[#allocation2 + $0x88] sm:$0xff]
    %v7610 = vld [vmem:[#allocation2 + $0x90] sm:$0xff]
    %v7611 = vld [vmem:[#allocation2 + $0x98] sm:$0xff]
    %v7612 = vld [vmem:[#allocation2 + $0xa0] sm:$0xff]
    %v7613 = vld [vmem:[#allocation2 + $0xa8] sm:$0xff]
    %v7614 = vld [vmem:[#allocation2 + $0xb0] sm:$0xff]
    %v7615 = vld [vmem:[#allocation2 + $0xb8] sm:$0xff]
    %v7616 = vld [vmem:[#allocation2 + $0xc0] sm:$0xff]
    %v7617 = vld [vmem:[#allocation2 + $0xc8] sm:$0xff]
    %v7618 = vld [vmem:[#allocation2 + $0xd0] sm:$0xff]
    %v7619 = vld [vmem:[#allocation2 + $0xd8] sm:$0xff]
    %v7620 = vld [vmem:[#allocation2 + $0xe0] sm:$0xff]
    %v7621 = vld [vmem:[#allocation2 + $0xe8] sm:$0xff]
    %v7622 = vld [vmem:[#allocation2 + $0xf0] sm:$0xff]
    %v7623 = vld [vmem:[#allocation2 + $0xf8] sm:$0xff]
    %v7624 = vld [vmem:[#allocation2 + $0x100] sm:$0xff]
    %v7625 = vld [vmem:[#allocation2 + $0x108] sm:$0xff]
    %v7626 = vld [vmem:[#allocation2 + $0x110] sm:$0xff]
    %v7627 = vld [vmem:[#allocation2 + $0x118] sm:$0xff]
    %v7628 = vld [vmem:[#allocation2 + $0x120] sm:$0xff]
    %v7629 = vld [vmem:[#allocation2 + $0x128] sm:$0xff]
    %v7630 = vld [vmem:[#allocation2 + $0x130] sm:$0xff]
    %v7631 = vld [vmem:[#allocation2 + $0x138] sm:$0xff]
    %v7632 = vld [vmem:[#allocation2 + $0x140] sm:$0xff]
    %v7633 = vld [vmem:[#allocation2 + $0x148] sm:$0xff]
    %v7634 = vld [vmem:[#allocation2 + $0x150] sm:$0xff]
    %v7635 = vld [vmem:[#allocation2 + $0x158] sm:$0xff]
    %v7636 = vld [vmem:[#allocation2 + $0x160] sm:$0xff]
    %v7637 = vld [vmem:[#allocation2 + $0x168] sm:$0xff]
    %v7638 = vld [vmem:[#allocation2 + $0x170] sm:$0xff]
    %v7639 = vld [vmem:[#allocation2 + $0x178] sm:$0xff]
    %v7640 = vld [vmem:[#allocation2 + $0x180] sm:$0xff]
    %v7641 = vld [vmem:[#allocation2 + $0x188] sm:$0xff]
    %v7642 = vld [vmem:[#allocation2 + $0x190] sm:$0xff]
    %v7643 = vld [vmem:[#allocation2 + $0x198] sm:$0xff]
    %v7644 = vld [vmem:[#allocation2 + $0x1a0] sm:$0xff]
    %v7645 = vld [vmem:[#allocation2 + $0x1a8] sm:$0xff]
    %v7646 = vld [vmem:[#allocation2 + $0x1b0] sm:$0xff]
    %v7647 = vld [vmem:[#allocation2 + $0x1b8] sm:$0xff]
    %v7648 = vld [vmem:[#allocation2 + $0x1c0] sm:$0xff]
    %v7649 = vld [vmem:[#allocation2 + $0x1c8] sm:$0xff]
    %v7650 = vld [vmem:[#allocation2 + $0x1d0] sm:$0xff]
    %v7651 = vld [vmem:[#allocation2 + $0x1d8] sm:$0xff]
    %v7652 = vld [vmem:[#allocation2 + $0x1e0] sm:$0xff]
    %v7653 = vld [vmem:[#allocation2 + $0x1e8] sm:$0xff]
    %v7654 = vld [vmem:[#allocation2 + $0x1f0] sm:$0xff]
    %v7655 = vld [vmem:[#allocation2 + $0x1f8] sm:$0xff]
    %v7656 = vld [vmem:[#allocation2 + $0x200] sm:$0xff]
    %v7657 = vld [vmem:[#allocation2 + $0x208] sm:$0xff]
    %v7658 = vld [vmem:[#allocation2 + $0x210] sm:$0xff]
    %v7659 = vld [vmem:[#allocation2 + $0x218] sm:$0xff]
    %v7660 = vld [vmem:[#allocation2 + $0x220] sm:$0xff]
    %v7661 = vld [vmem:[#allocation2 + $0x228] sm:$0xff]
    %v7662 = vld [vmem:[#allocation2 + $0x230] sm:$0xff]
    %v7663 = vld [vmem:[#allocation2 + $0x238] sm:$0xff]
    %v7664 = vld [vmem:[#allocation2 + $0x240] sm:$0xff]
    %v7665 = vld [vmem:[#allocation2 + $0x248] sm:$0xff]
    %v7666 = vld [vmem:[#allocation2 + $0x250] sm:$0xff]
    %v7667 = vld [vmem:[#allocation2 + $0x258] sm:$0xff]
    %v7668 = vld [vmem:[#allocation2 + $0x260] sm:$0xff]
    %v7669 = vld [vmem:[#allocation2 + $0x268] sm:$0xff]
    %v7670 = vld [vmem:[#allocation2 + $0x270] sm:$0xff]
    %v7671 = vld [vmem:[#allocation2 + $0x278] sm:$0xff]
    %v7672 = vld [vmem:[#allocation2 + $0x280] sm:$0xff]
    %v7673 = vld [vmem:[#allocation2 + $0x288] sm:$0xff]
    %v7674 = vld [vmem:[#allocation2 + $0x290] sm:$0xff]
    %v7675 = vld [vmem:[#allocation2 + $0x298] sm:$0xff]
    %v7676 = vld [vmem:[#allocation2 + $0x2a0] sm:$0xff]
    %v7677 = vld [vmem:[#allocation2 + $0x2a8] sm:$0xff]
    %v7678 = vld [vmem:[#allocation2 + $0x2b0] sm:$0xff]
    %v7679 = vld [vmem:[#allocation2 + $0x2b8] sm:$0xff]
    %v7680 = vld [vmem:[#allocation2 + $0x2c0] sm:$0xff]
    %v7681 = vld [vmem:[#allocation2 + $0x2c8] sm:$0xff]
    %v7682 = vld [vmem:[#allocation2 + $0x2d0] sm:$0xff]
    %v7683 = vld [vmem:[#allocation2 + $0x2d8] sm:$0xff]
    %v7684 = vld [vmem:[#allocation2 + $0x2e0] sm:$0xff]
    %v7685 = vld [vmem:[#allocation2 + $0x2e8] sm:$0xff]
    %v7686 = vld [vmem:[#allocation2 + $0x2f0] sm:$0xff]
    %v7687 = vld [vmem:[#allocation2 + $0x2f8] sm:$0xff]
    %v7688 = vld [vmem:[#allocation2 + $0x300] sm:$0xff]
    %v7689 = vld [vmem:[#allocation2 + $0x308] sm:$0xff]
    %v7690 = vld [vmem:[#allocation2 + $0x310] sm:$0xff]
    %v7691 = vld [vmem:[#allocation2 + $0x318] sm:$0xff]
    %v7692 = vld [vmem:[#allocation2 + $0x320] sm:$0xff]
    %v7693 = vld [vmem:[#allocation2 + $0x328] sm:$0xff]
    %v7694 = vld [vmem:[#allocation2 + $0x330] sm:$0xff]
    %v7695 = vld [vmem:[#allocation2 + $0x338] sm:$0xff]
    %v7696 = vld [vmem:[#allocation2 + $0x340] sm:$0xff]
    %v7697 = vld [vmem:[#allocation2 + $0x348] sm:$0xff]
    %v7698 = vld [vmem:[#allocation2 + $0x350] sm:$0xff]
    %v7699 = vld [vmem:[#allocation2 + $0x358] sm:$0xff]
    %v7700 = vld [vmem:[#allocation2 + $0x360] sm:$0xff]
    %v7701 = vld [vmem:[#allocation2 + $0x368] sm:$0xff]
    %v7702 = vld [vmem:[#allocation2 + $0x370] sm:$0xff]
    %v7703 = vld [vmem:[#allocation2 + $0x378] sm:$0xff]
    %v7704 = vld [vmem:[#allocation2 + $0x380] sm:$0xff]
    %v7705 = vld [vmem:[#allocation2 + $0x388] sm:$0xff]
    %v7706 = vld [vmem:[#allocation2 + $0x390] sm:$0xff]
    %v7707 = vld [vmem:[#allocation2 + $0x398] sm:$0xff]
    %v7708 = vld [vmem:[#allocation2 + $0x3a0] sm:$0xff]
    %v7709 = vld [vmem:[#allocation2 + $0x3a8] sm:$0xff]
    %v7710 = vld [vmem:[#allocation2 + $0x3b0] sm:$0xff]
    %v7711 = vld [vmem:[#allocation2 + $0x3b8] sm:$0xff]
    %v7712 = vld [vmem:[#allocation2 + $0x3c0] sm:$0xff]
    %v7713 = vld [vmem:[#allocation2 + $0x3c8] sm:$0xff]
    %v7714 = vld [vmem:[#allocation2 + $0x3d0] sm:$0xff]
    %v7715 = vld [vmem:[#allocation2 + $0x3d8] sm:$0xff]
    %v7716 = vld [vmem:[#allocation2 + $0x3e0] sm:$0xff]
    %v7717 = vld [vmem:[#allocation2 + $0x3e8] sm:$0xff]
    %v7718 = vld [vmem:[#allocation2 + $0x3f0] sm:$0xff]
    %v7719 = vld [vmem:[#allocation2 + $0x3f8] sm:$0xff]
    %v7720 = vld [vmem:[#allocation2 + $0x400] sm:$0xff]
    %v7721 = vld [vmem:[#allocation2 + $0x408] sm:$0xff]
    %v7722 = vld [vmem:[#allocation2 + $0x410] sm:$0xff]
    %v7723 = vld [vmem:[#allocation2 + $0x418] sm:$0xff]
    %v7724 = vld [vmem:[#allocation2 + $0x420] sm:$0xff]
    %v7725 = vld [vmem:[#allocation2 + $0x428] sm:$0xff]
    %v7726 = vld [vmem:[#allocation2 + $0x430] sm:$0xff]
    %v7727 = vld [vmem:[#allocation2 + $0x438] sm:$0xff]
    %v7728 = vld [vmem:[#allocation2 + $0x440] sm:$0xff]
    %v7729 = vld [vmem:[#allocation2 + $0x448] sm:$0xff]
    %v7730 = vld [vmem:[#allocation2 + $0x450] sm:$0xff]
    %v7731 = vld [vmem:[#allocation2 + $0x458] sm:$0xff]
    %v7732 = vld [vmem:[#allocation2 + $0x460] sm:$0xff]
    %v7733 = vld [vmem:[#allocation2 + $0x468] sm:$0xff]
    %v7734 = vld [vmem:[#allocation2 + $0x470] sm:$0xff]
    %v7735 = vld [vmem:[#allocation2 + $0x478] sm:$0xff]
    %v7736 = vld [vmem:[#allocation2 + $0x480] sm:$0xff]
    %v7737 = vld [vmem:[#allocation2 + $0x488] sm:$0xff]
    %v7738 = vld [vmem:[#allocation2 + $0x490] sm:$0xff]
    %v7739 = vld [vmem:[#allocation2 + $0x498] sm:$0xff]
    %v7740 = vld [vmem:[#allocation2 + $0x4a0] sm:$0xff]
    %v7741 = vld [vmem:[#allocation2 + $0x4a8] sm:$0xff]
    %v7742 = vld [vmem:[#allocation2 + $0x4b0] sm:$0xff]
    %v7743 = vld [vmem:[#allocation2 + $0x4b8] sm:$0xff]
    %v7744 = vld [vmem:[#allocation2 + $0x4c0] sm:$0xff]
    %v7745 = vld [vmem:[#allocation2 + $0x4c8] sm:$0xff]
    %v7746 = vld [vmem:[#allocation2 + $0x4d0] sm:$0xff]
    %v7747 = vld [vmem:[#allocation2 + $0x4d8] sm:$0xff]
    %v7748 = vld [vmem:[#allocation2 + $0x4e0] sm:$0xff]
    %v7749 = vld [vmem:[#allocation2 + $0x4e8] sm:$0xff]
    %v7750 = vld [vmem:[#allocation2 + $0x4f0] sm:$0xff]
    %v7751 = vld [vmem:[#allocation2 + $0x4f8] sm:$0xff]
    %v7752 = vld [vmem:[#allocation2 + $0x500] sm:$0xff]
    %v7753 = vld [vmem:[#allocation2 + $0x508] sm:$0xff]
    %v7754 = vld [vmem:[#allocation2 + $0x510] sm:$0xff]
    %v7755 = vld [vmem:[#allocation2 + $0x518] sm:$0xff]
    %v7756 = vld [vmem:[#allocation2 + $0x520] sm:$0xff]
    %v7757 = vld [vmem:[#allocation2 + $0x528] sm:$0xff]
    %v7758 = vld [vmem:[#allocation2 + $0x530] sm:$0xff]
    %v7759 = vld [vmem:[#allocation2 + $0x538] sm:$0xff]
    %v7760 = vld [vmem:[#allocation2 + $0x540] sm:$0xff]
    %v7761 = vld [vmem:[#allocation2 + $0x548] sm:$0xff]
    %v7762 = vld [vmem:[#allocation2 + $0x550] sm:$0xff]
    %v7763 = vld [vmem:[#allocation2 + $0x558] sm:$0xff]
    %v7764 = vld [vmem:[#allocation2 + $0x560] sm:$0xff]
    %v7765 = vld [vmem:[#allocation2 + $0x568] sm:$0xff]
    %v7766 = vld [vmem:[#allocation2 + $0x570] sm:$0xff]
    %v7767 = vld [vmem:[#allocation2 + $0x578] sm:$0xff]
    %v7768 = vld [vmem:[#allocation2 + $0x580] sm:$0xff]
    %v7769 = vld [vmem:[#allocation2 + $0x588] sm:$0xff]
    %v7770 = vld [vmem:[#allocation2 + $0x590] sm:$0xff]
    %v7771 = vld [vmem:[#allocation2 + $0x598] sm:$0xff]
    %v7772 = vld [vmem:[#allocation2 + $0x5a0] sm:$0xff]
    %v7773 = vld [vmem:[#allocation2 + $0x5a8] sm:$0xff]
    %v7774 = vld [vmem:[#allocation2 + $0x5b0] sm:$0xff]
    %v7775 = vld [vmem:[#allocation2 + $0x5b8] sm:$0xff]
    %v7776 = vld [vmem:[#allocation2 + $0x5c0] sm:$0xff]
    %v7777 = vld [vmem:[#allocation2 + $0x5c8] sm:$0xff]
    %v7778 = vld [vmem:[#allocation2 + $0x5d0] sm:$0xff]
    %v7779 = vld [vmem:[#allocation2 + $0x5d8] sm:$0xff]
    %v7780 = vld [vmem:[#allocation2 + $0x5e0] sm:$0xff]
    %v7781 = vld [vmem:[#allocation2 + $0x5e8] sm:$0xff]
    %v7782 = vld [vmem:[#allocation2 + $0x5f0] sm:$0xff]
    %v7783 = vld [vmem:[#allocation2 + $0x5f8] sm:$0xff]
    %v7784 = vld [vmem:[#allocation2 + $0x600] sm:$0xff]
    %v7785 = vld [vmem:[#allocation2 + $0x608] sm:$0xff]
    %v7786 = vld [vmem:[#allocation2 + $0x610] sm:$0xff]
    %v7787 = vld [vmem:[#allocation2 + $0x618] sm:$0xff]
    %v7788 = vld [vmem:[#allocation2 + $0x620] sm:$0xff]
    %v7789 = vld [vmem:[#allocation2 + $0x628] sm:$0xff]
    %v7790 = vld [vmem:[#allocation2 + $0x630] sm:$0xff]
    %v7791 = vld [vmem:[#allocation2 + $0x638] sm:$0xff]
    %v7792 = vld [vmem:[#allocation2 + $0x640] sm:$0xff]
    %v7793 = vld [vmem:[#allocation2 + $0x648] sm:$0xff]
    %v7794 = vld [vmem:[#allocation2 + $0x650] sm:$0xff]
    %v7795 = vld [vmem:[#allocation2 + $0x658] sm:$0xff]
    %v7796 = vld [vmem:[#allocation2 + $0x660] sm:$0xff]
    %v7797 = vld [vmem:[#allocation2 + $0x668] sm:$0xff]
    %v7798 = vld [vmem:[#allocation2 + $0x670] sm:$0xff]
    %v7799 = vld [vmem:[#allocation2 + $0x678] sm:$0xff]
    %v7800 = vld [vmem:[#allocation2 + $0x680] sm:$0xff]
    %v7801 = vld [vmem:[#allocation2 + $0x688] sm:$0xff]
    %v7802 = vld [vmem:[#allocation2 + $0x690] sm:$0xff]
    %v7803 = vld [vmem:[#allocation2 + $0x698] sm:$0xff]
    %v7804 = vld [vmem:[#allocation2 + $0x6a0] sm:$0xff]
    %v7805 = vld [vmem:[#allocation2 + $0x6a8] sm:$0xff]
    %v7806 = vld [vmem:[#allocation2 + $0x6b0] sm:$0xff]
    %v7807 = vld [vmem:[#allocation2 + $0x6b8] sm:$0xff]
    %v7808 = vld [vmem:[#allocation2 + $0x6c0] sm:$0xff]
    %v7809 = vld [vmem:[#allocation2 + $0x6c8] sm:$0xff]
    %v7810 = vld [vmem:[#allocation2 + $0x6d0] sm:$0xff]
    %v7811 = vld [vmem:[#allocation2 + $0x6d8] sm:$0xff]
    %v7812 = vld [vmem:[#allocation2 + $0x6e0] sm:$0xff]
    %v7813 = vld [vmem:[#allocation2 + $0x6e8] sm:$0xff]
    %v7814 = vld [vmem:[#allocation2 + $0x6f0] sm:$0xff]
    %v7815 = vld [vmem:[#allocation2 + $0x6f8] sm:$0xff]
    %v7816 = vld [vmem:[#allocation2 + $0x700] sm:$0xff]
    %v7817 = vld [vmem:[#allocation2 + $0x708] sm:$0xff]
    %v7818 = vld [vmem:[#allocation2 + $0x710] sm:$0xff]
    %v7819 = vld [vmem:[#allocation2 + $0x718] sm:$0xff]
    %v7820 = vld [vmem:[#allocation2 + $0x720] sm:$0xff]
    %v7821 = vld [vmem:[#allocation2 + $0x728] sm:$0xff]
    %v7822 = vld [vmem:[#allocation2 + $0x730] sm:$0xff]
    %v7823 = vld [vmem:[#allocation2 + $0x738] sm:$0xff]
    %v7824 = vld [vmem:[#allocation2 + $0x740] sm:$0xff]
    %v7825 = vld [vmem:[#allocation2 + $0x748] sm:$0xff]
    %v7826 = vld [vmem:[#allocation2 + $0x750] sm:$0xff]
    %v7827 = vld [vmem:[#allocation2 + $0x758] sm:$0xff]
    %v7828 = vld [vmem:[#allocation2 + $0x760] sm:$0xff]
    %v7829 = vld [vmem:[#allocation2 + $0x768] sm:$0xff]
    %v7830 = vld [vmem:[#allocation2 + $0x770] sm:$0xff]
    %v7831 = vld [vmem:[#allocation2 + $0x778] sm:$0xff]
    %v7832 = vld [vmem:[#allocation2 + $0x780] sm:$0xff]
    %v7833 = vld [vmem:[#allocation2 + $0x788] sm:$0xff]
    %v7834 = vld [vmem:[#allocation2 + $0x790] sm:$0xff]
    %v7835 = vld [vmem:[#allocation2 + $0x798] sm:$0xff]
    %v7836 = vld [vmem:[#allocation2 + $0x7a0] sm:$0xff]
    %v7837 = vld [vmem:[#allocation2 + $0x7a8] sm:$0xff]
    %v7838 = vld [vmem:[#allocation2 + $0x7b0] sm:$0xff]
    %v7839 = vld [vmem:[#allocation2 + $0x7b8] sm:$0xff]
    %v7840 = vld [vmem:[#allocation2 + $0x7c0] sm:$0xff]
    %v7841 = vld [vmem:[#allocation2 + $0x7c8] sm:$0xff]
    %v7842 = vld [vmem:[#allocation2 + $0x7d0] sm:$0xff]
    %v7843 = vld [vmem:[#allocation2 + $0x7d8] sm:$0xff]
    %v7844 = vld [vmem:[#allocation2 + $0x7e0] sm:$0xff]
    %v7845 = vld [vmem:[#allocation2 + $0x7e8] sm:$0xff]
    %v7846 = vld [vmem:[#allocation2 + $0x7f0] sm:$0xff]
    %v7847 = vld [vmem:[#allocation2 + $0x7f8] sm:$0xff]
    %v7848 = vld [vmem:[#allocation2 + $0x800] sm:$0xff]
    %v7849 = vld [vmem:[#allocation2 + $0x808] sm:$0xff]
    %v7850 = vld [vmem:[#allocation2 + $0x810] sm:$0xff]
    %v7851 = vld [vmem:[#allocation2 + $0x818] sm:$0xff]
    %v7852 = vld [vmem:[#allocation2 + $0x820] sm:$0xff]
    %v7853 = vld [vmem:[#allocation2 + $0x828] sm:$0xff]
    %v7854 = vld [vmem:[#allocation2 + $0x830] sm:$0xff]
    %v7855 = vld [vmem:[#allocation2 + $0x838] sm:$0xff]
    %v7856 = vld [vmem:[#allocation2 + $0x840] sm:$0xff]
    %v7857 = vld [vmem:[#allocation2 + $0x848] sm:$0xff]
    %v7858 = vld [vmem:[#allocation2 + $0x850] sm:$0xff]
    %v7859 = vld [vmem:[#allocation2 + $0x858] sm:$0xff]
    %v7860 = vld [vmem:[#allocation2 + $0x860] sm:$0xff]
    %v7861 = vld [vmem:[#allocation2 + $0x868] sm:$0xff]
    %v7862 = vld [vmem:[#allocation2 + $0x870] sm:$0xff]
    %v7863 = vld [vmem:[#allocation2 + $0x878] sm:$0xff]
    %v7864 = vld [vmem:[#allocation2 + $0x880] sm:$0xff]
    %v7865 = vld [vmem:[#allocation2 + $0x888] sm:$0xff]
    %v7866 = vld [vmem:[#allocation2 + $0x890] sm:$0xff]
    %v7867 = vld [vmem:[#allocation2 + $0x898] sm:$0xff]
    %v7868 = vld [vmem:[#allocation2 + $0x8a0] sm:$0xff]
    %v7869 = vld [vmem:[#allocation2 + $0x8a8] sm:$0xff]
    %v7870 = vld [vmem:[#allocation2 + $0x8b0] sm:$0xff]
    %v7871 = vld [vmem:[#allocation2 + $0x8b8] sm:$0xff]
    %v7872 = vld [vmem:[#allocation2 + $0x8c0] sm:$0xff]
    %v7873 = vld [vmem:[#allocation2 + $0x8c8] sm:$0xff]
    %v7874 = vld [vmem:[#allocation2 + $0x8d0] sm:$0xff]
    %v7875 = vld [vmem:[#allocation2 + $0x8d8] sm:$0xff]
    %v7876 = vld [vmem:[#allocation2 + $0x8e0] sm:$0xff]
    %v7877 = vld [vmem:[#allocation2 + $0x8e8] sm:$0xff]
    %v7878 = vld [vmem:[#allocation2 + $0x8f0] sm:$0xff]
    %v7879 = vld [vmem:[#allocation2 + $0x8f8] sm:$0xff]
    %v7880 = vld [vmem:[%s3] sm:$0xff]
    %7882 = vset.pattern.permute.xlu0 0
    %7883 = vperm.xlu0 %7882, %v7880
    %v7884 = vpop.permute.xlu0 %7883
    %v7904 = vunpack.c.l.b16 %v7574
    %v7905 = vunpack.c.h.b16 %v7574
    %v7906 = vunpack.c.l.b16 %v7575
    %v7907 = vunpack.c.h.b16 %v7575
    %v7908 = vunpack.c.l.b16 %v7576
    %v7909 = vunpack.c.h.b16 %v7576
    %v7910 = vunpack.c.l.b16 %v7577
    %v7911 = vunpack.c.h.b16 %v7577
    %v7912 = vunpack.c.l.b16 %v7578
    %v7913 = vunpack.c.h.b16 %v7578
    %v7914 = vunpack.c.l.b16 %v7579
    %v7915 = vunpack.c.h.b16 %v7579
    %v7916 = vunpack.c.l.b16 %v7580
    %v7917 = vunpack.c.h.b16 %v7580
    %v7918 = vunpack.c.l.b16 %v7581
    %v7919 = vunpack.c.h.b16 %v7581
    %v7920 = vunpack.c.l.b16 %v7582
    %v7921 = vunpack.c.h.b16 %v7582
    %v7922 = vunpack.c.l.b16 %v7583
    %v7923 = vunpack.c.h.b16 %v7583
    %v7924 = vunpack.c.l.b16 %v7584
    %v7925 = vunpack.c.h.b16 %v7584
    %v7926 = vunpack.c.l.b16 %v7585
    %v7927 = vunpack.c.h.b16 %v7585
    %v7928 = vunpack.c.l.b16 %v7586
    %v7929 = vunpack.c.h.b16 %v7586
    %v7930 = vunpack.c.l.b16 %v7587
    %v7931 = vunpack.c.h.b16 %v7587
    %v7932 = vunpack.c.l.b16 %v7588
    %v7933 = vunpack.c.h.b16 %v7588
    %v7934 = vunpack.c.l.b16 %v7589
    %v7935 = vunpack.c.h.b16 %v7589
    %v7936 = vunpack.c.l.b16 %v7590
    %v7937 = vunpack.c.h.b16 %v7590
    %v7938 = vunpack.c.l.b16 %v7591
    %v7939 = vunpack.c.h.b16 %v7591
    %v7940 = vpack.c.b16 %v7904, %v7904
    %v7941 = vpack.c.b16 %v7905, %v7905
    %v7942 = vpack.c.b16 %v7906, %v7906
    %v7943 = vpack.c.b16 %v7907, %v7907
    %v7944 = vpack.c.b16 %v7908, %v7908
    %v7945 = vpack.c.b16 %v7909, %v7909
    %v7946 = vpack.c.b16 %v7910, %v7910
    %v7947 = vpack.c.b16 %v7911, %v7911
    %v7948 = vpack.c.b16 %v7912, %v7912
    %v7949 = vpack.c.b16 %v7913, %v7913
    %v7950 = vpack.c.b16 %v7914, %v7914
    %v7951 = vpack.c.b16 %v7915, %v7915
    %v7952 = vpack.c.b16 %v7916, %v7916
    %v7953 = vpack.c.b16 %v7917, %v7917
    %v7954 = vpack.c.b16 %v7918, %v7918
    %v7955 = vpack.c.b16 %v7919, %v7919
    %v7956 = vpack.c.b16 %v7920, %v7920
    %v7957 = vpack.c.b16 %v7921, %v7921
    %v7958 = vpack.c.b16 %v7922, %v7922
    %v7959 = vpack.c.b16 %v7923, %v7923
    %v7960 = vpack.c.b16 %v7924, %v7924
    %v7961 = vpack.c.b16 %v7925, %v7925
    %v7962 = vpack.c.b16 %v7926, %v7926
    %v7963 = vpack.c.b16 %v7927, %v7927
    %v7964 = vpack.c.b16 %v7928, %v7928
    %v7965 = vpack.c.b16 %v7929, %v7929
    %v7966 = vpack.c.b16 %v7930, %v7930
    %v7967 = vpack.c.b16 %v7931, %v7931
    %v7968 = vpack.c.b16 %v7932, %v7932
    %v7969 = vpack.c.b16 %v7933, %v7933
    %v7970 = vpack.c.b16 %v7934, %v7934
    %v7971 = vpack.c.b16 %v7935, %v7935
    %v7972 = vpack.c.b16 %v7936, %v7936
    %v7973 = vpack.c.b16 %v7937, %v7937
    %v7974 = vpack.c.b16 %v7938, %v7938
    %v7975 = vpack.c.b16 %v7939, %v7939
    %8012 = vmatprep.subr.bf16.mxu0 0
    %8013 = vmatpush1.bf16.msra.mxu0 %v7592
    %8014 = vmatprep.subr.bf16.mxu0 0
    %8015 = vmatpush1.bf16.msra.mxu0 %v7593
    %8016 = vmatprep.subr.bf16.mxu0 0
    %8017 = vmatpush1.bf16.msra.mxu0 %v7594
    %8018 = vmatprep.subr.bf16.mxu0 0
    %8019 = vmatpush1.bf16.msra.mxu0 %v7595
    %8020 = vmatprep.subr.bf16.mxu0 0
    %8021 = vmatpush1.bf16.msra.mxu0 %v7596
    %8022 = vmatprep.subr.bf16.mxu0 0
    %8023 = vmatpush1.bf16.msra.mxu0 %v7597
    %8024 = vmatprep.subr.bf16.mxu0 0
    %8025 = vmatpush1.bf16.msra.mxu0 %v7598
    %8026 = vmatprep.subr.bf16.mxu0 0
    %8027 = vmatpush1.bf16.msra.mxu0 %v7599
    %8028 = vmatprep.subr.bf16.mxu0 0
    %8029 = vmatpush1.bf16.msra.mxu0 %v7600
    %8030 = vmatprep.subr.bf16.mxu0 0
    %8031 = vmatpush1.bf16.msra.mxu0 %v7601
    %8032 = vmatprep.subr.bf16.mxu0 0
    %8033 = vmatpush1.bf16.msra.mxu0 %v7602
    %8034 = vmatprep.subr.bf16.mxu0 0
    %8035 = vmatpush1.bf16.msra.mxu0 %v7603
    %8036 = vmatprep.subr.bf16.mxu0 0
    %8037 = vmatpush1.bf16.msra.mxu0 %v7604
    %8038 = vmatprep.subr.bf16.mxu0 0
    %8039 = vmatpush1.bf16.msra.mxu0 %v7605
    %8040 = vmatprep.subr.bf16.mxu0 0
    %8041 = vmatpush1.bf16.msra.mxu0 %v7606
    %8042 = vmatprep.subr.bf16.mxu0 0
    %8043 = vmatpush1.bf16.msra.mxu0 %v7607
    %8044 = vmatprep.mubr.bf16.mxu0 %v7941
    %8045 = vmatmul.mubr.bf16.gmra.mrb[0].mxu0 %v7940
    %v8046 = vpop.f32.mrb[0].mxu0
    %v8047 = vadd.f32 %v7884, %v8046
    %v8048 = vpop.f32.mrb[0].mxu0
    %v8049 = vpop.f32.mrb[0].mxu0
    %v8050 = vpop.f32.mrb[0].mxu0
    %8051 = vdwg.mxu0
    %8052 = vmatprep.subr.bf16.mxu0 0
    %8053 = vmatpush1.bf16.msra.mxu0 %v7608
    %8054 = vmatprep.subr.bf16.mxu0 0
    %8055 = vmatpush1.bf16.msra.mxu0 %v7609
    %8056 = vmatprep.subr.bf16.mxu0 0
    %8057 = vmatpush1.bf16.msra.mxu0 %v7610
    %8058 = vmatprep.subr.bf16.mxu0 0
    %8059 = vmatpush1.bf16.msra.mxu0 %v7611
    %8060 = vmatprep.subr.bf16.mxu0 0
    %8061 = vmatpush1.bf16.msra.mxu0 %v7612
    %8062 = vmatprep.subr.bf16.mxu0 0
    %8063 = vmatpush1.bf16.msra.mxu0 %v7613
    %8064 = vmatprep.subr.bf16.mxu0 0
    %8065 = vmatpush1.bf16.msra.mxu0 %v7614
    %8066 = vmatprep.subr.bf16.mxu0 0
    %8067 = vmatpush1.bf16.msra.mxu0 %v7615
    %8068 = vmatprep.subr.bf16.mxu0 0
    %8069 = vmatpush1.bf16.msra.mxu0 %v7616
    %8070 = vmatprep.subr.bf16.mxu0 0
    %8071 = vmatpush1.bf16.msra.mxu0 %v7617
    %8072 = vmatprep.subr.bf16.mxu0 0
    %8073 = vmatpush1.bf16.msra.mxu0 %v7618
    %8074 = vmatprep.subr.bf16.mxu0 0
    %8075 = vmatpush1.bf16.msra.mxu0 %v7619
    %8076 = vmatprep.subr.bf16.mxu0 0
    %8077 = vmatpush1.bf16.msra.mxu0 %v7620
    %8078 = vmatprep.subr.bf16.mxu0 0
    %8079 = vmatpush1.bf16.msra.mxu0 %v7621
    %8080 = vmatprep.subr.bf16.mxu0 0
    %8081 = vmatpush1.bf16.msra.mxu0 %v7622
    %8082 = vmatprep.subr.bf16.mxu0 0
    %8083 = vmatpush1.bf16.msra.mxu0 %v7623
    %8084 = vmatprep.mubr.bf16.mxu0 %v7943
    %8085 = vmatmul.mubr.bf16.gmra.mrb[0].mxu0 %v7942
    %v8086 = vpop.f32.mrb[0].mxu0
    %v8087 = vadd.f32 %v8047, %v8086
    %v8088 = vpop.f32.mrb[0].mxu0
    %v8089 = vpop.f32.mrb[0].mxu0
    %v8090 = vpop.f32.mrb[0].mxu0
    %8091 = vdwg.mxu0
    %8092 = vmatprep.subr.bf16.mxu0 0
    %8093 = vmatpush1.bf16.msra.mxu0 %v7624
    %8094 = vmatprep.subr.bf16.mxu0 0
    %8095 = vmatpush1.bf16.msra.mxu0 %v7625
    %8096 = vmatprep.subr.bf16.mxu0 0
    %8097 = vmatpush1.bf16.msra.mxu0 %v7626
    %8098 = vmatprep.subr.bf16.mxu0 0
    %8099 = vmatpush1.bf16.msra.mxu0 %v7627
    %8100 = vmatprep.subr.bf16.mxu0 0
    %8101 = vmatpush1.bf16.msra.mxu0 %v7628
    %8102 = vmatprep.subr.bf16.mxu0 0
    %8103 = vmatpush1.bf16.msra.mxu0 %v7629
    %8104 = vmatprep.subr.bf16.mxu0 0
    %8105 = vmatpush1.bf16.msra.mxu0 %v7630
    %8106 = vmatprep.subr.bf16.mxu0 0
    %8107 = vmatpush1.bf16.msra.mxu0 %v7631
    %8108 = vmatprep.subr.bf16.mxu0 0
    %8109 = vmatpush1.bf16.msra.mxu0 %v7632
    %8110 = vmatprep.subr.bf16.mxu0 0
    %8111 = vmatpush1.bf16.msra.mxu0 %v7633
    %8112 = vmatprep.subr.bf16.mxu0 0
    %8113 = vmatpush1.bf16.msra.mxu0 %v7634
    %8114 = vmatprep.subr.bf16.mxu0 0
    %8115 = vmatpush1.bf16.msra.mxu0 %v7635
    %8116 = vmatprep.subr.bf16.mxu0 0
    %8117 = vmatpush1.bf16.msra.mxu0 %v7636
    %8118 = vmatprep.subr.bf16.mxu0 0
    %8119 = vmatpush1.bf16.msra.mxu0 %v7637
    %8120 = vmatprep.subr.bf16.mxu0 0
    %8121 = vmatpush1.bf16.msra.mxu0 %v7638
    %8122 = vmatprep.subr.bf16.mxu0 0
    %8123 = vmatpush1.bf16.msra.mxu0 %v7639
    %8124 = vmatprep.mubr.bf16.mxu0 %v7945
    %8125 = vmatmul.mubr.bf16.gmra.mrb[0].mxu0 %v7944
    %v8126 = vpop.f32.mrb[0].mxu0
    %v8127 = vadd.f32 %v8087, %v8126
    %v8128 = vpop.f32.mrb[0].mxu0
    %v8129 = vpop.f32.mrb[0].mxu0
    %v8130 = vpop.f32.mrb[0].mxu0
    %8131 = vdwg.mxu0
    %8132 = vmatprep.subr.bf16.mxu0 0
    %8133 = vmatpush1.bf16.msra.mxu0 %v7640
    %8134 = vmatprep.subr.bf16.mxu0 0
    %8135 = vmatpush1.bf16.msra.mxu0 %v7641
    %8136 = vmatprep.subr.bf16.mxu0 0
    %8137 = vmatpush1.bf16.msra.mxu0 %v7642
    %8138 = vmatprep.subr.bf16.mxu0 0
    %8139 = vmatpush1.bf16.msra.mxu0 %v7643
    %8140 = vmatprep.subr.bf16.mxu0 0
    %8141 = vmatpush1.bf16.msra.mxu0 %v7644
    %8142 = vmatprep.subr.bf16.mxu0 0
    %8143 = vmatpush1.bf16.msra.mxu0 %v7645
    %8144 = vmatprep.subr.bf16.mxu0 0
    %8145 = vmatpush1.bf16.msra.mxu0 %v7646
    %8146 = vmatprep.subr.bf16.mxu0 0
    %8147 = vmatpush1.bf16.msra.mxu0 %v7647
    %8148 = vmatprep.subr.bf16.mxu0 0
    %8149 = vmatpush1.bf16.msra.mxu0 %v7648
    %8150 = vmatprep.subr.bf16.mxu0 0
    %8151 = vmatpush1.bf16.msra.mxu0 %v7649
    %8152 = vmatprep.subr.bf16.mxu0 0
    %8153 = vmatpush1.bf16.msra.mxu0 %v7650
    %8154 = vmatprep.subr.bf16.mxu0 0
    %8155 = vmatpush1.bf16.msra.mxu0 %v7651
    %8156 = vmatprep.subr.bf16.mxu0 0
    %8157 = vmatpush1.bf16.msra.mxu0 %v7652
    %8158 = vmatprep.subr.bf16.mxu0 0
    %8159 = vmatpush1.bf16.msra.mxu0 %v7653
    %8160 = vmatprep.subr.bf16.mxu0 0
    %8161 = vmatpush1.bf16.msra.mxu0 %v7654
    %8162 = vmatprep.subr.bf16.mxu0 0
    %8163 = vmatpush1.bf16.msra.mxu0 %v7655
    %8164 = vmatprep.mubr.bf16.mxu0 %v7947
    %8165 = vmatmul.mubr.bf16.gmra.mrb[0].mxu0 %v7946
    %v8166 = vpop.f32.mrb[0].mxu0
    %v8167 = vadd.f32 %v8127, %v8166
    %v8168 = vpop.f32.mrb[0].mxu0
    %v8169 = vpop.f32.mrb[0].mxu0
    %v8170 = vpop.f32.mrb[0].mxu0
    %8171 = vdwg.mxu0
    %8172 = vmatprep.subr.bf16.mxu0 0
    %8173 = vmatpush1.bf16.msra.mxu0 %v7656
    %8174 = vmatprep.subr.bf16.mxu0 0
    %8175 = vmatpush1.bf16.msra.mxu0 %v7657
    %8176 = vmatprep.subr.bf16.mxu0 0
    %8177 = vmatpush1.bf16.msra.mxu0 %v7658
    %8178 = vmatprep.subr.bf16.mxu0 0
    %8179 = vmatpush1.bf16.msra.mxu0 %v7659
    %8180 = vmatprep.subr.bf16.mxu0 0
    %8181 = vmatpush1.bf16.msra.mxu0 %v7660
    %8182 = vmatprep.subr.bf16.mxu0 0
    %8183 = vmatpush1.bf16.msra.mxu0 %v7661
    %8184 = vmatprep.subr.bf16.mxu0 0
    %8185 = vmatpush1.bf16.msra.mxu0 %v7662
    %8186 = vmatprep.subr.bf16.mxu0 0
    %8187 = vmatpush1.bf16.msra.mxu0 %v7663
    %8188 = vmatprep.subr.bf16.mxu0 0
    %8189 = vmatpush1.bf16.msra.mxu0 %v7664
    %8190 = vmatprep.subr.bf16.mxu0 0
    %8191 = vmatpush1.bf16.msra.mxu0 %v7665
    %8192 = vmatprep.subr.bf16.mxu0 0
    %8193 = vmatpush1.bf16.msra.mxu0 %v7666
    %8194 = vmatprep.subr.bf16.mxu0 0
    %8195 = vmatpush1.bf16.msra.mxu0 %v7667
    %8196 = vmatprep.subr.bf16.mxu0 0
    %8197 = vmatpush1.bf16.msra.mxu0 %v7668
    %8198 = vmatprep.subr.bf16.mxu0 0
    %8199 = vmatpush1.bf16.msra.mxu0 %v7669
    %8200 = vmatprep.subr.bf16.mxu0 0
    %8201 = vmatpush1.bf16.msra.mxu0 %v7670
    %8202 = vmatprep.subr.bf16.mxu0 0
    %8203 = vmatpush1.bf16.msra.mxu0 %v7671
    %8204 = vmatprep.mubr.bf16.mxu0 %v7949
    %8205 = vmatmul.mubr.bf16.gmra.mrb[0].mxu0 %v7948
    %v8206 = vpop.f32.mrb[0].mxu0
    %v8207 = vadd.f32 %v8167, %v8206
    %v8208 = vpop.f32.mrb[0].mxu0
    %v8209 = vpop.f32.mrb[0].mxu0
    %v8210 = vpop.f32.mrb[0].mxu0
    %8211 = vdwg.mxu0
    %8212 = vmatprep.subr.bf16.mxu0 0
    %8213 = vmatpush1.bf16.msra.mxu0 %v7672
    %8214 = vmatprep.subr.bf16.mxu0 0
    %8215 = vmatpush1.bf16.msra.mxu0 %v7673
    %8216 = vmatprep.subr.bf16.mxu0 0
    %8217 = vmatpush1.bf16.msra.mxu0 %v7674
    %8218 = vmatprep.subr.bf16.mxu0 0
    %8219 = vmatpush1.bf16.msra.mxu0 %v7675
    %8220 = vmatprep.subr.bf16.mxu0 0
    %8221 = vmatpush1.bf16.msra.mxu0 %v7676
    %8222 = vmatprep.subr.bf16.mxu0 0
    %8223 = vmatpush1.bf16.msra.mxu0 %v7677
    %8224 = vmatprep.subr.bf16.mxu0 0
    %8225 = vmatpush1.bf16.msra.mxu0 %v7678
    %8226 = vmatprep.subr.bf16.mxu0 0
    %8227 = vmatpush1.bf16.msra.mxu0 %v7679
    %8228 = vmatprep.subr.bf16.mxu0 0
    %8229 = vmatpush1.bf16.msra.mxu0 %v7680
    %8230 = vmatprep.subr.bf16.mxu0 0
    %8231 = vmatpush1.bf16.msra.mxu0 %v7681
    %8232 = vmatprep.subr.bf16.mxu0 0
    %8233 = vmatpush1.bf16.msra.mxu0 %v7682
    %8234 = vmatprep.subr.bf16.mxu0 0
    %8235 = vmatpush1.bf16.msra.mxu0 %v7683
    %8236 = vmatprep.subr.bf16.mxu0 0
    %8237 = vmatpush1.bf16.msra.mxu0 %v7684
    %8238 = vmatprep.subr.bf16.mxu0 0
    %8239 = vmatpush1.bf16.msra.mxu0 %v7685
    %8240 = vmatprep.subr.bf16.mxu0 0
    %8241 = vmatpush1.bf16.msra.mxu0 %v7686
    %8242 = vmatprep.subr.bf16.mxu0 0
    %8243 = vmatpush1.bf16.msra.mxu0 %v7687
    %8244 = vmatprep.mubr.bf16.mxu0 %v7951
    %8245 = vmatmul.mubr.bf16.gmra.mrb[0].mxu0 %v7950
    %v8246 = vpop.f32.mrb[0].mxu0
    %v8247 = vadd.f32 %v8207, %v8246
    %v8248 = vpop.f32.mrb[0].mxu0
    %v8249 = vpop.f32.mrb[0].mxu0
    %v8250 = vpop.f32.mrb[0].mxu0
    %8251 = vdwg.mxu0
    %8252 = vmatprep.subr.bf16.mxu0 0
    %8253 = vmatpush1.bf16.msra.mxu0 %v7688
    %8254 = vmatprep.subr.bf16.mxu0 0
    %8255 = vmatpush1.bf16.msra.mxu0 %v7689
    %8256 = vmatprep.subr.bf16.mxu0 0
    %8257 = vmatpush1.bf16.msra.mxu0 %v7690
    %8258 = vmatprep.subr.bf16.mxu0 0
    %8259 = vmatpush1.bf16.msra.mxu0 %v7691
    %8260 = vmatprep.subr.bf16.mxu0 0
    %8261 = vmatpush1.bf16.msra.mxu0 %v7692
    %8262 = vmatprep.subr.bf16.mxu0 0
    %8263 = vmatpush1.bf16.msra.mxu0 %v7693
    %8264 = vmatprep.subr.bf16.mxu0 0
    %8265 = vmatpush1.bf16.msra.mxu0 %v7694
    %8266 = vmatprep.subr.bf16.mxu0 0
    %8267 = vmatpush1.bf16.msra.mxu0 %v7695
    %8268 = vmatprep.subr.bf16.mxu0 0
    %8269 = vmatpush1.bf16.msra.mxu0 %v7696
    %8270 = vmatprep.subr.bf16.mxu0 0
    %8271 = vmatpush1.bf16.msra.mxu0 %v7697
    %8272 = vmatprep.subr.bf16.mxu0 0
    %8273 = vmatpush1.bf16.msra.mxu0 %v7698
    %8274 = vmatprep.subr.bf16.mxu0 0
    %8275 = vmatpush1.bf16.msra.mxu0 %v7699
    %8276 = vmatprep.subr.bf16.mxu0 0
    %8277 = vmatpush1.bf16.msra.mxu0 %v7700
    %8278 = vmatprep.subr.bf16.mxu0 0
    %8279 = vmatpush1.bf16.msra.mxu0 %v7701
    %8280 = vmatprep.subr.bf16.mxu0 0
    %8281 = vmatpush1.bf16.msra.mxu0 %v7702
    %8282 = vmatprep.subr.bf16.mxu0 0
    %8283 = vmatpush1.bf16.msra.mxu0 %v7703
    %8284 = vmatprep.mubr.bf16.mxu0 %v7953
    %8285 = vmatmul.mubr.bf16.gmra.mrb[0].mxu0 %v7952
    %v8286 = vpop.f32.mrb[0].mxu0
    %v8287 = vadd.f32 %v8247, %v8286
    %v8288 = vpop.f32.mrb[0].mxu0
    %v8289 = vpop.f32.mrb[0].mxu0
    %v8290 = vpop.f32.mrb[0].mxu0
    %8291 = vdwg.mxu0
    %8292 = vmatprep.subr.bf16.mxu0 0
    %8293 = vmatpush1.bf16.msra.mxu0 %v7704
    %8294 = vmatprep.subr.bf16.mxu0 0
    %8295 = vmatpush1.bf16.msra.mxu0 %v7705
    %8296 = vmatprep.subr.bf16.mxu0 0
    %8297 = vmatpush1.bf16.msra.mxu0 %v7706
    %8298 = vmatprep.subr.bf16.mxu0 0
    %8299 = vmatpush1.bf16.msra.mxu0 %v7707
    %8300 = vmatprep.subr.bf16.mxu0 0
    %8301 = vmatpush1.bf16.msra.mxu0 %v7708
    %8302 = vmatprep.subr.bf16.mxu0 0
    %8303 = vmatpush1.bf16.msra.mxu0 %v7709
    %8304 = vmatprep.subr.bf16.mxu0 0
    %8305 = vmatpush1.bf16.msra.mxu0 %v7710
    %8306 = vmatprep.subr.bf16.mxu0 0
    %8307 = vmatpush1.bf16.msra.mxu0 %v7711
    %8308 = vmatprep.subr.bf16.mxu0 0
    %8309 = vmatpush1.bf16.msra.mxu0 %v7712
    %8310 = vmatprep.subr.bf16.mxu0 0
    %8311 = vmatpush1.bf16.msra.mxu0 %v7713
    %8312 = vmatprep.subr.bf16.mxu0 0
    %8313 = vmatpush1.bf16.msra.mxu0 %v7714
    %8314 = vmatprep.subr.bf16.mxu0 0
    %8315 = vmatpush1.bf16.msra.mxu0 %v7715
    %8316 = vmatprep.subr.bf16.mxu0 0
    %8317 = vmatpush1.bf16.msra.mxu0 %v7716
    %8318 = vmatprep.subr.bf16.mxu0 0
    %8319 = vmatpush1.bf16.msra.mxu0 %v7717
    %8320 = vmatprep.subr.bf16.mxu0 0
    %8321 = vmatpush1.bf16.msra.mxu0 %v7718
    %8322 = vmatprep.subr.bf16.mxu0 0
    %8323 = vmatpush1.bf16.msra.mxu0 %v7719
    %8324 = vmatprep.mubr.bf16.mxu0 %v7955
    %8325 = vmatmul.mubr.bf16.gmra.mrb[0].mxu0 %v7954
    %v8326 = vpop.f32.mrb[0].mxu0
    %v8327 = vadd.f32 %v8287, %v8326
    %v8328 = vpop.f32.mrb[0].mxu0
    %v8329 = vpop.f32.mrb[0].mxu0
    %v8330 = vpop.f32.mrb[0].mxu0
    %8331 = vdwg.mxu0
    %8332 = vmatprep.subr.bf16.mxu0 0
    %8333 = vmatpush1.bf16.msra.mxu0 %v7720
    %8334 = vmatprep.subr.bf16.mxu0 0
    %8335 = vmatpush1.bf16.msra.mxu0 %v7721
    %8336 = vmatprep.subr.bf16.mxu0 0
    %8337 = vmatpush1.bf16.msra.mxu0 %v7722
    %8338 = vmatprep.subr.bf16.mxu0 0
    %8339 = vmatpush1.bf16.msra.mxu0 %v7723
    %8340 = vmatprep.subr.bf16.mxu0 0
    %8341 = vmatpush1.bf16.msra.mxu0 %v7724
    %8342 = vmatprep.subr.bf16.mxu0 0
    %8343 = vmatpush1.bf16.msra.mxu0 %v7725
    %8344 = vmatprep.subr.bf16.mxu0 0
    %8345 = vmatpush1.bf16.msra.mxu0 %v7726
    %8346 = vmatprep.subr.bf16.mxu0 0
    %8347 = vmatpush1.bf16.msra.mxu0 %v7727
    %8348 = vmatprep.subr.bf16.mxu0 0
    %8349 = vmatpush1.bf16.msra.mxu0 %v7728
    %8350 = vmatprep.subr.bf16.mxu0 0
    %8351 = vmatpush1.bf16.msra.mxu0 %v7729
    %8352 = vmatprep.subr.bf16.mxu0 0
    %8353 = vmatpush1.bf16.msra.mxu0 %v7730
    %8354 = vmatprep.subr.bf16.mxu0 0
    %8355 = vmatpush1.bf16.msra.mxu0 %v7731
    %8356 = vmatprep.subr.bf16.mxu0 0
    %8357 = vmatpush1.bf16.msra.mxu0 %v7732
    %8358 = vmatprep.subr.bf16.mxu0 0
    %8359 = vmatpush1.bf16.msra.mxu0 %v7733
    %8360 = vmatprep.subr.bf16.mxu0 0
    %8361 = vmatpush1.bf16.msra.mxu0 %v7734
    %8362 = vmatprep.subr.bf16.mxu0 0
    %8363 = vmatpush1.bf16.msra.mxu0 %v7735
    %8364 = vmatprep.mubr.bf16.mxu0 %v7957
    %8365 = vmatmul.mubr.bf16.gmra.mrb[0].mxu0 %v7956
    %v8366 = vpop.f32.mrb[0].mxu0
    %v8367 = vadd.f32 %v8327, %v8366
    %v8368 = vpop.f32.mrb[0].mxu0
    %v8369 = vpop.f32.mrb[0].mxu0
    %v8370 = vpop.f32.mrb[0].mxu0
    %8371 = vdwg.mxu0
    %8372 = vmatprep.subr.bf16.mxu0 0
    %8373 = vmatpush1.bf16.msra.mxu0 %v7736
    %8374 = vmatprep.subr.bf16.mxu0 0
    %8375 = vmatpush1.bf16.msra.mxu0 %v7737
    %8376 = vmatprep.subr.bf16.mxu0 0
    %8377 = vmatpush1.bf16.msra.mxu0 %v7738
    %8378 = vmatprep.subr.bf16.mxu0 0
    %8379 = vmatpush1.bf16.msra.mxu0 %v7739
    %8380 = vmatprep.subr.bf16.mxu0 0
    %8381 = vmatpush1.bf16.msra.mxu0 %v7740
    %8382 = vmatprep.subr.bf16.mxu0 0
    %8383 = vmatpush1.bf16.msra.mxu0 %v7741
    %8384 = vmatprep.subr.bf16.mxu0 0
    %8385 = vmatpush1.bf16.msra.mxu0 %v7742
    %8386 = vmatprep.subr.bf16.mxu0 0
    %8387 = vmatpush1.bf16.msra.mxu0 %v7743
    %8388 = vmatprep.subr.bf16.mxu0 0
    %8389 = vmatpush1.bf16.msra.mxu0 %v7744
    %8390 = vmatprep.subr.bf16.mxu0 0
    %8391 = vmatpush1.bf16.msra.mxu0 %v7745
    %8392 = vmatprep.subr.bf16.mxu0 0
    %8393 = vmatpush1.bf16.msra.mxu0 %v7746
    %8394 = vmatprep.subr.bf16.mxu0 0
    %8395 = vmatpush1.bf16.msra.mxu0 %v7747
    %8396 = vmatprep.subr.bf16.mxu0 0
    %8397 = vmatpush1.bf16.msra.mxu0 %v7748
    %8398 = vmatprep.subr.bf16.mxu0 0
    %8399 = vmatpush1.bf16.msra.mxu0 %v7749
    %8400 = vmatprep.subr.bf16.mxu0 0
    %8401 = vmatpush1.bf16.msra.mxu0 %v7750
    %8402 = vmatprep.subr.bf16.mxu0 0
    %8403 = vmatpush1.bf16.msra.mxu0 %v7751
    %8404 = vmatprep.mubr.bf16.mxu0 %v7959
    %8405 = vmatmul.mubr.bf16.gmra.mrb[0].mxu0 %v7958
    %v8406 = vpop.f32.mrb[0].mxu0
    %v8407 = vadd.f32 %v8367, %v8406
    %v8408 = vpop.f32.mrb[0].mxu0
    %v8409 = vpop.f32.mrb[0].mxu0
    %v8410 = vpop.f32.mrb[0].mxu0
    %8411 = vdwg.mxu0
    %8412 = vmatprep.subr.bf16.mxu0 0
    %8413 = vmatpush1.bf16.msra.mxu0 %v7752
    %8414 = vmatprep.subr.bf16.mxu0 0
    %8415 = vmatpush1.bf16.msra.mxu0 %v7753
    %8416 = vmatprep.subr.bf16.mxu0 0
    %8417 = vmatpush1.bf16.msra.mxu0 %v7754
    %8418 = vmatprep.subr.bf16.mxu0 0
    %8419 = vmatpush1.bf16.msra.mxu0 %v7755
    %8420 = vmatprep.subr.bf16.mxu0 0
    %8421 = vmatpush1.bf16.msra.mxu0 %v7756
    %8422 = vmatprep.subr.bf16.mxu0 0
    %8423 = vmatpush1.bf16.msra.mxu0 %v7757
    %8424 = vmatprep.subr.bf16.mxu0 0
    %8425 = vmatpush1.bf16.msra.mxu0 %v7758
    %8426 = vmatprep.subr.bf16.mxu0 0
    %8427 = vmatpush1.bf16.msra.mxu0 %v7759
    %8428 = vmatprep.subr.bf16.mxu0 0
    %8429 = vmatpush1.bf16.msra.mxu0 %v7760
    %8430 = vmatprep.subr.bf16.mxu0 0
    %8431 = vmatpush1.bf16.msra.mxu0 %v7761
    %8432 = vmatprep.subr.bf16.mxu0 0
    %8433 = vmatpush1.bf16.msra.mxu0 %v7762
    %8434 = vmatprep.subr.bf16.mxu0 0
    %8435 = vmatpush1.bf16.msra.mxu0 %v7763
    %8436 = vmatprep.subr.bf16.mxu0 0
    %8437 = vmatpush1.bf16.msra.mxu0 %v7764
    %8438 = vmatprep.subr.bf16.mxu0 0
    %8439 = vmatpush1.bf16.msra.mxu0 %v7765
    %8440 = vmatprep.subr.bf16.mxu0 0
    %8441 = vmatpush1.bf16.msra.mxu0 %v7766
    %8442 = vmatprep.subr.bf16.mxu0 0
    %8443 = vmatpush1.bf16.msra.mxu0 %v7767
    %8444 = vmatprep.mubr.bf16.mxu0 %v7961
    %8445 = vmatmul.mubr.bf16.gmra.mrb[0].mxu0 %v7960
    %v8446 = vpop.f32.mrb[0].mxu0
    %v8447 = vadd.f32 %v8407, %v8446
    %v8448 = vpop.f32.mrb[0].mxu0
    %v8449 = vpop.f32.mrb[0].mxu0
    %v8450 = vpop.f32.mrb[0].mxu0
    %8451 = vdwg.mxu0
    %8452 = vmatprep.subr.bf16.mxu0 0
    %8453 = vmatpush1.bf16.msra.mxu0 %v7768
    %8454 = vmatprep.subr.bf16.mxu0 0
    %8455 = vmatpush1.bf16.msra.mxu0 %v7769
    %8456 = vmatprep.subr.bf16.mxu0 0
    %8457 = vmatpush1.bf16.msra.mxu0 %v7770
    %8458 = vmatprep.subr.bf16.mxu0 0
    %8459 = vmatpush1.bf16.msra.mxu0 %v7771
    %8460 = vmatprep.subr.bf16.mxu0 0
    %8461 = vmatpush1.bf16.msra.mxu0 %v7772
    %8462 = vmatprep.subr.bf16.mxu0 0
    %8463 = vmatpush1.bf16.msra.mxu0 %v7773
    %8464 = vmatprep.subr.bf16.mxu0 0
    %8465 = vmatpush1.bf16.msra.mxu0 %v7774
    %8466 = vmatprep.subr.bf16.mxu0 0
    %8467 = vmatpush1.bf16.msra.mxu0 %v7775
    %8468 = vmatprep.subr.bf16.mxu0 0
    %8469 = vmatpush1.bf16.msra.mxu0 %v7776
    %8470 = vmatprep.subr.bf16.mxu0 0
    %8471 = vmatpush1.bf16.msra.mxu0 %v7777
    %8472 = vmatprep.subr.bf16.mxu0 0
    %8473 = vmatpush1.bf16.msra.mxu0 %v7778
    %8474 = vmatprep.subr.bf16.mxu0 0
    %8475 = vmatpush1.bf16.msra.mxu0 %v7779
    %8476 = vmatprep.subr.bf16.mxu0 0
    %8477 = vmatpush1.bf16.msra.mxu0 %v7780
    %8478 = vmatprep.subr.bf16.mxu0 0
    %8479 = vmatpush1.bf16.msra.mxu0 %v7781
    %8480 = vmatprep.subr.bf16.mxu0 0
    %8481 = vmatpush1.bf16.msra.mxu0 %v7782
    %8482 = vmatprep.subr.bf16.mxu0 0
    %8483 = vmatpush1.bf16.msra.mxu0 %v7783
    %8484 = vmatprep.mubr.bf16.mxu0 %v7963
    %8485 = vmatmul.mubr.bf16.gmra.mrb[0].mxu0 %v7962
    %v8486 = vpop.f32.mrb[0].mxu0
    %v8487 = vadd.f32 %v8447, %v8486
    %v8488 = vpop.f32.mrb[0].mxu0
    %v8489 = vpop.f32.mrb[0].mxu0
    %v8490 = vpop.f32.mrb[0].mxu0
    %8491 = vdwg.mxu0
    %8492 = vmatprep.subr.bf16.mxu0 0
    %8493 = vmatpush1.bf16.msra.mxu0 %v7784
    %8494 = vmatprep.subr.bf16.mxu0 0
    %8495 = vmatpush1.bf16.msra.mxu0 %v7785
    %8496 = vmatprep.subr.bf16.mxu0 0
    %8497 = vmatpush1.bf16.msra.mxu0 %v7786
    %8498 = vmatprep.subr.bf16.mxu0 0
    %8499 = vmatpush1.bf16.msra.mxu0 %v7787
    %8500 = vmatprep.subr.bf16.mxu0 0
    %8501 = vmatpush1.bf16.msra.mxu0 %v7788
    %8502 = vmatprep.subr.bf16.mxu0 0
    %8503 = vmatpush1.bf16.msra.mxu0 %v7789
    %8504 = vmatprep.subr.bf16.mxu0 0
    %8505 = vmatpush1.bf16.msra.mxu0 %v7790
    %8506 = vmatprep.subr.bf16.mxu0 0
    %8507 = vmatpush1.bf16.msra.mxu0 %v7791
    %8508 = vmatprep.subr.bf16.mxu0 0
    %8509 = vmatpush1.bf16.msra.mxu0 %v7792
    %8510 = vmatprep.subr.bf16.mxu0 0
    %8511 = vmatpush1.bf16.msra.mxu0 %v7793
    %8512 = vmatprep.subr.bf16.mxu0 0
    %8513 = vmatpush1.bf16.msra.mxu0 %v7794
    %8514 = vmatprep.subr.bf16.mxu0 0
    %8515 = vmatpush1.bf16.msra.mxu0 %v7795
    %8516 = vmatprep.subr.bf16.mxu0 0
    %8517 = vmatpush1.bf16.msra.mxu0 %v7796
    %8518 = vmatprep.subr.bf16.mxu0 0
    %8519 = vmatpush1.bf16.msra.mxu0 %v7797
    %8520 = vmatprep.subr.bf16.mxu0 0
    %8521 = vmatpush1.bf16.msra.mxu0 %v7798
    %8522 = vmatprep.subr.bf16.mxu0 0
    %8523 = vmatpush1.bf16.msra.mxu0 %v7799
    %8524 = vmatprep.mubr.bf16.mxu0 %v7965
    %8525 = vmatmul.mubr.bf16.gmra.mrb[0].mxu0 %v7964
    %v8526 = vpop.f32.mrb[0].mxu0
    %v8527 = vadd.f32 %v8487, %v8526
    %v8528 = vpop.f32.mrb[0].mxu0
    %v8529 = vpop.f32.mrb[0].mxu0
    %v8530 = vpop.f32.mrb[0].mxu0
    %8531 = vdwg.mxu0
    %8532 = vmatprep.subr.bf16.mxu0 0
    %8533 = vmatpush1.bf16.msra.mxu0 %v7800
    %8534 = vmatprep.subr.bf16.mxu0 0
    %8535 = vmatpush1.bf16.msra.mxu0 %v7801
    %8536 = vmatprep.subr.bf16.mxu0 0
    %8537 = vmatpush1.bf16.msra.mxu0 %v7802
    %8538 = vmatprep.subr.bf16.mxu0 0
    %8539 = vmatpush1.bf16.msra.mxu0 %v7803
    %8540 = vmatprep.subr.bf16.mxu0 0
    %8541 = vmatpush1.bf16.msra.mxu0 %v7804
    %8542 = vmatprep.subr.bf16.mxu0 0
    %8543 = vmatpush1.bf16.msra.mxu0 %v7805
    %8544 = vmatprep.subr.bf16.mxu0 0
    %8545 = vmatpush1.bf16.msra.mxu0 %v7806
    %8546 = vmatprep.subr.bf16.mxu0 0
    %8547 = vmatpush1.bf16.msra.mxu0 %v7807
    %8548 = vmatprep.subr.bf16.mxu0 0
    %8549 = vmatpush1.bf16.msra.mxu0 %v7808
    %8550 = vmatprep.subr.bf16.mxu0 0
    %8551 = vmatpush1.bf16.msra.mxu0 %v7809
    %8552 = vmatprep.subr.bf16.mxu0 0
    %8553 = vmatpush1.bf16.msra.mxu0 %v7810
    %8554 = vmatprep.subr.bf16.mxu0 0
    %8555 = vmatpush1.bf16.msra.mxu0 %v7811
    %8556 = vmatprep.subr.bf16.mxu0 0
    %8557 = vmatpush1.bf16.msra.mxu0 %v7812
    %8558 = vmatprep.subr.bf16.mxu0 0
    %8559 = vmatpush1.bf16.msra.mxu0 %v7813
    %8560 = vmatprep.subr.bf16.mxu0 0
    %8561 = vmatpush1.bf16.msra.mxu0 %v7814
    %8562 = vmatprep.subr.bf16.mxu0 0
    %8563 = vmatpush1.bf16.msra.mxu0 %v7815
    %8564 = vmatprep.mubr.bf16.mxu0 %v7967
    %8565 = vmatmul.mubr.bf16.gmra.mrb[0].mxu0 %v7966
    %v8566 = vpop.f32.mrb[0].mxu0
    %v8567 = vadd.f32 %v8527, %v8566
    %v8568 = vpop.f32.mrb[0].mxu0
    %v8569 = vpop.f32.mrb[0].mxu0
    %v8570 = vpop.f32.mrb[0].mxu0
    %8571 = vdwg.mxu0
    %8572 = vmatprep.subr.bf16.mxu0 0
    %8573 = vmatpush1.bf16.msra.mxu0 %v7816
    %8574 = vmatprep.subr.bf16.mxu0 0
    %8575 = vmatpush1.bf16.msra.mxu0 %v7817
    %8576 = vmatprep.subr.bf16.mxu0 0
    %8577 = vmatpush1.bf16.msra.mxu0 %v7818
    %8578 = vmatprep.subr.bf16.mxu0 0
    %8579 = vmatpush1.bf16.msra.mxu0 %v7819
    %8580 = vmatprep.subr.bf16.mxu0 0
    %8581 = vmatpush1.bf16.msra.mxu0 %v7820
    %8582 = vmatprep.subr.bf16.mxu0 0
    %8583 = vmatpush1.bf16.msra.mxu0 %v7821
    %8584 = vmatprep.subr.bf16.mxu0 0
    %8585 = vmatpush1.bf16.msra.mxu0 %v7822
    %8586 = vmatprep.subr.bf16.mxu0 0
    %8587 = vmatpush1.bf16.msra.mxu0 %v7823
    %8588 = vmatprep.subr.bf16.mxu0 0
    %8589 = vmatpush1.bf16.msra.mxu0 %v7824
    %8590 = vmatprep.subr.bf16.mxu0 0
    %8591 = vmatpush1.bf16.msra.mxu0 %v7825
    %8592 = vmatprep.subr.bf16.mxu0 0
    %8593 = vmatpush1.bf16.msra.mxu0 %v7826
    %8594 = vmatprep.subr.bf16.mxu0 0
    %8595 = vmatpush1.bf16.msra.mxu0 %v7827
    %8596 = vmatprep.subr.bf16.mxu0 0
    %8597 = vmatpush1.bf16.msra.mxu0 %v7828
    %8598 = vmatprep.subr.bf16.mxu0 0
    %8599 = vmatpush1.bf16.msra.mxu0 %v7829
    %8600 = vmatprep.subr.bf16.mxu0 0
    %8601 = vmatpush1.bf16.msra.mxu0 %v7830
    %8602 = vmatprep.subr.bf16.mxu0 0
    %8603 = vmatpush1.bf16.msra.mxu0 %v7831
    %8604 = vmatprep.mubr.bf16.mxu0 %v7969
    %8605 = vmatmul.mubr.bf16.gmra.mrb[0].mxu0 %v7968
    %v8606 = vpop.f32.mrb[0].mxu0
    %v8607 = vadd.f32 %v8567, %v8606
    %v8608 = vpop.f32.mrb[0].mxu0
    %v8609 = vpop.f32.mrb[0].mxu0
    %v8610 = vpop.f32.mrb[0].mxu0
    %8611 = vdwg.mxu0
    %8612 = vmatprep.subr.bf16.mxu0 0
    %8613 = vmatpush1.bf16.msra.mxu0 %v7832
    %8614 = vmatprep.subr.bf16.mxu0 0
    %8615 = vmatpush1.bf16.msra.mxu0 %v7833
    %8616 = vmatprep.subr.bf16.mxu0 0
    %8617 = vmatpush1.bf16.msra.mxu0 %v7834
    %8618 = vmatprep.subr.bf16.mxu0 0
    %8619 = vmatpush1.bf16.msra.mxu0 %v7835
    %8620 = vmatprep.subr.bf16.mxu0 0
    %8621 = vmatpush1.bf16.msra.mxu0 %v7836
    %8622 = vmatprep.subr.bf16.mxu0 0
    %8623 = vmatpush1.bf16.msra.mxu0 %v7837
    %8624 = vmatprep.subr.bf16.mxu0 0
    %8625 = vmatpush1.bf16.msra.mxu0 %v7838
    %8626 = vmatprep.subr.bf16.mxu0 0
    %8627 = vmatpush1.bf16.msra.mxu0 %v7839
    %8628 = vmatprep.subr.bf16.mxu0 0
    %8629 = vmatpush1.bf16.msra.mxu0 %v7840
    %8630 = vmatprep.subr.bf16.mxu0 0
    %8631 = vmatpush1.bf16.msra.mxu0 %v7841
    %8632 = vmatprep.subr.bf16.mxu0 0
    %8633 = vmatpush1.bf16.msra.mxu0 %v7842
    %8634 = vmatprep.subr.bf16.mxu0 0
    %8635 = vmatpush1.bf16.msra.mxu0 %v7843
    %8636 = vmatprep.subr.bf16.mxu0 0
    %8637 = vmatpush1.bf16.msra.mxu0 %v7844
    %8638 = vmatprep.subr.bf16.mxu0 0
    %8639 = vmatpush1.bf16.msra.mxu0 %v7845
    %8640 = vmatprep.subr.bf16.mxu0 0
    %8641 = vmatpush1.bf16.msra.mxu0 %v7846
    %8642 = vmatprep.subr.bf16.mxu0 0
    %8643 = vmatpush1.bf16.msra.mxu0 %v7847
    %8644 = vmatprep.mubr.bf16.mxu0 %v7971
    %8645 = vmatmul.mubr.bf16.gmra.mrb[0].mxu0 %v7970
    %v8646 = vpop.f32.mrb[0].mxu0
    %v8647 = vadd.f32 %v8607, %v8646
    %v8648 = vpop.f32.mrb[0].mxu0
    %v8649 = vpop.f32.mrb[0].mxu0
    %v8650 = vpop.f32.mrb[0].mxu0
    %8651 = vdwg.mxu0
    %8652 = vmatprep.subr.bf16.mxu0 0
    %8653 = vmatpush1.bf16.msra.mxu0 %v7848
    %8654 = vmatprep.subr.bf16.mxu0 0
    %8655 = vmatpush1.bf16.msra.mxu0 %v7849
    %8656 = vmatprep.subr.bf16.mxu0 0
    %8657 = vmatpush1.bf16.msra.mxu0 %v7850
    %8658 = vmatprep.subr.bf16.mxu0 0
    %8659 = vmatpush1.bf16.msra.mxu0 %v7851
    %8660 = vmatprep.subr.bf16.mxu0 0
    %8661 = vmatpush1.bf16.msra.mxu0 %v7852
    %8662 = vmatprep.subr.bf16.mxu0 0
    %8663 = vmatpush1.bf16.msra.mxu0 %v7853
    %8664 = vmatprep.subr.bf16.mxu0 0
    %8665 = vmatpush1.bf16.msra.mxu0 %v7854
    %8666 = vmatprep.subr.bf16.mxu0 0
    %8667 = vmatpush1.bf16.msra.mxu0 %v7855
    %8668 = vmatprep.subr.bf16.mxu0 0
    %8669 = vmatpush1.bf16.msra.mxu0 %v7856
    %8670 = vmatprep.subr.bf16.mxu0 0
    %8671 = vmatpush1.bf16.msra.mxu0 %v7857
    %8672 = vmatprep.subr.bf16.mxu0 0
    %8673 = vmatpush1.bf16.msra.mxu0 %v7858
    %8674 = vmatprep.subr.bf16.mxu0 0
    %8675 = vmatpush1.bf16.msra.mxu0 %v7859
    %8676 = vmatprep.subr.bf16.mxu0 0
    %8677 = vmatpush1.bf16.msra.mxu0 %v7860
    %8678 = vmatprep.subr.bf16.mxu0 0
    %8679 = vmatpush1.bf16.msra.mxu0 %v7861
    %8680 = vmatprep.subr.bf16.mxu0 0
    %8681 = vmatpush1.bf16.msra.mxu0 %v7862
    %8682 = vmatprep.subr.bf16.mxu0 0
    %8683 = vmatpush1.bf16.msra.mxu0 %v7863
    %8684 = vmatprep.mubr.bf16.mxu0 %v7973
    %8685 = vmatmul.mubr.bf16.gmra.mrb[0].mxu0 %v7972
    %v8686 = vpop.f32.mrb[0].mxu0
    %v8687 = vadd.f32 %v8647, %v8686
    %v8688 = vpop.f32.mrb[0].mxu0
    %v8689 = vpop.f32.mrb[0].mxu0
    %v8690 = vpop.f32.mrb[0].mxu0
    %8691 = vdwg.mxu0
    %8692 = vmatprep.subr.bf16.mxu0 0
    %8693 = vmatpush1.bf16.msra.mxu0 %v7864
    %8694 = vmatprep.subr.bf16.mxu0 0
    %8695 = vmatpush1.bf16.msra.mxu0 %v7865
    %8696 = vmatprep.subr.bf16.mxu0 0
    %8697 = vmatpush1.bf16.msra.mxu0 %v7866
    %8698 = vmatprep.subr.bf16.mxu0 0
    %8699 = vmatpush1.bf16.msra.mxu0 %v7867
    %8700 = vmatprep.subr.bf16.mxu0 0
    %8701 = vmatpush1.bf16.msra.mxu0 %v7868
    %8702 = vmatprep.subr.bf16.mxu0 0
    %8703 = vmatpush1.bf16.msra.mxu0 %v7869
    %8704 = vmatprep.subr.bf16.mxu0 0
    %8705 = vmatpush1.bf16.msra.mxu0 %v7870
    %8706 = vmatprep.subr.bf16.mxu0 0
    %8707 = vmatpush1.bf16.msra.mxu0 %v7871
    %8708 = vmatprep.subr.bf16.mxu0 0
    %8709 = vmatpush1.bf16.msra.mxu0 %v7872
    %8710 = vmatprep.subr.bf16.mxu0 0
    %8711 = vmatpush1.bf16.msra.mxu0 %v7873
    %8712 = vmatprep.subr.bf16.mxu0 0
    %8713 = vmatpush1.bf16.msra.mxu0 %v7874
    %8714 = vmatprep.subr.bf16.mxu0 0
    %8715 = vmatpush1.bf16.msra.mxu0 %v7875
    %8716 = vmatprep.subr.bf16.mxu0 0
    %8717 = vmatpush1.bf16.msra.mxu0 %v7876
    %8718 = vmatprep.subr.bf16.mxu0 0
    %8719 = vmatpush1.bf16.msra.mxu0 %v7877
    %8720 = vmatprep.subr.bf16.mxu0 0
    %8721 = vmatpush1.bf16.msra.mxu0 %v7878
    %8722 = vmatprep.subr.bf16.mxu0 0
    %8723 = vmatpush1.bf16.msra.mxu0 %v7879
    %8724 = vmatprep.mubr.bf16.mxu0 %v7975
    %8725 = vmatmul.mubr.bf16.gmra.mrb[0].mxu0 %v7974
    %v8726 = vpop.f32.mrb[0].mxu0
    %v8727 = vadd.f32 %v8687, %v8726
    %v8728 = vpop.f32.mrb[0].mxu0
    %v8729 = vpop.f32.mrb[0].mxu0
    %v8730 = vpop.f32.mrb[0].mxu0
    %8731 = vdwg.mxu0
    %8732 = vst [vmem:[#allocation3] sm:$0xff] %v8727
    // Predicated region
    $region18: #{tpu_custom_call.1} parent=1 // pred_check
      _
    $region19: #{tpu_custom_call.1} parent=1 // pred_check_branch
      %8734 = sbr.rel (0) target = $region21
    $region20: #{tpu_custom_call.1} parent=1 // pred_region
      %s8736 = ssub.s32 128, 128
      %8737 = vsyncadd [#allocation4], %s8736
      %s8739 = sshll.u32 [#allocation3], 4
      %s8740 = int_to_ptr.vmem [resolvable:$true] %s8739
      %8742 = dma.vmem_to_hbm [thread:$0]  %s8740, 128, %s4, [#allocation4]
    $region21: #{tpu_custom_call.1} parent=1 // pred_fallthru
      _
    // Predicated region
    $region22: #{tpu_custom_call.1} parent=1 // pred_check
      _
    $region23: #{tpu_custom_call.1} parent=1 // pred_check_branch
      %8744 = sbr.rel (0) target = $region25
    $region24: #{tpu_custom_call.1} parent=1 // pred_region
      %8745 = dma.done [#allocation4], 128
    $region25: #{tpu_custom_call.1} parent=1 // pred_fallthru
      _
    %8746 = vsyncpa [#allocation4], 1

</llo_original>
